<compile_context>
chip_gen: v7x
topology: tpu7x:2x2x1
jax: 0.10.0
libtpu: 0.0.40
codegen_flags: <defaults>
</compile_context>

<pallas_src>
import functools
import numpy as np
import jax
import jax.numpy as jnp
from jax.experimental import pallas as pl
from jax.experimental.pallas import tpu as pltpu

BN_EPS = 1e-5
SN_EPS = 1e-12
GUARD = 128  # lane-aligned zero guard band for the in-kernel conv scratch


# ----------------------------- fused Pallas kernel --------------------------

def _fused_kernel(B, C, H1, W1,
                  x_ref, msum_ref, up_ref, mm1_ref, mp1_ref, mm2_ref, mp2_ref,
                  sn_w_ref, sn_b_ref,
                  gb_w1_ref, gb_b1_ref, gb_w3_ref, gb_b3_ref, gb_g_ref, gb_bt_ref,
                  gbu_w1_ref, gbu_b1_ref, gbu_w31_ref, gbu_b31_ref,
                  gbu_w32_ref, gbu_b32_ref, gbu_g_ref, gbu_bt_ref,
                  o_ref, pad1_ref, pad2_ref, stack_ref):
    BC = B * C
    H2, W2 = 2 * H1, 2 * W1
    S1, S2 = H1 * W1, H2 * W2

    # (#2) Zero ONLY the guard bands; the centre [GUARD, GUARD+S) is always
    # overwritten by conv3x3 before any read.  Redone every grid step because a
    # core's scratch is undefined on its first iteration (grid may be sharded).
    zg = jnp.zeros((BC, GUARD), jnp.float32)
    pad1_ref[:, :GUARD] = zg
    pad1_ref[:, GUARD + S1:] = zg
    pad2_ref[:, :GUARD] = zg
    pad2_ref[:, GUARD + S2:] = zg

    msum = msum_ref[...]  # (BC, BC) = kron(ones(B,B), I_C): per-channel batch sum

    def conv3x3(x, w_ref, b_ref, pad_ref, mm_ref, mp_ref, H, W):
        """3x3 conv, stride 1, pad 1.  (#3) stack the 9 shifted windows into a
        (9*BC, S) VMEM scratch and contract with ONE K=9*BC MXU dot.
        w_ref: (BC, 9*BC) = concat_t kron(I_B, W[:, :, kh, kw]), t = 3*kh + kw."""
        S = H * W
        m_minus = mm_ref[...]   # (BC, S): 1 where (w-1) is in range
        m_plus = mp_ref[...]    # (BC, S): 1 where (w+1) is in range
        pad_ref[:, GUARD:GUARD + S] = x            # lane-aligned centre write
        for t in range(9):                         # t = 3*kh + kw
            dh, dw = t // 3 - 1, t % 3 - 1
            shift = dh * W + dw
            xs = pad_ref[:, GUARD + shift:GUARD + shift + S]  # x[(h+dh, w+dw)]
            if dw == -1:
                xs = xs * m_minus                  # kill within-row wraparound
            elif dw == 1:
                xs = xs * m_plus
            stack_ref[t * BC:(t + 1) * BC, :S] = xs
        return (jnp.dot(w_ref[...], stack_ref[:, :S],
                        preferred_element_type=jnp.float32) + b_ref[...])

    def conv1x1(x, w, b):
        return jnp.dot(w, x, preferred_element_type=jnp.float32) + b

    def bn_relu(x, gamma, beta, S):
        # (#1) Training-mode BatchNorm2d (biased batch variance) + ReLU.
        # Reduce over the lane (spatial) axis first, then combine across the
        # batch with a tiny (BC,BC)x(BC,1) dot on the reduced vectors.
        inv_n = 1.0 / float(B * S)
        s1 = jnp.sum(x, axis=1, keepdims=True)          # (BC, 1)
        s2 = jnp.sum(x * x, axis=1, keepdims=True)      # (BC, 1)
        mean = jnp.dot(msum, s1, preferred_element_type=jnp.float32) * inv_n
        ex2 = jnp.dot(msum, s2, preferred_element_type=jnp.float32) * inv_n
        var = ex2 - mean * mean
        scale = jax.lax.rsqrt(var + BN_EPS) * gamma     # (BC, 1)
        shift = beta - mean * scale
        return jnp.maximum(x * scale + shift, 0.0)

    def upsample(x):
        # align_corners=True bilinear 2x as one matmul with the separable matrix.
        return jnp.dot(x, up_ref[...], preferred_element_type=jnp.float32)

    x = x_ref[...]  # (BC, S1)

    # --- SpectralNorm(Conv2d 3x3, padding=1) ---
    x = conv3x3(x, sn_w_ref, sn_b_ref, pad1_ref, mm1_ref, mp1_ref, H1, W1)

    # --- GBlock (conv3_1 and BN are shared modules applied twice, as in the spec) ---
    gb_g, gb_bt = gb_g_ref[...], gb_bt_ref[...]
    x1 = conv1x1(x, gb_w1_ref[...], gb_b1_ref[...])
    x2 = bn_relu(x, gb_g, gb_bt, S1)
    x2 = conv3x3(x2, gb_w3_ref, gb_b3_ref, pad1_ref, mm1_ref, mp1_ref, H1, W1)
    x2 = bn_relu(x2, gb_g, gb_bt, S1)
    x2 = conv3x3(x2, gb_w3_ref, gb_b3_ref, pad1_ref, mm1_ref, mp1_ref, H1, W1)
    x = x1 + x2

    # --- GBlockUp (#9: x2 branch first so the S2-sized live set stays small) ---
    gbu_g, gbu_bt = gbu_g_ref[...], gbu_bt_ref[...]
    x2 = bn_relu(x, gbu_g, gbu_bt, S1)
    x2 = upsample(x2)                                   # (BC, S2)
    x2 = conv3x3(x2, gbu_w31_ref, gbu_b31_ref, pad2_ref, mm2_ref, mp2_ref, H2, W2)
    x2 = bn_relu(x2, gbu_g, gbu_bt, S2)
    x2 = conv3x3(x2, gbu_w32_ref, gbu_b32_ref, pad2_ref, mm2_ref, mp2_ref, H2, W2)
    x1 = upsample(x)
    x1 = conv1x1(x1, gbu_w1_ref[...], gbu_b1_ref[...])
    o_ref[...] = x1 + x2


# ----------------------------- host-side constants / repacking ---------------

def _bilinear_matrix(n_in, n_out):
    """1D interpolation matrix for align_corners=True bilinear resize."""
    A = np.zeros((n_out, n_in), np.float32)
    if n_in == 1:
        A[:, 0] = 1.0
        return A
    scale = (n_in - 1) / (n_out - 1)
    for i in range(n_out):
        src = i * scale
        i0 = int(np.floor(src))
        i1 = min(i0 + 1, n_in - 1)
        frac = src - i0
        A[i, i0] += 1.0 - frac
        A[i, i1] += frac
    return A


def _upsample_matrix(H, W):
    A_h = _bilinear_matrix(H, 2 * H)   # (2H, H)
    A_w = _bilinear_matrix(W, 2 * W)   # (2W, W)
    # U[h*W + w, h2*(2W) + w2] = A_h[h2, h] * A_w[w2, w]
    return np.kron(A_h.T, A_w.T).astype(np.float32)  # (H*W, 4*H*W)


def _col_masks(BC, H, W):
    """(BC, H*W) lane masks: valid when reading column w-1 / w+1 respectively."""
    col = np.arange(H * W, dtype=np.int32) % W
    mm = (col >= 1).astype(np.float32)
    mp = (col <= W - 2).astype(np.float32)
    return (np.ascontiguousarray(np.broadcast_to(mm, (BC, H * W))),
            np.ascontiguousarray(np.broadcast_to(mp, (BC, H * W))))


def _conv3_mat(w_oihw, B):
    """(B*O, 9*B*I): 9 taps kron'ed with I_B and concatenated along K (t = 3*kh+kw)."""
    eye_b = jnp.eye(B, dtype=jnp.float32)
    taps = [jnp.kron(eye_b, w_oihw[:, :, kh, kw])
            for kh in range(3) for kw in range(3)]
    return jnp.concatenate(taps, axis=1)


def _conv1_mat(w_oihw, B):
    O, I = w_oihw.shape[0], w_oihw.shape[1]
    return jnp.kron(jnp.eye(B, dtype=jnp.float32), w_oihw.reshape(O, I))


def _row_vec(v, B):
    return jnp.tile(v, B).reshape(B * v.shape[0], 1)


def spectral_normalize(w_bar, u):
    """One power iteration as in SpectralNorm._update_u_v (power_iterations=1)."""
    # TODO(synk): PyTorch mutates the persistent `u`/`v` buffers each forward; only
    # the normalized weight matters for a single inference pass, so `u` is not returned.
    O = w_bar.shape[0]
    w2 = w_bar.reshape(O, -1)
    v = w2.T @ u
    v = v / (jnp.linalg.norm(v) + SN_EPS)
    u_new = w2 @ v
    u_new = u_new / (jnp.linalg.norm(u_new) + SN_EPS)
    sigma = jnp.dot(u_new, w2 @ v)
    return w_bar / sigma


# ----------------------------- module forward --------------------------------

def sequence_gru_forward(x, params):
    """x: (B, C, H, W) single step or (T, B, C, H, W) sequence of independent steps."""
    single = (x.ndim == 4)
    if single:
        x = x[None]
    T, B, C, H, W = x.shape
    BC, S1 = B * C, H * W
    S2 = 4 * S1

    # tiny XLA prologue: spectral norm + weight/bias repacking (fused under jit)
    w_sn = spectral_normalize(params["sn_w_bar"], params["sn_u"])
    gb, gbu = params["gb"], params["gbu"]

    mm1, mp1 = _col_masks(BC, H, W)
    mm2, mp2 = _col_masks(BC, 2 * H, 2 * W)
    const_inputs = (
        jnp.asarray(np.kron(np.ones((B, B), np.float32),
                            np.eye(C, dtype=np.float32))),      # msum
        jnp.asarray(_upsample_matrix(H, W)),                     # up (S1, S2)
        jnp.asarray(mm1), jnp.asarray(mp1), jnp.asarray(mm2), jnp.asarray(mp2),
        _conv3_mat(w_sn, B), _row_vec(params["sn_b"], B),
        _conv1_mat(gb["conv1_w"], B), _row_vec(gb["conv1_b"], B),
        _conv3_mat(gb["conv3_1_w"], B), _row_vec(gb["conv3_1_b"], B),
        _row_vec(gb["bn_g"], B), _row_vec(gb["bn_b"], B),
        _conv1_mat(gbu["conv1_w"], B), _row_vec(gbu["conv1_b"], B),
        _conv3_mat(gbu["conv3_1_w"], B), _row_vec(gbu["conv3_1_b"], B),
        _conv3_mat(gbu["conv3_2_w"], B), _row_vec(gbu["conv3_2_b"], B),
        _row_vec(gbu["bn_g"], B), _row_vec(gbu["bn_b"], B),
    )

    x_in = x.astype(jnp.float32).reshape(T, BC, S1)

    # (#6/#7) per-step blocks pipeline HBM<->VMEM; constants stay VMEM-resident
    # (index_map returns the same block every iteration -> DMA'd once per core).
    in_specs = [pl.BlockSpec((None, BC, S1), lambda t: (t, 0, 0))]
    for c in const_inputs:
        nd = c.ndim
        in_specs.append(pl.BlockSpec(c.shape, lambda t, _nd=nd: (0,) * _nd))
    out_spec = pl.BlockSpec((None, BC, S2), lambda t: (t, 0, 0))

    # (#10) advisory cost estimate so XLA overlaps the prologue with the DMA window
    flops_step = (2 * BC * (9 * BC) * (3 * S1 + 2 * S2)   # 3x3 convs
                  + 2 * BC * BC * (S1 + S2)               # 1x1 convs
                  + 2 * 2 * BC * S1 * S2)                 # two bilinear upsamples
    bytes_const = sum(int(np.prod(c.shape)) * 4 for c in const_inputs)
    cost = pl.CostEstimate(flops=int(T * flops_step), transcendentals=0,
                           bytes_accessed=int(T * (BC * S1 + BC * S2) * 4 + bytes_const))

    kernel = functools.partial(_fused_kernel, B, C, H, W)
    out = pl.pallas_call(
        kernel,
        grid=(T,),
        out_shape=jax.ShapeDtypeStruct((T, BC, S2), jnp.float32),
        in_specs=in_specs,
        out_specs=out_spec,
        scratch_shapes=[
            pltpu.VMEM((BC, S1 + 2 * GUARD), jnp.float32),   # pad1 (zero-guarded)
            pltpu.VMEM((BC, S2 + 2 * GUARD), jnp.float32),   # pad2 (zero-guarded)
            pltpu.VMEM((9 * BC, S2), jnp.float32),           # stacked conv windows
        ],
        compiler_params=pltpu.CompilerParams(
            dimension_semantics=("parallel",)),              # v7x: shard steps on 2 TCs
        cost_estimate=cost,
    )(x_in, *const_inputs)

    out = out.reshape(T, B, C, 2 * H, 2 * W)
    return out[0] if single else out


# ----------------------------- parameter init --------------------------------

def init_params(key, C):
    ks = jax.random.split(key, 16)

    def conv_w(k, o, i, kh, kw, scale=0.1):
        return scale * jax.random.normal(k, (o, i, kh, kw), jnp.float32)

    def vec(k, n, scale=0.05):
        return scale * jax.random.normal(k, (n,), jnp.float32)

    u = jax.random.normal(ks[0], (C,), jnp.float32)
    u = u / (jnp.linalg.norm(u) + SN_EPS)

    return {
        "sn_w_bar": conv_w(ks[1], C, C, 3, 3),
        "sn_b": vec(ks[2], C),
        "sn_u": u,
        "gb": {
            "conv1_w": conv_w(ks[3], C, C, 1, 1),
            "conv1_b": vec(ks[4], C),
            "conv3_1_w": conv_w(ks[5], C, C, 3, 3),
            "conv3_1_b": vec(ks[6], C),
            "bn_g": 1.0 + 0.1 * jax.random.normal(ks[7], (C,), jnp.float32),
            "bn_b": vec(ks[8], C),
        },
        "gbu": {
            "conv1_w": conv_w(ks[9], C, C, 1, 1),
            "conv1_b": vec(ks[10], C),
            "conv3_1_w": conv_w(ks[11], C, C, 3, 3),
            "conv3_1_b": vec(ks[12], C),
            "conv3_2_w": conv_w(ks[13], C, C, 3, 3),
            "conv3_2_b": vec(ks[14], C),
            "bn_g": 1.0 + 0.1 * jax.random.normal(ks[15], (C,), jnp.float32),
            "bn_b": jnp.zeros((C,), jnp.float32),
        },
    }


# ----------------------------- main -------------------------------------------

if __name__ == "__main__":
    T, B, C, H, W = 4, 2, 8, 16, 16  # input_size = 8, 4 independent timesteps
    key = jax.random.PRNGKey(0)
    k_param, k_x = jax.random.split(key)
    params = init_params(k_param, C)
    x = jax.random.normal(k_x, (T, B, C, H, W), jnp.float32)

    fwd = jax.jit(sequence_gru_forward)
    out = jax.block_until_ready(fwd(x, params))

    assert out.shape == (T, B, C, 2 * H, 2 * W), out.shape
    assert bool(jnp.all(jnp.isfinite(out)))
    print("KERNEL_OK")
</pallas_src>

<mosaic_0001>
module attributes {stable_mosaic.version = 11 : i64} {
  func.func @_fused_kernel(%arg0: i32, %arg1: memref<1x16x256xf32, #tpu.memory_space<vmem>>, %arg2: memref<16x16xf32, #tpu.memory_space<vmem>>, %arg3: memref<256x1024xf32, #tpu.memory_space<vmem>>, %arg4: memref<16x256xf32, #tpu.memory_space<vmem>>, %arg5: memref<16x256xf32, #tpu.memory_space<vmem>>, %arg6: memref<16x1024xf32, #tpu.memory_space<vmem>>, %arg7: memref<16x1024xf32, #tpu.memory_space<vmem>>, %arg8: memref<16x144xf32, #tpu.memory_space<vmem>>, %arg9: memref<16x1xf32, #tpu.memory_space<vmem>>, %arg10: memref<16x16xf32, #tpu.memory_space<vmem>>, %arg11: memref<16x1xf32, #tpu.memory_space<vmem>>, %arg12: memref<16x144xf32, #tpu.memory_space<vmem>>, %arg13: memref<16x1xf32, #tpu.memory_space<vmem>>, %arg14: memref<16x1xf32, #tpu.memory_space<vmem>>, %arg15: memref<16x1xf32, #tpu.memory_space<vmem>>, %arg16: memref<16x16xf32, #tpu.memory_space<vmem>>, %arg17: memref<16x1xf32, #tpu.memory_space<vmem>>, %arg18: memref<16x144xf32, #tpu.memory_space<vmem>>, %arg19: memref<16x1xf32, #tpu.memory_space<vmem>>, %arg20: memref<16x144xf32, #tpu.memory_space<vmem>>, %arg21: memref<16x1xf32, #tpu.memory_space<vmem>>, %arg22: memref<16x1xf32, #tpu.memory_space<vmem>>, %arg23: memref<16x1xf32, #tpu.memory_space<vmem>>, %arg24: memref<1x16x1024xf32, #tpu.memory_space<vmem>>, %arg25: memref<16x512xf32, #tpu.memory_space<vmem>>, %arg26: memref<16x1280xf32, #tpu.memory_space<vmem>>, %arg27: memref<144x1024xf32, #tpu.memory_space<vmem>>) attributes {dimension_semantics = [#tpu.dimension_semantics<parallel>], iteration_bounds = array<i64: 4>, scalar_prefetch = 0 : i64, scratch_operands = 3 : i64, tpu.core_type = #tpu.core_type<tc>, window_params = [{transform_indices = @transform_0, window_bounds = array<i64: 1, 16, 256>}, {pipeline_mode = #tpu.pipeline_mode<synchronous>, transform_indices = @transform_1, window_bounds = array<i64: 16, 16>}, {pipeline_mode = #tpu.pipeline_mode<synchronous>, transform_indices = @transform_2, window_bounds = array<i64: 256, 1024>}, {pipeline_mode = #tpu.pipeline_mode<synchronous>, transform_indices = @transform_3, window_bounds = array<i64: 16, 256>}, {pipeline_mode = #tpu.pipeline_mode<synchronous>, transform_indices = @transform_4, window_bounds = array<i64: 16, 256>}, {pipeline_mode = #tpu.pipeline_mode<synchronous>, transform_indices = @transform_5, window_bounds = array<i64: 16, 1024>}, {pipeline_mode = #tpu.pipeline_mode<synchronous>, transform_indices = @transform_6, window_bounds = array<i64: 16, 1024>}, {pipeline_mode = #tpu.pipeline_mode<synchronous>, transform_indices = @transform_7, window_bounds = array<i64: 16, 144>}, {pipeline_mode = #tpu.pipeline_mode<synchronous>, transform_indices = @transform_8, window_bounds = array<i64: 16, 1>}, {pipeline_mode = #tpu.pipeline_mode<synchronous>, transform_indices = @transform_9, window_bounds = array<i64: 16, 16>}, {pipeline_mode = #tpu.pipeline_mode<synchronous>, transform_indices = @transform_10, window_bounds = array<i64: 16, 1>}, {pipeline_mode = #tpu.pipeline_mode<synchronous>, transform_indices = @transform_11, window_bounds = array<i64: 16, 144>}, {pipeline_mode = #tpu.pipeline_mode<synchronous>, transform_indices = @transform_12, window_bounds = array<i64: 16, 1>}, {pipeline_mode = #tpu.pipeline_mode<synchronous>, transform_indices = @transform_13, window_bounds = array<i64: 16, 1>}, {pipeline_mode = #tpu.pipeline_mode<synchronous>, transform_indices = @transform_14, window_bounds = array<i64: 16, 1>}, {pipeline_mode = #tpu.pipeline_mode<synchronous>, transform_indices = @transform_15, window_bounds = array<i64: 16, 16>}, {pipeline_mode = #tpu.pipeline_mode<synchronous>, transform_indices = @transform_16, window_bounds = array<i64: 16, 1>}, {pipeline_mode = #tpu.pipeline_mode<synchronous>, transform_indices = @transform_17, window_bounds = array<i64: 16, 144>}, {pipeline_mode = #tpu.pipeline_mode<synchronous>, transform_indices = @transform_18, window_bounds = array<i64: 16, 1>}, {pipeline_mode = #tpu.pipeline_mode<synchronous>, transform_indices = @transform_19, window_bounds = array<i64: 16, 144>}, {pipeline_mode = #tpu.pipeline_mode<synchronous>, transform_indices = @transform_20, window_bounds = array<i64: 16, 1>}, {pipeline_mode = #tpu.pipeline_mode<synchronous>, transform_indices = @transform_21, window_bounds = array<i64: 16, 1>}, {pipeline_mode = #tpu.pipeline_mode<synchronous>, transform_indices = @transform_22, window_bounds = array<i64: 16, 1>}, {transform_indices = @transform_23, window_bounds = array<i64: 1, 16, 1024>}]} {
    %cst = arith.constant 0.000000e+00 : f32
    %0 = vector.broadcast %cst : f32 to vector<16x128xf32>
    %c0 = arith.constant 0 : index
    %c0_0 = arith.constant 0 : index
    %1 = vector.load %arg25[%c0, %c0_0] : memref<16x512xf32, #tpu.memory_space<vmem>>, vector<16x128xf32>
    tpu.vector_store %arg25[%c0, %c0_0], %0 {strides = array<i32>} : memref<16x512xf32, #tpu.memory_space<vmem>>, vector<16x128xf32>,
    %c0_1 = arith.constant 0 : index
    %c384 = arith.constant 384 : index
    %2 = vector.load %arg25[%c0_1, %c384] : memref<16x512xf32, #tpu.memory_space<vmem>>, vector<16x128xf32>
    tpu.vector_store %arg25[%c0_1, %c384], %0 {strides = array<i32>} : memref<16x512xf32, #tpu.memory_space<vmem>>, vector<16x128xf32>,
    %c0_2 = arith.constant 0 : index
    %c0_3 = arith.constant 0 : index
    %3 = vector.load %arg26[%c0_2, %c0_3] : memref<16x1280xf32, #tpu.memory_space<vmem>>, vector<16x128xf32>
    tpu.vector_store %arg26[%c0_2, %c0_3], %0 {strides = array<i32>} : memref<16x1280xf32, #tpu.memory_space<vmem>>, vector<16x128xf32>,
    %c0_4 = arith.constant 0 : index
    %c1152 = arith.constant 1152 : index
    %4 = vector.load %arg26[%c0_4, %c1152] : memref<16x1280xf32, #tpu.memory_space<vmem>>, vector<16x128xf32>
    tpu.vector_store %arg26[%c0_4, %c1152], %0 {strides = array<i32>} : memref<16x1280xf32, #tpu.memory_space<vmem>>, vector<16x128xf32>,
    %c0_5 = arith.constant 0 : index
    %c0_6 = arith.constant 0 : index
    %5 = vector.load %arg2[%c0_5, %c0_6] : memref<16x16xf32, #tpu.memory_space<vmem>>, vector<16x16xf32>
    %c0_7 = arith.constant 0 : index
    %c0_8 = arith.constant 0 : index
    %c0_9 = arith.constant 0 : index
    %6 = vector.load %arg1[%c0_7, %c0_8, %c0_9] : memref<1x16x256xf32, #tpu.memory_space<vmem>>, vector<1x16x256xf32>
    %7 = vector.shape_cast %6 : vector<1x16x256xf32> to vector<16x256xf32>
    %c0_10 = arith.constant 0 : index
    %c0_11 = arith.constant 0 : index
    %8 = vector.load %arg4[%c0_10, %c0_11] : memref<16x256xf32, #tpu.memory_space<vmem>>, vector<16x256xf32>
    %c0_12 = arith.constant 0 : index
    %c0_13 = arith.constant 0 : index
    %9 = vector.load %arg5[%c0_12, %c0_13] : memref<16x256xf32, #tpu.memory_space<vmem>>, vector<16x256xf32>
    %c0_14 = arith.constant 0 : index
    %c128 = arith.constant 128 : index
    %10 = vector.load %arg25[%c0_14, %c128] : memref<16x512xf32, #tpu.memory_space<vmem>>, vector<16x256xf32>
    tpu.vector_store %arg25[%c0_14, %c128], %7 {strides = array<i32>} : memref<16x512xf32, #tpu.memory_space<vmem>>, vector<16x256xf32>,
    %c0_15 = arith.constant 0 : index
    %c111 = arith.constant 111 : index
    %11 = vector.load %arg25[%c0_15, %c111] : memref<16x512xf32, #tpu.memory_space<vmem>>, vector<16x256xf32>
    %12 = arith.mulf %11, %8 : vector<16x256xf32>
    %c0_16 = arith.constant 0 : index
    %c0_17 = arith.constant 0 : index
    %13 = vector.load %arg27[%c0_16, %c0_17] : memref<144x1024xf32, #tpu.memory_space<vmem>>, vector<16x256xf32>
    tpu.vector_store %arg27[%c0_16, %c0_17], %12 {strides = array<i32>} : memref<144x1024xf32, #tpu.memory_space<vmem>>, vector<16x256xf32>,
    %c0_18 = arith.constant 0 : index
    %c112 = arith.constant 112 : index
    %14 = vector.load %arg25[%c0_18, %c112] : memref<16x512xf32, #tpu.memory_space<vmem>>, vector<16x256xf32>
    %c16 = arith.constant 16 : index
    %c0_19 = arith.constant 0 : index
    %15 = vector.load %arg27[%c16, %c0_19] : memref<144x1024xf32, #tpu.memory_space<vmem>>, vector<16x256xf32>
    tpu.vector_store %arg27[%c16, %c0_19], %14 {strides = array<i32>} : memref<144x1024xf32, #tpu.memory_space<vmem>>, vector<16x256xf32>,
    %c0_20 = arith.constant 0 : index
    %c113 = arith.constant 113 : index
    %16 = vector.load %arg25[%c0_20, %c113] : memref<16x512xf32, #tpu.memory_space<vmem>>, vector<16x256xf32>
    %17 = arith.mulf %16, %9 : vector<16x256xf32>
    %c32 = arith.constant 32 : index
    %c0_21 = arith.constant 0 : index
    %18 = vector.load %arg27[%c32, %c0_21] : memref<144x1024xf32, #tpu.memory_space<vmem>>, vector<16x256xf32>
    tpu.vector_store %arg27[%c32, %c0_21], %17 {strides = array<i32>} : memref<144x1024xf32, #tpu.memory_space<vmem>>, vector<16x256xf32>,
    %c0_22 = arith.constant 0 : index
    %c127 = arith.constant 127 : index
    %19 = vector.load %arg25[%c0_22, %c127] : memref<16x512xf32, #tpu.memory_space<vmem>>, vector<16x256xf32>
    %20 = arith.mulf %19, %8 : vector<16x256xf32>
    %c48 = arith.constant 48 : index
    %c0_23 = arith.constant 0 : index
    %21 = vector.load %arg27[%c48, %c0_23] : memref<144x1024xf32, #tpu.memory_space<vmem>>, vector<16x256xf32>
    tpu.vector_store %arg27[%c48, %c0_23], %20 {strides = array<i32>} : memref<144x1024xf32, #tpu.memory_space<vmem>>, vector<16x256xf32>,
    %c0_24 = arith.constant 0 : index
    %c128_25 = arith.constant 128 : index
    %22 = vector.load %arg25[%c0_24, %c128_25] : memref<16x512xf32, #tpu.memory_space<vmem>>, vector<16x256xf32>
    %c64 = arith.constant 64 : index
    %c0_26 = arith.constant 0 : index
    %23 = vector.load %arg27[%c64, %c0_26] : memref<144x1024xf32, #tpu.memory_space<vmem>>, vector<16x256xf32>
    tpu.vector_store %arg27[%c64, %c0_26], %22 {strides = array<i32>} : memref<144x1024xf32, #tpu.memory_space<vmem>>, vector<16x256xf32>,
    %c0_27 = arith.constant 0 : index
    %c129 = arith.constant 129 : index
    %24 = vector.load %arg25[%c0_27, %c129] : memref<16x512xf32, #tpu.memory_space<vmem>>, vector<16x256xf32>
    %25 = arith.mulf %24, %9 : vector<16x256xf32>
    %c80 = arith.constant 80 : index
    %c0_28 = arith.constant 0 : index
    %26 = vector.load %arg27[%c80, %c0_28] : memref<144x1024xf32, #tpu.memory_space<vmem>>, vector<16x256xf32>
    tpu.vector_store %arg27[%c80, %c0_28], %25 {strides = array<i32>} : memref<144x1024xf32, #tpu.memory_space<vmem>>, vector<16x256xf32>,
    %c0_29 = arith.constant 0 : index
    %c143 = arith.constant 143 : index
    %27 = vector.load %arg25[%c0_29, %c143] : memref<16x512xf32, #tpu.memory_space<vmem>>, vector<16x256xf32>
    %28 = arith.mulf %27, %8 : vector<16x256xf32>
    %c96 = arith.constant 96 : index
    %c0_30 = arith.constant 0 : index
    %29 = vector.load %arg27[%c96, %c0_30] : memref<144x1024xf32, #tpu.memory_space<vmem>>, vector<16x256xf32>
    tpu.vector_store %arg27[%c96, %c0_30], %28 {strides = array<i32>} : memref<144x1024xf32, #tpu.memory_space<vmem>>, vector<16x256xf32>,
    %c0_31 = arith.constant 0 : index
    %c144 = arith.constant 144 : index
    %30 = vector.load %arg25[%c0_31, %c144] : memref<16x512xf32, #tpu.memory_space<vmem>>, vector<16x256xf32>
    %c112_32 = arith.constant 112 : index
    %c0_33 = arith.constant 0 : index
    %31 = vector.load %arg27[%c112_32, %c0_33] : memref<144x1024xf32, #tpu.memory_space<vmem>>, vector<16x256xf32>
    tpu.vector_store %arg27[%c112_32, %c0_33], %30 {strides = array<i32>} : memref<144x1024xf32, #tpu.memory_space<vmem>>, vector<16x256xf32>,
    %c0_34 = arith.constant 0 : index
    %c145 = arith.constant 145 : index
    %32 = vector.load %arg25[%c0_34, %c145] : memref<16x512xf32, #tpu.memory_space<vmem>>, vector<16x256xf32>
    %33 = arith.mulf %32, %9 : vector<16x256xf32>
    %c128_35 = arith.constant 128 : index
    %c0_36 = arith.constant 0 : index
    %34 = vector.load %arg27[%c128_35, %c0_36] : memref<144x1024xf32, #tpu.memory_space<vmem>>, vector<16x256xf32>
    tpu.vector_store %arg27[%c128_35, %c0_36], %33 {strides = array<i32>} : memref<144x1024xf32, #tpu.memory_space<vmem>>, vector<16x256xf32>,
    %c0_37 = arith.constant 0 : index
    %c0_38 = arith.constant 0 : index
    %35 = vector.load %arg8[%c0_37, %c0_38] : memref<16x144xf32, #tpu.memory_space<vmem>>, vector<16x144xf32>
    %c0_39 = arith.constant 0 : index
    %c0_40 = arith.constant 0 : index
    %36 = vector.load %arg27[%c0_39, %c0_40] : memref<144x1024xf32, #tpu.memory_space<vmem>>, vector<144x256xf32>
    %cst_41 = arith.constant dense<0.000000e+00> : vector<16x256xf32>
    %37 = tpu.matmul %35, %36, %cst_41 {dimension_numbers = #tpu.dot_dimension_numbers<[1], [0], [0], [1], [0, 0, 1, 1], [], []>} : vector<16x144xf32>, vector<144x256xf32>, vector<16x256xf32> -> vector<16x256xf32>
    %c0_42 = arith.constant 0 : index
    %c0_43 = arith.constant 0 : index
    %38 = vector.load %arg9[%c0_42, %c0_43] : memref<16x1xf32, #tpu.memory_space<vmem>>, vector<16x1xf32>
    %39 = vector.broadcast %38 : vector<16x1xf32> to vector<16x256xf32>
    %40 = arith.addf %37, %39 : vector<16x256xf32>
    %c0_44 = arith.constant 0 : index
    %c0_45 = arith.constant 0 : index
    %41 = vector.load %arg14[%c0_44, %c0_45] : memref<16x1xf32, #tpu.memory_space<vmem>>, vector<16x1xf32>
    %c0_46 = arith.constant 0 : index
    %c0_47 = arith.constant 0 : index
    %42 = vector.load %arg15[%c0_46, %c0_47] : memref<16x1xf32, #tpu.memory_space<vmem>>, vector<16x1xf32>
    %c0_48 = arith.constant 0 : index
    %c0_49 = arith.constant 0 : index
    %43 = vector.load %arg10[%c0_48, %c0_49] : memref<16x16xf32, #tpu.memory_space<vmem>>, vector<16x16xf32>
    %c0_50 = arith.constant 0 : index
    %c0_51 = arith.constant 0 : index
    %44 = vector.load %arg11[%c0_50, %c0_51] : memref<16x1xf32, #tpu.memory_space<vmem>>, vector<16x1xf32>
    %cst_52 = arith.constant dense<0.000000e+00> : vector<16x256xf32>
    %45 = tpu.matmul %43, %40, %cst_52 {dimension_numbers = #tpu.dot_dimension_numbers<[1], [0], [0], [1], [0, 0, 1, 1], [], []>} : vector<16x16xf32>, vector<16x256xf32>, vector<16x256xf32> -> vector<16x256xf32>
    %46 = vector.broadcast %44 : vector<16x1xf32> to vector<16x256xf32>
    %47 = arith.addf %45, %46 : vector<16x256xf32>
    %cst_53 = arith.constant dense<0.000000e+00> : vector<16xf32>
    %48 = vector.multi_reduction <add>, %40, %cst_53 [1] : vector<16x256xf32> to vector<16xf32>
    %49 = vector.shape_cast %48 : vector<16xf32> to vector<16x1xf32>
    %50 = arith.mulf %40, %40 : vector<16x256xf32>
    %cst_54 = arith.constant dense<0.000000e+00> : vector<16xf32>
    %51 = vector.multi_reduction <add>, %50, %cst_54 [1] : vector<16x256xf32> to vector<16xf32>
    %52 = vector.shape_cast %51 : vector<16xf32> to vector<16x1xf32>
    %cst_55 = arith.constant dense<0.000000e+00> : vector<16x1xf32>
    %53 = tpu.matmul %5, %49, %cst_55 {dimension_numbers = #tpu.dot_dimension_numbers<[1], [0], [0], [1], [0, 0, 1, 1], [], []>} : vector<16x16xf32>, vector<16x1xf32>, vector<16x1xf32> -> vector<16x1xf32>
    %cst_56 = arith.constant 0.001953125 : f32
    %54 = vector.broadcast %cst_56 : f32 to vector<16x1xf32>
    %55 = arith.mulf %53, %54 : vector<16x1xf32>
    %cst_57 = arith.constant dense<0.000000e+00> : vector<16x1xf32>
    %56 = tpu.matmul %5, %52, %cst_57 {dimension_numbers = #tpu.dot_dimension_numbers<[1], [0], [0], [1], [0, 0, 1, 1], [], []>} : vector<16x16xf32>, vector<16x1xf32>, vector<16x1xf32> -> vector<16x1xf32>
    %cst_58 = arith.constant 0.001953125 : f32
    %57 = vector.broadcast %cst_58 : f32 to vector<16x1xf32>
    %58 = arith.mulf %56, %57 : vector<16x1xf32>
    %59 = arith.mulf %55, %55 : vector<16x1xf32>
    %60 = arith.subf %58, %59 : vector<16x1xf32>
    %cst_59 = arith.constant 9.99999974E-6 : f32
    %61 = vector.broadcast %cst_59 : f32 to vector<16x1xf32>
    %62 = arith.addf %60, %61 : vector<16x1xf32>
    %63 = math.rsqrt %62 : vector<16x1xf32>
    %64 = arith.mulf %63, %41 : vector<16x1xf32>
    %65 = arith.mulf %55, %64 : vector<16x1xf32>
    %66 = arith.subf %42, %65 : vector<16x1xf32>
    %67 = vector.broadcast %64 : vector<16x1xf32> to vector<16x256xf32>
    %68 = arith.mulf %40, %67 : vector<16x256xf32>
    %69 = vector.broadcast %66 : vector<16x1xf32> to vector<16x256xf32>
    %70 = arith.addf %68, %69 : vector<16x256xf32>
    %cst_60 = arith.constant 0.000000e+00 : f32
    %71 = vector.broadcast %cst_60 : f32 to vector<16x256xf32>
    %72 = arith.maximumf %70, %71 : vector<16x256xf32>
    %c0_61 = arith.constant 0 : index
    %c0_62 = arith.constant 0 : index
    %73 = vector.load %arg4[%c0_61, %c0_62] : memref<16x256xf32, #tpu.memory_space<vmem>>, vector<16x256xf32>
    %c0_63 = arith.constant 0 : index
    %c0_64 = arith.constant 0 : index
    %74 = vector.load %arg5[%c0_63, %c0_64] : memref<16x256xf32, #tpu.memory_space<vmem>>, vector<16x256xf32>
    %c0_65 = arith.constant 0 : index
    %c128_66 = arith.constant 128 : index
    %75 = vector.load %arg25[%c0_65, %c128_66] : memref<16x512xf32, #tpu.memory_space<vmem>>, vector<16x256xf32>
    tpu.vector_store %arg25[%c0_65, %c128_66], %72 {strides = array<i32>} : memref<16x512xf32, #tpu.memory_space<vmem>>, vector<16x256xf32>,
    %c0_67 = arith.constant 0 : index
    %c111_68 = arith.constant 111 : index
    %76 = vector.load %arg25[%c0_67, %c111_68] : memref<16x512xf32, #tpu.memory_space<vmem>>, vector<16x256xf32>
    %77 = arith.mulf %76, %73 : vector<16x256xf32>
    %c0_69 = arith.constant 0 : index
    %c0_70 = arith.constant 0 : index
    %78 = vector.load %arg27[%c0_69, %c0_70] : memref<144x1024xf32, #tpu.memory_space<vmem>>, vector<16x256xf32>
    tpu.vector_store %arg27[%c0_69, %c0_70], %77 {strides = array<i32>} : memref<144x1024xf32, #tpu.memory_space<vmem>>, vector<16x256xf32>,
    %c0_71 = arith.constant 0 : index
    %c112_72 = arith.constant 112 : index
    %79 = vector.load %arg25[%c0_71, %c112_72] : memref<16x512xf32, #tpu.memory_space<vmem>>, vector<16x256xf32>
    %c16_73 = arith.constant 16 : index
    %c0_74 = arith.constant 0 : index
    %80 = vector.load %arg27[%c16_73, %c0_74] : memref<144x1024xf32, #tpu.memory_space<vmem>>, vector<16x256xf32>
    tpu.vector_store %arg27[%c16_73, %c0_74], %79 {strides = array<i32>} : memref<144x1024xf32, #tpu.memory_space<vmem>>, vector<16x256xf32>,
    %c0_75 = arith.constant 0 : index
    %c113_76 = arith.constant 113 : index
    %81 = vector.load %arg25[%c0_75, %c113_76] : memref<16x512xf32, #tpu.memory_space<vmem>>, vector<16x256xf32>
    %82 = arith.mulf %81, %74 : vector<16x256xf32>
    %c32_77 = arith.constant 32 : index
    %c0_78 = arith.constant 0 : index
    %83 = vector.load %arg27[%c32_77, %c0_78] : memref<144x1024xf32, #tpu.memory_space<vmem>>, vector<16x256xf32>
    tpu.vector_store %arg27[%c32_77, %c0_78], %82 {strides = array<i32>} : memref<144x1024xf32, #tpu.memory_space<vmem>>, vector<16x256xf32>,
    %c0_79 = arith.constant 0 : index
    %c127_80 = arith.constant 127 : index
    %84 = vector.load %arg25[%c0_79, %c127_80] : memref<16x512xf32, #tpu.memory_space<vmem>>, vector<16x256xf32>
    %85 = arith.mulf %84, %73 : vector<16x256xf32>
    %c48_81 = arith.constant 48 : index
    %c0_82 = arith.constant 0 : index
    %86 = vector.load %arg27[%c48_81, %c0_82] : memref<144x1024xf32, #tpu.memory_space<vmem>>, vector<16x256xf32>
    tpu.vector_store %arg27[%c48_81, %c0_82], %85 {strides = array<i32>} : memref<144x1024xf32, #tpu.memory_space<vmem>>, vector<16x256xf32>,
    %c0_83 = arith.constant 0 : index
    %c128_84 = arith.constant 128 : index
    %87 = vector.load %arg25[%c0_83, %c128_84] : memref<16x512xf32, #tpu.memory_space<vmem>>, vector<16x256xf32>
    %c64_85 = arith.constant 64 : index
    %c0_86 = arith.constant 0 : index
    %88 = vector.load %arg27[%c64_85, %c0_86] : memref<144x1024xf32, #tpu.memory_space<vmem>>, vector<16x256xf32>
    tpu.vector_store %arg27[%c64_85, %c0_86], %87 {strides = array<i32>} : memref<144x1024xf32, #tpu.memory_space<vmem>>, vector<16x256xf32>,
    %c0_87 = arith.constant 0 : index
    %c129_88 = arith.constant 129 : index
    %89 = vector.load %arg25[%c0_87, %c129_88] : memref<16x512xf32, #tpu.memory_space<vmem>>, vector<16x256xf32>
    %90 = arith.mulf %89, %74 : vector<16x256xf32>
    %c80_89 = arith.constant 80 : index
    %c0_90 = arith.constant 0 : index
    %91 = vector.load %arg27[%c80_89, %c0_90] : memref<144x1024xf32, #tpu.memory_space<vmem>>, vector<16x256xf32>
    tpu.vector_store %arg27[%c80_89, %c0_90], %90 {strides = array<i32>} : memref<144x1024xf32, #tpu.memory_space<vmem>>, vector<16x256xf32>,
    %c0_91 = arith.constant 0 : index
    %c143_92 = arith.constant 143 : index
    %92 = vector.load %arg25[%c0_91, %c143_92] : memref<16x512xf32, #tpu.memory_space<vmem>>, vector<16x256xf32>
    %93 = arith.mulf %92, %73 : vector<16x256xf32>
    %c96_93 = arith.constant 96 : index
    %c0_94 = arith.constant 0 : index
    %94 = vector.load %arg27[%c96_93, %c0_94] : memref<144x1024xf32, #tpu.memory_space<vmem>>, vector<16x256xf32>
    tpu.vector_store %arg27[%c96_93, %c0_94], %93 {strides = array<i32>} : memref<144x1024xf32, #tpu.memory_space<vmem>>, vector<16x256xf32>,
    %c0_95 = arith.constant 0 : index
    %c144_96 = arith.constant 144 : index
    %95 = vector.load %arg25[%c0_95, %c144_96] : memref<16x512xf32, #tpu.memory_space<vmem>>, vector<16x256xf32>
    %c112_97 = arith.constant 112 : index
    %c0_98 = arith.constant 0 : index
    %96 = vector.load %arg27[%c112_97, %c0_98] : memref<144x1024xf32, #tpu.memory_space<vmem>>, vector<16x256xf32>
    tpu.vector_store %arg27[%c112_97, %c0_98], %95 {strides = array<i32>} : memref<144x1024xf32, #tpu.memory_space<vmem>>, vector<16x256xf32>,
    %c0_99 = arith.constant 0 : index
    %c145_100 = arith.constant 145 : index
    %97 = vector.load %arg25[%c0_99, %c145_100] : memref<16x512xf32, #tpu.memory_space<vmem>>, vector<16x256xf32>
    %98 = arith.mulf %97, %74 : vector<16x256xf32>
    %c128_101 = arith.constant 128 : index
    %c0_102 = arith.constant 0 : index
    %99 = vector.load %arg27[%c128_101, %c0_102] : memref<144x1024xf32, #tpu.memory_space<vmem>>, vector<16x256xf32>
    tpu.vector_store %arg27[%c128_101, %c0_102], %98 {strides = array<i32>} : memref<144x1024xf32, #tpu.memory_space<vmem>>, vector<16x256xf32>,
    %c0_103 = arith.constant 0 : index
    %c0_104 = arith.constant 0 : index
    %100 = vector.load %arg12[%c0_103, %c0_104] : memref<16x144xf32, #tpu.memory_space<vmem>>, vector<16x144xf32>
    %c0_105 = arith.constant 0 : index
    %c0_106 = arith.constant 0 : index
    %101 = vector.load %arg27[%c0_105, %c0_106] : memref<144x1024xf32, #tpu.memory_space<vmem>>, vector<144x256xf32>
    %cst_107 = arith.constant dense<0.000000e+00> : vector<16x256xf32>
    %102 = tpu.matmul %100, %101, %cst_107 {dimension_numbers = #tpu.dot_dimension_numbers<[1], [0], [0], [1], [0, 0, 1, 1], [], []>} : vector<16x144xf32>, vector<144x256xf32>, vector<16x256xf32> -> vector<16x256xf32>
    %c0_108 = arith.constant 0 : index
    %c0_109 = arith.constant 0 : index
    %103 = vector.load %arg13[%c0_108, %c0_109] : memref<16x1xf32, #tpu.memory_space<vmem>>, vector<16x1xf32>
    %104 = vector.broadcast %103 : vector<16x1xf32> to vector<16x256xf32>
    %105 = arith.addf %102, %104 : vector<16x256xf32>
    %cst_110 = arith.constant dense<0.000000e+00> : vector<16xf32>
    %106 = vector.multi_reduction <add>, %105, %cst_110 [1] : vector<16x256xf32> to vector<16xf32>
    %107 = vector.shape_cast %106 : vector<16xf32> to vector<16x1xf32>
    %108 = arith.mulf %105, %105 : vector<16x256xf32>
    %cst_111 = arith.constant dense<0.000000e+00> : vector<16xf32>
    %109 = vector.multi_reduction <add>, %108, %cst_111 [1] : vector<16x256xf32> to vector<16xf32>
    %110 = vector.shape_cast %109 : vector<16xf32> to vector<16x1xf32>
    %cst_112 = arith.constant dense<0.000000e+00> : vector<16x1xf32>
    %111 = tpu.matmul %5, %107, %cst_112 {dimension_numbers = #tpu.dot_dimension_numbers<[1], [0], [0], [1], [0, 0, 1, 1], [], []>} : vector<16x16xf32>, vector<16x1xf32>, vector<16x1xf32> -> vector<16x1xf32>
    %cst_113 = arith.constant 0.001953125 : f32
    %112 = vector.broadcast %cst_113 : f32 to vector<16x1xf32>
    %113 = arith.mulf %111, %112 : vector<16x1xf32>
    %cst_114 = arith.constant dense<0.000000e+00> : vector<16x1xf32>
    %114 = tpu.matmul %5, %110, %cst_114 {dimension_numbers = #tpu.dot_dimension_numbers<[1], [0], [0], [1], [0, 0, 1, 1], [], []>} : vector<16x16xf32>, vector<16x1xf32>, vector<16x1xf32> -> vector<16x1xf32>
    %cst_115 = arith.constant 0.001953125 : f32
    %115 = vector.broadcast %cst_115 : f32 to vector<16x1xf32>
    %116 = arith.mulf %114, %115 : vector<16x1xf32>
    %117 = arith.mulf %113, %113 : vector<16x1xf32>
    %118 = arith.subf %116, %117 : vector<16x1xf32>
    %cst_116 = arith.constant 9.99999974E-6 : f32
    %119 = vector.broadcast %cst_116 : f32 to vector<16x1xf32>
    %120 = arith.addf %118, %119 : vector<16x1xf32>
    %121 = math.rsqrt %120 : vector<16x1xf32>
    %122 = arith.mulf %121, %41 : vector<16x1xf32>
    %123 = arith.mulf %113, %122 : vector<16x1xf32>
    %124 = arith.subf %42, %123 : vector<16x1xf32>
    %125 = vector.broadcast %122 : vector<16x1xf32> to vector<16x256xf32>
    %126 = arith.mulf %105, %125 : vector<16x256xf32>
    %127 = vector.broadcast %124 : vector<16x1xf32> to vector<16x256xf32>
    %128 = arith.addf %126, %127 : vector<16x256xf32>
    %cst_117 = arith.constant 0.000000e+00 : f32
    %129 = vector.broadcast %cst_117 : f32 to vector<16x256xf32>
    %130 = arith.maximumf %128, %129 : vector<16x256xf32>
    %c0_118 = arith.constant 0 : index
    %c0_119 = arith.constant 0 : index
    %131 = vector.load %arg4[%c0_118, %c0_119] : memref<16x256xf32, #tpu.memory_space<vmem>>, vector<16x256xf32>
    %c0_120 = arith.constant 0 : index
    %c0_121 = arith.constant 0 : index
    %132 = vector.load %arg5[%c0_120, %c0_121] : memref<16x256xf32, #tpu.memory_space<vmem>>, vector<16x256xf32>
    %c0_122 = arith.constant 0 : index
    %c128_123 = arith.constant 128 : index
    %133 = vector.load %arg25[%c0_122, %c128_123] : memref<16x512xf32, #tpu.memory_space<vmem>>, vector<16x256xf32>
    tpu.vector_store %arg25[%c0_122, %c128_123], %130 {strides = array<i32>} : memref<16x512xf32, #tpu.memory_space<vmem>>, vector<16x256xf32>,
    %c0_124 = arith.constant 0 : index
    %c111_125 = arith.constant 111 : index
    %134 = vector.load %arg25[%c0_124, %c111_125] : memref<16x512xf32, #tpu.memory_space<vmem>>, vector<16x256xf32>
    %135 = arith.mulf %134, %131 : vector<16x256xf32>
    %c0_126 = arith.constant 0 : index
    %c0_127 = arith.constant 0 : index
    %136 = vector.load %arg27[%c0_126, %c0_127] : memref<144x1024xf32, #tpu.memory_space<vmem>>, vector<16x256xf32>
    tpu.vector_store %arg27[%c0_126, %c0_127], %135 {strides = array<i32>} : memref<144x1024xf32, #tpu.memory_space<vmem>>, vector<16x256xf32>,
    %c0_128 = arith.constant 0 : index
    %c112_129 = arith.constant 112 : index
    %137 = vector.load %arg25[%c0_128, %c112_129] : memref<16x512xf32, #tpu.memory_space<vmem>>, vector<16x256xf32>
    %c16_130 = arith.constant 16 : index
    %c0_131 = arith.constant 0 : index
    %138 = vector.load %arg27[%c16_130, %c0_131] : memref<144x1024xf32, #tpu.memory_space<vmem>>, vector<16x256xf32>
    tpu.vector_store %arg27[%c16_130, %c0_131], %137 {strides = array<i32>} : memref<144x1024xf32, #tpu.memory_space<vmem>>, vector<16x256xf32>,
    %c0_132 = arith.constant 0 : index
    %c113_133 = arith.constant 113 : index
    %139 = vector.load %arg25[%c0_132, %c113_133] : memref<16x512xf32, #tpu.memory_space<vmem>>, vector<16x256xf32>
    %140 = arith.mulf %139, %132 : vector<16x256xf32>
    %c32_134 = arith.constant 32 : index
    %c0_135 = arith.constant 0 : index
    %141 = vector.load %arg27[%c32_134, %c0_135] : memref<144x1024xf32, #tpu.memory_space<vmem>>, vector<16x256xf32>
    tpu.vector_store %arg27[%c32_134, %c0_135], %140 {strides = array<i32>} : memref<144x1024xf32, #tpu.memory_space<vmem>>, vector<16x256xf32>,
    %c0_136 = arith.constant 0 : index
    %c127_137 = arith.constant 127 : index
    %142 = vector.load %arg25[%c0_136, %c127_137] : memref<16x512xf32, #tpu.memory_space<vmem>>, vector<16x256xf32>
    %143 = arith.mulf %142, %131 : vector<16x256xf32>
    %c48_138 = arith.constant 48 : index
    %c0_139 = arith.constant 0 : index
    %144 = vector.load %arg27[%c48_138, %c0_139] : memref<144x1024xf32, #tpu.memory_space<vmem>>, vector<16x256xf32>
    tpu.vector_store %arg27[%c48_138, %c0_139], %143 {strides = array<i32>} : memref<144x1024xf32, #tpu.memory_space<vmem>>, vector<16x256xf32>,
    %c0_140 = arith.constant 0 : index
    %c128_141 = arith.constant 128 : index
    %145 = vector.load %arg25[%c0_140, %c128_141] : memref<16x512xf32, #tpu.memory_space<vmem>>, vector<16x256xf32>
    %c64_142 = arith.constant 64 : index
    %c0_143 = arith.constant 0 : index
    %146 = vector.load %arg27[%c64_142, %c0_143] : memref<144x1024xf32, #tpu.memory_space<vmem>>, vector<16x256xf32>
    tpu.vector_store %arg27[%c64_142, %c0_143], %145 {strides = array<i32>} : memref<144x1024xf32, #tpu.memory_space<vmem>>, vector<16x256xf32>,
    %c0_144 = arith.constant 0 : index
    %c129_145 = arith.constant 129 : index
    %147 = vector.load %arg25[%c0_144, %c129_145] : memref<16x512xf32, #tpu.memory_space<vmem>>, vector<16x256xf32>
    %148 = arith.mulf %147, %132 : vector<16x256xf32>
    %c80_146 = arith.constant 80 : index
    %c0_147 = arith.constant 0 : index
    %149 = vector.load %arg27[%c80_146, %c0_147] : memref<144x1024xf32, #tpu.memory_space<vmem>>, vector<16x256xf32>
    tpu.vector_store %arg27[%c80_146, %c0_147], %148 {strides = array<i32>} : memref<144x1024xf32, #tpu.memory_space<vmem>>, vector<16x256xf32>,
    %c0_148 = arith.constant 0 : index
    %c143_149 = arith.constant 143 : index
    %150 = vector.load %arg25[%c0_148, %c143_149] : memref<16x512xf32, #tpu.memory_space<vmem>>, vector<16x256xf32>
    %151 = arith.mulf %150, %131 : vector<16x256xf32>
    %c96_150 = arith.constant 96 : index
    %c0_151 = arith.constant 0 : index
    %152 = vector.load %arg27[%c96_150, %c0_151] : memref<144x1024xf32, #tpu.memory_space<vmem>>, vector<16x256xf32>
    tpu.vector_store %arg27[%c96_150, %c0_151], %151 {strides = array<i32>} : memref<144x1024xf32, #tpu.memory_space<vmem>>, vector<16x256xf32>,
    %c0_152 = arith.constant 0 : index
    %c144_153 = arith.constant 144 : index
    %153 = vector.load %arg25[%c0_152, %c144_153] : memref<16x512xf32, #tpu.memory_space<vmem>>, vector<16x256xf32>
    %c112_154 = arith.constant 112 : index
    %c0_155 = arith.constant 0 : index
    %154 = vector.load %arg27[%c112_154, %c0_155] : memref<144x1024xf32, #tpu.memory_space<vmem>>, vector<16x256xf32>
    tpu.vector_store %arg27[%c112_154, %c0_155], %153 {strides = array<i32>} : memref<144x1024xf32, #tpu.memory_space<vmem>>, vector<16x256xf32>,
    %c0_156 = arith.constant 0 : index
    %c145_157 = arith.constant 145 : index
    %155 = vector.load %arg25[%c0_156, %c145_157] : memref<16x512xf32, #tpu.memory_space<vmem>>, vector<16x256xf32>
    %156 = arith.mulf %155, %132 : vector<16x256xf32>
    %c128_158 = arith.constant 128 : index
    %c0_159 = arith.constant 0 : index
    %157 = vector.load %arg27[%c128_158, %c0_159] : memref<144x1024xf32, #tpu.memory_space<vmem>>, vector<16x256xf32>
    tpu.vector_store %arg27[%c128_158, %c0_159], %156 {strides = array<i32>} : memref<144x1024xf32, #tpu.memory_space<vmem>>, vector<16x256xf32>,
    %c0_160 = arith.constant 0 : index
    %c0_161 = arith.constant 0 : index
    %158 = vector.load %arg12[%c0_160, %c0_161] : memref<16x144xf32, #tpu.memory_space<vmem>>, vector<16x144xf32>
    %c0_162 = arith.constant 0 : index
    %c0_163 = arith.constant 0 : index
    %159 = vector.load %arg27[%c0_162, %c0_163] : memref<144x1024xf32, #tpu.memory_space<vmem>>, vector<144x256xf32>
    %cst_164 = arith.constant dense<0.000000e+00> : vector<16x256xf32>
    %160 = tpu.matmul %158, %159, %cst_164 {dimension_numbers = #tpu.dot_dimension_numbers<[1], [0], [0], [1], [0, 0, 1, 1], [], []>} : vector<16x144xf32>, vector<144x256xf32>, vector<16x256xf32> -> vector<16x256xf32>
    %c0_165 = arith.constant 0 : index
    %c0_166 = arith.constant 0 : index
    %161 = vector.load %arg13[%c0_165, %c0_166] : memref<16x1xf32, #tpu.memory_space<vmem>>, vector<16x1xf32>
    %162 = vector.broadcast %161 : vector<16x1xf32> to vector<16x256xf32>
    %163 = arith.addf %160, %162 : vector<16x256xf32>
    %164 = arith.addf %47, %163 : vector<16x256xf32>
    %c0_167 = arith.constant 0 : index
    %c0_168 = arith.constant 0 : index
    %165 = vector.load %arg22[%c0_167, %c0_168] : memref<16x1xf32, #tpu.memory_space<vmem>>, vector<16x1xf32>
    %c0_169 = arith.constant 0 : index
    %c0_170 = arith.constant 0 : index
    %166 = vector.load %arg23[%c0_169, %c0_170] : memref<16x1xf32, #tpu.memory_space<vmem>>, vector<16x1xf32>
    %cst_171 = arith.constant dense<0.000000e+00> : vector<16xf32>
    %167 = vector.multi_reduction <add>, %164, %cst_171 [1] : vector<16x256xf32> to vector<16xf32>
    %168 = vector.shape_cast %167 : vector<16xf32> to vector<16x1xf32>
    %169 = arith.mulf %164, %164 : vector<16x256xf32>
    %cst_172 = arith.constant dense<0.000000e+00> : vector<16xf32>
    %170 = vector.multi_reduction <add>, %169, %cst_172 [1] : vector<16x256xf32> to vector<16xf32>
    %171 = vector.shape_cast %170 : vector<16xf32> to vector<16x1xf32>
    %cst_173 = arith.constant dense<0.000000e+00> : vector<16x1xf32>
    %172 = tpu.matmul %5, %168, %cst_173 {dimension_numbers = #tpu.dot_dimension_numbers<[1], [0], [0], [1], [0, 0, 1, 1], [], []>} : vector<16x16xf32>, vector<16x1xf32>, vector<16x1xf32> -> vector<16x1xf32>
    %cst_174 = arith.constant 0.001953125 : f32
    %173 = vector.broadcast %cst_174 : f32 to vector<16x1xf32>
    %174 = arith.mulf %172, %173 : vector<16x1xf32>
    %cst_175 = arith.constant dense<0.000000e+00> : vector<16x1xf32>
    %175 = tpu.matmul %5, %171, %cst_175 {dimension_numbers = #tpu.dot_dimension_numbers<[1], [0], [0], [1], [0, 0, 1, 1], [], []>} : vector<16x16xf32>, vector<16x1xf32>, vector<16x1xf32> -> vector<16x1xf32>
    %cst_176 = arith.constant 0.001953125 : f32
    %176 = vector.broadcast %cst_176 : f32 to vector<16x1xf32>
    %177 = arith.mulf %175, %176 : vector<16x1xf32>
    %178 = arith.mulf %174, %174 : vector<16x1xf32>
    %179 = arith.subf %177, %178 : vector<16x1xf32>
    %cst_177 = arith.constant 9.99999974E-6 : f32
    %180 = vector.broadcast %cst_177 : f32 to vector<16x1xf32>
    %181 = arith.addf %179, %180 : vector<16x1xf32>
    %182 = math.rsqrt %181 : vector<16x1xf32>
    %183 = arith.mulf %182, %165 : vector<16x1xf32>
    %184 = arith.mulf %174, %183 : vector<16x1xf32>
    %185 = arith.subf %166, %184 : vector<16x1xf32>
    %186 = vector.broadcast %183 : vector<16x1xf32> to vector<16x256xf32>
    %187 = arith.mulf %164, %186 : vector<16x256xf32>
    %188 = vector.broadcast %185 : vector<16x1xf32> to vector<16x256xf32>
    %189 = arith.addf %187, %188 : vector<16x256xf32>
    %cst_178 = arith.constant 0.000000e+00 : f32
    %190 = vector.broadcast %cst_178 : f32 to vector<16x256xf32>
    %191 = arith.maximumf %189, %190 : vector<16x256xf32>
    %c0_179 = arith.constant 0 : index
    %c0_180 = arith.constant 0 : index
    %192 = vector.load %arg3[%c0_179, %c0_180] : memref<256x1024xf32, #tpu.memory_space<vmem>>, vector<256x1024xf32>
    %cst_181 = arith.constant dense<0.000000e+00> : vector<16x1024xf32>
    %193 = tpu.matmul %191, %192, %cst_181 {dimension_numbers = #tpu.dot_dimension_numbers<[1], [0], [0], [1], [0, 0, 1, 1], [], []>} : vector<16x256xf32>, vector<256x1024xf32>, vector<16x1024xf32> -> vector<16x1024xf32>
    %c0_182 = arith.constant 0 : index
    %c0_183 = arith.constant 0 : index
    %194 = vector.load %arg6[%c0_182, %c0_183] : memref<16x1024xf32, #tpu.memory_space<vmem>>, vector<16x1024xf32>
    %c0_184 = arith.constant 0 : index
    %c0_185 = arith.constant 0 : index
    %195 = vector.load %arg7[%c0_184, %c0_185] : memref<16x1024xf32, #tpu.memory_space<vmem>>, vector<16x1024xf32>
    %c0_186 = arith.constant 0 : index
    %c128_187 = arith.constant 128 : index
    %196 = vector.load %arg26[%c0_186, %c128_187] : memref<16x1280xf32, #tpu.memory_space<vmem>>, vector<16x1024xf32>
    tpu.vector_store %arg26[%c0_186, %c128_187], %193 {strides = array<i32>} : memref<16x1280xf32, #tpu.memory_space<vmem>>, vector<16x1024xf32>,
    %c0_188 = arith.constant 0 : index
    %c95 = arith.constant 95 : index
    %197 = vector.load %arg26[%c0_188, %c95] : memref<16x1280xf32, #tpu.memory_space<vmem>>, vector<16x1024xf32>
    %198 = arith.mulf %197, %194 : vector<16x1024xf32>
    %c0_189 = arith.constant 0 : index
    %c0_190 = arith.constant 0 : index
    %199 = vector.load %arg27[%c0_189, %c0_190] : memref<144x1024xf32, #tpu.memory_space<vmem>>, vector<16x1024xf32>
    tpu.vector_store %arg27[%c0_189, %c0_190], %198 {strides = array<i32>} : memref<144x1024xf32, #tpu.memory_space<vmem>>, vector<16x1024xf32>,
    %c0_191 = arith.constant 0 : index
    %c96_192 = arith.constant 96 : index
    %200 = vector.load %arg26[%c0_191, %c96_192] : memref<16x1280xf32, #tpu.memory_space<vmem>>, vector<16x1024xf32>
    %c16_193 = arith.constant 16 : index
    %c0_194 = arith.constant 0 : index
    %201 = vector.load %arg27[%c16_193, %c0_194] : memref<144x1024xf32, #tpu.memory_space<vmem>>, vector<16x1024xf32>
    tpu.vector_store %arg27[%c16_193, %c0_194], %200 {strides = array<i32>} : memref<144x1024xf32, #tpu.memory_space<vmem>>, vector<16x1024xf32>,
    %c0_195 = arith.constant 0 : index
    %c97 = arith.constant 97 : index
    %202 = vector.load %arg26[%c0_195, %c97] : memref<16x1280xf32, #tpu.memory_space<vmem>>, vector<16x1024xf32>
    %203 = arith.mulf %202, %195 : vector<16x1024xf32>
    %c32_196 = arith.constant 32 : index
    %c0_197 = arith.constant 0 : index
    %204 = vector.load %arg27[%c32_196, %c0_197] : memref<144x1024xf32, #tpu.memory_space<vmem>>, vector<16x1024xf32>
    tpu.vector_store %arg27[%c32_196, %c0_197], %203 {strides = array<i32>} : memref<144x1024xf32, #tpu.memory_space<vmem>>, vector<16x1024xf32>,
    %c0_198 = arith.constant 0 : index
    %c127_199 = arith.constant 127 : index
    %205 = vector.load %arg26[%c0_198, %c127_199] : memref<16x1280xf32, #tpu.memory_space<vmem>>, vector<16x1024xf32>
    %206 = arith.mulf %205, %194 : vector<16x1024xf32>
    %c48_200 = arith.constant 48 : index
    %c0_201 = arith.constant 0 : index
    %207 = vector.load %arg27[%c48_200, %c0_201] : memref<144x1024xf32, #tpu.memory_space<vmem>>, vector<16x1024xf32>
    tpu.vector_store %arg27[%c48_200, %c0_201], %206 {strides = array<i32>} : memref<144x1024xf32, #tpu.memory_space<vmem>>, vector<16x1024xf32>,
    %c0_202 = arith.constant 0 : index
    %c128_203 = arith.constant 128 : index
    %208 = vector.load %arg26[%c0_202, %c128_203] : memref<16x1280xf32, #tpu.memory_space<vmem>>, vector<16x1024xf32>
    %c64_204 = arith.constant 64 : index
    %c0_205 = arith.constant 0 : index
    %209 = vector.load %arg27[%c64_204, %c0_205] : memref<144x1024xf32, #tpu.memory_space<vmem>>, vector<16x1024xf32>
    tpu.vector_store %arg27[%c64_204, %c0_205], %208 {strides = array<i32>} : memref<144x1024xf32, #tpu.memory_space<vmem>>, vector<16x1024xf32>,
    %c0_206 = arith.constant 0 : index
    %c129_207 = arith.constant 129 : index
    %210 = vector.load %arg26[%c0_206, %c129_207] : memref<16x1280xf32, #tpu.memory_space<vmem>>, vector<16x1024xf32>
    %211 = arith.mulf %210, %195 : vector<16x1024xf32>
    %c80_208 = arith.constant 80 : index
    %c0_209 = arith.constant 0 : index
    %212 = vector.load %arg27[%c80_208, %c0_209] : memref<144x1024xf32, #tpu.memory_space<vmem>>, vector<16x1024xf32>
    tpu.vector_store %arg27[%c80_208, %c0_209], %211 {strides = array<i32>} : memref<144x1024xf32, #tpu.memory_space<vmem>>, vector<16x1024xf32>,
    %c0_210 = arith.constant 0 : index
    %c159 = arith.constant 159 : index
    %213 = vector.load %arg26[%c0_210, %c159] : memref<16x1280xf32, #tpu.memory_space<vmem>>, vector<16x1024xf32>
    %214 = arith.mulf %213, %194 : vector<16x1024xf32>
    %c96_211 = arith.constant 96 : index
    %c0_212 = arith.constant 0 : index
    %215 = vector.load %arg27[%c96_211, %c0_212] : memref<144x1024xf32, #tpu.memory_space<vmem>>, vector<16x1024xf32>
    tpu.vector_store %arg27[%c96_211, %c0_212], %214 {strides = array<i32>} : memref<144x1024xf32, #tpu.memory_space<vmem>>, vector<16x1024xf32>,
    %c0_213 = arith.constant 0 : index
    %c160 = arith.constant 160 : index
    %216 = vector.load %arg26[%c0_213, %c160] : memref<16x1280xf32, #tpu.memory_space<vmem>>, vector<16x1024xf32>
    %c112_214 = arith.constant 112 : index
    %c0_215 = arith.constant 0 : index
    %217 = vector.load %arg27[%c112_214, %c0_215] : memref<144x1024xf32, #tpu.memory_space<vmem>>, vector<16x1024xf32>
    tpu.vector_store %arg27[%c112_214, %c0_215], %216 {strides = array<i32>} : memref<144x1024xf32, #tpu.memory_space<vmem>>, vector<16x1024xf32>,
    %c0_216 = arith.constant 0 : index
    %c161 = arith.constant 161 : index
    %218 = vector.load %arg26[%c0_216, %c161] : memref<16x1280xf32, #tpu.memory_space<vmem>>, vector<16x1024xf32>
    %219 = arith.mulf %218, %195 : vector<16x1024xf32>
    %c128_217 = arith.constant 128 : index
    %c0_218 = arith.constant 0 : index
    %220 = vector.load %arg27[%c128_217, %c0_218] : memref<144x1024xf32, #tpu.memory_space<vmem>>, vector<16x1024xf32>
    tpu.vector_store %arg27[%c128_217, %c0_218], %219 {strides = array<i32>} : memref<144x1024xf32, #tpu.memory_space<vmem>>, vector<16x1024xf32>,
    %c0_219 = arith.constant 0 : index
    %c0_220 = arith.constant 0 : index
    %221 = vector.load %arg18[%c0_219, %c0_220] : memref<16x144xf32, #tpu.memory_space<vmem>>, vector<16x144xf32>
    %c0_221 = arith.constant 0 : index
    %c0_222 = arith.constant 0 : index
    %222 = vector.load %arg27[%c0_221, %c0_222] : memref<144x1024xf32, #tpu.memory_space<vmem>>, vector<144x1024xf32>
    %cst_223 = arith.constant dense<0.000000e+00> : vector<16x1024xf32>
    %223 = tpu.matmul %221, %222, %cst_223 {dimension_numbers = #tpu.dot_dimension_numbers<[1], [0], [0], [1], [0, 0, 1, 1], [], []>} : vector<16x144xf32>, vector<144x1024xf32>, vector<16x1024xf32> -> vector<16x1024xf32>
    %c0_224 = arith.constant 0 : index
    %c0_225 = arith.constant 0 : index
    %224 = vector.load %arg19[%c0_224, %c0_225] : memref<16x1xf32, #tpu.memory_space<vmem>>, vector<16x1xf32>
    %225 = vector.broadcast %224 : vector<16x1xf32> to vector<16x1024xf32>
    %226 = arith.addf %223, %225 : vector<16x1024xf32>
    %cst_226 = arith.constant dense<0.000000e+00> : vector<16xf32>
    %227 = vector.multi_reduction <add>, %226, %cst_226 [1] : vector<16x1024xf32> to vector<16xf32>
    %228 = vector.shape_cast %227 : vector<16xf32> to vector<16x1xf32>
    %229 = arith.mulf %226, %226 : vector<16x1024xf32>
    %cst_227 = arith.constant dense<0.000000e+00> : vector<16xf32>
    %230 = vector.multi_reduction <add>, %229, %cst_227 [1] : vector<16x1024xf32> to vector<16xf32>
    %231 = vector.shape_cast %230 : vector<16xf32> to vector<16x1xf32>
    %cst_228 = arith.constant dense<0.000000e+00> : vector<16x1xf32>
    %232 = tpu.matmul %5, %228, %cst_228 {dimension_numbers = #tpu.dot_dimension_numbers<[1], [0], [0], [1], [0, 0, 1, 1], [], []>} : vector<16x16xf32>, vector<16x1xf32>, vector<16x1xf32> -> vector<16x1xf32>
    %cst_229 = arith.constant 4.8828125E-4 : f32
    %233 = vector.broadcast %cst_229 : f32 to vector<16x1xf32>
    %234 = arith.mulf %232, %233 : vector<16x1xf32>
    %cst_230 = arith.constant dense<0.000000e+00> : vector<16x1xf32>
    %235 = tpu.matmul %5, %231, %cst_230 {dimension_numbers = #tpu.dot_dimension_numbers<[1], [0], [0], [1], [0, 0, 1, 1], [], []>} : vector<16x16xf32>, vector<16x1xf32>, vector<16x1xf32> -> vector<16x1xf32>
    %cst_231 = arith.constant 4.8828125E-4 : f32
    %236 = vector.broadcast %cst_231 : f32 to vector<16x1xf32>
    %237 = arith.mulf %235, %236 : vector<16x1xf32>
    %238 = arith.mulf %234, %234 : vector<16x1xf32>
    %239 = arith.subf %237, %238 : vector<16x1xf32>
    %cst_232 = arith.constant 9.99999974E-6 : f32
    %240 = vector.broadcast %cst_232 : f32 to vector<16x1xf32>
    %241 = arith.addf %239, %240 : vector<16x1xf32>
    %242 = math.rsqrt %241 : vector<16x1xf32>
    %243 = arith.mulf %242, %165 : vector<16x1xf32>
    %244 = arith.mulf %234, %243 : vector<16x1xf32>
    %245 = arith.subf %166, %244 : vector<16x1xf32>
    %246 = vector.broadcast %243 : vector<16x1xf32> to vector<16x1024xf32>
    %247 = arith.mulf %226, %246 : vector<16x1024xf32>
    %248 = vector.broadcast %245 : vector<16x1xf32> to vector<16x1024xf32>
    %249 = arith.addf %247, %248 : vector<16x1024xf32>
    %cst_233 = arith.constant 0.000000e+00 : f32
    %250 = vector.broadcast %cst_233 : f32 to vector<16x1024xf32>
    %251 = arith.maximumf %249, %250 : vector<16x1024xf32>
    %c0_234 = arith.constant 0 : index
    %c0_235 = arith.constant 0 : index
    %252 = vector.load %arg6[%c0_234, %c0_235] : memref<16x1024xf32, #tpu.memory_space<vmem>>, vector<16x1024xf32>
    %c0_236 = arith.constant 0 : index
    %c0_237 = arith.constant 0 : index
    %253 = vector.load %arg7[%c0_236, %c0_237] : memref<16x1024xf32, #tpu.memory_space<vmem>>, vector<16x1024xf32>
    %c0_238 = arith.constant 0 : index
    %c128_239 = arith.constant 128 : index
    %254 = vector.load %arg26[%c0_238, %c128_239] : memref<16x1280xf32, #tpu.memory_space<vmem>>, vector<16x1024xf32>
    tpu.vector_store %arg26[%c0_238, %c128_239], %251 {strides = array<i32>} : memref<16x1280xf32, #tpu.memory_space<vmem>>, vector<16x1024xf32>,
    %c0_240 = arith.constant 0 : index
    %c95_241 = arith.constant 95 : index
    %255 = vector.load %arg26[%c0_240, %c95_241] : memref<16x1280xf32, #tpu.memory_space<vmem>>, vector<16x1024xf32>
    %256 = arith.mulf %255, %252 : vector<16x1024xf32>
    %c0_242 = arith.constant 0 : index
    %c0_243 = arith.constant 0 : index
    %257 = vector.load %arg27[%c0_242, %c0_243] : memref<144x1024xf32, #tpu.memory_space<vmem>>, vector<16x1024xf32>
    tpu.vector_store %arg27[%c0_242, %c0_243], %256 {strides = array<i32>} : memref<144x1024xf32, #tpu.memory_space<vmem>>, vector<16x1024xf32>,
    %c0_244 = arith.constant 0 : index
    %c96_245 = arith.constant 96 : index
    %258 = vector.load %arg26[%c0_244, %c96_245] : memref<16x1280xf32, #tpu.memory_space<vmem>>, vector<16x1024xf32>
    %c16_246 = arith.constant 16 : index
    %c0_247 = arith.constant 0 : index
    %259 = vector.load %arg27[%c16_246, %c0_247] : memref<144x1024xf32, #tpu.memory_space<vmem>>, vector<16x1024xf32>
    tpu.vector_store %arg27[%c16_246, %c0_247], %258 {strides = array<i32>} : memref<144x1024xf32, #tpu.memory_space<vmem>>, vector<16x1024xf32>,
    %c0_248 = arith.constant 0 : index
    %c97_249 = arith.constant 97 : index
    %260 = vector.load %arg26[%c0_248, %c97_249] : memref<16x1280xf32, #tpu.memory_space<vmem>>, vector<16x1024xf32>
    %261 = arith.mulf %260, %253 : vector<16x1024xf32>
    %c32_250 = arith.constant 32 : index
    %c0_251 = arith.constant 0 : index
    %262 = vector.load %arg27[%c32_250, %c0_251] : memref<144x1024xf32, #tpu.memory_space<vmem>>, vector<16x1024xf32>
    tpu.vector_store %arg27[%c32_250, %c0_251], %261 {strides = array<i32>} : memref<144x1024xf32, #tpu.memory_space<vmem>>, vector<16x1024xf32>,
    %c0_252 = arith.constant 0 : index
    %c127_253 = arith.constant 127 : index
    %263 = vector.load %arg26[%c0_252, %c127_253] : memref<16x1280xf32, #tpu.memory_space<vmem>>, vector<16x1024xf32>
    %264 = arith.mulf %263, %252 : vector<16x1024xf32>
    %c48_254 = arith.constant 48 : index
    %c0_255 = arith.constant 0 : index
    %265 = vector.load %arg27[%c48_254, %c0_255] : memref<144x1024xf32, #tpu.memory_space<vmem>>, vector<16x1024xf32>
    tpu.vector_store %arg27[%c48_254, %c0_255], %264 {strides = array<i32>} : memref<144x1024xf32, #tpu.memory_space<vmem>>, vector<16x1024xf32>,
    %c0_256 = arith.constant 0 : index
    %c128_257 = arith.constant 128 : index
    %266 = vector.load %arg26[%c0_256, %c128_257] : memref<16x1280xf32, #tpu.memory_space<vmem>>, vector<16x1024xf32>
    %c64_258 = arith.constant 64 : index
    %c0_259 = arith.constant 0 : index
    %267 = vector.load %arg27[%c64_258, %c0_259] : memref<144x1024xf32, #tpu.memory_space<vmem>>, vector<16x1024xf32>
    tpu.vector_store %arg27[%c64_258, %c0_259], %266 {strides = array<i32>} : memref<144x1024xf32, #tpu.memory_space<vmem>>, vector<16x1024xf32>,
    %c0_260 = arith.constant 0 : index
    %c129_261 = arith.constant 129 : index
    %268 = vector.load %arg26[%c0_260, %c129_261] : memref<16x1280xf32, #tpu.memory_space<vmem>>, vector<16x1024xf32>
    %269 = arith.mulf %268, %253 : vector<16x1024xf32>
    %c80_262 = arith.constant 80 : index
    %c0_263 = arith.constant 0 : index
    %270 = vector.load %arg27[%c80_262, %c0_263] : memref<144x1024xf32, #tpu.memory_space<vmem>>, vector<16x1024xf32>
    tpu.vector_store %arg27[%c80_262, %c0_263], %269 {strides = array<i32>} : memref<144x1024xf32, #tpu.memory_space<vmem>>, vector<16x1024xf32>,
    %c0_264 = arith.constant 0 : index
    %c159_265 = arith.constant 159 : index
    %271 = vector.load %arg26[%c0_264, %c159_265] : memref<16x1280xf32, #tpu.memory_space<vmem>>, vector<16x1024xf32>
    %272 = arith.mulf %271, %252 : vector<16x1024xf32>
    %c96_266 = arith.constant 96 : index
    %c0_267 = arith.constant 0 : index
    %273 = vector.load %arg27[%c96_266, %c0_267] : memref<144x1024xf32, #tpu.memory_space<vmem>>, vector<16x1024xf32>
    tpu.vector_store %arg27[%c96_266, %c0_267], %272 {strides = array<i32>} : memref<144x1024xf32, #tpu.memory_space<vmem>>, vector<16x1024xf32>,
    %c0_268 = arith.constant 0 : index
    %c160_269 = arith.constant 160 : index
    %274 = vector.load %arg26[%c0_268, %c160_269] : memref<16x1280xf32, #tpu.memory_space<vmem>>, vector<16x1024xf32>
    %c112_270 = arith.constant 112 : index
    %c0_271 = arith.constant 0 : index
    %275 = vector.load %arg27[%c112_270, %c0_271] : memref<144x1024xf32, #tpu.memory_space<vmem>>, vector<16x1024xf32>
    tpu.vector_store %arg27[%c112_270, %c0_271], %274 {strides = array<i32>} : memref<144x1024xf32, #tpu.memory_space<vmem>>, vector<16x1024xf32>,
    %c0_272 = arith.constant 0 : index
    %c161_273 = arith.constant 161 : index
    %276 = vector.load %arg26[%c0_272, %c161_273] : memref<16x1280xf32, #tpu.memory_space<vmem>>, vector<16x1024xf32>
    %277 = arith.mulf %276, %253 : vector<16x1024xf32>
    %c128_274 = arith.constant 128 : index
    %c0_275 = arith.constant 0 : index
    %278 = vector.load %arg27[%c128_274, %c0_275] : memref<144x1024xf32, #tpu.memory_space<vmem>>, vector<16x1024xf32>
    tpu.vector_store %arg27[%c128_274, %c0_275], %277 {strides = array<i32>} : memref<144x1024xf32, #tpu.memory_space<vmem>>, vector<16x1024xf32>,
    %c0_276 = arith.constant 0 : index
    %c0_277 = arith.constant 0 : index
    %279 = vector.load %arg20[%c0_276, %c0_277] : memref<16x144xf32, #tpu.memory_space<vmem>>, vector<16x144xf32>
    %c0_278 = arith.constant 0 : index
    %c0_279 = arith.constant 0 : index
    %280 = vector.load %arg27[%c0_278, %c0_279] : memref<144x1024xf32, #tpu.memory_space<vmem>>, vector<144x1024xf32>
    %cst_280 = arith.constant dense<0.000000e+00> : vector<16x1024xf32>
    %281 = tpu.matmul %279, %280, %cst_280 {dimension_numbers = #tpu.dot_dimension_numbers<[1], [0], [0], [1], [0, 0, 1, 1], [], []>} : vector<16x144xf32>, vector<144x1024xf32>, vector<16x1024xf32> -> vector<16x1024xf32>
    %c0_281 = arith.constant 0 : index
    %c0_282 = arith.constant 0 : index
    %282 = vector.load %arg21[%c0_281, %c0_282] : memref<16x1xf32, #tpu.memory_space<vmem>>, vector<16x1xf32>
    %283 = vector.broadcast %282 : vector<16x1xf32> to vector<16x1024xf32>
    %284 = arith.addf %281, %283 : vector<16x1024xf32>
    %c0_283 = arith.constant 0 : index
    %c0_284 = arith.constant 0 : index
    %285 = vector.load %arg3[%c0_283, %c0_284] : memref<256x1024xf32, #tpu.memory_space<vmem>>, vector<256x1024xf32>
    %cst_285 = arith.constant dense<0.000000e+00> : vector<16x1024xf32>
    %286 = tpu.matmul %164, %285, %cst_285 {dimension_numbers = #tpu.dot_dimension_numbers<[1], [0], [0], [1], [0, 0, 1, 1], [], []>} : vector<16x256xf32>, vector<256x1024xf32>, vector<16x1024xf32> -> vector<16x1024xf32>
    %c0_286 = arith.constant 0 : index
    %c0_287 = arith.constant 0 : index
    %287 = vector.load %arg16[%c0_286, %c0_287] : memref<16x16xf32, #tpu.memory_space<vmem>>, vector<16x16xf32>
    %c0_288 = arith.constant 0 : index
    %c0_289 = arith.constant 0 : index
    %288 = vector.load %arg17[%c0_288, %c0_289] : memref<16x1xf32, #tpu.memory_space<vmem>>, vector<16x1xf32>
    %cst_290 = arith.constant dense<0.000000e+00> : vector<16x1024xf32>
    %289 = tpu.matmul %287, %286, %cst_290 {dimension_numbers = #tpu.dot_dimension_numbers<[1], [0], [0], [1], [0, 0, 1, 1], [], []>} : vector<16x16xf32>, vector<16x1024xf32>, vector<16x1024xf32> -> vector<16x1024xf32>
    %290 = vector.broadcast %288 : vector<16x1xf32> to vector<16x1024xf32>
    %291 = arith.addf %289, %290 : vector<16x1024xf32>
    %292 = arith.addf %291, %284 : vector<16x1024xf32>
    %c0_291 = arith.constant 0 : index
    %c0_292 = arith.constant 0 : index
    %c0_293 = arith.constant 0 : index
    %293 = vector.load %arg24[%c0_291, %c0_292, %c0_293] : memref<1x16x1024xf32, #tpu.memory_space<vmem>>, vector<1x16x1024xf32>
    %294 = vector.shape_cast %293 : vector<1x16x1024xf32> to vector<16x1024xf32>
    %295 = vector.shape_cast %292 : vector<16x1024xf32> to vector<1x16x1024xf32>
    tpu.vector_store %arg24[%c0_291, %c0_292, %c0_293], %295 {strides = array<i32>} : memref<1x16x1024xf32, #tpu.memory_space<vmem>>, vector<1x16x1024xf32>,
    return
  }
  func.func @transform_0(%arg0: i32) -> (i32, i32, i32) {
    %c0_i32 = arith.constant 0 : i32
    %c0_i32_0 = arith.constant 0 : i32
    %c0_i32_1 = arith.constant 0 : i32
    return %arg0, %c0_i32, %c0_i32_0 : i32, i32, i32
  }
  func.func @transform_1(%arg0: i32) -> (i32, i32) {
    %c0_i32 = arith.constant 0 : i32
    %c0_i32_0 = arith.constant 0 : i32
    %c0_i32_1 = arith.constant 0 : i32
    return %c0_i32, %c0_i32_0 : i32, i32
  }
  func.func @transform_2(%arg0: i32) -> (i32, i32) {
    %c0_i32 = arith.constant 0 : i32
    %c0_i32_0 = arith.constant 0 : i32
    %c0_i32_1 = arith.constant 0 : i32
    return %c0_i32, %c0_i32_0 : i32, i32
  }
  func.func @transform_3(%arg0: i32) -> (i32, i32) {
    %c0_i32 = arith.constant 0 : i32
    %c0_i32_0 = arith.constant 0 : i32
    %c0_i32_1 = arith.constant 0 : i32
    return %c0_i32, %c0_i32_0 : i32, i32
  }
  func.func @transform_4(%arg0: i32) -> (i32, i32) {
    %c0_i32 = arith.constant 0 : i32
    %c0_i32_0 = arith.constant 0 : i32
    %c0_i32_1 = arith.constant 0 : i32
    return %c0_i32, %c0_i32_0 : i32, i32
  }
  func.func @transform_5(%arg0: i32) -> (i32, i32) {
    %c0_i32 = arith.constant 0 : i32
    %c0_i32_0 = arith.constant 0 : i32
    %c0_i32_1 = arith.constant 0 : i32
    return %c0_i32, %c0_i32_0 : i32, i32
  }
  func.func @transform_6(%arg0: i32) -> (i32, i32) {
    %c0_i32 = arith.constant 0 : i32
    %c0_i32_0 = arith.constant 0 : i32
    %c0_i32_1 = arith.constant 0 : i32
    return %c0_i32, %c0_i32_0 : i32, i32
  }
  func.func @transform_7(%arg0: i32) -> (i32, i32) {
    %c0_i32 = arith.constant 0 : i32
    %c0_i32_0 = arith.constant 0 : i32
    %c0_i32_1 = arith.constant 0 : i32
    return %c0_i32, %c0_i32_0 : i32, i32
  }
  func.func @transform_8(%arg0: i32) -> (i32, i32) {
    %c0_i32 = arith.constant 0 : i32
    %c0_i32_0 = arith.constant 0 : i32
    %c0_i32_1 = arith.constant 0 : i32
    return %c0_i32, %c0_i32_0 : i32, i32
  }
  func.func @transform_9(%arg0: i32) -> (i32, i32) {
    %c0_i32 = arith.constant 0 : i32
    %c0_i32_0 = arith.constant 0 : i32
    %c0_i32_1 = arith.constant 0 : i32
    return %c0_i32, %c0_i32_0 : i32, i32
  }
  func.func @transform_10(%arg0: i32) -> (i32, i32) {
    %c0_i32 = arith.constant 0 : i32
    %c0_i32_0 = arith.constant 0 : i32
    %c0_i32_1 = arith.constant 0 : i32
    return %c0_i32, %c0_i32_0 : i32, i32
  }
  func.func @transform_11(%arg0: i32) -> (i32, i32) {
    %c0_i32 = arith.constant 0 : i32
    %c0_i32_0 = arith.constant 0 : i32
    %c0_i32_1 = arith.constant 0 : i32
    return %c0_i32, %c0_i32_0 : i32, i32
  }
  func.func @transform_12(%arg0: i32) -> (i32, i32) {
    %c0_i32 = arith.constant 0 : i32
    %c0_i32_0 = arith.constant 0 : i32
    %c0_i32_1 = arith.constant 0 : i32
    return %c0_i32, %c0_i32_0 : i32, i32
  }
  func.func @transform_13(%arg0: i32) -> (i32, i32) {
    %c0_i32 = arith.constant 0 : i32
    %c0_i32_0 = arith.constant 0 : i32
    %c0_i32_1 = arith.constant 0 : i32
    return %c0_i32, %c0_i32_0 : i32, i32
  }
  func.func @transform_14(%arg0: i32) -> (i32, i32) {
    %c0_i32 = arith.constant 0 : i32
    %c0_i32_0 = arith.constant 0 : i32
    %c0_i32_1 = arith.constant 0 : i32
    return %c0_i32, %c0_i32_0 : i32, i32
  }
  func.func @transform_15(%arg0: i32) -> (i32, i32) {
    %c0_i32 = arith.constant 0 : i32
    %c0_i32_0 = arith.constant 0 : i32
    %c0_i32_1 = arith.constant 0 : i32
    return %c0_i32, %c0_i32_0 : i32, i32
  }
  func.func @transform_16(%arg0: i32) -> (i32, i32) {
    %c0_i32 = arith.constant 0 : i32
    %c0_i32_0 = arith.constant 0 : i32
    %c0_i32_1 = arith.constant 0 : i32
    return %c0_i32, %c0_i32_0 : i32, i32
  }
  func.func @transform_17(%arg0: i32) -> (i32, i32) {
    %c0_i32 = arith.constant 0 : i32
    %c0_i32_0 = arith.constant 0 : i32
    %c0_i32_1 = arith.constant 0 : i32
    return %c0_i32, %c0_i32_0 : i32, i32
  }
  func.func @transform_18(%arg0: i32) -> (i32, i32) {
    %c0_i32 = arith.constant 0 : i32
    %c0_i32_0 = arith.constant 0 : i32
    %c0_i32_1 = arith.constant 0 : i32
    return %c0_i32, %c0_i32_0 : i32, i32
  }
  func.func @transform_19(%arg0: i32) -> (i32, i32) {
    %c0_i32 = arith.constant 0 : i32
    %c0_i32_0 = arith.constant 0 : i32
    %c0_i32_1 = arith.constant 0 : i32
    return %c0_i32, %c0_i32_0 : i32, i32
  }
  func.func @transform_20(%arg0: i32) -> (i32, i32) {
    %c0_i32 = arith.constant 0 : i32
    %c0_i32_0 = arith.constant 0 : i32
    %c0_i32_1 = arith.constant 0 : i32
    return %c0_i32, %c0_i32_0 : i32, i32
  }
  func.func @transform_21(%arg0: i32) -> (i32, i32) {
    %c0_i32 = arith.constant 0 : i32
    %c0_i32_0 = arith.constant 0 : i32
    %c0_i32_1 = arith.constant 0 : i32
    return %c0_i32, %c0_i32_0 : i32, i32
  }
  func.func @transform_22(%arg0: i32) -> (i32, i32) {
    %c0_i32 = arith.constant 0 : i32
    %c0_i32_0 = arith.constant 0 : i32
    %c0_i32_1 = arith.constant 0 : i32
    return %c0_i32, %c0_i32_0 : i32, i32
  }
  func.func @transform_23(%arg0: i32) -> (i32, i32, i32) {
    %c0_i32 = arith.constant 0 : i32
    %c0_i32_0 = arith.constant 0 : i32
    %c0_i32_1 = arith.constant 0 : i32
    return %arg0, %c0_i32, %c0_i32_0 : i32, i32, i32
  }
}

</mosaic_0001>

<llo_original>
// kernel: tile.58
$region0: #{tile.58}
  #allocation0 [shape = 's32[1]{0}', space=sflag, size = 0x4, scoped, tag = 'scoped memory for tile.58']
  %s0 = inlined_call_operand.vmem [shape: f32[8], index: 0, kind: input, shape index: {}]
  %s1 = inlined_call_operand.vmem [shape: f32[2,8], index: 1, kind: output, shape index: {}]
  // Predicated region
  $region2: #{tile.58} parent=0 // pred_check
    _
  $region3: #{tile.58} parent=0 // pred_check_branch
    %3 = sbr.rel (0) target = $region5
  $region4: #{tile.58} parent=0 // pred_region
    _
  $region5: #{tile.58} parent=0 // pred_fallthru
    _
  %v4 = vld [vmem:[%s0] ss:$0 sm:$0xff]
  %5 = vst [vmem:[%s1] sm:$0x3] %v4

// kernel: tile.73
$region0: #{tile.73}
  #allocation2 [shape = 's32[1]{0}', space=sflag, size = 0x4, scoped, tag = 'scoped memory for tile.73']
  %s0 = inlined_call_operand.hbm [shape: f32[8], index: 0, kind: input, shape index: {}]
  %s1 = inlined_call_operand.vmem [shape: f32[2,8], index: 1, kind: output, shape index: {}]
  $region1: #{tile.73} parent=0
    #allocation0 [shape = 'u8[512]{0}', space=vmem, size = 0x400, scoped, tag = 'operand span for operand 0']
    #allocation1 [shape = 's32[1]{0}', space=sflag, size = 0x4, scoped, tag = 'scoped memory for tile.73']
    %2 = vsyncpa [#allocation1], 0
    // Predicated region
    $region2: #{tile.73} parent=1 // pred_check
      _
    $region3: #{tile.73} parent=1 // pred_check_branch
      %4 = sbr.rel (0) target = $region5
    $region4: #{tile.73} parent=1 // pred_region
      %s6 = ssub.s32 16, 16
      %7 = vsyncadd [#allocation1], %s6
      %s9 = sshll.u32 [#allocation0], 4
      %s10 = int_to_ptr.vmem [resolvable:$true] %s9
      %12 = dma.hbm_to_vmem [thread:$0]  %s0, 16, %s10, [#allocation1]
    $region5: #{tile.73} parent=1 // pred_fallthru
      _
    // Predicated region
    $region6: #{tile.73} parent=1 // pred_check
      _
    $region7: #{tile.73} parent=1 // pred_check_branch
      %14 = sbr.rel (0) target = $region9
    $region8: #{tile.73} parent=1 // pred_region
      %15 = dma.done [#allocation1], 16
    $region9: #{tile.73} parent=1 // pred_fallthru
      _
    %v16 = vld [vmem:[#allocation0] ss:$0 sm:$0xff]
    %17 = vst [vmem:[%s1] sm:$0x3] %v16
    %18 = vsyncpa [#allocation1], 1

// kernel: tile.0
$region0: #{tile.0}
  %s0 = inlined_call_operand.vmem [shape: f32[2,8], index: 0, kind: input, shape index: {}]
  %s1 = inlined_call_operand.vmem [shape: f32[16,1], index: 1, kind: output, shape index: {}]
  $region1: #{tile.0} parent=0
    #allocation0 [shape = 'u8[4096]{0}', space=vmem, size = 0x1000, scoped, tag = 'scoped mem for input reshape']
    %s3 = sshllo.u32 0, 2
    %v4 = vld [vmem:[%s0] sm:%s3]
    %5 = vst [vmem:[#allocation0] sm:%s3] %v4
    %v6 = vld [vmem:[#allocation0] sm:$0x3]
    %vm7 = vcmask 7168
    %8 = vst.msk [vmem:[%s1] ss:$8 sm:$0x3] %vm7, %v6
    %v9 = vld [vmem:[#allocation0] sm:$0x3]
    %10 = vrot.lane.b32.xlu0 %v9, 127
    %v11 = vpop.permute.xlu0 %10
    %vm12 = vcmask 7168
    %s13 = scalar_lea.vmem %s1, 1
    %14 = vst.msk [vmem:[%s13] ss:$8 sm:$0x3] %vm12, %v11
    %v15 = vld [vmem:[#allocation0] sm:$0x3]
    %16 = vrot.lane.b32.xlu0 %v15, 126
    %v17 = vpop.permute.xlu0 %16
    %vm18 = vcmask 7168
    %s19 = scalar_lea.vmem %s1, 2
    %20 = vst.msk [vmem:[%s19] ss:$8 sm:$0x3] %vm18, %v17
    %v21 = vld [vmem:[#allocation0] sm:$0x3]
    %22 = vrot.lane.b32.xlu0 %v21, 125
    %v23 = vpop.permute.xlu0 %22
    %vm24 = vcmask 7168
    %s25 = scalar_lea.vmem %s1, 3
    %26 = vst.msk [vmem:[%s25] ss:$8 sm:$0x3] %vm24, %v23
    %v27 = vld [vmem:[#allocation0] sm:$0x3]
    %28 = vrot.lane.b32.xlu0 %v27, 124
    %v29 = vpop.permute.xlu0 %28
    %vm30 = vcmask 7168
    %s31 = scalar_lea.vmem %s1, 4
    %32 = vst.msk [vmem:[%s31] ss:$8 sm:$0x3] %vm30, %v29
    %v33 = vld [vmem:[#allocation0] sm:$0x3]
    %34 = vrot.lane.b32.xlu0 %v33, 123
    %v35 = vpop.permute.xlu0 %34
    %vm36 = vcmask 7168
    %s37 = scalar_lea.vmem %s1, 5
    %38 = vst.msk [vmem:[%s37] ss:$8 sm:$0x3] %vm36, %v35
    %v39 = vld [vmem:[#allocation0] sm:$0x3]
    %40 = vrot.lane.b32.xlu0 %v39, 122
    %v41 = vpop.permute.xlu0 %40
    %vm42 = vcmask 7168
    %s43 = scalar_lea.vmem %s1, 6
    %44 = vst.msk [vmem:[%s43] ss:$8 sm:$0x3] %vm42, %v41
    %v45 = vld [vmem:[#allocation0] sm:$0x3]
    %46 = vrot.lane.b32.xlu0 %v45, 121
    %v47 = vpop.permute.xlu0 %46
    %vm48 = vcmask 7168
    %s49 = scalar_lea.vmem %s1, 7
    %50 = vst.msk [vmem:[%s49] ss:$8 sm:$0x3] %vm48, %v47

// kernel: sequence_gru_forward.1
$region0: #{sequence_gru_forward.1}
  #allocation0 [shape = 'u32[]', space=smem, size = 0x4, offset = 0x4, fixed_abs, tag = 'smem constant byte address 0x4 - core index']
  #allocation1 [shape = 'u32[144,128]{1,0:T(1,128)}', space=vmem, size = 0x12000, scoped, tag = 'internal scratch']
  #allocation2 [shape = 'f32[16,512]{1,0:T(8,128)}', space=vmem, size = 0x8000, scoped, tag = 'scratch operand']
  #allocation3 [shape = 'f32[16,1280]{1,0:T(8,128)}', space=vmem, size = 0x14000, scoped, tag = 'scratch operand']
  #allocation4 [shape = 'f32[144,1024]{1,0:T(8,128)}', space=vmem, size = 0x90000, scoped, tag = 'scratch operand']
  %s0 = inlined_call_operand.vmem [shape: f32[4,16,256], index: 0, kind: input, shape index: {}]
  %s1 = inlined_call_operand.vmem [shape: f32[16,16], index: 1, kind: input, shape index: {}]
  %s2 = inlined_call_operand.vmem [shape: f32[256,1024], index: 2, kind: input, shape index: {}]
  %s3 = inlined_call_operand.vmem [shape: f32[16,256], index: 3, kind: input, shape index: {}]
  %s4 = inlined_call_operand.vmem [shape: f32[16,256], index: 4, kind: input, shape index: {}]
  %s5 = inlined_call_operand.vmem [shape: f32[16,1024], index: 5, kind: input, shape index: {}]
  %s6 = inlined_call_operand.vmem [shape: f32[16,1024], index: 6, kind: input, shape index: {}]
  %s7 = inlined_call_operand.vmem [shape: f32[16,144], index: 7, kind: input, shape index: {}]
  %s8 = inlined_call_operand.vmem [shape: f32[16,1], index: 8, kind: input, shape index: {}]
  %s9 = inlined_call_operand.vmem [shape: f32[16,16], index: 9, kind: input, shape index: {}]
  %s10 = inlined_call_operand.vmem [shape: f32[16,1], index: 10, kind: input, shape index: {}]
  %s11 = inlined_call_operand.vmem [shape: f32[16,144], index: 11, kind: input, shape index: {}]
  %s12 = inlined_call_operand.vmem [shape: f32[16,1], index: 12, kind: input, shape index: {}]
  %s13 = inlined_call_operand.vmem [shape: f32[16,1], index: 13, kind: input, shape index: {}]
  %s14 = inlined_call_operand.vmem [shape: f32[16,1], index: 14, kind: input, shape index: {}]
  %s15 = inlined_call_operand.vmem [shape: f32[16,16], index: 15, kind: input, shape index: {}]
  %s16 = inlined_call_operand.vmem [shape: f32[16,1], index: 16, kind: input, shape index: {}]
  %s17 = inlined_call_operand.vmem [shape: f32[16,144], index: 17, kind: input, shape index: {}]
  %s18 = inlined_call_operand.vmem [shape: f32[16,1], index: 18, kind: input, shape index: {}]
  %s19 = inlined_call_operand.vmem [shape: f32[16,144], index: 19, kind: input, shape index: {}]
  %s20 = inlined_call_operand.vmem [shape: f32[16,1], index: 20, kind: input, shape index: {}]
  %s21 = inlined_call_operand.vmem [shape: f32[16,1], index: 21, kind: input, shape index: {}]
  %s22 = inlined_call_operand.vmem [shape: f32[16,1], index: 22, kind: input, shape index: {}]
  %s23 = inlined_call_operand.vmem [shape: f32[4,16,1024], index: 23, kind: output, shape index: {}]
  %s24 = sld [smem:[#allocation0]]
  $region125: #{sequence_gru_forward.1} parent=0
    _
  %s26 = ssub.s32 1, %s24
  %s27 = scalar_select 0, %s26, %s24
  loop: start=0, step=1, limit=6
  $region2: #{sequence_gru_forward.1} parent=0 // loop_pre_header
    _
  $region3: #{sequence_gru_forward.1} parent=0 // loop_header
    %s29 = sphi 0, %s33
    %p30 = scmp.ge.s32.totalorder %s29, 6
    %s39 = sphi 0, %s41
    %s42 = sphi 0, %s39
    %s43 = sphi 0, %s42
    %s59 = sphi 0, %s43
    %s63 = sphi 0, %s63
    %s65 = sphi 0, %s63
    %s66 = sphi 0, %s65
    %s80 = sphi 0, %s66
    %s84 = sphi 0, %s84
    %s86 = sphi 0, %s84
    %s87 = sphi 0, %s86
    %s101 = sphi 0, %s87
    %s105 = sphi 0, %s105
    %s107 = sphi 0, %s105
    %s108 = sphi 0, %s107
    %s122 = sphi 0, %s108
    %s126 = sphi 0, %s126
    %s128 = sphi 0, %s126
    %s129 = sphi 0, %s128
    %s143 = sphi 0, %s129
    %s147 = sphi 0, %s147
    %s149 = sphi 0, %s147
    %s150 = sphi 0, %s149
    %s164 = sphi 0, %s150
    %s168 = sphi 0, %s168
    %s170 = sphi 0, %s168
    %s171 = sphi 0, %s170
    %s185 = sphi 0, %s171
    %s189 = sphi 0, %s189
    %s191 = sphi 0, %s189
    %s192 = sphi 0, %s191
    %s206 = sphi 0, %s192
    %s210 = sphi 0, %s210
    %s212 = sphi 0, %s210
    %s213 = sphi 0, %s212
    %s227 = sphi 0, %s213
    %s231 = sphi 0, %s231
    %s233 = sphi 0, %s231
    %s234 = sphi 0, %s233
    %s248 = sphi 0, %s234
    %s252 = sphi 0, %s252
    %s254 = sphi 0, %s252
    %s255 = sphi 0, %s254
    %s269 = sphi 0, %s255
    %s273 = sphi 0, %s273
    %s275 = sphi 0, %s273
    %s276 = sphi 0, %s275
    %s290 = sphi 0, %s276
    %s294 = sphi 0, %s294
    %s296 = sphi 0, %s294
    %s297 = sphi 0, %s296
    %s311 = sphi 0, %s297
    %s315 = sphi 0, %s315
    %s317 = sphi 0, %s315
    %s318 = sphi 0, %s317
    %s332 = sphi 0, %s318
    %s336 = sphi 0, %s336
    %s338 = sphi 0, %s336
    %s339 = sphi 0, %s338
    %s353 = sphi 0, %s339
    %s357 = sphi 0, %s357
    %s359 = sphi 0, %s357
    %s360 = sphi 0, %s359
    %s374 = sphi 0, %s360
    %s378 = sphi 0, %s378
    %s380 = sphi 0, %s378
    %s381 = sphi 0, %s380
    %s395 = sphi 0, %s381
    %s399 = sphi 0, %s399
    %s401 = sphi 0, %s399
    %s402 = sphi 0, %s401
    %s416 = sphi 0, %s402
    %s420 = sphi 0, %s420
    %s422 = sphi 0, %s420
    %s423 = sphi 0, %s422
    %s437 = sphi 0, %s423
    %s441 = sphi 0, %s441
    %s443 = sphi 0, %s441
    %s444 = sphi 0, %s443
    %s458 = sphi 0, %s444
    %s462 = sphi 0, %s462
    %s464 = sphi 0, %s462
    %s465 = sphi 0, %s464
    %s479 = sphi 0, %s465
    %s483 = sphi 0, %s483
    %s485 = sphi 0, %s483
    %s486 = sphi 0, %s485
    %s500 = sphi 0, %s486
    %s504 = sphi 0, %s504
    %s506 = sphi 0, %s504
    %s507 = sphi 0, %s506
    %s521 = sphi 0, %s507
    %s527 = sphi 0, %s529
    %s530 = sphi 0, %s527
    %s531 = sphi 0, %s530
    %s547 = sphi 0, %s531
  $region4: #{sequence_gru_forward.1} parent=0 // loop_header_branch
    %32 = sbr.rel (%p30) target = $region8
  $region5: #{sequence_gru_forward.1} parent=0 // loop_body
    %s34 = ssub.s32 %s29, 1
    %s35 = ssub.s32 %s29, 2
    %s36 = sadd.s32 %s29, 1
    %s37 = ssub.s32 %s29, %s36
    %p38 = scmp.eq.s32.totalorder %s37, 0
    %s40 = sadd.s32 %s39, 1
    %s41 = scalar_select %p38, %s39, %s40
    %p44 = pneg %p38
    %p45 = scmp.eq.s32.totalorder %s29, 3
    %p46 = por %p44, %p45
    %p47 = scmp.ne.s32.totalorder %s39, %s42
    %p48 = scmp.eq.s32.totalorder %s29, 0
    %p49 = por %p47, %p48
    %p50 = scmp.ne.s32.totalorder %s39, %s42
    %p51 = scmp.eq.s32.totalorder %s34, 3
    %p52 = por %p50, %p51
    %p53 = scmp.ne.s32.totalorder %s42, %s43
    %p54 = scmp.eq.s32.totalorder %s34, 0
    %p55 = por %p53, %p54
    %p56 = scmp.ne.s32.totalorder %s42, %s43
    %p57 = scmp.eq.s32.totalorder %s35, 3
    %p58 = por %p56, %p57
    %p60 = scmp.ne.s32.totalorder %s43, %s59
    %p61 = scmp.eq.s32.totalorder %s35, 0
    %p62 = por %p60, %p61
    %s64 = sadd.s32 %s63, 1
    %p67 = scmp.eq.s32.totalorder %s29, 3
    %p68 = scmp.ne.s32.totalorder %s63, %s65
    %p69 = scmp.eq.s32.totalorder %s29, 0
    %p70 = por %p68, %p69
    %p71 = scmp.ne.s32.totalorder %s63, %s65
    %p72 = scmp.eq.s32.totalorder %s34, 3
    %p73 = por %p71, %p72
    %p74 = scmp.ne.s32.totalorder %s65, %s66
    %p75 = scmp.eq.s32.totalorder %s34, 0
    %p76 = por %p74, %p75
    %p77 = scmp.ne.s32.totalorder %s65, %s66
    %p78 = scmp.eq.s32.totalorder %s35, 3
    %p79 = por %p77, %p78
    %p81 = scmp.ne.s32.totalorder %s66, %s80
    %p82 = scmp.eq.s32.totalorder %s35, 0
    %p83 = por %p81, %p82
    %s85 = sadd.s32 %s84, 1
    %p88 = scmp.eq.s32.totalorder %s29, 3
    %p89 = scmp.ne.s32.totalorder %s84, %s86
    %p90 = scmp.eq.s32.totalorder %s29, 0
    %p91 = por %p89, %p90
    %p92 = scmp.ne.s32.totalorder %s84, %s86
    %p93 = scmp.eq.s32.totalorder %s34, 3
    %p94 = por %p92, %p93
    %p95 = scmp.ne.s32.totalorder %s86, %s87
    %p96 = scmp.eq.s32.totalorder %s34, 0
    %p97 = por %p95, %p96
    %p98 = scmp.ne.s32.totalorder %s86, %s87
    %p99 = scmp.eq.s32.totalorder %s35, 3
    %p100 = por %p98, %p99
    %p102 = scmp.ne.s32.totalorder %s87, %s101
    %p103 = scmp.eq.s32.totalorder %s35, 0
    %p104 = por %p102, %p103
    %s106 = sadd.s32 %s105, 1
    %p109 = scmp.eq.s32.totalorder %s29, 3
    %p110 = scmp.ne.s32.totalorder %s105, %s107
    %p111 = scmp.eq.s32.totalorder %s29, 0
    %p112 = por %p110, %p111
    %p113 = scmp.ne.s32.totalorder %s105, %s107
    %p114 = scmp.eq.s32.totalorder %s34, 3
    %p115 = por %p113, %p114
    %p116 = scmp.ne.s32.totalorder %s107, %s108
    %p117 = scmp.eq.s32.totalorder %s34, 0
    %p118 = por %p116, %p117
    %p119 = scmp.ne.s32.totalorder %s107, %s108
    %p120 = scmp.eq.s32.totalorder %s35, 3
    %p121 = por %p119, %p120
    %p123 = scmp.ne.s32.totalorder %s108, %s122
    %p124 = scmp.eq.s32.totalorder %s35, 0
    %p125 = por %p123, %p124
    %s127 = sadd.s32 %s126, 1
    %p130 = scmp.eq.s32.totalorder %s29, 3
    %p131 = scmp.ne.s32.totalorder %s126, %s128
    %p132 = scmp.eq.s32.totalorder %s29, 0
    %p133 = por %p131, %p132
    %p134 = scmp.ne.s32.totalorder %s126, %s128
    %p135 = scmp.eq.s32.totalorder %s34, 3
    %p136 = por %p134, %p135
    %p137 = scmp.ne.s32.totalorder %s128, %s129
    %p138 = scmp.eq.s32.totalorder %s34, 0
    %p139 = por %p137, %p138
    %p140 = scmp.ne.s32.totalorder %s128, %s129
    %p141 = scmp.eq.s32.totalorder %s35, 3
    %p142 = por %p140, %p141
    %p144 = scmp.ne.s32.totalorder %s129, %s143
    %p145 = scmp.eq.s32.totalorder %s35, 0
    %p146 = por %p144, %p145
    %s148 = sadd.s32 %s147, 1
    %p151 = scmp.eq.s32.totalorder %s29, 3
    %p152 = scmp.ne.s32.totalorder %s147, %s149
    %p153 = scmp.eq.s32.totalorder %s29, 0
    %p154 = por %p152, %p153
    %p155 = scmp.ne.s32.totalorder %s147, %s149
    %p156 = scmp.eq.s32.totalorder %s34, 3
    %p157 = por %p155, %p156
    %p158 = scmp.ne.s32.totalorder %s149, %s150
    %p159 = scmp.eq.s32.totalorder %s34, 0
    %p160 = por %p158, %p159
    %p161 = scmp.ne.s32.totalorder %s149, %s150
    %p162 = scmp.eq.s32.totalorder %s35, 3
    %p163 = por %p161, %p162
    %p165 = scmp.ne.s32.totalorder %s150, %s164
    %p166 = scmp.eq.s32.totalorder %s35, 0
    %p167 = por %p165, %p166
    %s169 = sadd.s32 %s168, 1
    %p172 = scmp.eq.s32.totalorder %s29, 3
    %p173 = scmp.ne.s32.totalorder %s168, %s170
    %p174 = scmp.eq.s32.totalorder %s29, 0
    %p175 = por %p173, %p174
    %p176 = scmp.ne.s32.totalorder %s168, %s170
    %p177 = scmp.eq.s32.totalorder %s34, 3
    %p178 = por %p176, %p177
    %p179 = scmp.ne.s32.totalorder %s170, %s171
    %p180 = scmp.eq.s32.totalorder %s34, 0
    %p181 = por %p179, %p180
    %p182 = scmp.ne.s32.totalorder %s170, %s171
    %p183 = scmp.eq.s32.totalorder %s35, 3
    %p184 = por %p182, %p183
    %p186 = scmp.ne.s32.totalorder %s171, %s185
    %p187 = scmp.eq.s32.totalorder %s35, 0
    %p188 = por %p186, %p187
    %s190 = sadd.s32 %s189, 1
    %p193 = scmp.eq.s32.totalorder %s29, 3
    %p194 = scmp.ne.s32.totalorder %s189, %s191
    %p195 = scmp.eq.s32.totalorder %s29, 0
    %p196 = por %p194, %p195
    %p197 = scmp.ne.s32.totalorder %s189, %s191
    %p198 = scmp.eq.s32.totalorder %s34, 3
    %p199 = por %p197, %p198
    %p200 = scmp.ne.s32.totalorder %s191, %s192
    %p201 = scmp.eq.s32.totalorder %s34, 0
    %p202 = por %p200, %p201
    %p203 = scmp.ne.s32.totalorder %s191, %s192
    %p204 = scmp.eq.s32.totalorder %s35, 3
    %p205 = por %p203, %p204
    %p207 = scmp.ne.s32.totalorder %s192, %s206
    %p208 = scmp.eq.s32.totalorder %s35, 0
    %p209 = por %p207, %p208
    %s211 = sadd.s32 %s210, 1
    %p214 = scmp.eq.s32.totalorder %s29, 3
    %p215 = scmp.ne.s32.totalorder %s210, %s212
    %p216 = scmp.eq.s32.totalorder %s29, 0
    %p217 = por %p215, %p216
    %p218 = scmp.ne.s32.totalorder %s210, %s212
    %p219 = scmp.eq.s32.totalorder %s34, 3
    %p220 = por %p218, %p219
    %p221 = scmp.ne.s32.totalorder %s212, %s213
    %p222 = scmp.eq.s32.totalorder %s34, 0
    %p223 = por %p221, %p222
    %p224 = scmp.ne.s32.totalorder %s212, %s213
    %p225 = scmp.eq.s32.totalorder %s35, 3
    %p226 = por %p224, %p225
    %p228 = scmp.ne.s32.totalorder %s213, %s227
    %p229 = scmp.eq.s32.totalorder %s35, 0
    %p230 = por %p228, %p229
    %s232 = sadd.s32 %s231, 1
    %p235 = scmp.eq.s32.totalorder %s29, 3
    %p236 = scmp.ne.s32.totalorder %s231, %s233
    %p237 = scmp.eq.s32.totalorder %s29, 0
    %p238 = por %p236, %p237
    %p239 = scmp.ne.s32.totalorder %s231, %s233
    %p240 = scmp.eq.s32.totalorder %s34, 3
    %p241 = por %p239, %p240
    %p242 = scmp.ne.s32.totalorder %s233, %s234
    %p243 = scmp.eq.s32.totalorder %s34, 0
    %p244 = por %p242, %p243
    %p245 = scmp.ne.s32.totalorder %s233, %s234
    %p246 = scmp.eq.s32.totalorder %s35, 3
    %p247 = por %p245, %p246
    %p249 = scmp.ne.s32.totalorder %s234, %s248
    %p250 = scmp.eq.s32.totalorder %s35, 0
    %p251 = por %p249, %p250
    %s253 = sadd.s32 %s252, 1
    %p256 = scmp.eq.s32.totalorder %s29, 3
    %p257 = scmp.ne.s32.totalorder %s252, %s254
    %p258 = scmp.eq.s32.totalorder %s29, 0
    %p259 = por %p257, %p258
    %p260 = scmp.ne.s32.totalorder %s252, %s254
    %p261 = scmp.eq.s32.totalorder %s34, 3
    %p262 = por %p260, %p261
    %p263 = scmp.ne.s32.totalorder %s254, %s255
    %p264 = scmp.eq.s32.totalorder %s34, 0
    %p265 = por %p263, %p264
    %p266 = scmp.ne.s32.totalorder %s254, %s255
    %p267 = scmp.eq.s32.totalorder %s35, 3
    %p268 = por %p266, %p267
    %p270 = scmp.ne.s32.totalorder %s255, %s269
    %p271 = scmp.eq.s32.totalorder %s35, 0
    %p272 = por %p270, %p271
    %s274 = sadd.s32 %s273, 1
    %p277 = scmp.eq.s32.totalorder %s29, 3
    %p278 = scmp.ne.s32.totalorder %s273, %s275
    %p279 = scmp.eq.s32.totalorder %s29, 0
    %p280 = por %p278, %p279
    %p281 = scmp.ne.s32.totalorder %s273, %s275
    %p282 = scmp.eq.s32.totalorder %s34, 3
    %p283 = por %p281, %p282
    %p284 = scmp.ne.s32.totalorder %s275, %s276
    %p285 = scmp.eq.s32.totalorder %s34, 0
    %p286 = por %p284, %p285
    %p287 = scmp.ne.s32.totalorder %s275, %s276
    %p288 = scmp.eq.s32.totalorder %s35, 3
    %p289 = por %p287, %p288
    %p291 = scmp.ne.s32.totalorder %s276, %s290
    %p292 = scmp.eq.s32.totalorder %s35, 0
    %p293 = por %p291, %p292
    %s295 = sadd.s32 %s294, 1
    %p298 = scmp.eq.s32.totalorder %s29, 3
    %p299 = scmp.ne.s32.totalorder %s294, %s296
    %p300 = scmp.eq.s32.totalorder %s29, 0
    %p301 = por %p299, %p300
    %p302 = scmp.ne.s32.totalorder %s294, %s296
    %p303 = scmp.eq.s32.totalorder %s34, 3
    %p304 = por %p302, %p303
    %p305 = scmp.ne.s32.totalorder %s296, %s297
    %p306 = scmp.eq.s32.totalorder %s34, 0
    %p307 = por %p305, %p306
    %p308 = scmp.ne.s32.totalorder %s296, %s297
    %p309 = scmp.eq.s32.totalorder %s35, 3
    %p310 = por %p308, %p309
    %p312 = scmp.ne.s32.totalorder %s297, %s311
    %p313 = scmp.eq.s32.totalorder %s35, 0
    %p314 = por %p312, %p313
    %s316 = sadd.s32 %s315, 1
    %p319 = scmp.eq.s32.totalorder %s29, 3
    %p320 = scmp.ne.s32.totalorder %s315, %s317
    %p321 = scmp.eq.s32.totalorder %s29, 0
    %p322 = por %p320, %p321
    %p323 = scmp.ne.s32.totalorder %s315, %s317
    %p324 = scmp.eq.s32.totalorder %s34, 3
    %p325 = por %p323, %p324
    %p326 = scmp.ne.s32.totalorder %s317, %s318
    %p327 = scmp.eq.s32.totalorder %s34, 0
    %p328 = por %p326, %p327
    %p329 = scmp.ne.s32.totalorder %s317, %s318
    %p330 = scmp.eq.s32.totalorder %s35, 3
    %p331 = por %p329, %p330
    %p333 = scmp.ne.s32.totalorder %s318, %s332
    %p334 = scmp.eq.s32.totalorder %s35, 0
    %p335 = por %p333, %p334
    %s337 = sadd.s32 %s336, 1
    %p340 = scmp.eq.s32.totalorder %s29, 3
    %p341 = scmp.ne.s32.totalorder %s336, %s338
    %p342 = scmp.eq.s32.totalorder %s29, 0
    %p343 = por %p341, %p342
    %p344 = scmp.ne.s32.totalorder %s336, %s338
    %p345 = scmp.eq.s32.totalorder %s34, 3
    %p346 = por %p344, %p345
    %p347 = scmp.ne.s32.totalorder %s338, %s339
    %p348 = scmp.eq.s32.totalorder %s34, 0
    %p349 = por %p347, %p348
    %p350 = scmp.ne.s32.totalorder %s338, %s339
    %p351 = scmp.eq.s32.totalorder %s35, 3
    %p352 = por %p350, %p351
    %p354 = scmp.ne.s32.totalorder %s339, %s353
    %p355 = scmp.eq.s32.totalorder %s35, 0
    %p356 = por %p354, %p355
    %s358 = sadd.s32 %s357, 1
    %p361 = scmp.eq.s32.totalorder %s29, 3
    %p362 = scmp.ne.s32.totalorder %s357, %s359
    %p363 = scmp.eq.s32.totalorder %s29, 0
    %p364 = por %p362, %p363
    %p365 = scmp.ne.s32.totalorder %s357, %s359
    %p366 = scmp.eq.s32.totalorder %s34, 3
    %p367 = por %p365, %p366
    %p368 = scmp.ne.s32.totalorder %s359, %s360
    %p369 = scmp.eq.s32.totalorder %s34, 0
    %p370 = por %p368, %p369
    %p371 = scmp.ne.s32.totalorder %s359, %s360
    %p372 = scmp.eq.s32.totalorder %s35, 3
    %p373 = por %p371, %p372
    %p375 = scmp.ne.s32.totalorder %s360, %s374
    %p376 = scmp.eq.s32.totalorder %s35, 0
    %p377 = por %p375, %p376
    %s379 = sadd.s32 %s378, 1
    %p382 = scmp.eq.s32.totalorder %s29, 3
    %p383 = scmp.ne.s32.totalorder %s378, %s380
    %p384 = scmp.eq.s32.totalorder %s29, 0
    %p385 = por %p383, %p384
    %p386 = scmp.ne.s32.totalorder %s378, %s380
    %p387 = scmp.eq.s32.totalorder %s34, 3
    %p388 = por %p386, %p387
    %p389 = scmp.ne.s32.totalorder %s380, %s381
    %p390 = scmp.eq.s32.totalorder %s34, 0
    %p391 = por %p389, %p390
    %p392 = scmp.ne.s32.totalorder %s380, %s381
    %p393 = scmp.eq.s32.totalorder %s35, 3
    %p394 = por %p392, %p393
    %p396 = scmp.ne.s32.totalorder %s381, %s395
    %p397 = scmp.eq.s32.totalorder %s35, 0
    %p398 = por %p396, %p397
    %s400 = sadd.s32 %s399, 1
    %p403 = scmp.eq.s32.totalorder %s29, 3
    %p404 = scmp.ne.s32.totalorder %s399, %s401
    %p405 = scmp.eq.s32.totalorder %s29, 0
    %p406 = por %p404, %p405
    %p407 = scmp.ne.s32.totalorder %s399, %s401
    %p408 = scmp.eq.s32.totalorder %s34, 3
    %p409 = por %p407, %p408
    %p410 = scmp.ne.s32.totalorder %s401, %s402
    %p411 = scmp.eq.s32.totalorder %s34, 0
    %p412 = por %p410, %p411
    %p413 = scmp.ne.s32.totalorder %s401, %s402
    %p414 = scmp.eq.s32.totalorder %s35, 3
    %p415 = por %p413, %p414
    %p417 = scmp.ne.s32.totalorder %s402, %s416
    %p418 = scmp.eq.s32.totalorder %s35, 0
    %p419 = por %p417, %p418
    %s421 = sadd.s32 %s420, 1
    %p424 = scmp.eq.s32.totalorder %s29, 3
    %p425 = scmp.ne.s32.totalorder %s420, %s422
    %p426 = scmp.eq.s32.totalorder %s29, 0
    %p427 = por %p425, %p426
    %p428 = scmp.ne.s32.totalorder %s420, %s422
    %p429 = scmp.eq.s32.totalorder %s34, 3
    %p430 = por %p428, %p429
    %p431 = scmp.ne.s32.totalorder %s422, %s423
    %p432 = scmp.eq.s32.totalorder %s34, 0
    %p433 = por %p431, %p432
    %p434 = scmp.ne.s32.totalorder %s422, %s423
    %p435 = scmp.eq.s32.totalorder %s35, 3
    %p436 = por %p434, %p435
    %p438 = scmp.ne.s32.totalorder %s423, %s437
    %p439 = scmp.eq.s32.totalorder %s35, 0
    %p440 = por %p438, %p439
    %s442 = sadd.s32 %s441, 1
    %p445 = scmp.eq.s32.totalorder %s29, 3
    %p446 = scmp.ne.s32.totalorder %s441, %s443
    %p447 = scmp.eq.s32.totalorder %s29, 0
    %p448 = por %p446, %p447
    %p449 = scmp.ne.s32.totalorder %s441, %s443
    %p450 = scmp.eq.s32.totalorder %s34, 3
    %p451 = por %p449, %p450
    %p452 = scmp.ne.s32.totalorder %s443, %s444
    %p453 = scmp.eq.s32.totalorder %s34, 0
    %p454 = por %p452, %p453
    %p455 = scmp.ne.s32.totalorder %s443, %s444
    %p456 = scmp.eq.s32.totalorder %s35, 3
    %p457 = por %p455, %p456
    %p459 = scmp.ne.s32.totalorder %s444, %s458
    %p460 = scmp.eq.s32.totalorder %s35, 0
    %p461 = por %p459, %p460
    %s463 = sadd.s32 %s462, 1
    %p466 = scmp.eq.s32.totalorder %s29, 3
    %p467 = scmp.ne.s32.totalorder %s462, %s464
    %p468 = scmp.eq.s32.totalorder %s29, 0
    %p469 = por %p467, %p468
    %p470 = scmp.ne.s32.totalorder %s462, %s464
    %p471 = scmp.eq.s32.totalorder %s34, 3
    %p472 = por %p470, %p471
    %p473 = scmp.ne.s32.totalorder %s464, %s465
    %p474 = scmp.eq.s32.totalorder %s34, 0
    %p475 = por %p473, %p474
    %p476 = scmp.ne.s32.totalorder %s464, %s465
    %p477 = scmp.eq.s32.totalorder %s35, 3
    %p478 = por %p476, %p477
    %p480 = scmp.ne.s32.totalorder %s465, %s479
    %p481 = scmp.eq.s32.totalorder %s35, 0
    %p482 = por %p480, %p481
    %s484 = sadd.s32 %s483, 1
    %p487 = scmp.eq.s32.totalorder %s29, 3
    %p488 = scmp.ne.s32.totalorder %s483, %s485
    %p489 = scmp.eq.s32.totalorder %s29, 0
    %p490 = por %p488, %p489
    %p491 = scmp.ne.s32.totalorder %s483, %s485
    %p492 = scmp.eq.s32.totalorder %s34, 3
    %p493 = por %p491, %p492
    %p494 = scmp.ne.s32.totalorder %s485, %s486
    %p495 = scmp.eq.s32.totalorder %s34, 0
    %p496 = por %p494, %p495
    %p497 = scmp.ne.s32.totalorder %s485, %s486
    %p498 = scmp.eq.s32.totalorder %s35, 3
    %p499 = por %p497, %p498
    %p501 = scmp.ne.s32.totalorder %s486, %s500
    %p502 = scmp.eq.s32.totalorder %s35, 0
    %p503 = por %p501, %p502
    %s505 = sadd.s32 %s504, 1
    %p508 = scmp.eq.s32.totalorder %s29, 3
    %p509 = scmp.ne.s32.totalorder %s504, %s506
    %p510 = scmp.eq.s32.totalorder %s29, 0
    %p511 = por %p509, %p510
    %p512 = scmp.ne.s32.totalorder %s504, %s506
    %p513 = scmp.eq.s32.totalorder %s34, 3
    %p514 = por %p512, %p513
    %p515 = scmp.ne.s32.totalorder %s506, %s507
    %p516 = scmp.eq.s32.totalorder %s34, 0
    %p517 = por %p515, %p516
    %p518 = scmp.ne.s32.totalorder %s506, %s507
    %p519 = scmp.eq.s32.totalorder %s35, 3
    %p520 = por %p518, %p519
    %p522 = scmp.ne.s32.totalorder %s507, %s521
    %p523 = scmp.eq.s32.totalorder %s35, 0
    %p524 = por %p522, %p523
    %s525 = ssub.s32 %s29, %s36
    %p526 = scmp.eq.s32.totalorder %s525, 0
    %s528 = sadd.s32 %s527, 1
    %s529 = scalar_select %p526, %s527, %s528
    %p532 = pneg %p526
    %p533 = scmp.eq.s32.totalorder %s29, 3
    %p534 = por %p532, %p533
    %p535 = scmp.ne.s32.totalorder %s527, %s530
    %p536 = scmp.eq.s32.totalorder %s29, 0
    %p537 = por %p535, %p536
    %p538 = scmp.ne.s32.totalorder %s527, %s530
    %p539 = scmp.eq.s32.totalorder %s34, 3
    %p540 = por %p538, %p539
    %p541 = scmp.ne.s32.totalorder %s530, %s531
    %p542 = scmp.eq.s32.totalorder %s34, 0
    %p543 = por %p541, %p542
    %p544 = scmp.ne.s32.totalorder %s530, %s531
    %p545 = scmp.eq.s32.totalorder %s35, 3
    %p546 = por %p544, %p545
    %p548 = scmp.ne.s32.totalorder %s531, %s547
    %p549 = scmp.eq.s32.totalorder %s35, 0
    %p550 = por %p548, %p549
    %p551 = scmp.le.s32.totalorder 1, %s29
    %p552 = scmp.lt.s32.totalorder %s29, 5
    %p553 = pnand %p551, %p552
    %p554 = pneg %p553
    // Predicated region
    $region9: #{sequence_gru_forward.1} parent=5 // pred_check
      _
    $region10: #{sequence_gru_forward.1} parent=5 // pred_check_branch
      %556 = sbr.rel (%p553) target = $region12
    $region11: #{sequence_gru_forward.1} parent=5 // pred_region
      %s557 = ssub.s32 %s29, 1
      // Predicated region
      $region13: #{sequence_gru_forward.1} parent=11 // pred_check
        %p558 = pneg %p76
      $region14: #{sequence_gru_forward.1} parent=11 // pred_check_branch
        %560 = sbr.rel (%p558) target = $region16
      $region15: #{sequence_gru_forward.1} parent=11 // pred_region
        _
      $region16: #{sequence_gru_forward.1} parent=11 // pred_fallthru
        _
      // Predicated region
      $region17: #{sequence_gru_forward.1} parent=11 // pred_check
        %p561 = pneg %p97
      $region18: #{sequence_gru_forward.1} parent=11 // pred_check_branch
        %563 = sbr.rel (%p561) target = $region20
      $region19: #{sequence_gru_forward.1} parent=11 // pred_region
        _
      $region20: #{sequence_gru_forward.1} parent=11 // pred_fallthru
        _
      // Predicated region
      $region21: #{sequence_gru_forward.1} parent=11 // pred_check
        %p564 = pneg %p118
      $region22: #{sequence_gru_forward.1} parent=11 // pred_check_branch
        %566 = sbr.rel (%p564) target = $region24
      $region23: #{sequence_gru_forward.1} parent=11 // pred_region
        _
      $region24: #{sequence_gru_forward.1} parent=11 // pred_fallthru
        _
      // Predicated region
      $region25: #{sequence_gru_forward.1} parent=11 // pred_check
        %p567 = pneg %p139
      $region26: #{sequence_gru_forward.1} parent=11 // pred_check_branch
        %569 = sbr.rel (%p567) target = $region28
      $region27: #{sequence_gru_forward.1} parent=11 // pred_region
        _
      $region28: #{sequence_gru_forward.1} parent=11 // pred_fallthru
        _
      // Predicated region
      $region29: #{sequence_gru_forward.1} parent=11 // pred_check
        %p570 = pneg %p160
      $region30: #{sequence_gru_forward.1} parent=11 // pred_check_branch
        %572 = sbr.rel (%p570) target = $region32
      $region31: #{sequence_gru_forward.1} parent=11 // pred_region
        _
      $region32: #{sequence_gru_forward.1} parent=11 // pred_fallthru
        _
      // Predicated region
      $region33: #{sequence_gru_forward.1} parent=11 // pred_check
        %p573 = pneg %p181
      $region34: #{sequence_gru_forward.1} parent=11 // pred_check_branch
        %575 = sbr.rel (%p573) target = $region36
      $region35: #{sequence_gru_forward.1} parent=11 // pred_region
        _
      $region36: #{sequence_gru_forward.1} parent=11 // pred_fallthru
        _
      // Predicated region
      $region37: #{sequence_gru_forward.1} parent=11 // pred_check
        %p576 = pneg %p202
      $region38: #{sequence_gru_forward.1} parent=11 // pred_check_branch
        %578 = sbr.rel (%p576) target = $region40
      $region39: #{sequence_gru_forward.1} parent=11 // pred_region
        _
      $region40: #{sequence_gru_forward.1} parent=11 // pred_fallthru
        _
      // Predicated region
      $region41: #{sequence_gru_forward.1} parent=11 // pred_check
        %p579 = pneg %p223
      $region42: #{sequence_gru_forward.1} parent=11 // pred_check_branch
        %581 = sbr.rel (%p579) target = $region44
      $region43: #{sequence_gru_forward.1} parent=11 // pred_region
        _
      $region44: #{sequence_gru_forward.1} parent=11 // pred_fallthru
        _
      // Predicated region
      $region45: #{sequence_gru_forward.1} parent=11 // pred_check
        %p582 = pneg %p244
      $region46: #{sequence_gru_forward.1} parent=11 // pred_check_branch
        %584 = sbr.rel (%p582) target = $region48
      $region47: #{sequence_gru_forward.1} parent=11 // pred_region
        _
      $region48: #{sequence_gru_forward.1} parent=11 // pred_fallthru
        _
      // Predicated region
      $region49: #{sequence_gru_forward.1} parent=11 // pred_check
        %p585 = pneg %p265
      $region50: #{sequence_gru_forward.1} parent=11 // pred_check_branch
        %587 = sbr.rel (%p585) target = $region52
      $region51: #{sequence_gru_forward.1} parent=11 // pred_region
        _
      $region52: #{sequence_gru_forward.1} parent=11 // pred_fallthru
        _
      // Predicated region
      $region53: #{sequence_gru_forward.1} parent=11 // pred_check
        %p588 = pneg %p286
      $region54: #{sequence_gru_forward.1} parent=11 // pred_check_branch
        %590 = sbr.rel (%p588) target = $region56
      $region55: #{sequence_gru_forward.1} parent=11 // pred_region
        _
      $region56: #{sequence_gru_forward.1} parent=11 // pred_fallthru
        _
      // Predicated region
      $region57: #{sequence_gru_forward.1} parent=11 // pred_check
        %p591 = pneg %p307
      $region58: #{sequence_gru_forward.1} parent=11 // pred_check_branch
        %593 = sbr.rel (%p591) target = $region60
      $region59: #{sequence_gru_forward.1} parent=11 // pred_region
        _
      $region60: #{sequence_gru_forward.1} parent=11 // pred_fallthru
        _
      // Predicated region
      $region61: #{sequence_gru_forward.1} parent=11 // pred_check
        %p594 = pneg %p328
      $region62: #{sequence_gru_forward.1} parent=11 // pred_check_branch
        %596 = sbr.rel (%p594) target = $region64
      $region63: #{sequence_gru_forward.1} parent=11 // pred_region
        _
      $region64: #{sequence_gru_forward.1} parent=11 // pred_fallthru
        _
      // Predicated region
      $region65: #{sequence_gru_forward.1} parent=11 // pred_check
        %p597 = pneg %p349
      $region66: #{sequence_gru_forward.1} parent=11 // pred_check_branch
        %599 = sbr.rel (%p597) target = $region68
      $region67: #{sequence_gru_forward.1} parent=11 // pred_region
        _
      $region68: #{sequence_gru_forward.1} parent=11 // pred_fallthru
        _
      // Predicated region
      $region69: #{sequence_gru_forward.1} parent=11 // pred_check
        %p600 = pneg %p370
      $region70: #{sequence_gru_forward.1} parent=11 // pred_check_branch
        %602 = sbr.rel (%p600) target = $region72
      $region71: #{sequence_gru_forward.1} parent=11 // pred_region
        _
      $region72: #{sequence_gru_forward.1} parent=11 // pred_fallthru
        _
      // Predicated region
      $region73: #{sequence_gru_forward.1} parent=11 // pred_check
        %p603 = pneg %p391
      $region74: #{sequence_gru_forward.1} parent=11 // pred_check_branch
        %605 = sbr.rel (%p603) target = $region76
      $region75: #{sequence_gru_forward.1} parent=11 // pred_region
        _
      $region76: #{sequence_gru_forward.1} parent=11 // pred_fallthru
        _
      // Predicated region
      $region77: #{sequence_gru_forward.1} parent=11 // pred_check
        %p606 = pneg %p412
      $region78: #{sequence_gru_forward.1} parent=11 // pred_check_branch
        %608 = sbr.rel (%p606) target = $region80
      $region79: #{sequence_gru_forward.1} parent=11 // pred_region
        _
      $region80: #{sequence_gru_forward.1} parent=11 // pred_fallthru
        _
      // Predicated region
      $region81: #{sequence_gru_forward.1} parent=11 // pred_check
        %p609 = pneg %p433
      $region82: #{sequence_gru_forward.1} parent=11 // pred_check_branch
        %611 = sbr.rel (%p609) target = $region84
      $region83: #{sequence_gru_forward.1} parent=11 // pred_region
        _
      $region84: #{sequence_gru_forward.1} parent=11 // pred_fallthru
        _
      // Predicated region
      $region85: #{sequence_gru_forward.1} parent=11 // pred_check
        %p612 = pneg %p454
      $region86: #{sequence_gru_forward.1} parent=11 // pred_check_branch
        %614 = sbr.rel (%p612) target = $region88
      $region87: #{sequence_gru_forward.1} parent=11 // pred_region
        _
      $region88: #{sequence_gru_forward.1} parent=11 // pred_fallthru
        _
      // Predicated region
      $region89: #{sequence_gru_forward.1} parent=11 // pred_check
        %p615 = pneg %p475
      $region90: #{sequence_gru_forward.1} parent=11 // pred_check_branch
        %617 = sbr.rel (%p615) target = $region92
      $region91: #{sequence_gru_forward.1} parent=11 // pred_region
        _
      $region92: #{sequence_gru_forward.1} parent=11 // pred_fallthru
        _
      // Predicated region
      $region93: #{sequence_gru_forward.1} parent=11 // pred_check
        %p618 = pneg %p496
      $region94: #{sequence_gru_forward.1} parent=11 // pred_check_branch
        %620 = sbr.rel (%p618) target = $region96
      $region95: #{sequence_gru_forward.1} parent=11 // pred_region
        _
      $region96: #{sequence_gru_forward.1} parent=11 // pred_fallthru
        _
      // Predicated region
      $region97: #{sequence_gru_forward.1} parent=11 // pred_check
        %p621 = pneg %p517
      $region98: #{sequence_gru_forward.1} parent=11 // pred_check_branch
        %623 = sbr.rel (%p621) target = $region100
      $region99: #{sequence_gru_forward.1} parent=11 // pred_region
        _
      $region100: #{sequence_gru_forward.1} parent=11 // pred_fallthru
        _
    $region12: #{sequence_gru_forward.1} parent=5 // pred_fallthru
      _
    %p624 = scmp.lt.s32.totalorder %s29, 4
    // Predicated region
    $region101: #{sequence_gru_forward.1} parent=5 // pred_check
      %p625 = pneg %p624
    $region102: #{sequence_gru_forward.1} parent=5 // pred_check_branch
      %627 = sbr.rel (%p625) target = $region104
    $region103: #{sequence_gru_forward.1} parent=5 // pred_region
      // Predicated region
      $region105: #{sequence_gru_forward.1} parent=103 // pred_check
        %p628 = pneg %p49
      $region106: #{sequence_gru_forward.1} parent=103 // pred_check_branch
        %630 = sbr.rel (%p628) target = $region108
      $region107: #{sequence_gru_forward.1} parent=103 // pred_region
        %p631 = scmp.lt.s32.totalorder %s29, 3
        %s632 = scalar_select %p631, %s29, 3
        %s633 = smul.addr %s632, 4
        %s634 = smul.addr %s633, 8
        %s635 = scalar_lea.vmem %s0, %s634
      $region108: #{sequence_gru_forward.1} parent=103 // pred_fallthru
        _
    $region104: #{sequence_gru_forward.1} parent=5 // pred_fallthru
      _
    %p636 = scmp.le.s32.totalorder 1, %s29
    %p637 = scmp.lt.s32.totalorder %s29, 5
    %p638 = pnand %p636, %p637
    %p639 = pneg %p638
    // Predicated region
    $region109: #{sequence_gru_forward.1} parent=5 // pred_check
      _
    $region110: #{sequence_gru_forward.1} parent=5 // pred_check_branch
      %641 = sbr.rel (%p638) target = $region112
    $region111: #{sequence_gru_forward.1} parent=5 // pred_region
      %s642 = ssub.s32 %s29, 1
      %p643 = scmp.lt.s32.totalorder %s34, 3
      %s644 = scalar_select %p643, %s34, 3
      %s645 = smul.addr %s644, 4
      %s646 = smul.addr %s645, 8
      %s647 = scalar_lea.vmem %s0, %s646
      %p648 = pneg %p55
      %p649 = pneg %p52
      %p650 = pneg %p76
      %p651 = pneg %p73
      %p652 = pneg %p97
      %p653 = pneg %p94
      %p654 = pneg %p118
      %p655 = pneg %p115
      %p656 = pneg %p139
      %p657 = pneg %p136
      %p658 = pneg %p160
      %p659 = pneg %p157
      %p660 = pneg %p181
      %p661 = pneg %p178
      %p662 = pneg %p202
      %p663 = pneg %p199
      %p664 = pneg %p223
      %p665 = pneg %p220
      %p666 = pneg %p244
      %p667 = pneg %p241
      %p668 = pneg %p265
      %p669 = pneg %p262
      %p670 = pneg %p286
      %p671 = pneg %p283
      %p672 = pneg %p307
      %p673 = pneg %p304
      %p674 = pneg %p328
      %p675 = pneg %p325
      %p676 = pneg %p349
      %p677 = pneg %p346
      %p678 = pneg %p370
      %p679 = pneg %p367
      %p680 = pneg %p391
      %p681 = pneg %p388
      %p682 = pneg %p412
      %p683 = pneg %p409
      %p684 = pneg %p433
      %p685 = pneg %p430
      %p686 = pneg %p454
      %p687 = pneg %p451
      %p688 = pneg %p475
      %p689 = pneg %p472
      %p690 = pneg %p496
      %p691 = pneg %p493
      %p692 = pneg %p517
      %p693 = pneg %p514
      %p694 = pneg %p543
      %p695 = pneg %p540
      %p696 = scmp.lt.s32.totalorder %s34, 3
      %s697 = scalar_select %p696, %s34, 3
      %s698 = smul.addr %s697, 16
      %s699 = smul.addr %s698, 8
      %s700 = scalar_lea.vmem %s23, %s699
      %p701 = scmp.lt.s32.totalorder %s34, 3
      %s702 = scalar_select %p701, %s34, 3
      %s703 = smul.addr %s702, 4
      %s704 = smul.addr %s703, 8
      %s705 = scalar_lea.vmem %s0, %s704
      %p706 = scmp.lt.s32.totalorder %s34, 3
      %s707 = scalar_select %p706, %s34, 3
      %s708 = smul.addr %s707, 16
      %s709 = smul.addr %s708, 8
      %s710 = scalar_lea.vmem %s23, %s709
      %711 = vst [vmem:[#allocation2] sm:$0xff] 0.0
      %712 = vst [vmem:[#allocation2 + $0x20] sm:$0xff] 0.0
      %713 = vst [vmem:[#allocation2 + $0x18] sm:$0xff] 0.0
      %714 = vst [vmem:[#allocation2 + $0x38] sm:$0xff] 0.0
      %715 = vst [vmem:[#allocation3] sm:$0xff] 0.0
      %716 = vst [vmem:[#allocation3 + $0x50] sm:$0xff] 0.0
      %717 = vst [vmem:[#allocation3 + $0x48] sm:$0xff] 0.0
      %718 = vst [vmem:[#allocation3 + $0x98] sm:$0xff] 0.0
      %v719 = vld [vmem:[%s1] sm:$0xff]
      %v720 = vld [vmem:[%s1 + $0x8] sm:$0xff]
      %v721 = vld [vmem:[%s705] sm:$0xff]
      %v722 = vld [vmem:[%s705 + $0x8] sm:$0xff]
      %v723 = vld [vmem:[%s705 + $0x10] sm:$0xff]
      %v724 = vld [vmem:[%s705 + $0x18] sm:$0xff]
      %v725 = vld [vmem:[%s3] sm:$0xff]
      %v726 = vld [vmem:[%s3 + $0x8] sm:$0xff]
      %v727 = vld [vmem:[%s3 + $0x10] sm:$0xff]
      %v728 = vld [vmem:[%s3 + $0x18] sm:$0xff]
      %v729 = vld [vmem:[%s4] sm:$0xff]
      %v730 = vld [vmem:[%s4 + $0x8] sm:$0xff]
      %v731 = vld [vmem:[%s4 + $0x10] sm:$0xff]
      %v732 = vld [vmem:[%s4 + $0x18] sm:$0xff]
      %733 = vst [vmem:[#allocation2 + $0x8] sm:$0xff] %v721
      %734 = vst [vmem:[#allocation2 + $0x10] sm:$0xff] %v722
      %735 = vst [vmem:[#allocation2 + $0x28] sm:$0xff] %v723
      %736 = vst [vmem:[#allocation2 + $0x30] sm:$0xff] %v724
      %v737 = vld [vmem:[#allocation2] sm:$0xff]
      %v738 = vld [vmem:[#allocation2 + $0x8] sm:$0xff]
      %v739 = vld [vmem:[#allocation2 + $0x10] sm:$0xff]
      %v740 = vld [vmem:[#allocation2 + $0x20] sm:$0xff]
      %v741 = vld [vmem:[#allocation2 + $0x28] sm:$0xff]
      %v742 = vld [vmem:[#allocation2 + $0x30] sm:$0xff]
      %747 = vrot.lane.b32.xlu0 %v725, 111
      %v748 = vpop.permute.xlu0 %747
      %749 = vrot.lane.b32.xlu0 %v726, 111
      %v750 = vpop.permute.xlu0 %749
      %751 = vrot.lane.b32.xlu0 %v727, 111
      %v752 = vpop.permute.xlu0 %751
      %753 = vrot.lane.b32.xlu0 %v728, 111
      %v754 = vpop.permute.xlu0 %753
      %vm755 = vcmask 908288
      %v756 = vsel %vm755, %v748, %v750
      %v757 = vsel %vm755, %v752, %v754
      %v764 = vmul.f32 %v737, %v748
      %v765 = vmul.f32 %v738, %v756
      %v766 = vmul.f32 %v739, %v750
      %v767 = vmul.f32 %v740, %v752
      %v768 = vmul.f32 %v741, %v757
      %v769 = vmul.f32 %v742, %v754
      %776 = vrot.lane.b32.xlu0 %v764, 17
      %v777 = vpop.permute.xlu0 %776
      %778 = vrot.lane.b32.xlu0 %v765, 17
      %v779 = vpop.permute.xlu0 %778
      %780 = vrot.lane.b32.xlu0 %v766, 17
      %v781 = vpop.permute.xlu0 %780
      %782 = vrot.lane.b32.xlu0 %v767, 17
      %v783 = vpop.permute.xlu0 %782
      %784 = vrot.lane.b32.xlu0 %v768, 17
      %v785 = vpop.permute.xlu0 %784
      %786 = vrot.lane.b32.xlu0 %v769, 17
      %v787 = vpop.permute.xlu0 %786
      %vm788 = vcmask 138240
      %v789 = vsel %vm788, %v777, %v779
      %v790 = vsel %vm788, %v779, %v781
      %v791 = vsel %vm788, %v783, %v785
      %v792 = vsel %vm788, %v785, %v787
      %797 = vst [vmem:[#allocation4] sm:$0xff] %v789
      %798 = vst [vmem:[#allocation4 + $0x8] sm:$0xff] %v790
      %799 = vst [vmem:[#allocation4 + $0x40] sm:$0xff] %v791
      %800 = vst [vmem:[#allocation4 + $0x48] sm:$0xff] %v792
      %v801 = vld [vmem:[#allocation2] sm:$0xff]
      %v802 = vld [vmem:[#allocation2 + $0x8] sm:$0xff]
      %v803 = vld [vmem:[#allocation2 + $0x10] sm:$0xff]
      %v804 = vld [vmem:[#allocation2 + $0x20] sm:$0xff]
      %v805 = vld [vmem:[#allocation2 + $0x28] sm:$0xff]
      %v806 = vld [vmem:[#allocation2 + $0x30] sm:$0xff]
      %813 = vrot.lane.b32.xlu0 %v801, 16
      %v814 = vpop.permute.xlu0 %813
      %815 = vrot.lane.b32.xlu0 %v802, 16
      %v816 = vpop.permute.xlu0 %815
      %817 = vrot.lane.b32.xlu0 %v803, 16
      %v818 = vpop.permute.xlu0 %817
      %819 = vrot.lane.b32.xlu0 %v804, 16
      %v820 = vpop.permute.xlu0 %819
      %821 = vrot.lane.b32.xlu0 %v805, 16
      %v822 = vpop.permute.xlu0 %821
      %823 = vrot.lane.b32.xlu0 %v806, 16
      %v824 = vpop.permute.xlu0 %823
      %vm825 = vcmask 130048
      %v826 = vsel %vm825, %v814, %v816
      %v827 = vsel %vm825, %v816, %v818
      %v828 = vsel %vm825, %v820, %v822
      %v829 = vsel %vm825, %v822, %v824
      %834 = vst [vmem:[#allocation4 + $0x80] sm:$0xff] %v826
      %835 = vst [vmem:[#allocation4 + $0x88] sm:$0xff] %v827
      %836 = vst [vmem:[#allocation4 + $0xc0] sm:$0xff] %v828
      %837 = vst [vmem:[#allocation4 + $0xc8] sm:$0xff] %v829
      %v838 = vld [vmem:[#allocation2] sm:$0xff]
      %v839 = vld [vmem:[#allocation2 + $0x8] sm:$0xff]
      %v840 = vld [vmem:[#allocation2 + $0x10] sm:$0xff]
      %v841 = vld [vmem:[#allocation2 + $0x20] sm:$0xff]
      %v842 = vld [vmem:[#allocation2 + $0x28] sm:$0xff]
      %v843 = vld [vmem:[#allocation2 + $0x30] sm:$0xff]
      %848 = vrot.lane.b32.xlu0 %v729, 113
      %v849 = vpop.permute.xlu0 %848
      %850 = vrot.lane.b32.xlu0 %v730, 113
      %v851 = vpop.permute.xlu0 %850
      %852 = vrot.lane.b32.xlu0 %v731, 113
      %v853 = vpop.permute.xlu0 %852
      %854 = vrot.lane.b32.xlu0 %v732, 113
      %v855 = vpop.permute.xlu0 %854
      %vm856 = vcmask 924672
      %v857 = vsel %vm856, %v849, %v851
      %v858 = vsel %vm856, %v853, %v855
      %v865 = vmul.f32 %v838, %v849
      %v866 = vmul.f32 %v839, %v857
      %v867 = vmul.f32 %v840, %v851
      %v868 = vmul.f32 %v841, %v853
      %v869 = vmul.f32 %v842, %v858
      %v870 = vmul.f32 %v843, %v855
      %877 = vrot.lane.b32.xlu0 %v865, 15
      %v878 = vpop.permute.xlu0 %877
      %879 = vrot.lane.b32.xlu0 %v866, 15
      %v880 = vpop.permute.xlu0 %879
      %881 = vrot.lane.b32.xlu0 %v867, 15
      %v882 = vpop.permute.xlu0 %881
      %883 = vrot.lane.b32.xlu0 %v868, 15
      %v884 = vpop.permute.xlu0 %883
      %885 = vrot.lane.b32.xlu0 %v869, 15
      %v886 = vpop.permute.xlu0 %885
      %887 = vrot.lane.b32.xlu0 %v870, 15
      %v888 = vpop.permute.xlu0 %887
      %vm889 = vcmask 121856
      %v890 = vsel %vm889, %v878, %v880
      %v891 = vsel %vm889, %v880, %v882
      %v892 = vsel %vm889, %v884, %v886
      %v893 = vsel %vm889, %v886, %v888
      %898 = vst [vmem:[#allocation4 + $0x100] sm:$0xff] %v890
      %899 = vst [vmem:[#allocation4 + $0x108] sm:$0xff] %v891
      %900 = vst [vmem:[#allocation4 + $0x140] sm:$0xff] %v892
      %901 = vst [vmem:[#allocation4 + $0x148] sm:$0xff] %v893
      %v902 = vld [vmem:[#allocation2] sm:$0xff]
      %v903 = vld [vmem:[#allocation2 + $0x8] sm:$0xff]
      %v904 = vld [vmem:[#allocation2 + $0x10] sm:$0xff]
      %v905 = vld [vmem:[#allocation2 + $0x20] sm:$0xff]
      %v906 = vld [vmem:[#allocation2 + $0x28] sm:$0xff]
      %v907 = vld [vmem:[#allocation2 + $0x30] sm:$0xff]
      %908 = vrot.lane.b32.xlu0 %v725, 127
      %v909 = vpop.permute.xlu0 %908
      %910 = vrot.lane.b32.xlu0 %v726, 127
      %v911 = vpop.permute.xlu0 %910
      %912 = vrot.lane.b32.xlu0 %v727, 127
      %v913 = vpop.permute.xlu0 %912
      %914 = vrot.lane.b32.xlu0 %v728, 127
      %v915 = vpop.permute.xlu0 %914
      %vm916 = vcmask 1039360
      %v917 = vsel %vm916, %v909, %v911
      %v918 = vsel %vm916, %v913, %v915
      %v925 = vmul.f32 %v902, %v909
      %v926 = vmul.f32 %v903, %v917
      %v927 = vmul.f32 %v904, %v911
      %v928 = vmul.f32 %v905, %v913
      %v929 = vmul.f32 %v906, %v918
      %v930 = vmul.f32 %v907, %v915
      %937 = vrot.lane.b32.xlu0 %v925, 1
      %v938 = vpop.permute.xlu0 %937
      %939 = vrot.lane.b32.xlu0 %v926, 1
      %v940 = vpop.permute.xlu0 %939
      %941 = vrot.lane.b32.xlu0 %v927, 1
      %v942 = vpop.permute.xlu0 %941
      %943 = vrot.lane.b32.xlu0 %v928, 1
      %v944 = vpop.permute.xlu0 %943
      %945 = vrot.lane.b32.xlu0 %v929, 1
      %v946 = vpop.permute.xlu0 %945
      %947 = vrot.lane.b32.xlu0 %v930, 1
      %v948 = vpop.permute.xlu0 %947
      %vm949 = vcmask 7168
      %v950 = vsel %vm949, %v938, %v940
      %v951 = vsel %vm949, %v940, %v942
      %v952 = vsel %vm949, %v944, %v946
      %v953 = vsel %vm949, %v946, %v948
      %958 = vst [vmem:[#allocation4 + $0x180] sm:$0xff] %v950
      %959 = vst [vmem:[#allocation4 + $0x188] sm:$0xff] %v951
      %960 = vst [vmem:[#allocation4 + $0x1c0] sm:$0xff] %v952
      %961 = vst [vmem:[#allocation4 + $0x1c8] sm:$0xff] %v953
      %v962 = vld [vmem:[#allocation2 + $0x8] sm:$0xff]
      %v963 = vld [vmem:[#allocation2 + $0x10] sm:$0xff]
      %v964 = vld [vmem:[#allocation2 + $0x28] sm:$0xff]
      %v965 = vld [vmem:[#allocation2 + $0x30] sm:$0xff]
      %966 = vst [vmem:[#allocation4 + $0x200] sm:$0xff] %v962
      %967 = vst [vmem:[#allocation4 + $0x208] sm:$0xff] %v963
      %968 = vst [vmem:[#allocation4 + $0x240] sm:$0xff] %v964
      %969 = vst [vmem:[#allocation4 + $0x248] sm:$0xff] %v965
      %v970 = vld [vmem:[#allocation2 + $0x8] sm:$0xff]
      %v971 = vld [vmem:[#allocation2 + $0x10] sm:$0xff]
      %v972 = vld [vmem:[#allocation2 + $0x18] sm:$0xff]
      %v973 = vld [vmem:[#allocation2 + $0x28] sm:$0xff]
      %v974 = vld [vmem:[#allocation2 + $0x30] sm:$0xff]
      %v975 = vld [vmem:[#allocation2 + $0x38] sm:$0xff]
      %976 = vrot.lane.b32.xlu0 %v729, 1
      %v977 = vpop.permute.xlu0 %976
      %978 = vrot.lane.b32.xlu0 %v730, 1
      %v979 = vpop.permute.xlu0 %978
      %980 = vrot.lane.b32.xlu0 %v731, 1
      %v981 = vpop.permute.xlu0 %980
      %982 = vrot.lane.b32.xlu0 %v732, 1
      %v983 = vpop.permute.xlu0 %982
      %v984 = vsel %vm949, %v977, %v979
      %v985 = vsel %vm949, %v981, %v983
      %v992 = vmul.f32 %v970, %v977
      %v993 = vmul.f32 %v971, %v984
      %v994 = vmul.f32 %v972, %v979
      %v995 = vmul.f32 %v973, %v981
      %v996 = vmul.f32 %v974, %v985
      %v997 = vmul.f32 %v975, %v983
      %1004 = vrot.lane.b32.xlu0 %v992, 127
      %v1005 = vpop.permute.xlu0 %1004
      %1006 = vrot.lane.b32.xlu0 %v993, 127
      %v1007 = vpop.permute.xlu0 %1006
      %1008 = vrot.lane.b32.xlu0 %v994, 127
      %v1009 = vpop.permute.xlu0 %1008
      %1010 = vrot.lane.b32.xlu0 %v995, 127
      %v1011 = vpop.permute.xlu0 %1010
      %1012 = vrot.lane.b32.xlu0 %v996, 127
      %v1013 = vpop.permute.xlu0 %1012
      %1014 = vrot.lane.b32.xlu0 %v997, 127
      %v1015 = vpop.permute.xlu0 %1014
      %v1016 = vsel %vm916, %v1005, %v1007
      %v1017 = vsel %vm916, %v1007, %v1009
      %v1018 = vsel %vm916, %v1011, %v1013
      %v1019 = vsel %vm916, %v1013, %v1015
      %1024 = vst [vmem:[#allocation4 + $0x280] sm:$0xff] %v1016
      %1025 = vst [vmem:[#allocation4 + $0x288] sm:$0xff] %v1017
      %1026 = vst [vmem:[#allocation4 + $0x2c0] sm:$0xff] %v1018
      %1027 = vst [vmem:[#allocation4 + $0x2c8] sm:$0xff] %v1019
      %v1028 = vld [vmem:[#allocation2 + $0x8] sm:$0xff]
      %v1029 = vld [vmem:[#allocation2 + $0x10] sm:$0xff]
      %v1030 = vld [vmem:[#allocation2 + $0x18] sm:$0xff]
      %v1031 = vld [vmem:[#allocation2 + $0x28] sm:$0xff]
      %v1032 = vld [vmem:[#allocation2 + $0x30] sm:$0xff]
      %v1033 = vld [vmem:[#allocation2 + $0x38] sm:$0xff]
      %1034 = vrot.lane.b32.xlu0 %v725, 15
      %v1035 = vpop.permute.xlu0 %1034
      %1036 = vrot.lane.b32.xlu0 %v726, 15
      %v1037 = vpop.permute.xlu0 %1036
      %1038 = vrot.lane.b32.xlu0 %v727, 15
      %v1039 = vpop.permute.xlu0 %1038
      %1040 = vrot.lane.b32.xlu0 %v728, 15
      %v1041 = vpop.permute.xlu0 %1040
      %v1042 = vsel %vm889, %v1035, %v1037
      %v1043 = vsel %vm889, %v1039, %v1041
      %v1050 = vmul.f32 %v1028, %v1035
      %v1051 = vmul.f32 %v1029, %v1042
      %v1052 = vmul.f32 %v1030, %v1037
      %v1053 = vmul.f32 %v1031, %v1039
      %v1054 = vmul.f32 %v1032, %v1043
      %v1055 = vmul.f32 %v1033, %v1041
      %1062 = vrot.lane.b32.xlu0 %v1050, 113
      %v1063 = vpop.permute.xlu0 %1062
      %1064 = vrot.lane.b32.xlu0 %v1051, 113
      %v1065 = vpop.permute.xlu0 %1064
      %1066 = vrot.lane.b32.xlu0 %v1052, 113
      %v1067 = vpop.permute.xlu0 %1066
      %1068 = vrot.lane.b32.xlu0 %v1053, 113
      %v1069 = vpop.permute.xlu0 %1068
      %1070 = vrot.lane.b32.xlu0 %v1054, 113
      %v1071 = vpop.permute.xlu0 %1070
      %1072 = vrot.lane.b32.xlu0 %v1055, 113
      %v1073 = vpop.permute.xlu0 %1072
      %v1074 = vsel %vm856, %v1063, %v1065
      %v1075 = vsel %vm856, %v1065, %v1067
      %v1076 = vsel %vm856, %v1069, %v1071
      %v1077 = vsel %vm856, %v1071, %v1073
      %1082 = vst [vmem:[#allocation4 + $0x300] sm:$0xff] %v1074
      %1083 = vst [vmem:[#allocation4 + $0x308] sm:$0xff] %v1075
      %1084 = vst [vmem:[#allocation4 + $0x340] sm:$0xff] %v1076
      %1085 = vst [vmem:[#allocation4 + $0x348] sm:$0xff] %v1077
      %v1086 = vld [vmem:[#allocation2 + $0x8] sm:$0xff]
      %v1087 = vld [vmem:[#allocation2 + $0x10] sm:$0xff]
      %v1088 = vld [vmem:[#allocation2 + $0x18] sm:$0xff]
      %v1089 = vld [vmem:[#allocation2 + $0x28] sm:$0xff]
      %v1090 = vld [vmem:[#allocation2 + $0x30] sm:$0xff]
      %v1091 = vld [vmem:[#allocation2 + $0x38] sm:$0xff]
      %1098 = vrot.lane.b32.xlu0 %v1086, 112
      %v1099 = vpop.permute.xlu0 %1098
      %1100 = vrot.lane.b32.xlu0 %v1087, 112
      %v1101 = vpop.permute.xlu0 %1100
      %1102 = vrot.lane.b32.xlu0 %v1088, 112
      %v1103 = vpop.permute.xlu0 %1102
      %1104 = vrot.lane.b32.xlu0 %v1089, 112
      %v1105 = vpop.permute.xlu0 %1104
      %1106 = vrot.lane.b32.xlu0 %v1090, 112
      %v1107 = vpop.permute.xlu0 %1106
      %1108 = vrot.lane.b32.xlu0 %v1091, 112
      %v1109 = vpop.permute.xlu0 %1108
      %vm1110 = vcmask 916480
      %v1111 = vsel %vm1110, %v1099, %v1101
      %v1112 = vsel %vm1110, %v1101, %v1103
      %v1113 = vsel %vm1110, %v1105, %v1107
      %v1114 = vsel %vm1110, %v1107, %v1109
      %1119 = vst [vmem:[#allocation4 + $0x380] sm:$0xff] %v1111
      %1120 = vst [vmem:[#allocation4 + $0x388] sm:$0xff] %v1112
      %1121 = vst [vmem:[#allocation4 + $0x3c0] sm:$0xff] %v1113
      %1122 = vst [vmem:[#allocation4 + $0x3c8] sm:$0xff] %v1114
      %v1123 = vld [vmem:[#allocation2 + $0x8] sm:$0xff]
      %v1124 = vld [vmem:[#allocation2 + $0x10] sm:$0xff]
      %v1125 = vld [vmem:[#allocation2 + $0x18] sm:$0xff]
      %v1126 = vld [vmem:[#allocation2 + $0x28] sm:$0xff]
      %v1127 = vld [vmem:[#allocation2 + $0x30] sm:$0xff]
      %v1128 = vld [vmem:[#allocation2 + $0x38] sm:$0xff]
      %1129 = vrot.lane.b32.xlu0 %v729, 17
      %v1130 = vpop.permute.xlu0 %1129
      %1131 = vrot.lane.b32.xlu0 %v730, 17
      %v1132 = vpop.permute.xlu0 %1131
      %1133 = vrot.lane.b32.xlu0 %v731, 17
      %v1134 = vpop.permute.xlu0 %1133
      %1135 = vrot.lane.b32.xlu0 %v732, 17
      %v1136 = vpop.permute.xlu0 %1135
      %v1137 = vsel %vm788, %v1130, %v1132
      %v1138 = vsel %vm788, %v1134, %v1136
      %v1145 = vmul.f32 %v1123, %v1130
      %v1146 = vmul.f32 %v1124, %v1137
      %v1147 = vmul.f32 %v1125, %v1132
      %v1148 = vmul.f32 %v1126, %v1134
      %v1149 = vmul.f32 %v1127, %v1138
      %v1150 = vmul.f32 %v1128, %v1136
      %1157 = vrot.lane.b32.xlu0 %v1145, 111
      %v1158 = vpop.permute.xlu0 %1157
      %1159 = vrot.lane.b32.xlu0 %v1146, 111
      %v1160 = vpop.permute.xlu0 %1159
      %1161 = vrot.lane.b32.xlu0 %v1147, 111
      %v1162 = vpop.permute.xlu0 %1161
      %1163 = vrot.lane.b32.xlu0 %v1148, 111
      %v1164 = vpop.permute.xlu0 %1163
      %1165 = vrot.lane.b32.xlu0 %v1149, 111
      %v1166 = vpop.permute.xlu0 %1165
      %1167 = vrot.lane.b32.xlu0 %v1150, 111
      %v1168 = vpop.permute.xlu0 %1167
      %v1169 = vsel %vm755, %v1158, %v1160
      %v1170 = vsel %vm755, %v1160, %v1162
      %v1171 = vsel %vm755, %v1164, %v1166
      %v1172 = vsel %vm755, %v1166, %v1168
      %1177 = vst [vmem:[#allocation4 + $0x400] sm:$0xff] %v1169
      %1178 = vst [vmem:[#allocation4 + $0x408] sm:$0xff] %v1170
      %1179 = vst [vmem:[#allocation4 + $0x440] sm:$0xff] %v1171
      %1180 = vst [vmem:[#allocation4 + $0x448] sm:$0xff] %v1172
      %v1181 = vld [vmem:[%s7] sm:$0xff]
      %v1182 = vld [vmem:[%s7 + $0x8] sm:$0xff]
      %v1183 = vld [vmem:[%s7 + $0x10] sm:$0xff]
      %v1184 = vld [vmem:[%s7 + $0x18] sm:$0xff]
      %v1185 = vld [vmem:[#allocation4] sm:$0xff]
      %v1186 = vld [vmem:[#allocation4 + $0x8] sm:$0xff]
      %v1187 = vld [vmem:[#allocation4 + $0x40] sm:$0xff]
      %v1188 = vld [vmem:[#allocation4 + $0x48] sm:$0xff]
      %v1189 = vld [vmem:[#allocation4 + $0x80] sm:$0xff]
      %v1190 = vld [vmem:[#allocation4 + $0x88] sm:$0xff]
      %v1191 = vld [vmem:[#allocation4 + $0xc0] sm:$0xff]
      %v1192 = vld [vmem:[#allocation4 + $0xc8] sm:$0xff]
      %v1193 = vld [vmem:[#allocation4 + $0x100] sm:$0xff]
      %v1194 = vld [vmem:[#allocation4 + $0x108] sm:$0xff]
      %v1195 = vld [vmem:[#allocation4 + $0x140] sm:$0xff]
      %v1196 = vld [vmem:[#allocation4 + $0x148] sm:$0xff]
      %v1197 = vld [vmem:[#allocation4 + $0x180] sm:$0xff]
      %v1198 = vld [vmem:[#allocation4 + $0x188] sm:$0xff]
      %v1199 = vld [vmem:[#allocation4 + $0x1c0] sm:$0xff]
      %v1200 = vld [vmem:[#allocation4 + $0x1c8] sm:$0xff]
      %v1201 = vld [vmem:[#allocation4 + $0x200] sm:$0xff]
      %v1202 = vld [vmem:[#allocation4 + $0x208] sm:$0xff]
      %v1203 = vld [vmem:[#allocation4 + $0x240] sm:$0xff]
      %v1204 = vld [vmem:[#allocation4 + $0x248] sm:$0xff]
      %v1205 = vld [vmem:[#allocation4 + $0x280] sm:$0xff]
      %v1206 = vld [vmem:[#allocation4 + $0x288] sm:$0xff]
      %v1207 = vld [vmem:[#allocation4 + $0x2c0] sm:$0xff]
      %v1208 = vld [vmem:[#allocation4 + $0x2c8] sm:$0xff]
      %v1209 = vld [vmem:[#allocation4 + $0x300] sm:$0xff]
      %v1210 = vld [vmem:[#allocation4 + $0x308] sm:$0xff]
      %v1211 = vld [vmem:[#allocation4 + $0x340] sm:$0xff]
      %v1212 = vld [vmem:[#allocation4 + $0x348] sm:$0xff]
      %v1213 = vld [vmem:[#allocation4 + $0x380] sm:$0xff]
      %v1214 = vld [vmem:[#allocation4 + $0x388] sm:$0xff]
      %v1215 = vld [vmem:[#allocation4 + $0x3c0] sm:$0xff]
      %v1216 = vld [vmem:[#allocation4 + $0x3c8] sm:$0xff]
      %v1217 = vld [vmem:[#allocation4 + $0x400] sm:$0xff]
      %v1218 = vld [vmem:[#allocation4 + $0x408] sm:$0xff]
      %v1219 = vld [vmem:[#allocation4 + $0x440] sm:$0xff]
      %v1220 = vld [vmem:[#allocation4 + $0x448] sm:$0xff]
      %v1221 = vld [vmem:[%s8] sm:$0xff]
      %v1222 = vld [vmem:[%s8 + $0x8] sm:$0xff]
      %1224 = vset.pattern.permute.xlu0 0
      %1225 = vperm.xlu0 %1224, %v1221
      %v1226 = vpop.permute.xlu0 %1225
      %1229 = vset.pattern.permute.xlu0 0
      %1230 = vperm.xlu0 %1229, %v1222
      %v1231 = vpop.permute.xlu0 %1230
      %v1234 = vsel %vm825, %v1182, 0
      %v1237 = vsel %vm825, %v1184, 0
      %1239 = vmatprep.subr.mxu0 %v1186
      %1240 = vmatpush1.msra.mxu0 %v1185
      %1241 = vmatprep.subr.mxu0 %v1188
      %1242 = vmatpush1.msra.mxu0 %v1187
      %1243 = vmatprep.subr.mxu0 %v1190
      %1244 = vmatpush1.msra.mxu0 %v1189
      %1245 = vmatprep.subr.mxu0 %v1192
      %1246 = vmatpush1.msra.mxu0 %v1191
      %1247 = vmatprep.subr.mxu0 %v1194
      %1248 = vmatpush1.msra.mxu0 %v1193
      %1249 = vmatprep.subr.mxu0 %v1196
      %1250 = vmatpush1.msra.mxu0 %v1195
      %1251 = vmatprep.subr.mxu0 %v1198
      %1252 = vmatpush1.msra.mxu0 %v1197
      %1253 = vmatprep.subr.mxu0 %v1200
      %1254 = vmatpush1.msra.mxu0 %v1199
      %1255 = vmatprep.subr.mxu0 %v1202
      %1256 = vmatpush1.msra.mxu0 %v1201
      %1257 = vmatprep.subr.mxu0 %v1204
      %1258 = vmatpush1.msra.mxu0 %v1203
      %1259 = vmatprep.subr.mxu0 %v1206
      %1260 = vmatpush1.msra.mxu0 %v1205
      %1261 = vmatprep.subr.mxu0 %v1208
      %1262 = vmatpush1.msra.mxu0 %v1207
      %1263 = vmatprep.subr.mxu0 %v1210
      %1264 = vmatpush1.msra.mxu0 %v1209
      %1265 = vmatprep.subr.mxu0 %v1212
      %1266 = vmatpush1.msra.mxu0 %v1211
      %1267 = vmatprep.subr.mxu0 %v1214
      %1268 = vmatpush1.msra.mxu0 %v1213
      %1269 = vmatprep.subr.mxu0 %v1216
      %1270 = vmatpush1.msra.mxu0 %v1215
      %1271 = vmatprep.subr.mxu0 %v1218
      %1272 = vmatpush1.msra.mxu0 %v1217
      %1273 = vmatprep.subr.mxu0 %v1220
      %1274 = vmatpush1.msra.mxu0 %v1219
      %1275 = vmatprep.subr.mxu0 0.0
      %1276 = vmatpush1.msra.mxu0 0.0
      %1277 = vmatprep.subr.mxu0 0.0
      %1278 = vmatpush1.msra.mxu0 0.0
      %1279 = vmatprep.subr.mxu0 0.0
      %1280 = vmatpush1.msra.mxu0 0.0
      %1281 = vmatprep.subr.mxu0 0.0
      %1282 = vmatpush1.msra.mxu0 0.0
      %1283 = vmatprep.subr.mxu0 0.0
      %1284 = vmatpush1.msra.mxu0 0.0
      %1285 = vmatprep.subr.mxu0 0.0
      %1286 = vmatpush1.msra.mxu0 0.0
      %1287 = vmatprep.subr.mxu0 0.0
      %1288 = vmatpush1.msra.mxu0 0.0
      %1289 = vmatprep.subr.mxu0 0.0
      %1290 = vmatpush1.msra.mxu0 0.0
      %1291 = vmatprep.subr.mxu0 0.0
      %1292 = vmatpush1.msra.mxu0 0.0
      %1293 = vmatprep.subr.mxu0 0.0
      %1294 = vmatpush1.msra.mxu0 0.0
      %1295 = vmatprep.subr.mxu0 0.0
      %1296 = vmatpush1.msra.mxu0 0.0
      %1297 = vmatprep.subr.mxu0 0.0
      %1298 = vmatpush1.msra.mxu0 0.0
      %1299 = vmatprep.subr.mxu0 0.0
      %1300 = vmatpush1.msra.mxu0 0.0
      %1301 = vmatprep.subr.mxu0 0.0
      %1302 = vmatpush1.msra.mxu0 0.0
      %1303 = vmatprep.mubr.f32.mxu0 %v1234
      %1304 = vmatmul.mubr.f32.gmra.mrb[0].mxu0 %v1181
      %v1305 = vpop.f32.mrb[0].mxu0
      %v1306 = vadd.f32 %v1226, %v1305
      %v1307 = vpop.f32.mrb[0].mxu0
      %v1308 = vadd.f32 %v1226, %v1307
      %1309 = vmatprep.mubr.f32.mxu0 %v1237
      %1310 = vmatmul.mubr.f32.gmra.mrb[0].mxu0 %v1183
      %v1311 = vpop.f32.mrb[0].mxu0
      %v1312 = vadd.f32 %v1231, %v1311
      %v1313 = vpop.f32.mrb[0].mxu0
      %v1314 = vadd.f32 %v1231, %v1313
      %1315 = vdwg.mxu0
      %v1316 = vld [vmem:[%s13] sm:$0xff]
      %v1317 = vld [vmem:[%s13 + $0x8] sm:$0xff]
      %v1318 = vld [vmem:[%s14] sm:$0xff]
      %v1319 = vld [vmem:[%s14 + $0x8] sm:$0xff]
      %v1320 = vld [vmem:[%s9] sm:$0xff]
      %v1321 = vld [vmem:[%s9 + $0x8] sm:$0xff]
      %v1322 = vld [vmem:[%s10] sm:$0xff]
      %v1323 = vld [vmem:[%s10 + $0x8] sm:$0xff]
      %1325 = vset.pattern.permute.xlu0 0
      %1326 = vperm.xlu0 %1325, %v1322
      %v1327 = vpop.permute.xlu0 %1326
      %1330 = vset.pattern.permute.xlu0 0
      %1331 = vperm.xlu0 %1330, %v1323
      %v1332 = vpop.permute.xlu0 %1331
      %v1335 = vsel %vm825, %v1320, 0
      %v1338 = vsel %vm825, %v1321, 0
      %1340 = vmatprep.subr.mxu0 %v1308
      %1341 = vmatpush1.msra.mxu0 %v1306
      %1342 = vmatprep.subr.mxu0 %v1314
      %1343 = vmatpush1.msra.mxu0 %v1312
      %1344 = vmatprep.subr.mxu0 0.0
      %1345 = vmatpush1.msra.mxu0 0.0
      %1346 = vmatprep.subr.mxu0 0.0
      %1347 = vmatpush1.msra.mxu0 0.0
      %1348 = vmatprep.subr.mxu0 0.0
      %1349 = vmatpush1.msra.mxu0 0.0
      %1350 = vmatprep.subr.mxu0 0.0
      %1351 = vmatpush1.msra.mxu0 0.0
      %1352 = vmatprep.subr.mxu0 0.0
      %1353 = vmatpush1.msra.mxu0 0.0
      %1354 = vmatprep.subr.mxu0 0.0
      %1355 = vmatpush1.msra.mxu0 0.0
      %1356 = vmatprep.subr.mxu0 0.0
      %1357 = vmatpush1.msra.mxu0 0.0
      %1358 = vmatprep.subr.mxu0 0.0
      %1359 = vmatpush1.msra.mxu0 0.0
      %1360 = vmatprep.subr.mxu0 0.0
      %1361 = vmatpush1.msra.mxu0 0.0
      %1362 = vmatprep.subr.mxu0 0.0
      %1363 = vmatpush1.msra.mxu0 0.0
      %1364 = vmatprep.subr.mxu0 0.0
      %1365 = vmatpush1.msra.mxu0 0.0
      %1366 = vmatprep.subr.mxu0 0.0
      %1367 = vmatpush1.msra.mxu0 0.0
      %1368 = vmatprep.subr.mxu0 0.0
      %1369 = vmatpush1.msra.mxu0 0.0
      %1370 = vmatprep.subr.mxu0 0.0
      %1371 = vmatpush1.msra.mxu0 0.0
      %1372 = vmatprep.subr.mxu0 0.0
      %1373 = vmatpush1.msra.mxu0 0.0
      %1374 = vmatprep.subr.mxu0 0.0
      %1375 = vmatpush1.msra.mxu0 0.0
      %1376 = vmatprep.subr.mxu0 0.0
      %1377 = vmatpush1.msra.mxu0 0.0
      %1378 = vmatprep.subr.mxu0 0.0
      %1379 = vmatpush1.msra.mxu0 0.0
      %1380 = vmatprep.subr.mxu0 0.0
      %1381 = vmatpush1.msra.mxu0 0.0
      %1382 = vmatprep.subr.mxu0 0.0
      %1383 = vmatpush1.msra.mxu0 0.0
      %1384 = vmatprep.subr.mxu0 0.0
      %1385 = vmatpush1.msra.mxu0 0.0
      %1386 = vmatprep.subr.mxu0 0.0
      %1387 = vmatpush1.msra.mxu0 0.0
      %1388 = vmatprep.subr.mxu0 0.0
      %1389 = vmatpush1.msra.mxu0 0.0
      %1390 = vmatprep.subr.mxu0 0.0
      %1391 = vmatpush1.msra.mxu0 0.0
      %1392 = vmatprep.subr.mxu0 0.0
      %1393 = vmatpush1.msra.mxu0 0.0
      %1394 = vmatprep.subr.mxu0 0.0
      %1395 = vmatpush1.msra.mxu0 0.0
      %1396 = vmatprep.subr.mxu0 0.0
      %1397 = vmatpush1.msra.mxu0 0.0
      %1398 = vmatprep.subr.mxu0 0.0
      %1399 = vmatpush1.msra.mxu0 0.0
      %1400 = vmatprep.subr.mxu0 0.0
      %1401 = vmatpush1.msra.mxu0 0.0
      %1402 = vmatprep.subr.mxu0 0.0
      %1403 = vmatpush1.msra.mxu0 0.0
      %1404 = vmatprep.mubr.f32.mxu0 0.0
      %1405 = vmatmul.mubr.f32.gmra.mrb[0].mxu0 %v1335
      %v1406 = vpop.f32.mrb[0].mxu0
      %v1407 = vadd.f32 %v1327, %v1406
      %v1408 = vpop.f32.mrb[0].mxu0
      %v1409 = vadd.f32 %v1327, %v1408
      %1410 = vmatprep.mubr.f32.mxu0 0.0
      %1411 = vmatmul.mubr.f32.gmra.mrb[0].mxu0 %v1338
      %v1412 = vpop.f32.mrb[0].mxu0
      %v1413 = vadd.f32 %v1332, %v1412
      %v1414 = vpop.f32.mrb[0].mxu0
      %v1415 = vadd.f32 %v1332, %v1414
      %1416 = vdwg.mxu0
      %v1417 = vadd.f32 %v1306, %v1308
      %1418 = vadd.xlane.f32.xlu0 %v1417
      %v1419 = vpop.xlane.xlu0 %1418
      %v1420 = vadd.f32 %v1312, %v1314
      %1421 = vadd.xlane.f32.xlu0 %v1420
      %v1422 = vpop.xlane.xlu0 %1421
      %v1423 = vmul.f32 %v1306, %v1306
      %v1424 = vmul.f32 %v1308, %v1308
      %v1425 = vmul.f32 %v1312, %v1312
      %v1426 = vmul.f32 %v1314, %v1314
      %v1427 = vadd.f32 %v1423, %v1424
      %1428 = vadd.xlane.f32.xlu0 %v1427
      %v1429 = vpop.xlane.xlu0 %1428
      %v1430 = vadd.f32 %v1425, %v1426
      %1431 = vadd.xlane.f32.xlu0 %v1430
      %v1432 = vpop.xlane.xlu0 %1431
      %v1434 = vsel %vm825, %v719, 0
      %v1437 = vsel %vm825, %v720, 0
      %1439 = vmatprep.subr.mxu0 0.0
      %1440 = vmatpush1.msra.mxu0 %v1419
      %1441 = vmatprep.subr.mxu0 0.0
      %1442 = vmatpush1.msra.mxu0 %v1422
      %1443 = vmatprep.subr.mxu0 0.0
      %1444 = vmatpush1.msra.mxu0 0.0
      %1445 = vmatprep.subr.mxu0 0.0
      %1446 = vmatpush1.msra.mxu0 0.0
      %1447 = vmatprep.subr.mxu0 0.0
      %1448 = vmatpush1.msra.mxu0 0.0
      %1449 = vmatprep.subr.mxu0 0.0
      %1450 = vmatpush1.msra.mxu0 0.0
      %1451 = vmatprep.subr.mxu0 0.0
      %1452 = vmatpush1.msra.mxu0 0.0
      %1453 = vmatprep.subr.mxu0 0.0
      %1454 = vmatpush1.msra.mxu0 0.0
      %1455 = vmatprep.subr.mxu0 0.0
      %1456 = vmatpush1.msra.mxu0 0.0
      %1457 = vmatprep.subr.mxu0 0.0
      %1458 = vmatpush1.msra.mxu0 0.0
      %1459 = vmatprep.subr.mxu0 0.0
      %1460 = vmatpush1.msra.mxu0 0.0
      %1461 = vmatprep.subr.mxu0 0.0
      %1462 = vmatpush1.msra.mxu0 0.0
      %1463 = vmatprep.subr.mxu0 0.0
      %1464 = vmatpush1.msra.mxu0 0.0
      %1465 = vmatprep.subr.mxu0 0.0
      %1466 = vmatpush1.msra.mxu0 0.0
      %1467 = vmatprep.subr.mxu0 0.0
      %1468 = vmatpush1.msra.mxu0 0.0
      %1469 = vmatprep.subr.mxu0 0.0
      %1470 = vmatpush1.msra.mxu0 0.0
      %1471 = vmatprep.subr.mxu0 0.0
      %1472 = vmatpush1.msra.mxu0 0.0
      %1473 = vmatprep.subr.mxu0 0.0
      %1474 = vmatpush1.msra.mxu0 0.0
      %1475 = vmatprep.subr.mxu0 0.0
      %1476 = vmatpush1.msra.mxu0 0.0
      %1477 = vmatprep.subr.mxu0 0.0
      %1478 = vmatpush1.msra.mxu0 0.0
      %1479 = vmatprep.subr.mxu0 0.0
      %1480 = vmatpush1.msra.mxu0 0.0
      %1481 = vmatprep.subr.mxu0 0.0
      %1482 = vmatpush1.msra.mxu0 0.0
      %1483 = vmatprep.subr.mxu0 0.0
      %1484 = vmatpush1.msra.mxu0 0.0
      %1485 = vmatprep.subr.mxu0 0.0
      %1486 = vmatpush1.msra.mxu0 0.0
      %1487 = vmatprep.subr.mxu0 0.0
      %1488 = vmatpush1.msra.mxu0 0.0
      %1489 = vmatprep.subr.mxu0 0.0
      %1490 = vmatpush1.msra.mxu0 0.0
      %1491 = vmatprep.subr.mxu0 0.0
      %1492 = vmatpush1.msra.mxu0 0.0
      %1493 = vmatprep.subr.mxu0 0.0
      %1494 = vmatpush1.msra.mxu0 0.0
      %1495 = vmatprep.subr.mxu0 0.0
      %1496 = vmatpush1.msra.mxu0 0.0
      %1497 = vmatprep.subr.mxu0 0.0
      %1498 = vmatpush1.msra.mxu0 0.0
      %1499 = vmatprep.subr.mxu0 0.0
      %1500 = vmatpush1.msra.mxu0 0.0
      %1501 = vmatprep.subr.mxu0 0.0
      %1502 = vmatpush1.msra.mxu0 0.0
      %1503 = vmatprep.mubr.f32.mxu0 0.0
      %1504 = vmatmul.mubr.f32.gmra.mrb[0].mxu0 %v1434
      %v1505 = vpop.f32.mrb[0].mxu0
      %v1506 = vadd.f32 0.0, %v1505
      %v1507 = vpop.f32.mrb[0].mxu0
      %1508 = vmatprep.mubr.f32.mxu0 0.0
      %1509 = vmatmul.mubr.f32.gmra.mrb[0].mxu0 %v1437
      %v1510 = vpop.f32.mrb[0].mxu0
      %v1511 = vadd.f32 0.0, %v1510
      %v1512 = vpop.f32.mrb[0].mxu0
      %1513 = vdwg.mxu0
      %v1514 = vmul.f32 %v1506, 0.001953125
      %v1515 = vmul.f32 %v1511, 0.001953125
      %1516 = vmatprep.subr.mxu0 0.0
      %1517 = vmatpush1.msra.mxu0 %v1429
      %1518 = vmatprep.subr.mxu0 0.0
      %1519 = vmatpush1.msra.mxu0 %v1432
      %1520 = vmatprep.subr.mxu0 0.0
      %1521 = vmatpush1.msra.mxu0 0.0
      %1522 = vmatprep.subr.mxu0 0.0
      %1523 = vmatpush1.msra.mxu0 0.0
      %1524 = vmatprep.subr.mxu0 0.0
      %1525 = vmatpush1.msra.mxu0 0.0
      %1526 = vmatprep.subr.mxu0 0.0
      %1527 = vmatpush1.msra.mxu0 0.0
      %1528 = vmatprep.subr.mxu0 0.0
      %1529 = vmatpush1.msra.mxu0 0.0
      %1530 = vmatprep.subr.mxu0 0.0
      %1531 = vmatpush1.msra.mxu0 0.0
      %1532 = vmatprep.subr.mxu0 0.0
      %1533 = vmatpush1.msra.mxu0 0.0
      %1534 = vmatprep.subr.mxu0 0.0
      %1535 = vmatpush1.msra.mxu0 0.0
      %1536 = vmatprep.subr.mxu0 0.0
      %1537 = vmatpush1.msra.mxu0 0.0
      %1538 = vmatprep.subr.mxu0 0.0
      %1539 = vmatpush1.msra.mxu0 0.0
      %1540 = vmatprep.subr.mxu0 0.0
      %1541 = vmatpush1.msra.mxu0 0.0
      %1542 = vmatprep.subr.mxu0 0.0
      %1543 = vmatpush1.msra.mxu0 0.0
      %1544 = vmatprep.subr.mxu0 0.0
      %1545 = vmatpush1.msra.mxu0 0.0
      %1546 = vmatprep.subr.mxu0 0.0
      %1547 = vmatpush1.msra.mxu0 0.0
      %1548 = vmatprep.subr.mxu0 0.0
      %1549 = vmatpush1.msra.mxu0 0.0
      %1550 = vmatprep.subr.mxu0 0.0
      %1551 = vmatpush1.msra.mxu0 0.0
      %1552 = vmatprep.subr.mxu0 0.0
      %1553 = vmatpush1.msra.mxu0 0.0
      %1554 = vmatprep.subr.mxu0 0.0
      %1555 = vmatpush1.msra.mxu0 0.0
      %1556 = vmatprep.subr.mxu0 0.0
      %1557 = vmatpush1.msra.mxu0 0.0
      %1558 = vmatprep.subr.mxu0 0.0
      %1559 = vmatpush1.msra.mxu0 0.0
      %1560 = vmatprep.subr.mxu0 0.0
      %1561 = vmatpush1.msra.mxu0 0.0
      %1562 = vmatprep.subr.mxu0 0.0
      %1563 = vmatpush1.msra.mxu0 0.0
      %1564 = vmatprep.subr.mxu0 0.0
      %1565 = vmatpush1.msra.mxu0 0.0
      %1566 = vmatprep.subr.mxu0 0.0
      %1567 = vmatpush1.msra.mxu0 0.0
      %1568 = vmatprep.subr.mxu0 0.0
      %1569 = vmatpush1.msra.mxu0 0.0
      %1570 = vmatprep.subr.mxu0 0.0
      %1571 = vmatpush1.msra.mxu0 0.0
      %1572 = vmatprep.subr.mxu0 0.0
      %1573 = vmatpush1.msra.mxu0 0.0
      %1574 = vmatprep.subr.mxu0 0.0
      %1575 = vmatpush1.msra.mxu0 0.0
      %1576 = vmatprep.subr.mxu0 0.0
      %1577 = vmatpush1.msra.mxu0 0.0
      %1578 = vmatprep.subr.mxu0 0.0
      %1579 = vmatpush1.msra.mxu0 0.0
      %1580 = vmatprep.mubr.f32.mxu0 0.0
      %1581 = vmatmul.mubr.f32.gmra.mrb[0].mxu0 %v1434
      %v1582 = vpop.f32.mrb[0].mxu0
      %v1583 = vadd.f32 0.0, %v1582
      %v1584 = vpop.f32.mrb[0].mxu0
      %1585 = vmatprep.mubr.f32.mxu0 0.0
      %1586 = vmatmul.mubr.f32.gmra.mrb[0].mxu0 %v1437
      %v1587 = vpop.f32.mrb[0].mxu0
      %v1588 = vadd.f32 0.0, %v1587
      %v1589 = vpop.f32.mrb[0].mxu0
      %1590 = vdwg.mxu0
      %v1591 = vmul.f32 %v1583, 0.001953125
      %v1592 = vmul.f32 %v1588, 0.001953125
      %v1593 = vmul.f32 %v1514, %v1514
      %v1594 = vmul.f32 %v1515, %v1515
      %v1595 = vsub.f32 %v1591, %v1593
      %v1596 = vsub.f32 %v1592, %v1594
      %v1597 = vadd.f32 %v1595, 1e-05
      %v1598 = vadd.f32 %v1596, 1e-05
      %v1599 = vrsqrt.pop %v1597
      %v1600 = vrsqrt.pop %v1598
      %v1601 = vmul.f32 %v1599, %v1316
      %v1602 = vmul.f32 %v1600, %v1317
      %v1603 = vmul.f32 %v1514, %v1601
      %v1604 = vmul.f32 %v1515, %v1602
      %v1605 = vsub.f32 %v1318, %v1603
      %v1606 = vsub.f32 %v1319, %v1604
      %1608 = vset.pattern.permute.xlu0 0
      %1609 = vperm.xlu0 %1608, %v1601
      %v1610 = vpop.permute.xlu0 %1609
      %1613 = vset.pattern.permute.xlu0 0
      %1614 = vperm.xlu0 %1613, %v1602
      %v1615 = vpop.permute.xlu0 %1614
      %v1617 = vmul.f32 %v1306, %v1610
      %v1618 = vmul.f32 %v1308, %v1610
      %v1619 = vmul.f32 %v1312, %v1615
      %v1620 = vmul.f32 %v1314, %v1615
      %1622 = vset.pattern.permute.xlu0 0
      %1623 = vperm.xlu0 %1622, %v1605
      %v1624 = vpop.permute.xlu0 %1623
      %1627 = vset.pattern.permute.xlu0 0
      %1628 = vperm.xlu0 %1627, %v1606
      %v1629 = vpop.permute.xlu0 %1628
      %v1631 = vadd.f32 %v1617, %v1624
      %v1632 = vadd.f32 %v1618, %v1624
      %v1633 = vadd.f32 %v1619, %v1629
      %v1634 = vadd.f32 %v1620, %v1629
      %v1635 = vmax.f32 %v1631, 0.0
      %v1636 = vmax.f32 %v1632, 0.0
      %v1637 = vmax.f32 %v1633, 0.0
      %v1638 = vmax.f32 %v1634, 0.0
      %v1639 = vld [vmem:[%s3] sm:$0xff]
      %v1640 = vld [vmem:[%s3 + $0x8] sm:$0xff]
      %v1641 = vld [vmem:[%s3 + $0x10] sm:$0xff]
      %v1642 = vld [vmem:[%s3 + $0x18] sm:$0xff]
      %v1643 = vld [vmem:[%s4] sm:$0xff]
      %v1644 = vld [vmem:[%s4 + $0x8] sm:$0xff]
      %v1645 = vld [vmem:[%s4 + $0x10] sm:$0xff]
      %v1646 = vld [vmem:[%s4 + $0x18] sm:$0xff]
      %1647 = vst [vmem:[#allocation2 + $0x8] sm:$0xff] %v1635
      %1648 = vst [vmem:[#allocation2 + $0x10] sm:$0xff] %v1636
      %1649 = vst [vmem:[#allocation2 + $0x28] sm:$0xff] %v1637
      %1650 = vst [vmem:[#allocation2 + $0x30] sm:$0xff] %v1638
      %v1651 = vld [vmem:[#allocation2] sm:$0xff]
      %v1652 = vld [vmem:[#allocation2 + $0x8] sm:$0xff]
      %v1653 = vld [vmem:[#allocation2 + $0x10] sm:$0xff]
      %v1654 = vld [vmem:[#allocation2 + $0x20] sm:$0xff]
      %v1655 = vld [vmem:[#allocation2 + $0x28] sm:$0xff]
      %v1656 = vld [vmem:[#allocation2 + $0x30] sm:$0xff]
      %1661 = vrot.lane.b32.xlu0 %v1639, 111
      %v1662 = vpop.permute.xlu0 %1661
      %1663 = vrot.lane.b32.xlu0 %v1640, 111
      %v1664 = vpop.permute.xlu0 %1663
      %1665 = vrot.lane.b32.xlu0 %v1641, 111
      %v1666 = vpop.permute.xlu0 %1665
      %1667 = vrot.lane.b32.xlu0 %v1642, 111
      %v1668 = vpop.permute.xlu0 %1667
      %v1669 = vsel %vm755, %v1662, %v1664
      %v1670 = vsel %vm755, %v1666, %v1668
      %v1677 = vmul.f32 %v1651, %v1662
      %v1678 = vmul.f32 %v1652, %v1669
      %v1679 = vmul.f32 %v1653, %v1664
      %v1680 = vmul.f32 %v1654, %v1666
      %v1681 = vmul.f32 %v1655, %v1670
      %v1682 = vmul.f32 %v1656, %v1668
      %1689 = vrot.lane.b32.xlu0 %v1677, 17
      %v1690 = vpop.permute.xlu0 %1689
      %1691 = vrot.lane.b32.xlu0 %v1678, 17
      %v1692 = vpop.permute.xlu0 %1691
      %1693 = vrot.lane.b32.xlu0 %v1679, 17
      %v1694 = vpop.permute.xlu0 %1693
      %1695 = vrot.lane.b32.xlu0 %v1680, 17
      %v1696 = vpop.permute.xlu0 %1695
      %1697 = vrot.lane.b32.xlu0 %v1681, 17
      %v1698 = vpop.permute.xlu0 %1697
      %1699 = vrot.lane.b32.xlu0 %v1682, 17
      %v1700 = vpop.permute.xlu0 %1699
      %v1701 = vsel %vm788, %v1690, %v1692
      %v1702 = vsel %vm788, %v1692, %v1694
      %v1703 = vsel %vm788, %v1696, %v1698
      %v1704 = vsel %vm788, %v1698, %v1700
      %1709 = vst [vmem:[#allocation4] sm:$0xff] %v1701
      %1710 = vst [vmem:[#allocation4 + $0x8] sm:$0xff] %v1702
      %1711 = vst [vmem:[#allocation4 + $0x40] sm:$0xff] %v1703
      %1712 = vst [vmem:[#allocation4 + $0x48] sm:$0xff] %v1704
      %v1713 = vld [vmem:[#allocation2] sm:$0xff]
      %v1714 = vld [vmem:[#allocation2 + $0x8] sm:$0xff]
      %v1715 = vld [vmem:[#allocation2 + $0x10] sm:$0xff]
      %v1716 = vld [vmem:[#allocation2 + $0x20] sm:$0xff]
      %v1717 = vld [vmem:[#allocation2 + $0x28] sm:$0xff]
      %v1718 = vld [vmem:[#allocation2 + $0x30] sm:$0xff]
      %1725 = vrot.lane.b32.xlu0 %v1713, 16
      %v1726 = vpop.permute.xlu0 %1725
      %1727 = vrot.lane.b32.xlu0 %v1714, 16
      %v1728 = vpop.permute.xlu0 %1727
      %1729 = vrot.lane.b32.xlu0 %v1715, 16
      %v1730 = vpop.permute.xlu0 %1729
      %1731 = vrot.lane.b32.xlu0 %v1716, 16
      %v1732 = vpop.permute.xlu0 %1731
      %1733 = vrot.lane.b32.xlu0 %v1717, 16
      %v1734 = vpop.permute.xlu0 %1733
      %1735 = vrot.lane.b32.xlu0 %v1718, 16
      %v1736 = vpop.permute.xlu0 %1735
      %v1737 = vsel %vm825, %v1726, %v1728
      %v1738 = vsel %vm825, %v1728, %v1730
      %v1739 = vsel %vm825, %v1732, %v1734
      %v1740 = vsel %vm825, %v1734, %v1736
      %1745 = vst [vmem:[#allocation4 + $0x80] sm:$0xff] %v1737
      %1746 = vst [vmem:[#allocation4 + $0x88] sm:$0xff] %v1738
      %1747 = vst [vmem:[#allocation4 + $0xc0] sm:$0xff] %v1739
      %1748 = vst [vmem:[#allocation4 + $0xc8] sm:$0xff] %v1740
      %v1749 = vld [vmem:[#allocation2] sm:$0xff]
      %v1750 = vld [vmem:[#allocation2 + $0x8] sm:$0xff]
      %v1751 = vld [vmem:[#allocation2 + $0x10] sm:$0xff]
      %v1752 = vld [vmem:[#allocation2 + $0x20] sm:$0xff]
      %v1753 = vld [vmem:[#allocation2 + $0x28] sm:$0xff]
      %v1754 = vld [vmem:[#allocation2 + $0x30] sm:$0xff]
      %1759 = vrot.lane.b32.xlu0 %v1643, 113
      %v1760 = vpop.permute.xlu0 %1759
      %1761 = vrot.lane.b32.xlu0 %v1644, 113
      %v1762 = vpop.permute.xlu0 %1761
      %1763 = vrot.lane.b32.xlu0 %v1645, 113
      %v1764 = vpop.permute.xlu0 %1763
      %1765 = vrot.lane.b32.xlu0 %v1646, 113
      %v1766 = vpop.permute.xlu0 %1765
      %v1767 = vsel %vm856, %v1760, %v1762
      %v1768 = vsel %vm856, %v1764, %v1766
      %v1775 = vmul.f32 %v1749, %v1760
      %v1776 = vmul.f32 %v1750, %v1767
      %v1777 = vmul.f32 %v1751, %v1762
      %v1778 = vmul.f32 %v1752, %v1764
      %v1779 = vmul.f32 %v1753, %v1768
      %v1780 = vmul.f32 %v1754, %v1766
      %1787 = vrot.lane.b32.xlu0 %v1775, 15
      %v1788 = vpop.permute.xlu0 %1787
      %1789 = vrot.lane.b32.xlu0 %v1776, 15
      %v1790 = vpop.permute.xlu0 %1789
      %1791 = vrot.lane.b32.xlu0 %v1777, 15
      %v1792 = vpop.permute.xlu0 %1791
      %1793 = vrot.lane.b32.xlu0 %v1778, 15
      %v1794 = vpop.permute.xlu0 %1793
      %1795 = vrot.lane.b32.xlu0 %v1779, 15
      %v1796 = vpop.permute.xlu0 %1795
      %1797 = vrot.lane.b32.xlu0 %v1780, 15
      %v1798 = vpop.permute.xlu0 %1797
      %v1799 = vsel %vm889, %v1788, %v1790
      %v1800 = vsel %vm889, %v1790, %v1792
      %v1801 = vsel %vm889, %v1794, %v1796
      %v1802 = vsel %vm889, %v1796, %v1798
      %1807 = vst [vmem:[#allocation4 + $0x100] sm:$0xff] %v1799
      %1808 = vst [vmem:[#allocation4 + $0x108] sm:$0xff] %v1800
      %1809 = vst [vmem:[#allocation4 + $0x140] sm:$0xff] %v1801
      %1810 = vst [vmem:[#allocation4 + $0x148] sm:$0xff] %v1802
      %v1811 = vld [vmem:[#allocation2] sm:$0xff]
      %v1812 = vld [vmem:[#allocation2 + $0x8] sm:$0xff]
      %v1813 = vld [vmem:[#allocation2 + $0x10] sm:$0xff]
      %v1814 = vld [vmem:[#allocation2 + $0x20] sm:$0xff]
      %v1815 = vld [vmem:[#allocation2 + $0x28] sm:$0xff]
      %v1816 = vld [vmem:[#allocation2 + $0x30] sm:$0xff]
      %1817 = vrot.lane.b32.xlu0 %v1639, 127
      %v1818 = vpop.permute.xlu0 %1817
      %1819 = vrot.lane.b32.xlu0 %v1640, 127
      %v1820 = vpop.permute.xlu0 %1819
      %1821 = vrot.lane.b32.xlu0 %v1641, 127
      %v1822 = vpop.permute.xlu0 %1821
      %1823 = vrot.lane.b32.xlu0 %v1642, 127
      %v1824 = vpop.permute.xlu0 %1823
      %v1825 = vsel %vm916, %v1818, %v1820
      %v1826 = vsel %vm916, %v1822, %v1824
      %v1833 = vmul.f32 %v1811, %v1818
      %v1834 = vmul.f32 %v1812, %v1825
      %v1835 = vmul.f32 %v1813, %v1820
      %v1836 = vmul.f32 %v1814, %v1822
      %v1837 = vmul.f32 %v1815, %v1826
      %v1838 = vmul.f32 %v1816, %v1824
      %1845 = vrot.lane.b32.xlu0 %v1833, 1
      %v1846 = vpop.permute.xlu0 %1845
      %1847 = vrot.lane.b32.xlu0 %v1834, 1
      %v1848 = vpop.permute.xlu0 %1847
      %1849 = vrot.lane.b32.xlu0 %v1835, 1
      %v1850 = vpop.permute.xlu0 %1849
      %1851 = vrot.lane.b32.xlu0 %v1836, 1
      %v1852 = vpop.permute.xlu0 %1851
      %1853 = vrot.lane.b32.xlu0 %v1837, 1
      %v1854 = vpop.permute.xlu0 %1853
      %1855 = vrot.lane.b32.xlu0 %v1838, 1
      %v1856 = vpop.permute.xlu0 %1855
      %v1857 = vsel %vm949, %v1846, %v1848
      %v1858 = vsel %vm949, %v1848, %v1850
      %v1859 = vsel %vm949, %v1852, %v1854
      %v1860 = vsel %vm949, %v1854, %v1856
      %1865 = vst [vmem:[#allocation4 + $0x180] sm:$0xff] %v1857
      %1866 = vst [vmem:[#allocation4 + $0x188] sm:$0xff] %v1858
      %1867 = vst [vmem:[#allocation4 + $0x1c0] sm:$0xff] %v1859
      %1868 = vst [vmem:[#allocation4 + $0x1c8] sm:$0xff] %v1860
      %v1869 = vld [vmem:[#allocation2 + $0x8] sm:$0xff]
      %v1870 = vld [vmem:[#allocation2 + $0x10] sm:$0xff]
      %v1871 = vld [vmem:[#allocation2 + $0x28] sm:$0xff]
      %v1872 = vld [vmem:[#allocation2 + $0x30] sm:$0xff]
      %1873 = vst [vmem:[#allocation4 + $0x200] sm:$0xff] %v1869
      %1874 = vst [vmem:[#allocation4 + $0x208] sm:$0xff] %v1870
      %1875 = vst [vmem:[#allocation4 + $0x240] sm:$0xff] %v1871
      %1876 = vst [vmem:[#allocation4 + $0x248] sm:$0xff] %v1872
      %v1877 = vld [vmem:[#allocation2 + $0x8] sm:$0xff]
      %v1878 = vld [vmem:[#allocation2 + $0x10] sm:$0xff]
      %v1879 = vld [vmem:[#allocation2 + $0x18] sm:$0xff]
      %v1880 = vld [vmem:[#allocation2 + $0x28] sm:$0xff]
      %v1881 = vld [vmem:[#allocation2 + $0x30] sm:$0xff]
      %v1882 = vld [vmem:[#allocation2 + $0x38] sm:$0xff]
      %1883 = vrot.lane.b32.xlu0 %v1643, 1
      %v1884 = vpop.permute.xlu0 %1883
      %1885 = vrot.lane.b32.xlu0 %v1644, 1
      %v1886 = vpop.permute.xlu0 %1885
      %1887 = vrot.lane.b32.xlu0 %v1645, 1
      %v1888 = vpop.permute.xlu0 %1887
      %1889 = vrot.lane.b32.xlu0 %v1646, 1
      %v1890 = vpop.permute.xlu0 %1889
      %v1891 = vsel %vm949, %v1884, %v1886
      %v1892 = vsel %vm949, %v1888, %v1890
      %v1899 = vmul.f32 %v1877, %v1884
      %v1900 = vmul.f32 %v1878, %v1891
      %v1901 = vmul.f32 %v1879, %v1886
      %v1902 = vmul.f32 %v1880, %v1888
      %v1903 = vmul.f32 %v1881, %v1892
      %v1904 = vmul.f32 %v1882, %v1890
      %1911 = vrot.lane.b32.xlu0 %v1899, 127
      %v1912 = vpop.permute.xlu0 %1911
      %1913 = vrot.lane.b32.xlu0 %v1900, 127
      %v1914 = vpop.permute.xlu0 %1913
      %1915 = vrot.lane.b32.xlu0 %v1901, 127
      %v1916 = vpop.permute.xlu0 %1915
      %1917 = vrot.lane.b32.xlu0 %v1902, 127
      %v1918 = vpop.permute.xlu0 %1917
      %1919 = vrot.lane.b32.xlu0 %v1903, 127
      %v1920 = vpop.permute.xlu0 %1919
      %1921 = vrot.lane.b32.xlu0 %v1904, 127
      %v1922 = vpop.permute.xlu0 %1921
      %v1923 = vsel %vm916, %v1912, %v1914
      %v1924 = vsel %vm916, %v1914, %v1916
      %v1925 = vsel %vm916, %v1918, %v1920
      %v1926 = vsel %vm916, %v1920, %v1922
      %1931 = vst [vmem:[#allocation4 + $0x280] sm:$0xff] %v1923
      %1932 = vst [vmem:[#allocation4 + $0x288] sm:$0xff] %v1924
      %1933 = vst [vmem:[#allocation4 + $0x2c0] sm:$0xff] %v1925
      %1934 = vst [vmem:[#allocation4 + $0x2c8] sm:$0xff] %v1926
      %v1935 = vld [vmem:[#allocation2 + $0x8] sm:$0xff]
      %v1936 = vld [vmem:[#allocation2 + $0x10] sm:$0xff]
      %v1937 = vld [vmem:[#allocation2 + $0x18] sm:$0xff]
      %v1938 = vld [vmem:[#allocation2 + $0x28] sm:$0xff]
      %v1939 = vld [vmem:[#allocation2 + $0x30] sm:$0xff]
      %v1940 = vld [vmem:[#allocation2 + $0x38] sm:$0xff]
      %1941 = vrot.lane.b32.xlu0 %v1639, 15
      %v1942 = vpop.permute.xlu0 %1941
      %1943 = vrot.lane.b32.xlu0 %v1640, 15
      %v1944 = vpop.permute.xlu0 %1943
      %1945 = vrot.lane.b32.xlu0 %v1641, 15
      %v1946 = vpop.permute.xlu0 %1945
      %1947 = vrot.lane.b32.xlu0 %v1642, 15
      %v1948 = vpop.permute.xlu0 %1947
      %v1949 = vsel %vm889, %v1942, %v1944
      %v1950 = vsel %vm889, %v1946, %v1948
      %v1957 = vmul.f32 %v1935, %v1942
      %v1958 = vmul.f32 %v1936, %v1949
      %v1959 = vmul.f32 %v1937, %v1944
      %v1960 = vmul.f32 %v1938, %v1946
      %v1961 = vmul.f32 %v1939, %v1950
      %v1962 = vmul.f32 %v1940, %v1948
      %1969 = vrot.lane.b32.xlu0 %v1957, 113
      %v1970 = vpop.permute.xlu0 %1969
      %1971 = vrot.lane.b32.xlu0 %v1958, 113
      %v1972 = vpop.permute.xlu0 %1971
      %1973 = vrot.lane.b32.xlu0 %v1959, 113
      %v1974 = vpop.permute.xlu0 %1973
      %1975 = vrot.lane.b32.xlu0 %v1960, 113
      %v1976 = vpop.permute.xlu0 %1975
      %1977 = vrot.lane.b32.xlu0 %v1961, 113
      %v1978 = vpop.permute.xlu0 %1977
      %1979 = vrot.lane.b32.xlu0 %v1962, 113
      %v1980 = vpop.permute.xlu0 %1979
      %v1981 = vsel %vm856, %v1970, %v1972
      %v1982 = vsel %vm856, %v1972, %v1974
      %v1983 = vsel %vm856, %v1976, %v1978
      %v1984 = vsel %vm856, %v1978, %v1980
      %1989 = vst [vmem:[#allocation4 + $0x300] sm:$0xff] %v1981
      %1990 = vst [vmem:[#allocation4 + $0x308] sm:$0xff] %v1982
      %1991 = vst [vmem:[#allocation4 + $0x340] sm:$0xff] %v1983
      %1992 = vst [vmem:[#allocation4 + $0x348] sm:$0xff] %v1984
      %v1993 = vld [vmem:[#allocation2 + $0x8] sm:$0xff]
      %v1994 = vld [vmem:[#allocation2 + $0x10] sm:$0xff]
      %v1995 = vld [vmem:[#allocation2 + $0x18] sm:$0xff]
      %v1996 = vld [vmem:[#allocation2 + $0x28] sm:$0xff]
      %v1997 = vld [vmem:[#allocation2 + $0x30] sm:$0xff]
      %v1998 = vld [vmem:[#allocation2 + $0x38] sm:$0xff]
      %2005 = vrot.lane.b32.xlu0 %v1993, 112
      %v2006 = vpop.permute.xlu0 %2005
      %2007 = vrot.lane.b32.xlu0 %v1994, 112
      %v2008 = vpop.permute.xlu0 %2007
      %2009 = vrot.lane.b32.xlu0 %v1995, 112
      %v2010 = vpop.permute.xlu0 %2009
      %2011 = vrot.lane.b32.xlu0 %v1996, 112
      %v2012 = vpop.permute.xlu0 %2011
      %2013 = vrot.lane.b32.xlu0 %v1997, 112
      %v2014 = vpop.permute.xlu0 %2013
      %2015 = vrot.lane.b32.xlu0 %v1998, 112
      %v2016 = vpop.permute.xlu0 %2015
      %v2017 = vsel %vm1110, %v2006, %v2008
      %v2018 = vsel %vm1110, %v2008, %v2010
      %v2019 = vsel %vm1110, %v2012, %v2014
      %v2020 = vsel %vm1110, %v2014, %v2016
      %2025 = vst [vmem:[#allocation4 + $0x380] sm:$0xff] %v2017
      %2026 = vst [vmem:[#allocation4 + $0x388] sm:$0xff] %v2018
      %2027 = vst [vmem:[#allocation4 + $0x3c0] sm:$0xff] %v2019
      %2028 = vst [vmem:[#allocation4 + $0x3c8] sm:$0xff] %v2020
      %v2029 = vld [vmem:[#allocation2 + $0x8] sm:$0xff]
      %v2030 = vld [vmem:[#allocation2 + $0x10] sm:$0xff]
      %v2031 = vld [vmem:[#allocation2 + $0x18] sm:$0xff]
      %v2032 = vld [vmem:[#allocation2 + $0x28] sm:$0xff]
      %v2033 = vld [vmem:[#allocation2 + $0x30] sm:$0xff]
      %v2034 = vld [vmem:[#allocation2 + $0x38] sm:$0xff]
      %2035 = vrot.lane.b32.xlu0 %v1643, 17
      %v2036 = vpop.permute.xlu0 %2035
      %2037 = vrot.lane.b32.xlu0 %v1644, 17
      %v2038 = vpop.permute.xlu0 %2037
      %2039 = vrot.lane.b32.xlu0 %v1645, 17
      %v2040 = vpop.permute.xlu0 %2039
      %2041 = vrot.lane.b32.xlu0 %v1646, 17
      %v2042 = vpop.permute.xlu0 %2041
      %v2043 = vsel %vm788, %v2036, %v2038
      %v2044 = vsel %vm788, %v2040, %v2042
      %v2051 = vmul.f32 %v2029, %v2036
      %v2052 = vmul.f32 %v2030, %v2043
      %v2053 = vmul.f32 %v2031, %v2038
      %v2054 = vmul.f32 %v2032, %v2040
      %v2055 = vmul.f32 %v2033, %v2044
      %v2056 = vmul.f32 %v2034, %v2042
      %2063 = vrot.lane.b32.xlu0 %v2051, 111
      %v2064 = vpop.permute.xlu0 %2063
      %2065 = vrot.lane.b32.xlu0 %v2052, 111
      %v2066 = vpop.permute.xlu0 %2065
      %2067 = vrot.lane.b32.xlu0 %v2053, 111
      %v2068 = vpop.permute.xlu0 %2067
      %2069 = vrot.lane.b32.xlu0 %v2054, 111
      %v2070 = vpop.permute.xlu0 %2069
      %2071 = vrot.lane.b32.xlu0 %v2055, 111
      %v2072 = vpop.permute.xlu0 %2071
      %2073 = vrot.lane.b32.xlu0 %v2056, 111
      %v2074 = vpop.permute.xlu0 %2073
      %v2075 = vsel %vm755, %v2064, %v2066
      %v2076 = vsel %vm755, %v2066, %v2068
      %v2077 = vsel %vm755, %v2070, %v2072
      %v2078 = vsel %vm755, %v2072, %v2074
      %2083 = vst [vmem:[#allocation4 + $0x400] sm:$0xff] %v2075
      %2084 = vst [vmem:[#allocation4 + $0x408] sm:$0xff] %v2076
      %2085 = vst [vmem:[#allocation4 + $0x440] sm:$0xff] %v2077
      %2086 = vst [vmem:[#allocation4 + $0x448] sm:$0xff] %v2078
      %v2087 = vld [vmem:[%s11] sm:$0xff]
      %v2088 = vld [vmem:[%s11 + $0x8] sm:$0xff]
      %v2089 = vld [vmem:[%s11 + $0x10] sm:$0xff]
      %v2090 = vld [vmem:[%s11 + $0x18] sm:$0xff]
      %v2091 = vld [vmem:[#allocation4] sm:$0xff]
      %v2092 = vld [vmem:[#allocation4 + $0x8] sm:$0xff]
      %v2093 = vld [vmem:[#allocation4 + $0x40] sm:$0xff]
      %v2094 = vld [vmem:[#allocation4 + $0x48] sm:$0xff]
      %v2095 = vld [vmem:[#allocation4 + $0x80] sm:$0xff]
      %v2096 = vld [vmem:[#allocation4 + $0x88] sm:$0xff]
      %v2097 = vld [vmem:[#allocation4 + $0xc0] sm:$0xff]
      %v2098 = vld [vmem:[#allocation4 + $0xc8] sm:$0xff]
      %v2099 = vld [vmem:[#allocation4 + $0x100] sm:$0xff]
      %v2100 = vld [vmem:[#allocation4 + $0x108] sm:$0xff]
      %v2101 = vld [vmem:[#allocation4 + $0x140] sm:$0xff]
      %v2102 = vld [vmem:[#allocation4 + $0x148] sm:$0xff]
      %v2103 = vld [vmem:[#allocation4 + $0x180] sm:$0xff]
      %v2104 = vld [vmem:[#allocation4 + $0x188] sm:$0xff]
      %v2105 = vld [vmem:[#allocation4 + $0x1c0] sm:$0xff]
      %v2106 = vld [vmem:[#allocation4 + $0x1c8] sm:$0xff]
      %v2107 = vld [vmem:[#allocation4 + $0x200] sm:$0xff]
      %v2108 = vld [vmem:[#allocation4 + $0x208] sm:$0xff]
      %v2109 = vld [vmem:[#allocation4 + $0x240] sm:$0xff]
      %v2110 = vld [vmem:[#allocation4 + $0x248] sm:$0xff]
      %v2111 = vld [vmem:[#allocation4 + $0x280] sm:$0xff]
      %v2112 = vld [vmem:[#allocation4 + $0x288] sm:$0xff]
      %v2113 = vld [vmem:[#allocation4 + $0x2c0] sm:$0xff]
      %v2114 = vld [vmem:[#allocation4 + $0x2c8] sm:$0xff]
      %v2115 = vld [vmem:[#allocation4 + $0x300] sm:$0xff]
      %v2116 = vld [vmem:[#allocation4 + $0x308] sm:$0xff]
      %v2117 = vld [vmem:[#allocation4 + $0x340] sm:$0xff]
      %v2118 = vld [vmem:[#allocation4 + $0x348] sm:$0xff]
      %v2119 = vld [vmem:[#allocation4 + $0x380] sm:$0xff]
      %v2120 = vld [vmem:[#allocation4 + $0x388] sm:$0xff]
      %v2121 = vld [vmem:[#allocation4 + $0x3c0] sm:$0xff]
      %v2122 = vld [vmem:[#allocation4 + $0x3c8] sm:$0xff]
      %v2123 = vld [vmem:[#allocation4 + $0x400] sm:$0xff]
      %v2124 = vld [vmem:[#allocation4 + $0x408] sm:$0xff]
      %v2125 = vld [vmem:[#allocation4 + $0x440] sm:$0xff]
      %v2126 = vld [vmem:[#allocation4 + $0x448] sm:$0xff]
      %v2127 = vld [vmem:[%s12] sm:$0xff]
      %v2128 = vld [vmem:[%s12 + $0x8] sm:$0xff]
      %2130 = vset.pattern.permute.xlu0 0
      %2131 = vperm.xlu0 %2130, %v2127
      %v2132 = vpop.permute.xlu0 %2131
      %2135 = vset.pattern.permute.xlu0 0
      %2136 = vperm.xlu0 %2135, %v2128
      %v2137 = vpop.permute.xlu0 %2136
      %v2140 = vsel %vm825, %v2088, 0
      %v2143 = vsel %vm825, %v2090, 0
      %2145 = vmatprep.subr.mxu0 %v2092
      %2146 = vmatpush1.msra.mxu0 %v2091
      %2147 = vmatprep.subr.mxu0 %v2094
      %2148 = vmatpush1.msra.mxu0 %v2093
      %2149 = vmatprep.subr.mxu0 %v2096
      %2150 = vmatpush1.msra.mxu0 %v2095
      %2151 = vmatprep.subr.mxu0 %v2098
      %2152 = vmatpush1.msra.mxu0 %v2097
      %2153 = vmatprep.subr.mxu0 %v2100
      %2154 = vmatpush1.msra.mxu0 %v2099
      %2155 = vmatprep.subr.mxu0 %v2102
      %2156 = vmatpush1.msra.mxu0 %v2101
      %2157 = vmatprep.subr.mxu0 %v2104
      %2158 = vmatpush1.msra.mxu0 %v2103
      %2159 = vmatprep.subr.mxu0 %v2106
      %2160 = vmatpush1.msra.mxu0 %v2105
      %2161 = vmatprep.subr.mxu0 %v2108
      %2162 = vmatpush1.msra.mxu0 %v2107
      %2163 = vmatprep.subr.mxu0 %v2110
      %2164 = vmatpush1.msra.mxu0 %v2109
      %2165 = vmatprep.subr.mxu0 %v2112
      %2166 = vmatpush1.msra.mxu0 %v2111
      %2167 = vmatprep.subr.mxu0 %v2114
      %2168 = vmatpush1.msra.mxu0 %v2113
      %2169 = vmatprep.subr.mxu0 %v2116
      %2170 = vmatpush1.msra.mxu0 %v2115
      %2171 = vmatprep.subr.mxu0 %v2118
      %2172 = vmatpush1.msra.mxu0 %v2117
      %2173 = vmatprep.subr.mxu0 %v2120
      %2174 = vmatpush1.msra.mxu0 %v2119
      %2175 = vmatprep.subr.mxu0 %v2122
      %2176 = vmatpush1.msra.mxu0 %v2121
      %2177 = vmatprep.subr.mxu0 %v2124
      %2178 = vmatpush1.msra.mxu0 %v2123
      %2179 = vmatprep.subr.mxu0 %v2126
      %2180 = vmatpush1.msra.mxu0 %v2125
      %2181 = vmatprep.subr.mxu0 0.0
      %2182 = vmatpush1.msra.mxu0 0.0
      %2183 = vmatprep.subr.mxu0 0.0
      %2184 = vmatpush1.msra.mxu0 0.0
      %2185 = vmatprep.subr.mxu0 0.0
      %2186 = vmatpush1.msra.mxu0 0.0
      %2187 = vmatprep.subr.mxu0 0.0
      %2188 = vmatpush1.msra.mxu0 0.0
      %2189 = vmatprep.subr.mxu0 0.0
      %2190 = vmatpush1.msra.mxu0 0.0
      %2191 = vmatprep.subr.mxu0 0.0
      %2192 = vmatpush1.msra.mxu0 0.0
      %2193 = vmatprep.subr.mxu0 0.0
      %2194 = vmatpush1.msra.mxu0 0.0
      %2195 = vmatprep.subr.mxu0 0.0
      %2196 = vmatpush1.msra.mxu0 0.0
      %2197 = vmatprep.subr.mxu0 0.0
      %2198 = vmatpush1.msra.mxu0 0.0
      %2199 = vmatprep.subr.mxu0 0.0
      %2200 = vmatpush1.msra.mxu0 0.0
      %2201 = vmatprep.subr.mxu0 0.0
      %2202 = vmatpush1.msra.mxu0 0.0
      %2203 = vmatprep.subr.mxu0 0.0
      %2204 = vmatpush1.msra.mxu0 0.0
      %2205 = vmatprep.subr.mxu0 0.0
      %2206 = vmatpush1.msra.mxu0 0.0
      %2207 = vmatprep.subr.mxu0 0.0
      %2208 = vmatpush1.msra.mxu0 0.0
      %2209 = vmatprep.mubr.f32.mxu0 %v2140
      %2210 = vmatmul.mubr.f32.gmra.mrb[0].mxu0 %v2087
      %v2211 = vpop.f32.mrb[0].mxu0
      %v2212 = vadd.f32 %v2132, %v2211
      %v2213 = vpop.f32.mrb[0].mxu0
      %v2214 = vadd.f32 %v2132, %v2213
      %2215 = vmatprep.mubr.f32.mxu0 %v2143
      %2216 = vmatmul.mubr.f32.gmra.mrb[0].mxu0 %v2089
      %v2217 = vpop.f32.mrb[0].mxu0
      %v2218 = vadd.f32 %v2137, %v2217
      %v2219 = vpop.f32.mrb[0].mxu0
      %v2220 = vadd.f32 %v2137, %v2219
      %2221 = vdwg.mxu0
      %v2222 = vadd.f32 %v2212, %v2214
      %2223 = vadd.xlane.f32.xlu0 %v2222
      %v2224 = vpop.xlane.xlu0 %2223
      %v2225 = vadd.f32 %v2218, %v2220
      %2226 = vadd.xlane.f32.xlu0 %v2225
      %v2227 = vpop.xlane.xlu0 %2226
      %v2228 = vmul.f32 %v2212, %v2212
      %v2229 = vmul.f32 %v2214, %v2214
      %v2230 = vmul.f32 %v2218, %v2218
      %v2231 = vmul.f32 %v2220, %v2220
      %v2232 = vadd.f32 %v2228, %v2229
      %2233 = vadd.xlane.f32.xlu0 %v2232
      %v2234 = vpop.xlane.xlu0 %2233
      %v2235 = vadd.f32 %v2230, %v2231
      %2236 = vadd.xlane.f32.xlu0 %v2235
      %v2237 = vpop.xlane.xlu0 %2236
      %2238 = vmatprep.subr.mxu0 0.0
      %2239 = vmatpush1.msra.mxu0 %v2224
      %2240 = vmatprep.subr.mxu0 0.0
      %2241 = vmatpush1.msra.mxu0 %v2227
      %2242 = vmatprep.subr.mxu0 0.0
      %2243 = vmatpush1.msra.mxu0 0.0
      %2244 = vmatprep.subr.mxu0 0.0
      %2245 = vmatpush1.msra.mxu0 0.0
      %2246 = vmatprep.subr.mxu0 0.0
      %2247 = vmatpush1.msra.mxu0 0.0
      %2248 = vmatprep.subr.mxu0 0.0
      %2249 = vmatpush1.msra.mxu0 0.0
      %2250 = vmatprep.subr.mxu0 0.0
      %2251 = vmatpush1.msra.mxu0 0.0
      %2252 = vmatprep.subr.mxu0 0.0
      %2253 = vmatpush1.msra.mxu0 0.0
      %2254 = vmatprep.subr.mxu0 0.0
      %2255 = vmatpush1.msra.mxu0 0.0
      %2256 = vmatprep.subr.mxu0 0.0
      %2257 = vmatpush1.msra.mxu0 0.0
      %2258 = vmatprep.subr.mxu0 0.0
      %2259 = vmatpush1.msra.mxu0 0.0
      %2260 = vmatprep.subr.mxu0 0.0
      %2261 = vmatpush1.msra.mxu0 0.0
      %2262 = vmatprep.subr.mxu0 0.0
      %2263 = vmatpush1.msra.mxu0 0.0
      %2264 = vmatprep.subr.mxu0 0.0
      %2265 = vmatpush1.msra.mxu0 0.0
      %2266 = vmatprep.subr.mxu0 0.0
      %2267 = vmatpush1.msra.mxu0 0.0
      %2268 = vmatprep.subr.mxu0 0.0
      %2269 = vmatpush1.msra.mxu0 0.0
      %2270 = vmatprep.subr.mxu0 0.0
      %2271 = vmatpush1.msra.mxu0 0.0
      %2272 = vmatprep.subr.mxu0 0.0
      %2273 = vmatpush1.msra.mxu0 0.0
      %2274 = vmatprep.subr.mxu0 0.0
      %2275 = vmatpush1.msra.mxu0 0.0
      %2276 = vmatprep.subr.mxu0 0.0
      %2277 = vmatpush1.msra.mxu0 0.0
      %2278 = vmatprep.subr.mxu0 0.0
      %2279 = vmatpush1.msra.mxu0 0.0
      %2280 = vmatprep.subr.mxu0 0.0
      %2281 = vmatpush1.msra.mxu0 0.0
      %2282 = vmatprep.subr.mxu0 0.0
      %2283 = vmatpush1.msra.mxu0 0.0
      %2284 = vmatprep.subr.mxu0 0.0
      %2285 = vmatpush1.msra.mxu0 0.0
      %2286 = vmatprep.subr.mxu0 0.0
      %2287 = vmatpush1.msra.mxu0 0.0
      %2288 = vmatprep.subr.mxu0 0.0
      %2289 = vmatpush1.msra.mxu0 0.0
      %2290 = vmatprep.subr.mxu0 0.0
      %2291 = vmatpush1.msra.mxu0 0.0
      %2292 = vmatprep.subr.mxu0 0.0
      %2293 = vmatpush1.msra.mxu0 0.0
      %2294 = vmatprep.subr.mxu0 0.0
      %2295 = vmatpush1.msra.mxu0 0.0
      %2296 = vmatprep.subr.mxu0 0.0
      %2297 = vmatpush1.msra.mxu0 0.0
      %2298 = vmatprep.subr.mxu0 0.0
      %2299 = vmatpush1.msra.mxu0 0.0
      %2300 = vmatprep.subr.mxu0 0.0
      %2301 = vmatpush1.msra.mxu0 0.0
      %2302 = vmatprep.mubr.f32.mxu0 0.0
      %2303 = vmatmul.mubr.f32.gmra.mrb[0].mxu0 %v1434
      %v2304 = vpop.f32.mrb[0].mxu0
      %v2305 = vadd.f32 0.0, %v2304
      %v2306 = vpop.f32.mrb[0].mxu0
      %2307 = vmatprep.mubr.f32.mxu0 0.0
      %2308 = vmatmul.mubr.f32.gmra.mrb[0].mxu0 %v1437
      %v2309 = vpop.f32.mrb[0].mxu0
      %v2310 = vadd.f32 0.0, %v2309
      %v2311 = vpop.f32.mrb[0].mxu0
      %2312 = vdwg.mxu0
      %v2313 = vmul.f32 %v2305, 0.001953125
      %v2314 = vmul.f32 %v2310, 0.001953125
      %2315 = vmatprep.subr.mxu0 0.0
      %2316 = vmatpush1.msra.mxu0 %v2234
      %2317 = vmatprep.subr.mxu0 0.0
      %2318 = vmatpush1.msra.mxu0 %v2237
      %2319 = vmatprep.subr.mxu0 0.0
      %2320 = vmatpush1.msra.mxu0 0.0
      %2321 = vmatprep.subr.mxu0 0.0
      %2322 = vmatpush1.msra.mxu0 0.0
      %2323 = vmatprep.subr.mxu0 0.0
      %2324 = vmatpush1.msra.mxu0 0.0
      %2325 = vmatprep.subr.mxu0 0.0
      %2326 = vmatpush1.msra.mxu0 0.0
      %2327 = vmatprep.subr.mxu0 0.0
      %2328 = vmatpush1.msra.mxu0 0.0
      %2329 = vmatprep.subr.mxu0 0.0
      %2330 = vmatpush1.msra.mxu0 0.0
      %2331 = vmatprep.subr.mxu0 0.0
      %2332 = vmatpush1.msra.mxu0 0.0
      %2333 = vmatprep.subr.mxu0 0.0
      %2334 = vmatpush1.msra.mxu0 0.0
      %2335 = vmatprep.subr.mxu0 0.0
      %2336 = vmatpush1.msra.mxu0 0.0
      %2337 = vmatprep.subr.mxu0 0.0
      %2338 = vmatpush1.msra.mxu0 0.0
      %2339 = vmatprep.subr.mxu0 0.0
      %2340 = vmatpush1.msra.mxu0 0.0
      %2341 = vmatprep.subr.mxu0 0.0
      %2342 = vmatpush1.msra.mxu0 0.0
      %2343 = vmatprep.subr.mxu0 0.0
      %2344 = vmatpush1.msra.mxu0 0.0
      %2345 = vmatprep.subr.mxu0 0.0
      %2346 = vmatpush1.msra.mxu0 0.0
      %2347 = vmatprep.subr.mxu0 0.0
      %2348 = vmatpush1.msra.mxu0 0.0
      %2349 = vmatprep.subr.mxu0 0.0
      %2350 = vmatpush1.msra.mxu0 0.0
      %2351 = vmatprep.subr.mxu0 0.0
      %2352 = vmatpush1.msra.mxu0 0.0
      %2353 = vmatprep.subr.mxu0 0.0
      %2354 = vmatpush1.msra.mxu0 0.0
      %2355 = vmatprep.subr.mxu0 0.0
      %2356 = vmatpush1.msra.mxu0 0.0
      %2357 = vmatprep.subr.mxu0 0.0
      %2358 = vmatpush1.msra.mxu0 0.0
      %2359 = vmatprep.subr.mxu0 0.0
      %2360 = vmatpush1.msra.mxu0 0.0
      %2361 = vmatprep.subr.mxu0 0.0
      %2362 = vmatpush1.msra.mxu0 0.0
      %2363 = vmatprep.subr.mxu0 0.0
      %2364 = vmatpush1.msra.mxu0 0.0
      %2365 = vmatprep.subr.mxu0 0.0
      %2366 = vmatpush1.msra.mxu0 0.0
      %2367 = vmatprep.subr.mxu0 0.0
      %2368 = vmatpush1.msra.mxu0 0.0
      %2369 = vmatprep.subr.mxu0 0.0
      %2370 = vmatpush1.msra.mxu0 0.0
      %2371 = vmatprep.subr.mxu0 0.0
      %2372 = vmatpush1.msra.mxu0 0.0
      %2373 = vmatprep.subr.mxu0 0.0
      %2374 = vmatpush1.msra.mxu0 0.0
      %2375 = vmatprep.subr.mxu0 0.0
      %2376 = vmatpush1.msra.mxu0 0.0
      %2377 = vmatprep.subr.mxu0 0.0
      %2378 = vmatpush1.msra.mxu0 0.0
      %2379 = vmatprep.mubr.f32.mxu0 0.0
      %2380 = vmatmul.mubr.f32.gmra.mrb[0].mxu0 %v1434
      %v2381 = vpop.f32.mrb[0].mxu0
      %v2382 = vadd.f32 0.0, %v2381
      %v2383 = vpop.f32.mrb[0].mxu0
      %2384 = vmatprep.mubr.f32.mxu0 0.0
      %2385 = vmatmul.mubr.f32.gmra.mrb[0].mxu0 %v1437
      %v2386 = vpop.f32.mrb[0].mxu0
      %v2387 = vadd.f32 0.0, %v2386
      %v2388 = vpop.f32.mrb[0].mxu0
      %2389 = vdwg.mxu0
      %v2390 = vmul.f32 %v2382, 0.001953125
      %v2391 = vmul.f32 %v2387, 0.001953125
      %v2392 = vmul.f32 %v2313, %v2313
      %v2393 = vmul.f32 %v2314, %v2314
      %v2394 = vsub.f32 %v2390, %v2392
      %v2395 = vsub.f32 %v2391, %v2393
      %v2396 = vadd.f32 %v2394, 1e-05
      %v2397 = vadd.f32 %v2395, 1e-05
      %v2398 = vrsqrt.pop %v2396
      %v2399 = vrsqrt.pop %v2397
      %v2400 = vmul.f32 %v2398, %v1316
      %v2401 = vmul.f32 %v2399, %v1317
      %v2402 = vmul.f32 %v2313, %v2400
      %v2403 = vmul.f32 %v2314, %v2401
      %v2404 = vsub.f32 %v1318, %v2402
      %v2405 = vsub.f32 %v1319, %v2403
      %2407 = vset.pattern.permute.xlu0 0
      %2408 = vperm.xlu0 %2407, %v2400
      %v2409 = vpop.permute.xlu0 %2408
      %2412 = vset.pattern.permute.xlu0 0
      %2413 = vperm.xlu0 %2412, %v2401
      %v2414 = vpop.permute.xlu0 %2413
      %v2416 = vmul.f32 %v2212, %v2409
      %v2417 = vmul.f32 %v2214, %v2409
      %v2418 = vmul.f32 %v2218, %v2414
      %v2419 = vmul.f32 %v2220, %v2414
      %2421 = vset.pattern.permute.xlu0 0
      %2422 = vperm.xlu0 %2421, %v2404
      %v2423 = vpop.permute.xlu0 %2422
      %2426 = vset.pattern.permute.xlu0 0
      %2427 = vperm.xlu0 %2426, %v2405
      %v2428 = vpop.permute.xlu0 %2427
      %v2430 = vadd.f32 %v2416, %v2423
      %v2431 = vadd.f32 %v2417, %v2423
      %v2432 = vadd.f32 %v2418, %v2428
      %v2433 = vadd.f32 %v2419, %v2428
      %v2434 = vmax.f32 %v2430, 0.0
      %v2435 = vmax.f32 %v2431, 0.0
      %v2436 = vmax.f32 %v2432, 0.0
      %v2437 = vmax.f32 %v2433, 0.0
      %v2438 = vld [vmem:[%s3] sm:$0xff]
      %v2439 = vld [vmem:[%s3 + $0x8] sm:$0xff]
      %v2440 = vld [vmem:[%s3 + $0x10] sm:$0xff]
      %v2441 = vld [vmem:[%s3 + $0x18] sm:$0xff]
      %v2442 = vld [vmem:[%s4] sm:$0xff]
      %v2443 = vld [vmem:[%s4 + $0x8] sm:$0xff]
      %v2444 = vld [vmem:[%s4 + $0x10] sm:$0xff]
      %v2445 = vld [vmem:[%s4 + $0x18] sm:$0xff]
      %2446 = vst [vmem:[#allocation2 + $0x8] sm:$0xff] %v2434
      %2447 = vst [vmem:[#allocation2 + $0x10] sm:$0xff] %v2435
      %2448 = vst [vmem:[#allocation2 + $0x28] sm:$0xff] %v2436
      %2449 = vst [vmem:[#allocation2 + $0x30] sm:$0xff] %v2437
      %v2450 = vld [vmem:[#allocation2] sm:$0xff]
      %v2451 = vld [vmem:[#allocation2 + $0x8] sm:$0xff]
      %v2452 = vld [vmem:[#allocation2 + $0x10] sm:$0xff]
      %v2453 = vld [vmem:[#allocation2 + $0x20] sm:$0xff]
      %v2454 = vld [vmem:[#allocation2 + $0x28] sm:$0xff]
      %v2455 = vld [vmem:[#allocation2 + $0x30] sm:$0xff]
      %2460 = vrot.lane.b32.xlu0 %v2438, 111
      %v2461 = vpop.permute.xlu0 %2460
      %2462 = vrot.lane.b32.xlu0 %v2439, 111
      %v2463 = vpop.permute.xlu0 %2462
      %2464 = vrot.lane.b32.xlu0 %v2440, 111
      %v2465 = vpop.permute.xlu0 %2464
      %2466 = vrot.lane.b32.xlu0 %v2441, 111
      %v2467 = vpop.permute.xlu0 %2466
      %v2468 = vsel %vm755, %v2461, %v2463
      %v2469 = vsel %vm755, %v2465, %v2467
      %v2476 = vmul.f32 %v2450, %v2461
      %v2477 = vmul.f32 %v2451, %v2468
      %v2478 = vmul.f32 %v2452, %v2463
      %v2479 = vmul.f32 %v2453, %v2465
      %v2480 = vmul.f32 %v2454, %v2469
      %v2481 = vmul.f32 %v2455, %v2467
      %2488 = vrot.lane.b32.xlu0 %v2476, 17
      %v2489 = vpop.permute.xlu0 %2488
      %2490 = vrot.lane.b32.xlu0 %v2477, 17
      %v2491 = vpop.permute.xlu0 %2490
      %2492 = vrot.lane.b32.xlu0 %v2478, 17
      %v2493 = vpop.permute.xlu0 %2492
      %2494 = vrot.lane.b32.xlu0 %v2479, 17
      %v2495 = vpop.permute.xlu0 %2494
      %2496 = vrot.lane.b32.xlu0 %v2480, 17
      %v2497 = vpop.permute.xlu0 %2496
      %2498 = vrot.lane.b32.xlu0 %v2481, 17
      %v2499 = vpop.permute.xlu0 %2498
      %v2500 = vsel %vm788, %v2489, %v2491
      %v2501 = vsel %vm788, %v2491, %v2493
      %v2502 = vsel %vm788, %v2495, %v2497
      %v2503 = vsel %vm788, %v2497, %v2499
      %2508 = vst [vmem:[#allocation4] sm:$0xff] %v2500
      %2509 = vst [vmem:[#allocation4 + $0x8] sm:$0xff] %v2501
      %2510 = vst [vmem:[#allocation4 + $0x40] sm:$0xff] %v2502
      %2511 = vst [vmem:[#allocation4 + $0x48] sm:$0xff] %v2503
      %v2512 = vld [vmem:[#allocation2] sm:$0xff]
      %v2513 = vld [vmem:[#allocation2 + $0x8] sm:$0xff]
      %v2514 = vld [vmem:[#allocation2 + $0x10] sm:$0xff]
      %v2515 = vld [vmem:[#allocation2 + $0x20] sm:$0xff]
      %v2516 = vld [vmem:[#allocation2 + $0x28] sm:$0xff]
      %v2517 = vld [vmem:[#allocation2 + $0x30] sm:$0xff]
      %2524 = vrot.lane.b32.xlu0 %v2512, 16
      %v2525 = vpop.permute.xlu0 %2524
      %2526 = vrot.lane.b32.xlu0 %v2513, 16
      %v2527 = vpop.permute.xlu0 %2526
      %2528 = vrot.lane.b32.xlu0 %v2514, 16
      %v2529 = vpop.permute.xlu0 %2528
      %2530 = vrot.lane.b32.xlu0 %v2515, 16
      %v2531 = vpop.permute.xlu0 %2530
      %2532 = vrot.lane.b32.xlu0 %v2516, 16
      %v2533 = vpop.permute.xlu0 %2532
      %2534 = vrot.lane.b32.xlu0 %v2517, 16
      %v2535 = vpop.permute.xlu0 %2534
      %v2536 = vsel %vm825, %v2525, %v2527
      %v2537 = vsel %vm825, %v2527, %v2529
      %v2538 = vsel %vm825, %v2531, %v2533
      %v2539 = vsel %vm825, %v2533, %v2535
      %2544 = vst [vmem:[#allocation4 + $0x80] sm:$0xff] %v2536
      %2545 = vst [vmem:[#allocation4 + $0x88] sm:$0xff] %v2537
      %2546 = vst [vmem:[#allocation4 + $0xc0] sm:$0xff] %v2538
      %2547 = vst [vmem:[#allocation4 + $0xc8] sm:$0xff] %v2539
      %v2548 = vld [vmem:[#allocation2] sm:$0xff]
      %v2549 = vld [vmem:[#allocation2 + $0x8] sm:$0xff]
      %v2550 = vld [vmem:[#allocation2 + $0x10] sm:$0xff]
      %v2551 = vld [vmem:[#allocation2 + $0x20] sm:$0xff]
      %v2552 = vld [vmem:[#allocation2 + $0x28] sm:$0xff]
      %v2553 = vld [vmem:[#allocation2 + $0x30] sm:$0xff]
      %2558 = vrot.lane.b32.xlu0 %v2442, 113
      %v2559 = vpop.permute.xlu0 %2558
      %2560 = vrot.lane.b32.xlu0 %v2443, 113
      %v2561 = vpop.permute.xlu0 %2560
      %2562 = vrot.lane.b32.xlu0 %v2444, 113
      %v2563 = vpop.permute.xlu0 %2562
      %2564 = vrot.lane.b32.xlu0 %v2445, 113
      %v2565 = vpop.permute.xlu0 %2564
      %v2566 = vsel %vm856, %v2559, %v2561
      %v2567 = vsel %vm856, %v2563, %v2565
      %v2574 = vmul.f32 %v2548, %v2559
      %v2575 = vmul.f32 %v2549, %v2566
      %v2576 = vmul.f32 %v2550, %v2561
      %v2577 = vmul.f32 %v2551, %v2563
      %v2578 = vmul.f32 %v2552, %v2567
      %v2579 = vmul.f32 %v2553, %v2565
      %2586 = vrot.lane.b32.xlu0 %v2574, 15
      %v2587 = vpop.permute.xlu0 %2586
      %2588 = vrot.lane.b32.xlu0 %v2575, 15
      %v2589 = vpop.permute.xlu0 %2588
      %2590 = vrot.lane.b32.xlu0 %v2576, 15
      %v2591 = vpop.permute.xlu0 %2590
      %2592 = vrot.lane.b32.xlu0 %v2577, 15
      %v2593 = vpop.permute.xlu0 %2592
      %2594 = vrot.lane.b32.xlu0 %v2578, 15
      %v2595 = vpop.permute.xlu0 %2594
      %2596 = vrot.lane.b32.xlu0 %v2579, 15
      %v2597 = vpop.permute.xlu0 %2596
      %v2598 = vsel %vm889, %v2587, %v2589
      %v2599 = vsel %vm889, %v2589, %v2591
      %v2600 = vsel %vm889, %v2593, %v2595
      %v2601 = vsel %vm889, %v2595, %v2597
      %2606 = vst [vmem:[#allocation4 + $0x100] sm:$0xff] %v2598
      %2607 = vst [vmem:[#allocation4 + $0x108] sm:$0xff] %v2599
      %2608 = vst [vmem:[#allocation4 + $0x140] sm:$0xff] %v2600
      %2609 = vst [vmem:[#allocation4 + $0x148] sm:$0xff] %v2601
      %v2610 = vld [vmem:[#allocation2] sm:$0xff]
      %v2611 = vld [vmem:[#allocation2 + $0x8] sm:$0xff]
      %v2612 = vld [vmem:[#allocation2 + $0x10] sm:$0xff]
      %v2613 = vld [vmem:[#allocation2 + $0x20] sm:$0xff]
      %v2614 = vld [vmem:[#allocation2 + $0x28] sm:$0xff]
      %v2615 = vld [vmem:[#allocation2 + $0x30] sm:$0xff]
      %2616 = vrot.lane.b32.xlu0 %v2438, 127
      %v2617 = vpop.permute.xlu0 %2616
      %2618 = vrot.lane.b32.xlu0 %v2439, 127
      %v2619 = vpop.permute.xlu0 %2618
      %2620 = vrot.lane.b32.xlu0 %v2440, 127
      %v2621 = vpop.permute.xlu0 %2620
      %2622 = vrot.lane.b32.xlu0 %v2441, 127
      %v2623 = vpop.permute.xlu0 %2622
      %v2624 = vsel %vm916, %v2617, %v2619
      %v2625 = vsel %vm916, %v2621, %v2623
      %v2632 = vmul.f32 %v2610, %v2617
      %v2633 = vmul.f32 %v2611, %v2624
      %v2634 = vmul.f32 %v2612, %v2619
      %v2635 = vmul.f32 %v2613, %v2621
      %v2636 = vmul.f32 %v2614, %v2625
      %v2637 = vmul.f32 %v2615, %v2623
      %2644 = vrot.lane.b32.xlu0 %v2632, 1
      %v2645 = vpop.permute.xlu0 %2644
      %2646 = vrot.lane.b32.xlu0 %v2633, 1
      %v2647 = vpop.permute.xlu0 %2646
      %2648 = vrot.lane.b32.xlu0 %v2634, 1
      %v2649 = vpop.permute.xlu0 %2648
      %2650 = vrot.lane.b32.xlu0 %v2635, 1
      %v2651 = vpop.permute.xlu0 %2650
      %2652 = vrot.lane.b32.xlu0 %v2636, 1
      %v2653 = vpop.permute.xlu0 %2652
      %2654 = vrot.lane.b32.xlu0 %v2637, 1
      %v2655 = vpop.permute.xlu0 %2654
      %v2656 = vsel %vm949, %v2645, %v2647
      %v2657 = vsel %vm949, %v2647, %v2649
      %v2658 = vsel %vm949, %v2651, %v2653
      %v2659 = vsel %vm949, %v2653, %v2655
      %2664 = vst [vmem:[#allocation4 + $0x180] sm:$0xff] %v2656
      %2665 = vst [vmem:[#allocation4 + $0x188] sm:$0xff] %v2657
      %2666 = vst [vmem:[#allocation4 + $0x1c0] sm:$0xff] %v2658
      %2667 = vst [vmem:[#allocation4 + $0x1c8] sm:$0xff] %v2659
      %v2668 = vld [vmem:[#allocation2 + $0x8] sm:$0xff]
      %v2669 = vld [vmem:[#allocation2 + $0x10] sm:$0xff]
      %v2670 = vld [vmem:[#allocation2 + $0x28] sm:$0xff]
      %v2671 = vld [vmem:[#allocation2 + $0x30] sm:$0xff]
      %2672 = vst [vmem:[#allocation4 + $0x200] sm:$0xff] %v2668
      %2673 = vst [vmem:[#allocation4 + $0x208] sm:$0xff] %v2669
      %2674 = vst [vmem:[#allocation4 + $0x240] sm:$0xff] %v2670
      %2675 = vst [vmem:[#allocation4 + $0x248] sm:$0xff] %v2671
      %v2676 = vld [vmem:[#allocation2 + $0x8] sm:$0xff]
      %v2677 = vld [vmem:[#allocation2 + $0x10] sm:$0xff]
      %v2678 = vld [vmem:[#allocation2 + $0x18] sm:$0xff]
      %v2679 = vld [vmem:[#allocation2 + $0x28] sm:$0xff]
      %v2680 = vld [vmem:[#allocation2 + $0x30] sm:$0xff]
      %v2681 = vld [vmem:[#allocation2 + $0x38] sm:$0xff]
      %2682 = vrot.lane.b32.xlu0 %v2442, 1
      %v2683 = vpop.permute.xlu0 %2682
      %2684 = vrot.lane.b32.xlu0 %v2443, 1
      %v2685 = vpop.permute.xlu0 %2684
      %2686 = vrot.lane.b32.xlu0 %v2444, 1
      %v2687 = vpop.permute.xlu0 %2686
      %2688 = vrot.lane.b32.xlu0 %v2445, 1
      %v2689 = vpop.permute.xlu0 %2688
      %v2690 = vsel %vm949, %v2683, %v2685
      %v2691 = vsel %vm949, %v2687, %v2689
      %v2698 = vmul.f32 %v2676, %v2683
      %v2699 = vmul.f32 %v2677, %v2690
      %v2700 = vmul.f32 %v2678, %v2685
      %v2701 = vmul.f32 %v2679, %v2687
      %v2702 = vmul.f32 %v2680, %v2691
      %v2703 = vmul.f32 %v2681, %v2689
      %2710 = vrot.lane.b32.xlu0 %v2698, 127
      %v2711 = vpop.permute.xlu0 %2710
      %2712 = vrot.lane.b32.xlu0 %v2699, 127
      %v2713 = vpop.permute.xlu0 %2712
      %2714 = vrot.lane.b32.xlu0 %v2700, 127
      %v2715 = vpop.permute.xlu0 %2714
      %2716 = vrot.lane.b32.xlu0 %v2701, 127
      %v2717 = vpop.permute.xlu0 %2716
      %2718 = vrot.lane.b32.xlu0 %v2702, 127
      %v2719 = vpop.permute.xlu0 %2718
      %2720 = vrot.lane.b32.xlu0 %v2703, 127
      %v2721 = vpop.permute.xlu0 %2720
      %v2722 = vsel %vm916, %v2711, %v2713
      %v2723 = vsel %vm916, %v2713, %v2715
      %v2724 = vsel %vm916, %v2717, %v2719
      %v2725 = vsel %vm916, %v2719, %v2721
      %2730 = vst [vmem:[#allocation4 + $0x280] sm:$0xff] %v2722
      %2731 = vst [vmem:[#allocation4 + $0x288] sm:$0xff] %v2723
      %2732 = vst [vmem:[#allocation4 + $0x2c0] sm:$0xff] %v2724
      %2733 = vst [vmem:[#allocation4 + $0x2c8] sm:$0xff] %v2725
      %v2734 = vld [vmem:[#allocation2 + $0x8] sm:$0xff]
      %v2735 = vld [vmem:[#allocation2 + $0x10] sm:$0xff]
      %v2736 = vld [vmem:[#allocation2 + $0x18] sm:$0xff]
      %v2737 = vld [vmem:[#allocation2 + $0x28] sm:$0xff]
      %v2738 = vld [vmem:[#allocation2 + $0x30] sm:$0xff]
      %v2739 = vld [vmem:[#allocation2 + $0x38] sm:$0xff]
      %2740 = vrot.lane.b32.xlu0 %v2438, 15
      %v2741 = vpop.permute.xlu0 %2740
      %2742 = vrot.lane.b32.xlu0 %v2439, 15
      %v2743 = vpop.permute.xlu0 %2742
      %2744 = vrot.lane.b32.xlu0 %v2440, 15
      %v2745 = vpop.permute.xlu0 %2744
      %2746 = vrot.lane.b32.xlu0 %v2441, 15
      %v2747 = vpop.permute.xlu0 %2746
      %v2748 = vsel %vm889, %v2741, %v2743
      %v2749 = vsel %vm889, %v2745, %v2747
      %v2756 = vmul.f32 %v2734, %v2741
      %v2757 = vmul.f32 %v2735, %v2748
      %v2758 = vmul.f32 %v2736, %v2743
      %v2759 = vmul.f32 %v2737, %v2745
      %v2760 = vmul.f32 %v2738, %v2749
      %v2761 = vmul.f32 %v2739, %v2747
      %2768 = vrot.lane.b32.xlu0 %v2756, 113
      %v2769 = vpop.permute.xlu0 %2768
      %2770 = vrot.lane.b32.xlu0 %v2757, 113
      %v2771 = vpop.permute.xlu0 %2770
      %2772 = vrot.lane.b32.xlu0 %v2758, 113
      %v2773 = vpop.permute.xlu0 %2772
      %2774 = vrot.lane.b32.xlu0 %v2759, 113
      %v2775 = vpop.permute.xlu0 %2774
      %2776 = vrot.lane.b32.xlu0 %v2760, 113
      %v2777 = vpop.permute.xlu0 %2776
      %2778 = vrot.lane.b32.xlu0 %v2761, 113
      %v2779 = vpop.permute.xlu0 %2778
      %v2780 = vsel %vm856, %v2769, %v2771
      %v2781 = vsel %vm856, %v2771, %v2773
      %v2782 = vsel %vm856, %v2775, %v2777
      %v2783 = vsel %vm856, %v2777, %v2779
      %2788 = vst [vmem:[#allocation4 + $0x300] sm:$0xff] %v2780
      %2789 = vst [vmem:[#allocation4 + $0x308] sm:$0xff] %v2781
      %2790 = vst [vmem:[#allocation4 + $0x340] sm:$0xff] %v2782
      %2791 = vst [vmem:[#allocation4 + $0x348] sm:$0xff] %v2783
      %v2792 = vld [vmem:[#allocation2 + $0x8] sm:$0xff]
      %v2793 = vld [vmem:[#allocation2 + $0x10] sm:$0xff]
      %v2794 = vld [vmem:[#allocation2 + $0x18] sm:$0xff]
      %v2795 = vld [vmem:[#allocation2 + $0x28] sm:$0xff]
      %v2796 = vld [vmem:[#allocation2 + $0x30] sm:$0xff]
      %v2797 = vld [vmem:[#allocation2 + $0x38] sm:$0xff]
      %2804 = vrot.lane.b32.xlu0 %v2792, 112
      %v2805 = vpop.permute.xlu0 %2804
      %2806 = vrot.lane.b32.xlu0 %v2793, 112
      %v2807 = vpop.permute.xlu0 %2806
      %2808 = vrot.lane.b32.xlu0 %v2794, 112
      %v2809 = vpop.permute.xlu0 %2808
      %2810 = vrot.lane.b32.xlu0 %v2795, 112
      %v2811 = vpop.permute.xlu0 %2810
      %2812 = vrot.lane.b32.xlu0 %v2796, 112
      %v2813 = vpop.permute.xlu0 %2812
      %2814 = vrot.lane.b32.xlu0 %v2797, 112
      %v2815 = vpop.permute.xlu0 %2814
      %v2816 = vsel %vm1110, %v2805, %v2807
      %v2817 = vsel %vm1110, %v2807, %v2809
      %v2818 = vsel %vm1110, %v2811, %v2813
      %v2819 = vsel %vm1110, %v2813, %v2815
      %2824 = vst [vmem:[#allocation4 + $0x380] sm:$0xff] %v2816
      %2825 = vst [vmem:[#allocation4 + $0x388] sm:$0xff] %v2817
      %2826 = vst [vmem:[#allocation4 + $0x3c0] sm:$0xff] %v2818
      %2827 = vst [vmem:[#allocation4 + $0x3c8] sm:$0xff] %v2819
      %v2828 = vld [vmem:[#allocation2 + $0x8] sm:$0xff]
      %v2829 = vld [vmem:[#allocation2 + $0x10] sm:$0xff]
      %v2830 = vld [vmem:[#allocation2 + $0x18] sm:$0xff]
      %v2831 = vld [vmem:[#allocation2 + $0x28] sm:$0xff]
      %v2832 = vld [vmem:[#allocation2 + $0x30] sm:$0xff]
      %v2833 = vld [vmem:[#allocation2 + $0x38] sm:$0xff]
      %2834 = vrot.lane.b32.xlu0 %v2442, 17
      %v2835 = vpop.permute.xlu0 %2834
      %2836 = vrot.lane.b32.xlu0 %v2443, 17
      %v2837 = vpop.permute.xlu0 %2836
      %2838 = vrot.lane.b32.xlu0 %v2444, 17
      %v2839 = vpop.permute.xlu0 %2838
      %2840 = vrot.lane.b32.xlu0 %v2445, 17
      %v2841 = vpop.permute.xlu0 %2840
      %v2842 = vsel %vm788, %v2835, %v2837
      %v2843 = vsel %vm788, %v2839, %v2841
      %v2850 = vmul.f32 %v2828, %v2835
      %v2851 = vmul.f32 %v2829, %v2842
      %v2852 = vmul.f32 %v2830, %v2837
      %v2853 = vmul.f32 %v2831, %v2839
      %v2854 = vmul.f32 %v2832, %v2843
      %v2855 = vmul.f32 %v2833, %v2841
      %2862 = vrot.lane.b32.xlu0 %v2850, 111
      %v2863 = vpop.permute.xlu0 %2862
      %2864 = vrot.lane.b32.xlu0 %v2851, 111
      %v2865 = vpop.permute.xlu0 %2864
      %2866 = vrot.lane.b32.xlu0 %v2852, 111
      %v2867 = vpop.permute.xlu0 %2866
      %2868 = vrot.lane.b32.xlu0 %v2853, 111
      %v2869 = vpop.permute.xlu0 %2868
      %2870 = vrot.lane.b32.xlu0 %v2854, 111
      %v2871 = vpop.permute.xlu0 %2870
      %2872 = vrot.lane.b32.xlu0 %v2855, 111
      %v2873 = vpop.permute.xlu0 %2872
      %v2874 = vsel %vm755, %v2863, %v2865
      %v2875 = vsel %vm755, %v2865, %v2867
      %v2876 = vsel %vm755, %v2869, %v2871
      %v2877 = vsel %vm755, %v2871, %v2873
      %2882 = vst [vmem:[#allocation4 + $0x400] sm:$0xff] %v2874
      %2883 = vst [vmem:[#allocation4 + $0x408] sm:$0xff] %v2875
      %2884 = vst [vmem:[#allocation4 + $0x440] sm:$0xff] %v2876
      %2885 = vst [vmem:[#allocation4 + $0x448] sm:$0xff] %v2877
      %v2886 = vld [vmem:[%s11] sm:$0xff]
      %v2887 = vld [vmem:[%s11 + $0x8] sm:$0xff]
      %v2888 = vld [vmem:[%s11 + $0x10] sm:$0xff]
      %v2889 = vld [vmem:[%s11 + $0x18] sm:$0xff]
      %v2890 = vld [vmem:[#allocation4] sm:$0xff]
      %v2891 = vld [vmem:[#allocation4 + $0x8] sm:$0xff]
      %v2892 = vld [vmem:[#allocation4 + $0x40] sm:$0xff]
      %v2893 = vld [vmem:[#allocation4 + $0x48] sm:$0xff]
      %v2894 = vld [vmem:[#allocation4 + $0x80] sm:$0xff]
      %v2895 = vld [vmem:[#allocation4 + $0x88] sm:$0xff]
      %v2896 = vld [vmem:[#allocation4 + $0xc0] sm:$0xff]
      %v2897 = vld [vmem:[#allocation4 + $0xc8] sm:$0xff]
      %v2898 = vld [vmem:[#allocation4 + $0x100] sm:$0xff]
      %v2899 = vld [vmem:[#allocation4 + $0x108] sm:$0xff]
      %v2900 = vld [vmem:[#allocation4 + $0x140] sm:$0xff]
      %v2901 = vld [vmem:[#allocation4 + $0x148] sm:$0xff]
      %v2902 = vld [vmem:[#allocation4 + $0x180] sm:$0xff]
      %v2903 = vld [vmem:[#allocation4 + $0x188] sm:$0xff]
      %v2904 = vld [vmem:[#allocation4 + $0x1c0] sm:$0xff]
      %v2905 = vld [vmem:[#allocation4 + $0x1c8] sm:$0xff]
      %v2906 = vld [vmem:[#allocation4 + $0x200] sm:$0xff]
      %v2907 = vld [vmem:[#allocation4 + $0x208] sm:$0xff]
      %v2908 = vld [vmem:[#allocation4 + $0x240] sm:$0xff]
      %v2909 = vld [vmem:[#allocation4 + $0x248] sm:$0xff]
      %v2910 = vld [vmem:[#allocation4 + $0x280] sm:$0xff]
      %v2911 = vld [vmem:[#allocation4 + $0x288] sm:$0xff]
      %v2912 = vld [vmem:[#allocation4 + $0x2c0] sm:$0xff]
      %v2913 = vld [vmem:[#allocation4 + $0x2c8] sm:$0xff]
      %v2914 = vld [vmem:[#allocation4 + $0x300] sm:$0xff]
      %v2915 = vld [vmem:[#allocation4 + $0x308] sm:$0xff]
      %v2916 = vld [vmem:[#allocation4 + $0x340] sm:$0xff]
      %v2917 = vld [vmem:[#allocation4 + $0x348] sm:$0xff]
      %v2918 = vld [vmem:[#allocation4 + $0x380] sm:$0xff]
      %v2919 = vld [vmem:[#allocation4 + $0x388] sm:$0xff]
      %v2920 = vld [vmem:[#allocation4 + $0x3c0] sm:$0xff]
      %v2921 = vld [vmem:[#allocation4 + $0x3c8] sm:$0xff]
      %v2922 = vld [vmem:[#allocation4 + $0x400] sm:$0xff]
      %v2923 = vld [vmem:[#allocation4 + $0x408] sm:$0xff]
      %v2924 = vld [vmem:[#allocation4 + $0x440] sm:$0xff]
      %v2925 = vld [vmem:[#allocation4 + $0x448] sm:$0xff]
      %v2926 = vld [vmem:[%s12] sm:$0xff]
      %v2927 = vld [vmem:[%s12 + $0x8] sm:$0xff]
      %2929 = vset.pattern.permute.xlu0 0
      %2930 = vperm.xlu0 %2929, %v2926
      %v2931 = vpop.permute.xlu0 %2930
      %2934 = vset.pattern.permute.xlu0 0
      %2935 = vperm.xlu0 %2934, %v2927
      %v2936 = vpop.permute.xlu0 %2935
      %v2939 = vsel %vm825, %v2887, 0
      %v2942 = vsel %vm825, %v2889, 0
      %2944 = vmatprep.subr.mxu0 %v2891
      %2945 = vmatpush1.msra.mxu0 %v2890
      %2946 = vmatprep.subr.mxu0 %v2893
      %2947 = vmatpush1.msra.mxu0 %v2892
      %2948 = vmatprep.subr.mxu0 %v2895
      %2949 = vmatpush1.msra.mxu0 %v2894
      %2950 = vmatprep.subr.mxu0 %v2897
      %2951 = vmatpush1.msra.mxu0 %v2896
      %2952 = vmatprep.subr.mxu0 %v2899
      %2953 = vmatpush1.msra.mxu0 %v2898
      %2954 = vmatprep.subr.mxu0 %v2901
      %2955 = vmatpush1.msra.mxu0 %v2900
      %2956 = vmatprep.subr.mxu0 %v2903
      %2957 = vmatpush1.msra.mxu0 %v2902
      %2958 = vmatprep.subr.mxu0 %v2905
      %2959 = vmatpush1.msra.mxu0 %v2904
      %2960 = vmatprep.subr.mxu0 %v2907
      %2961 = vmatpush1.msra.mxu0 %v2906
      %2962 = vmatprep.subr.mxu0 %v2909
      %2963 = vmatpush1.msra.mxu0 %v2908
      %2964 = vmatprep.subr.mxu0 %v2911
      %2965 = vmatpush1.msra.mxu0 %v2910
      %2966 = vmatprep.subr.mxu0 %v2913
      %2967 = vmatpush1.msra.mxu0 %v2912
      %2968 = vmatprep.subr.mxu0 %v2915
      %2969 = vmatpush1.msra.mxu0 %v2914
      %2970 = vmatprep.subr.mxu0 %v2917
      %2971 = vmatpush1.msra.mxu0 %v2916
      %2972 = vmatprep.subr.mxu0 %v2919
      %2973 = vmatpush1.msra.mxu0 %v2918
      %2974 = vmatprep.subr.mxu0 %v2921
      %2975 = vmatpush1.msra.mxu0 %v2920
      %2976 = vmatprep.subr.mxu0 %v2923
      %2977 = vmatpush1.msra.mxu0 %v2922
      %2978 = vmatprep.subr.mxu0 %v2925
      %2979 = vmatpush1.msra.mxu0 %v2924
      %2980 = vmatprep.subr.mxu0 0.0
      %2981 = vmatpush1.msra.mxu0 0.0
      %2982 = vmatprep.subr.mxu0 0.0
      %2983 = vmatpush1.msra.mxu0 0.0
      %2984 = vmatprep.subr.mxu0 0.0
      %2985 = vmatpush1.msra.mxu0 0.0
      %2986 = vmatprep.subr.mxu0 0.0
      %2987 = vmatpush1.msra.mxu0 0.0
      %2988 = vmatprep.subr.mxu0 0.0
      %2989 = vmatpush1.msra.mxu0 0.0
      %2990 = vmatprep.subr.mxu0 0.0
      %2991 = vmatpush1.msra.mxu0 0.0
      %2992 = vmatprep.subr.mxu0 0.0
      %2993 = vmatpush1.msra.mxu0 0.0
      %2994 = vmatprep.subr.mxu0 0.0
      %2995 = vmatpush1.msra.mxu0 0.0
      %2996 = vmatprep.subr.mxu0 0.0
      %2997 = vmatpush1.msra.mxu0 0.0
      %2998 = vmatprep.subr.mxu0 0.0
      %2999 = vmatpush1.msra.mxu0 0.0
      %3000 = vmatprep.subr.mxu0 0.0
      %3001 = vmatpush1.msra.mxu0 0.0
      %3002 = vmatprep.subr.mxu0 0.0
      %3003 = vmatpush1.msra.mxu0 0.0
      %3004 = vmatprep.subr.mxu0 0.0
      %3005 = vmatpush1.msra.mxu0 0.0
      %3006 = vmatprep.subr.mxu0 0.0
      %3007 = vmatpush1.msra.mxu0 0.0
      %3008 = vmatprep.mubr.f32.mxu0 %v2939
      %3009 = vmatmul.mubr.f32.gmra.mrb[0].mxu0 %v2886
      %v3010 = vpop.f32.mrb[0].mxu0
      %v3011 = vadd.f32 %v2931, %v3010
      %v3012 = vpop.f32.mrb[0].mxu0
      %v3013 = vadd.f32 %v2931, %v3012
      %3014 = vmatprep.mubr.f32.mxu0 %v2942
      %3015 = vmatmul.mubr.f32.gmra.mrb[0].mxu0 %v2888
      %v3016 = vpop.f32.mrb[0].mxu0
      %v3017 = vadd.f32 %v2936, %v3016
      %v3018 = vpop.f32.mrb[0].mxu0
      %v3019 = vadd.f32 %v2936, %v3018
      %3020 = vdwg.mxu0
      %v3021 = vadd.f32 %v1407, %v3011
      %v3022 = vadd.f32 %v1409, %v3013
      %v3023 = vadd.f32 %v1413, %v3017
      %v3024 = vadd.f32 %v1415, %v3019
      %v3025 = vld [vmem:[%s21] sm:$0xff]
      %v3026 = vld [vmem:[%s21 + $0x8] sm:$0xff]
      %v3027 = vld [vmem:[%s22] sm:$0xff]
      %v3028 = vld [vmem:[%s22 + $0x8] sm:$0xff]
      %v3029 = vadd.f32 %v3021, %v3022
      %3030 = vadd.xlane.f32.xlu0 %v3029
      %v3031 = vpop.xlane.xlu0 %3030
      %v3032 = vadd.f32 %v3023, %v3024
      %3033 = vadd.xlane.f32.xlu0 %v3032
      %v3034 = vpop.xlane.xlu0 %3033
      %v3035 = vmul.f32 %v3021, %v3021
      %v3036 = vmul.f32 %v3022, %v3022
      %v3037 = vmul.f32 %v3023, %v3023
      %v3038 = vmul.f32 %v3024, %v3024
      %v3039 = vadd.f32 %v3035, %v3036
      %3040 = vadd.xlane.f32.xlu0 %v3039
      %v3041 = vpop.xlane.xlu0 %3040
      %v3042 = vadd.f32 %v3037, %v3038
      %3043 = vadd.xlane.f32.xlu0 %v3042
      %v3044 = vpop.xlane.xlu0 %3043
      %3045 = vmatprep.subr.mxu0 0.0
      %3046 = vmatpush1.msra.mxu0 %v3031
      %3047 = vmatprep.subr.mxu0 0.0
      %3048 = vmatpush1.msra.mxu0 %v3034
      %3049 = vmatprep.subr.mxu0 0.0
      %3050 = vmatpush1.msra.mxu0 0.0
      %3051 = vmatprep.subr.mxu0 0.0
      %3052 = vmatpush1.msra.mxu0 0.0
      %3053 = vmatprep.subr.mxu0 0.0
      %3054 = vmatpush1.msra.mxu0 0.0
      %3055 = vmatprep.subr.mxu0 0.0
      %3056 = vmatpush1.msra.mxu0 0.0
      %3057 = vmatprep.subr.mxu0 0.0
      %3058 = vmatpush1.msra.mxu0 0.0
      %3059 = vmatprep.subr.mxu0 0.0
      %3060 = vmatpush1.msra.mxu0 0.0
      %3061 = vmatprep.subr.mxu0 0.0
      %3062 = vmatpush1.msra.mxu0 0.0
      %3063 = vmatprep.subr.mxu0 0.0
      %3064 = vmatpush1.msra.mxu0 0.0
      %3065 = vmatprep.subr.mxu0 0.0
      %3066 = vmatpush1.msra.mxu0 0.0
      %3067 = vmatprep.subr.mxu0 0.0
      %3068 = vmatpush1.msra.mxu0 0.0
      %3069 = vmatprep.subr.mxu0 0.0
      %3070 = vmatpush1.msra.mxu0 0.0
      %3071 = vmatprep.subr.mxu0 0.0
      %3072 = vmatpush1.msra.mxu0 0.0
      %3073 = vmatprep.subr.mxu0 0.0
      %3074 = vmatpush1.msra.mxu0 0.0
      %3075 = vmatprep.subr.mxu0 0.0
      %3076 = vmatpush1.msra.mxu0 0.0
      %3077 = vmatprep.subr.mxu0 0.0
      %3078 = vmatpush1.msra.mxu0 0.0
      %3079 = vmatprep.subr.mxu0 0.0
      %3080 = vmatpush1.msra.mxu0 0.0
      %3081 = vmatprep.subr.mxu0 0.0
      %3082 = vmatpush1.msra.mxu0 0.0
      %3083 = vmatprep.subr.mxu0 0.0
      %3084 = vmatpush1.msra.mxu0 0.0
      %3085 = vmatprep.subr.mxu0 0.0
      %3086 = vmatpush1.msra.mxu0 0.0
      %3087 = vmatprep.subr.mxu0 0.0
      %3088 = vmatpush1.msra.mxu0 0.0
      %3089 = vmatprep.subr.mxu0 0.0
      %3090 = vmatpush1.msra.mxu0 0.0
      %3091 = vmatprep.subr.mxu0 0.0
      %3092 = vmatpush1.msra.mxu0 0.0
      %3093 = vmatprep.subr.mxu0 0.0
      %3094 = vmatpush1.msra.mxu0 0.0
      %3095 = vmatprep.subr.mxu0 0.0
      %3096 = vmatpush1.msra.mxu0 0.0
      %3097 = vmatprep.subr.mxu0 0.0
      %3098 = vmatpush1.msra.mxu0 0.0
      %3099 = vmatprep.subr.mxu0 0.0
      %3100 = vmatpush1.msra.mxu0 0.0
      %3101 = vmatprep.subr.mxu0 0.0
      %3102 = vmatpush1.msra.mxu0 0.0
      %3103 = vmatprep.subr.mxu0 0.0
      %3104 = vmatpush1.msra.mxu0 0.0
      %3105 = vmatprep.subr.mxu0 0.0
      %3106 = vmatpush1.msra.mxu0 0.0
      %3107 = vmatprep.subr.mxu0 0.0
      %3108 = vmatpush1.msra.mxu0 0.0
      %3109 = vmatprep.mubr.f32.mxu0 0.0
      %3110 = vmatmul.mubr.f32.gmra.mrb[0].mxu0 %v1434
      %v3111 = vpop.f32.mrb[0].mxu0
      %v3112 = vadd.f32 0.0, %v3111
      %v3113 = vpop.f32.mrb[0].mxu0
      %3114 = vmatprep.mubr.f32.mxu0 0.0
      %3115 = vmatmul.mubr.f32.gmra.mrb[0].mxu0 %v1437
      %v3116 = vpop.f32.mrb[0].mxu0
      %v3117 = vadd.f32 0.0, %v3116
      %v3118 = vpop.f32.mrb[0].mxu0
      %3119 = vdwg.mxu0
      %v3120 = vmul.f32 %v3112, 0.001953125
      %v3121 = vmul.f32 %v3117, 0.001953125
      %3122 = vmatprep.subr.mxu0 0.0
      %3123 = vmatpush1.msra.mxu0 %v3041
      %3124 = vmatprep.subr.mxu0 0.0
      %3125 = vmatpush1.msra.mxu0 %v3044
      %3126 = vmatprep.subr.mxu0 0.0
      %3127 = vmatpush1.msra.mxu0 0.0
      %3128 = vmatprep.subr.mxu0 0.0
      %3129 = vmatpush1.msra.mxu0 0.0
      %3130 = vmatprep.subr.mxu0 0.0
      %3131 = vmatpush1.msra.mxu0 0.0
      %3132 = vmatprep.subr.mxu0 0.0
      %3133 = vmatpush1.msra.mxu0 0.0
      %3134 = vmatprep.subr.mxu0 0.0
      %3135 = vmatpush1.msra.mxu0 0.0
      %3136 = vmatprep.subr.mxu0 0.0
      %3137 = vmatpush1.msra.mxu0 0.0
      %3138 = vmatprep.subr.mxu0 0.0
      %3139 = vmatpush1.msra.mxu0 0.0
      %3140 = vmatprep.subr.mxu0 0.0
      %3141 = vmatpush1.msra.mxu0 0.0
      %3142 = vmatprep.subr.mxu0 0.0
      %3143 = vmatpush1.msra.mxu0 0.0
      %3144 = vmatprep.subr.mxu0 0.0
      %3145 = vmatpush1.msra.mxu0 0.0
      %3146 = vmatprep.subr.mxu0 0.0
      %3147 = vmatpush1.msra.mxu0 0.0
      %3148 = vmatprep.subr.mxu0 0.0
      %3149 = vmatpush1.msra.mxu0 0.0
      %3150 = vmatprep.subr.mxu0 0.0
      %3151 = vmatpush1.msra.mxu0 0.0
      %3152 = vmatprep.subr.mxu0 0.0
      %3153 = vmatpush1.msra.mxu0 0.0
      %3154 = vmatprep.subr.mxu0 0.0
      %3155 = vmatpush1.msra.mxu0 0.0
      %3156 = vmatprep.subr.mxu0 0.0
      %3157 = vmatpush1.msra.mxu0 0.0
      %3158 = vmatprep.subr.mxu0 0.0
      %3159 = vmatpush1.msra.mxu0 0.0
      %3160 = vmatprep.subr.mxu0 0.0
      %3161 = vmatpush1.msra.mxu0 0.0
      %3162 = vmatprep.subr.mxu0 0.0
      %3163 = vmatpush1.msra.mxu0 0.0
      %3164 = vmatprep.subr.mxu0 0.0
      %3165 = vmatpush1.msra.mxu0 0.0
      %3166 = vmatprep.subr.mxu0 0.0
      %3167 = vmatpush1.msra.mxu0 0.0
      %3168 = vmatprep.subr.mxu0 0.0
      %3169 = vmatpush1.msra.mxu0 0.0
      %3170 = vmatprep.subr.mxu0 0.0
      %3171 = vmatpush1.msra.mxu0 0.0
      %3172 = vmatprep.subr.mxu0 0.0
      %3173 = vmatpush1.msra.mxu0 0.0
      %3174 = vmatprep.subr.mxu0 0.0
      %3175 = vmatpush1.msra.mxu0 0.0
      %3176 = vmatprep.subr.mxu0 0.0
      %3177 = vmatpush1.msra.mxu0 0.0
      %3178 = vmatprep.subr.mxu0 0.0
      %3179 = vmatpush1.msra.mxu0 0.0
      %3180 = vmatprep.subr.mxu0 0.0
      %3181 = vmatpush1.msra.mxu0 0.0
      %3182 = vmatprep.subr.mxu0 0.0
      %3183 = vmatpush1.msra.mxu0 0.0
      %3184 = vmatprep.subr.mxu0 0.0
      %3185 = vmatpush1.msra.mxu0 0.0
      %3186 = vmatprep.mubr.f32.mxu0 0.0
      %3187 = vmatmul.mubr.f32.gmra.mrb[0].mxu0 %v1434
      %v3188 = vpop.f32.mrb[0].mxu0
      %v3189 = vadd.f32 0.0, %v3188
      %v3190 = vpop.f32.mrb[0].mxu0
      %3191 = vmatprep.mubr.f32.mxu0 0.0
      %3192 = vmatmul.mubr.f32.gmra.mrb[0].mxu0 %v1437
      %v3193 = vpop.f32.mrb[0].mxu0
      %v3194 = vadd.f32 0.0, %v3193
      %v3195 = vpop.f32.mrb[0].mxu0
      %3196 = vdwg.mxu0
      %v3197 = vmul.f32 %v3189, 0.001953125
      %v3198 = vmul.f32 %v3194, 0.001953125
      %v3199 = vmul.f32 %v3120, %v3120
      %v3200 = vmul.f32 %v3121, %v3121
      %v3201 = vsub.f32 %v3197, %v3199
      %v3202 = vsub.f32 %v3198, %v3200
      %v3203 = vadd.f32 %v3201, 1e-05
      %v3204 = vadd.f32 %v3202, 1e-05
      %v3205 = vrsqrt.pop %v3203
      %v3206 = vrsqrt.pop %v3204
      %v3207 = vmul.f32 %v3205, %v3025
      %v3208 = vmul.f32 %v3206, %v3026
      %v3209 = vmul.f32 %v3120, %v3207
      %v3210 = vmul.f32 %v3121, %v3208
      %v3211 = vsub.f32 %v3027, %v3209
      %v3212 = vsub.f32 %v3028, %v3210
      %3214 = vset.pattern.permute.xlu0 0
      %3215 = vperm.xlu0 %3214, %v3207
      %v3216 = vpop.permute.xlu0 %3215
      %3219 = vset.pattern.permute.xlu0 0
      %3220 = vperm.xlu0 %3219, %v3208
      %v3221 = vpop.permute.xlu0 %3220
      %v3223 = vmul.f32 %v3021, %v3216
      %v3224 = vmul.f32 %v3022, %v3216
      %v3225 = vmul.f32 %v3023, %v3221
      %v3226 = vmul.f32 %v3024, %v3221
      %3228 = vset.pattern.permute.xlu0 0
      %3229 = vperm.xlu0 %3228, %v3211
      %v3230 = vpop.permute.xlu0 %3229
      %3233 = vset.pattern.permute.xlu0 0
      %3234 = vperm.xlu0 %3233, %v3212
      %v3235 = vpop.permute.xlu0 %3234
      %v3237 = vadd.f32 %v3223, %v3230
      %v3238 = vadd.f32 %v3224, %v3230
      %v3239 = vadd.f32 %v3225, %v3235
      %v3240 = vadd.f32 %v3226, %v3235
      %v3241 = vmax.f32 %v3237, 0.0
      %v3242 = vmax.f32 %v3238, 0.0
      %v3243 = vmax.f32 %v3239, 0.0
      %v3244 = vmax.f32 %v3240, 0.0
      %v3245 = vld [vmem:[%s2] sm:$0xff]
      %v3246 = vld [vmem:[%s2 + $0x8] sm:$0xff]
      %v3247 = vld [vmem:[%s2 + $0x10] sm:$0xff]
      %v3248 = vld [vmem:[%s2 + $0x18] sm:$0xff]
      %v3249 = vld [vmem:[%s2 + $0x20] sm:$0xff]
      %v3250 = vld [vmem:[%s2 + $0x28] sm:$0xff]
      %v3251 = vld [vmem:[%s2 + $0x30] sm:$0xff]
      %v3252 = vld [vmem:[%s2 + $0x38] sm:$0xff]
      %v3253 = vld [vmem:[%s2 + $0x40] sm:$0xff]
      %v3254 = vld [vmem:[%s2 + $0x48] sm:$0xff]
      %v3255 = vld [vmem:[%s2 + $0x50] sm:$0xff]
      %v3256 = vld [vmem:[%s2 + $0x58] sm:$0xff]
      %v3257 = vld [vmem:[%s2 + $0x60] sm:$0xff]
      %v3258 = vld [vmem:[%s2 + $0x68] sm:$0xff]
      %v3259 = vld [vmem:[%s2 + $0x70] sm:$0xff]
      %v3260 = vld [vmem:[%s2 + $0x78] sm:$0xff]
      %v3261 = vld [vmem:[%s2 + $0x80] sm:$0xff]
      %v3262 = vld [vmem:[%s2 + $0x88] sm:$0xff]
      %v3263 = vld [vmem:[%s2 + $0x90] sm:$0xff]
      %v3264 = vld [vmem:[%s2 + $0x98] sm:$0xff]
      %v3265 = vld [vmem:[%s2 + $0xa0] sm:$0xff]
      %v3266 = vld [vmem:[%s2 + $0xa8] sm:$0xff]
      %v3267 = vld [vmem:[%s2 + $0xb0] sm:$0xff]
      %v3268 = vld [vmem:[%s2 + $0xb8] sm:$0xff]
      %v3269 = vld [vmem:[%s2 + $0xc0] sm:$0xff]
      %v3270 = vld [vmem:[%s2 + $0xc8] sm:$0xff]
      %v3271 = vld [vmem:[%s2 + $0xd0] sm:$0xff]
      %v3272 = vld [vmem:[%s2 + $0xd8] sm:$0xff]
      %v3273 = vld [vmem:[%s2 + $0xe0] sm:$0xff]
      %v3274 = vld [vmem:[%s2 + $0xe8] sm:$0xff]
      %v3275 = vld [vmem:[%s2 + $0xf0] sm:$0xff]
      %v3276 = vld [vmem:[%s2 + $0xf8] sm:$0xff]
      %v3277 = vld [vmem:[%s2 + $0x100] sm:$0xff]
      %v3278 = vld [vmem:[%s2 + $0x108] sm:$0xff]
      %v3279 = vld [vmem:[%s2 + $0x110] sm:$0xff]
      %v3280 = vld [vmem:[%s2 + $0x118] sm:$0xff]
      %v3281 = vld [vmem:[%s2 + $0x120] sm:$0xff]
      %v3282 = vld [vmem:[%s2 + $0x128] sm:$0xff]
      %v3283 = vld [vmem:[%s2 + $0x130] sm:$0xff]
      %v3284 = vld [vmem:[%s2 + $0x138] sm:$0xff]
      %v3285 = vld [vmem:[%s2 + $0x140] sm:$0xff]
      %v3286 = vld [vmem:[%s2 + $0x148] sm:$0xff]
      %v3287 = vld [vmem:[%s2 + $0x150] sm:$0xff]
      %v3288 = vld [vmem:[%s2 + $0x158] sm:$0xff]
      %v3289 = vld [vmem:[%s2 + $0x160] sm:$0xff]
      %v3290 = vld [vmem:[%s2 + $0x168] sm:$0xff]
      %v3291 = vld [vmem:[%s2 + $0x170] sm:$0xff]
      %v3292 = vld [vmem:[%s2 + $0x178] sm:$0xff]
      %v3293 = vld [vmem:[%s2 + $0x180] sm:$0xff]
      %v3294 = vld [vmem:[%s2 + $0x188] sm:$0xff]
      %v3295 = vld [vmem:[%s2 + $0x190] sm:$0xff]
      %v3296 = vld [vmem:[%s2 + $0x198] sm:$0xff]
      %v3297 = vld [vmem:[%s2 + $0x1a0] sm:$0xff]
      %v3298 = vld [vmem:[%s2 + $0x1a8] sm:$0xff]
      %v3299 = vld [vmem:[%s2 + $0x1b0] sm:$0xff]
      %v3300 = vld [vmem:[%s2 + $0x1b8] sm:$0xff]
      %v3301 = vld [vmem:[%s2 + $0x1c0] sm:$0xff]
      %v3302 = vld [vmem:[%s2 + $0x1c8] sm:$0xff]
      %v3303 = vld [vmem:[%s2 + $0x1d0] sm:$0xff]
      %v3304 = vld [vmem:[%s2 + $0x1d8] sm:$0xff]
      %v3305 = vld [vmem:[%s2 + $0x1e0] sm:$0xff]
      %v3306 = vld [vmem:[%s2 + $0x1e8] sm:$0xff]
      %v3307 = vld [vmem:[%s2 + $0x1f0] sm:$0xff]
      %v3308 = vld [vmem:[%s2 + $0x1f8] sm:$0xff]
      %v3309 = vld [vmem:[%s2 + $0x200] sm:$0xff]
      %v3310 = vld [vmem:[%s2 + $0x208] sm:$0xff]
      %v3311 = vld [vmem:[%s2 + $0x210] sm:$0xff]
      %v3312 = vld [vmem:[%s2 + $0x218] sm:$0xff]
      %v3313 = vld [vmem:[%s2 + $0x220] sm:$0xff]
      %v3314 = vld [vmem:[%s2 + $0x228] sm:$0xff]
      %v3315 = vld [vmem:[%s2 + $0x230] sm:$0xff]
      %v3316 = vld [vmem:[%s2 + $0x238] sm:$0xff]
      %v3317 = vld [vmem:[%s2 + $0x240] sm:$0xff]
      %v3318 = vld [vmem:[%s2 + $0x248] sm:$0xff]
      %v3319 = vld [vmem:[%s2 + $0x250] sm:$0xff]
      %v3320 = vld [vmem:[%s2 + $0x258] sm:$0xff]
      %v3321 = vld [vmem:[%s2 + $0x260] sm:$0xff]
      %v3322 = vld [vmem:[%s2 + $0x268] sm:$0xff]
      %v3323 = vld [vmem:[%s2 + $0x270] sm:$0xff]
      %v3324 = vld [vmem:[%s2 + $0x278] sm:$0xff]
      %v3325 = vld [vmem:[%s2 + $0x280] sm:$0xff]
      %v3326 = vld [vmem:[%s2 + $0x288] sm:$0xff]
      %v3327 = vld [vmem:[%s2 + $0x290] sm:$0xff]
      %v3328 = vld [vmem:[%s2 + $0x298] sm:$0xff]
      %v3329 = vld [vmem:[%s2 + $0x2a0] sm:$0xff]
      %v3330 = vld [vmem:[%s2 + $0x2a8] sm:$0xff]
      %v3331 = vld [vmem:[%s2 + $0x2b0] sm:$0xff]
      %v3332 = vld [vmem:[%s2 + $0x2b8] sm:$0xff]
      %v3333 = vld [vmem:[%s2 + $0x2c0] sm:$0xff]
      %v3334 = vld [vmem:[%s2 + $0x2c8] sm:$0xff]
      %v3335 = vld [vmem:[%s2 + $0x2d0] sm:$0xff]
      %v3336 = vld [vmem:[%s2 + $0x2d8] sm:$0xff]
      %v3337 = vld [vmem:[%s2 + $0x2e0] sm:$0xff]
      %v3338 = vld [vmem:[%s2 + $0x2e8] sm:$0xff]
      %v3339 = vld [vmem:[%s2 + $0x2f0] sm:$0xff]
      %v3340 = vld [vmem:[%s2 + $0x2f8] sm:$0xff]
      %v3341 = vld [vmem:[%s2 + $0x300] sm:$0xff]
      %v3342 = vld [vmem:[%s2 + $0x308] sm:$0xff]
      %v3343 = vld [vmem:[%s2 + $0x310] sm:$0xff]
      %v3344 = vld [vmem:[%s2 + $0x318] sm:$0xff]
      %v3345 = vld [vmem:[%s2 + $0x320] sm:$0xff]
      %v3346 = vld [vmem:[%s2 + $0x328] sm:$0xff]
      %v3347 = vld [vmem:[%s2 + $0x330] sm:$0xff]
      %v3348 = vld [vmem:[%s2 + $0x338] sm:$0xff]
      %v3349 = vld [vmem:[%s2 + $0x340] sm:$0xff]
      %v3350 = vld [vmem:[%s2 + $0x348] sm:$0xff]
      %v3351 = vld [vmem:[%s2 + $0x350] sm:$0xff]
      %v3352 = vld [vmem:[%s2 + $0x358] sm:$0xff]
      %v3353 = vld [vmem:[%s2 + $0x360] sm:$0xff]
      %v3354 = vld [vmem:[%s2 + $0x368] sm:$0xff]
      %v3355 = vld [vmem:[%s2 + $0x370] sm:$0xff]
      %v3356 = vld [vmem:[%s2 + $0x378] sm:$0xff]
      %v3357 = vld [vmem:[%s2 + $0x380] sm:$0xff]
      %v3358 = vld [vmem:[%s2 + $0x388] sm:$0xff]
      %v3359 = vld [vmem:[%s2 + $0x390] sm:$0xff]
      %v3360 = vld [vmem:[%s2 + $0x398] sm:$0xff]
      %v3361 = vld [vmem:[%s2 + $0x3a0] sm:$0xff]
      %v3362 = vld [vmem:[%s2 + $0x3a8] sm:$0xff]
      %v3363 = vld [vmem:[%s2 + $0x3b0] sm:$0xff]
      %v3364 = vld [vmem:[%s2 + $0x3b8] sm:$0xff]
      %v3365 = vld [vmem:[%s2 + $0x3c0] sm:$0xff]
      %v3366 = vld [vmem:[%s2 + $0x3c8] sm:$0xff]
      %v3367 = vld [vmem:[%s2 + $0x3d0] sm:$0xff]
      %v3368 = vld [vmem:[%s2 + $0x3d8] sm:$0xff]
      %v3369 = vld [vmem:[%s2 + $0x3e0] sm:$0xff]
      %v3370 = vld [vmem:[%s2 + $0x3e8] sm:$0xff]
      %v3371 = vld [vmem:[%s2 + $0x3f0] sm:$0xff]
      %v3372 = vld [vmem:[%s2 + $0x3f8] sm:$0xff]
      %v3373 = vld [vmem:[%s2 + $0x400] sm:$0xff]
      %v3374 = vld [vmem:[%s2 + $0x408] sm:$0xff]
      %v3375 = vld [vmem:[%s2 + $0x410] sm:$0xff]
      %v3376 = vld [vmem:[%s2 + $0x418] sm:$0xff]
      %v3377 = vld [vmem:[%s2 + $0x420] sm:$0xff]
      %v3378 = vld [vmem:[%s2 + $0x428] sm:$0xff]
      %v3379 = vld [vmem:[%s2 + $0x430] sm:$0xff]
      %v3380 = vld [vmem:[%s2 + $0x438] sm:$0xff]
      %v3381 = vld [vmem:[%s2 + $0x440] sm:$0xff]
      %v3382 = vld [vmem:[%s2 + $0x448] sm:$0xff]
      %v3383 = vld [vmem:[%s2 + $0x450] sm:$0xff]
      %v3384 = vld [vmem:[%s2 + $0x458] sm:$0xff]
      %v3385 = vld [vmem:[%s2 + $0x460] sm:$0xff]
      %v3386 = vld [vmem:[%s2 + $0x468] sm:$0xff]
      %v3387 = vld [vmem:[%s2 + $0x470] sm:$0xff]
      %v3388 = vld [vmem:[%s2 + $0x478] sm:$0xff]
      %v3389 = vld [vmem:[%s2 + $0x480] sm:$0xff]
      %v3390 = vld [vmem:[%s2 + $0x488] sm:$0xff]
      %v3391 = vld [vmem:[%s2 + $0x490] sm:$0xff]
      %v3392 = vld [vmem:[%s2 + $0x498] sm:$0xff]
      %v3393 = vld [vmem:[%s2 + $0x4a0] sm:$0xff]
      %v3394 = vld [vmem:[%s2 + $0x4a8] sm:$0xff]
      %v3395 = vld [vmem:[%s2 + $0x4b0] sm:$0xff]
      %v3396 = vld [vmem:[%s2 + $0x4b8] sm:$0xff]
      %v3397 = vld [vmem:[%s2 + $0x4c0] sm:$0xff]
      %v3398 = vld [vmem:[%s2 + $0x4c8] sm:$0xff]
      %v3399 = vld [vmem:[%s2 + $0x4d0] sm:$0xff]
      %v3400 = vld [vmem:[%s2 + $0x4d8] sm:$0xff]
      %v3401 = vld [vmem:[%s2 + $0x4e0] sm:$0xff]
      %v3402 = vld [vmem:[%s2 + $0x4e8] sm:$0xff]
      %v3403 = vld [vmem:[%s2 + $0x4f0] sm:$0xff]
      %v3404 = vld [vmem:[%s2 + $0x4f8] sm:$0xff]
      %v3405 = vld [vmem:[%s2 + $0x500] sm:$0xff]
      %v3406 = vld [vmem:[%s2 + $0x508] sm:$0xff]
      %v3407 = vld [vmem:[%s2 + $0x510] sm:$0xff]
      %v3408 = vld [vmem:[%s2 + $0x518] sm:$0xff]
      %v3409 = vld [vmem:[%s2 + $0x520] sm:$0xff]
      %v3410 = vld [vmem:[%s2 + $0x528] sm:$0xff]
      %v3411 = vld [vmem:[%s2 + $0x530] sm:$0xff]
      %v3412 = vld [vmem:[%s2 + $0x538] sm:$0xff]
      %v3413 = vld [vmem:[%s2 + $0x540] sm:$0xff]
      %v3414 = vld [vmem:[%s2 + $0x548] sm:$0xff]
      %v3415 = vld [vmem:[%s2 + $0x550] sm:$0xff]
      %v3416 = vld [vmem:[%s2 + $0x558] sm:$0xff]
      %v3417 = vld [vmem:[%s2 + $0x560] sm:$0xff]
      %v3418 = vld [vmem:[%s2 + $0x568] sm:$0xff]
      %v3419 = vld [vmem:[%s2 + $0x570] sm:$0xff]
      %v3420 = vld [vmem:[%s2 + $0x578] sm:$0xff]
      %v3421 = vld [vmem:[%s2 + $0x580] sm:$0xff]
      %v3422 = vld [vmem:[%s2 + $0x588] sm:$0xff]
      %v3423 = vld [vmem:[%s2 + $0x590] sm:$0xff]
      %v3424 = vld [vmem:[%s2 + $0x598] sm:$0xff]
      %v3425 = vld [vmem:[%s2 + $0x5a0] sm:$0xff]
      %v3426 = vld [vmem:[%s2 + $0x5a8] sm:$0xff]
      %v3427 = vld [vmem:[%s2 + $0x5b0] sm:$0xff]
      %v3428 = vld [vmem:[%s2 + $0x5b8] sm:$0xff]
      %v3429 = vld [vmem:[%s2 + $0x5c0] sm:$0xff]
      %v3430 = vld [vmem:[%s2 + $0x5c8] sm:$0xff]
      %v3431 = vld [vmem:[%s2 + $0x5d0] sm:$0xff]
      %v3432 = vld [vmem:[%s2 + $0x5d8] sm:$0xff]
      %v3433 = vld [vmem:[%s2 + $0x5e0] sm:$0xff]
      %v3434 = vld [vmem:[%s2 + $0x5e8] sm:$0xff]
      %v3435 = vld [vmem:[%s2 + $0x5f0] sm:$0xff]
      %v3436 = vld [vmem:[%s2 + $0x5f8] sm:$0xff]
      %v3437 = vld [vmem:[%s2 + $0x600] sm:$0xff]
      %v3438 = vld [vmem:[%s2 + $0x608] sm:$0xff]
      %v3439 = vld [vmem:[%s2 + $0x610] sm:$0xff]
      %v3440 = vld [vmem:[%s2 + $0x618] sm:$0xff]
      %v3441 = vld [vmem:[%s2 + $0x620] sm:$0xff]
      %v3442 = vld [vmem:[%s2 + $0x628] sm:$0xff]
      %v3443 = vld [vmem:[%s2 + $0x630] sm:$0xff]
      %v3444 = vld [vmem:[%s2 + $0x638] sm:$0xff]
      %v3445 = vld [vmem:[%s2 + $0x640] sm:$0xff]
      %v3446 = vld [vmem:[%s2 + $0x648] sm:$0xff]
      %v3447 = vld [vmem:[%s2 + $0x650] sm:$0xff]
      %v3448 = vld [vmem:[%s2 + $0x658] sm:$0xff]
      %v3449 = vld [vmem:[%s2 + $0x660] sm:$0xff]
      %v3450 = vld [vmem:[%s2 + $0x668] sm:$0xff]
      %v3451 = vld [vmem:[%s2 + $0x670] sm:$0xff]
      %v3452 = vld [vmem:[%s2 + $0x678] sm:$0xff]
      %v3453 = vld [vmem:[%s2 + $0x680] sm:$0xff]
      %v3454 = vld [vmem:[%s2 + $0x688] sm:$0xff]
      %v3455 = vld [vmem:[%s2 + $0x690] sm:$0xff]
      %v3456 = vld [vmem:[%s2 + $0x698] sm:$0xff]
      %v3457 = vld [vmem:[%s2 + $0x6a0] sm:$0xff]
      %v3458 = vld [vmem:[%s2 + $0x6a8] sm:$0xff]
      %v3459 = vld [vmem:[%s2 + $0x6b0] sm:$0xff]
      %v3460 = vld [vmem:[%s2 + $0x6b8] sm:$0xff]
      %v3461 = vld [vmem:[%s2 + $0x6c0] sm:$0xff]
      %v3462 = vld [vmem:[%s2 + $0x6c8] sm:$0xff]
      %v3463 = vld [vmem:[%s2 + $0x6d0] sm:$0xff]
      %v3464 = vld [vmem:[%s2 + $0x6d8] sm:$0xff]
      %v3465 = vld [vmem:[%s2 + $0x6e0] sm:$0xff]
      %v3466 = vld [vmem:[%s2 + $0x6e8] sm:$0xff]
      %v3467 = vld [vmem:[%s2 + $0x6f0] sm:$0xff]
      %v3468 = vld [vmem:[%s2 + $0x6f8] sm:$0xff]
      %v3469 = vld [vmem:[%s2 + $0x700] sm:$0xff]
      %v3470 = vld [vmem:[%s2 + $0x708] sm:$0xff]
      %v3471 = vld [vmem:[%s2 + $0x710] sm:$0xff]
      %v3472 = vld [vmem:[%s2 + $0x718] sm:$0xff]
      %v3473 = vld [vmem:[%s2 + $0x720] sm:$0xff]
      %v3474 = vld [vmem:[%s2 + $0x728] sm:$0xff]
      %v3475 = vld [vmem:[%s2 + $0x730] sm:$0xff]
      %v3476 = vld [vmem:[%s2 + $0x738] sm:$0xff]
      %v3477 = vld [vmem:[%s2 + $0x740] sm:$0xff]
      %v3478 = vld [vmem:[%s2 + $0x748] sm:$0xff]
      %v3479 = vld [vmem:[%s2 + $0x750] sm:$0xff]
      %v3480 = vld [vmem:[%s2 + $0x758] sm:$0xff]
      %v3481 = vld [vmem:[%s2 + $0x760] sm:$0xff]
      %v3482 = vld [vmem:[%s2 + $0x768] sm:$0xff]
      %v3483 = vld [vmem:[%s2 + $0x770] sm:$0xff]
      %v3484 = vld [vmem:[%s2 + $0x778] sm:$0xff]
      %v3485 = vld [vmem:[%s2 + $0x780] sm:$0xff]
      %v3486 = vld [vmem:[%s2 + $0x788] sm:$0xff]
      %v3487 = vld [vmem:[%s2 + $0x790] sm:$0xff]
      %v3488 = vld [vmem:[%s2 + $0x798] sm:$0xff]
      %v3489 = vld [vmem:[%s2 + $0x7a0] sm:$0xff]
      %v3490 = vld [vmem:[%s2 + $0x7a8] sm:$0xff]
      %v3491 = vld [vmem:[%s2 + $0x7b0] sm:$0xff]
      %v3492 = vld [vmem:[%s2 + $0x7b8] sm:$0xff]
      %v3493 = vld [vmem:[%s2 + $0x7c0] sm:$0xff]
      %v3494 = vld [vmem:[%s2 + $0x7c8] sm:$0xff]
      %v3495 = vld [vmem:[%s2 + $0x7d0] sm:$0xff]
      %v3496 = vld [vmem:[%s2 + $0x7d8] sm:$0xff]
      %v3497 = vld [vmem:[%s2 + $0x7e0] sm:$0xff]
      %v3498 = vld [vmem:[%s2 + $0x7e8] sm:$0xff]
      %v3499 = vld [vmem:[%s2 + $0x7f0] sm:$0xff]
      %v3500 = vld [vmem:[%s2 + $0x7f8] sm:$0xff]
      %3501 = vmatprep.subr.mxu0 %v3246
      %3502 = vmatpush1.msra.mxu0 %v3245
      %3503 = vmatprep.subr.mxu0 %v3254
      %3504 = vmatpush1.msra.mxu0 %v3253
      %3505 = vmatprep.subr.mxu0 %v3262
      %3506 = vmatpush1.msra.mxu0 %v3261
      %3507 = vmatprep.subr.mxu0 %v3270
      %3508 = vmatpush1.msra.mxu0 %v3269
      %3509 = vmatprep.subr.mxu0 %v3278
      %3510 = vmatpush1.msra.mxu0 %v3277
      %3511 = vmatprep.subr.mxu0 %v3286
      %3512 = vmatpush1.msra.mxu0 %v3285
      %3513 = vmatprep.subr.mxu0 %v3294
      %3514 = vmatpush1.msra.mxu0 %v3293
      %3515 = vmatprep.subr.mxu0 %v3302
      %3516 = vmatpush1.msra.mxu0 %v3301
      %3517 = vmatprep.subr.mxu0 %v3310
      %3518 = vmatpush1.msra.mxu0 %v3309
      %3519 = vmatprep.subr.mxu0 %v3318
      %3520 = vmatpush1.msra.mxu0 %v3317
      %3521 = vmatprep.subr.mxu0 %v3326
      %3522 = vmatpush1.msra.mxu0 %v3325
      %3523 = vmatprep.subr.mxu0 %v3334
      %3524 = vmatpush1.msra.mxu0 %v3333
      %3525 = vmatprep.subr.mxu0 %v3342
      %3526 = vmatpush1.msra.mxu0 %v3341
      %3527 = vmatprep.subr.mxu0 %v3350
      %3528 = vmatpush1.msra.mxu0 %v3349
      %3529 = vmatprep.subr.mxu0 %v3358
      %3530 = vmatpush1.msra.mxu0 %v3357
      %3531 = vmatprep.subr.mxu0 %v3366
      %3532 = vmatpush1.msra.mxu0 %v3365
      %3533 = vmatprep.subr.mxu0 %v3374
      %3534 = vmatpush1.msra.mxu0 %v3373
      %3535 = vmatprep.subr.mxu0 %v3382
      %3536 = vmatpush1.msra.mxu0 %v3381
      %3537 = vmatprep.subr.mxu0 %v3390
      %3538 = vmatpush1.msra.mxu0 %v3389
      %3539 = vmatprep.subr.mxu0 %v3398
      %3540 = vmatpush1.msra.mxu0 %v3397
      %3541 = vmatprep.subr.mxu0 %v3406
      %3542 = vmatpush1.msra.mxu0 %v3405
      %3543 = vmatprep.subr.mxu0 %v3414
      %3544 = vmatpush1.msra.mxu0 %v3413
      %3545 = vmatprep.subr.mxu0 %v3422
      %3546 = vmatpush1.msra.mxu0 %v3421
      %3547 = vmatprep.subr.mxu0 %v3430
      %3548 = vmatpush1.msra.mxu0 %v3429
      %3549 = vmatprep.subr.mxu0 %v3438
      %3550 = vmatpush1.msra.mxu0 %v3437
      %3551 = vmatprep.subr.mxu0 %v3446
      %3552 = vmatpush1.msra.mxu0 %v3445
      %3553 = vmatprep.subr.mxu0 %v3454
      %3554 = vmatpush1.msra.mxu0 %v3453
      %3555 = vmatprep.subr.mxu0 %v3462
      %3556 = vmatpush1.msra.mxu0 %v3461
      %3557 = vmatprep.subr.mxu0 %v3470
      %3558 = vmatpush1.msra.mxu0 %v3469
      %3559 = vmatprep.subr.mxu0 %v3478
      %3560 = vmatpush1.msra.mxu0 %v3477
      %3561 = vmatprep.subr.mxu0 %v3486
      %3562 = vmatpush1.msra.mxu0 %v3485
      %3563 = vmatprep.subr.mxu0 %v3494
      %3564 = vmatpush1.msra.mxu0 %v3493
      %3565 = vmatprep.mubr.f32.mxu0 %v3242
      %3566 = vmatmul.mubr.f32.gmra.mrb[0].mxu0 %v3241
      %v3567 = vpop.f32.mrb[0].mxu0
      %v3568 = vadd.f32 0.0, %v3567
      %v3569 = vpop.f32.mrb[0].mxu0
      %v3570 = vadd.f32 0.0, %v3569
      %3571 = vmatprep.mubr.f32.mxu0 %v3244
      %3572 = vmatmul.mubr.f32.gmra.mrb[0].mxu0 %v3243
      %v3573 = vpop.f32.mrb[0].mxu0
      %v3574 = vadd.f32 0.0, %v3573
      %v3575 = vpop.f32.mrb[0].mxu0
      %v3576 = vadd.f32 0.0, %v3575
      %3577 = vdwg.mxu0
      %3578 = vmatprep.subr.mxu0 %v3248
      %3579 = vmatpush1.msra.mxu0 %v3247
      %3580 = vmatprep.subr.mxu0 %v3256
      %3581 = vmatpush1.msra.mxu0 %v3255
      %3582 = vmatprep.subr.mxu0 %v3264
      %3583 = vmatpush1.msra.mxu0 %v3263
      %3584 = vmatprep.subr.mxu0 %v3272
      %3585 = vmatpush1.msra.mxu0 %v3271
      %3586 = vmatprep.subr.mxu0 %v3280
      %3587 = vmatpush1.msra.mxu0 %v3279
      %3588 = vmatprep.subr.mxu0 %v3288
      %3589 = vmatpush1.msra.mxu0 %v3287
      %3590 = vmatprep.subr.mxu0 %v3296
      %3591 = vmatpush1.msra.mxu0 %v3295
      %3592 = vmatprep.subr.mxu0 %v3304
      %3593 = vmatpush1.msra.mxu0 %v3303
      %3594 = vmatprep.subr.mxu0 %v3312
      %3595 = vmatpush1.msra.mxu0 %v3311
      %3596 = vmatprep.subr.mxu0 %v3320
      %3597 = vmatpush1.msra.mxu0 %v3319
      %3598 = vmatprep.subr.mxu0 %v3328
      %3599 = vmatpush1.msra.mxu0 %v3327
      %3600 = vmatprep.subr.mxu0 %v3336
      %3601 = vmatpush1.msra.mxu0 %v3335
      %3602 = vmatprep.subr.mxu0 %v3344
      %3603 = vmatpush1.msra.mxu0 %v3343
      %3604 = vmatprep.subr.mxu0 %v3352
      %3605 = vmatpush1.msra.mxu0 %v3351
      %3606 = vmatprep.subr.mxu0 %v3360
      %3607 = vmatpush1.msra.mxu0 %v3359
      %3608 = vmatprep.subr.mxu0 %v3368
      %3609 = vmatpush1.msra.mxu0 %v3367
      %3610 = vmatprep.subr.mxu0 %v3376
      %3611 = vmatpush1.msra.mxu0 %v3375
      %3612 = vmatprep.subr.mxu0 %v3384
      %3613 = vmatpush1.msra.mxu0 %v3383
      %3614 = vmatprep.subr.mxu0 %v3392
      %3615 = vmatpush1.msra.mxu0 %v3391
      %3616 = vmatprep.subr.mxu0 %v3400
      %3617 = vmatpush1.msra.mxu0 %v3399
      %3618 = vmatprep.subr.mxu0 %v3408
      %3619 = vmatpush1.msra.mxu0 %v3407
      %3620 = vmatprep.subr.mxu0 %v3416
      %3621 = vmatpush1.msra.mxu0 %v3415
      %3622 = vmatprep.subr.mxu0 %v3424
      %3623 = vmatpush1.msra.mxu0 %v3423
      %3624 = vmatprep.subr.mxu0 %v3432
      %3625 = vmatpush1.msra.mxu0 %v3431
      %3626 = vmatprep.subr.mxu0 %v3440
      %3627 = vmatpush1.msra.mxu0 %v3439
      %3628 = vmatprep.subr.mxu0 %v3448
      %3629 = vmatpush1.msra.mxu0 %v3447
      %3630 = vmatprep.subr.mxu0 %v3456
      %3631 = vmatpush1.msra.mxu0 %v3455
      %3632 = vmatprep.subr.mxu0 %v3464
      %3633 = vmatpush1.msra.mxu0 %v3463
      %3634 = vmatprep.subr.mxu0 %v3472
      %3635 = vmatpush1.msra.mxu0 %v3471
      %3636 = vmatprep.subr.mxu0 %v3480
      %3637 = vmatpush1.msra.mxu0 %v3479
      %3638 = vmatprep.subr.mxu0 %v3488
      %3639 = vmatpush1.msra.mxu0 %v3487
      %3640 = vmatprep.subr.mxu0 %v3496
      %3641 = vmatpush1.msra.mxu0 %v3495
      %3642 = vmatprep.mubr.f32.mxu0 %v3242
      %3643 = vmatmul.mubr.f32.gmra.mrb[0].mxu0 %v3241
      %v3644 = vpop.f32.mrb[0].mxu0
      %v3645 = vadd.f32 0.0, %v3644
      %v3646 = vpop.f32.mrb[0].mxu0
      %v3647 = vadd.f32 0.0, %v3646
      %3648 = vmatprep.mubr.f32.mxu0 %v3244
      %3649 = vmatmul.mubr.f32.gmra.mrb[0].mxu0 %v3243
      %v3650 = vpop.f32.mrb[0].mxu0
      %v3651 = vadd.f32 0.0, %v3650
      %v3652 = vpop.f32.mrb[0].mxu0
      %v3653 = vadd.f32 0.0, %v3652
      %3654 = vdwg.mxu0
      %3655 = vmatprep.subr.mxu0 %v3250
      %3656 = vmatpush1.msra.mxu0 %v3249
      %3657 = vmatprep.subr.mxu0 %v3258
      %3658 = vmatpush1.msra.mxu0 %v3257
      %3659 = vmatprep.subr.mxu0 %v3266
      %3660 = vmatpush1.msra.mxu0 %v3265
      %3661 = vmatprep.subr.mxu0 %v3274
      %3662 = vmatpush1.msra.mxu0 %v3273
      %3663 = vmatprep.subr.mxu0 %v3282
      %3664 = vmatpush1.msra.mxu0 %v3281
      %3665 = vmatprep.subr.mxu0 %v3290
      %3666 = vmatpush1.msra.mxu0 %v3289
      %3667 = vmatprep.subr.mxu0 %v3298
      %3668 = vmatpush1.msra.mxu0 %v3297
      %3669 = vmatprep.subr.mxu0 %v3306
      %3670 = vmatpush1.msra.mxu0 %v3305
      %3671 = vmatprep.subr.mxu0 %v3314
      %3672 = vmatpush1.msra.mxu0 %v3313
      %3673 = vmatprep.subr.mxu0 %v3322
      %3674 = vmatpush1.msra.mxu0 %v3321
      %3675 = vmatprep.subr.mxu0 %v3330
      %3676 = vmatpush1.msra.mxu0 %v3329
      %3677 = vmatprep.subr.mxu0 %v3338
      %3678 = vmatpush1.msra.mxu0 %v3337
      %3679 = vmatprep.subr.mxu0 %v3346
      %3680 = vmatpush1.msra.mxu0 %v3345
      %3681 = vmatprep.subr.mxu0 %v3354
      %3682 = vmatpush1.msra.mxu0 %v3353
      %3683 = vmatprep.subr.mxu0 %v3362
      %3684 = vmatpush1.msra.mxu0 %v3361
      %3685 = vmatprep.subr.mxu0 %v3370
      %3686 = vmatpush1.msra.mxu0 %v3369
      %3687 = vmatprep.subr.mxu0 %v3378
      %3688 = vmatpush1.msra.mxu0 %v3377
      %3689 = vmatprep.subr.mxu0 %v3386
      %3690 = vmatpush1.msra.mxu0 %v3385
      %3691 = vmatprep.subr.mxu0 %v3394
      %3692 = vmatpush1.msra.mxu0 %v3393
      %3693 = vmatprep.subr.mxu0 %v3402
      %3694 = vmatpush1.msra.mxu0 %v3401
      %3695 = vmatprep.subr.mxu0 %v3410
      %3696 = vmatpush1.msra.mxu0 %v3409
      %3697 = vmatprep.subr.mxu0 %v3418
      %3698 = vmatpush1.msra.mxu0 %v3417
      %3699 = vmatprep.subr.mxu0 %v3426
      %3700 = vmatpush1.msra.mxu0 %v3425
      %3701 = vmatprep.subr.mxu0 %v3434
      %3702 = vmatpush1.msra.mxu0 %v3433
      %3703 = vmatprep.subr.mxu0 %v3442
      %3704 = vmatpush1.msra.mxu0 %v3441
      %3705 = vmatprep.subr.mxu0 %v3450
      %3706 = vmatpush1.msra.mxu0 %v3449
      %3707 = vmatprep.subr.mxu0 %v3458
      %3708 = vmatpush1.msra.mxu0 %v3457
      %3709 = vmatprep.subr.mxu0 %v3466
      %3710 = vmatpush1.msra.mxu0 %v3465
      %3711 = vmatprep.subr.mxu0 %v3474
      %3712 = vmatpush1.msra.mxu0 %v3473
      %3713 = vmatprep.subr.mxu0 %v3482
      %3714 = vmatpush1.msra.mxu0 %v3481
      %3715 = vmatprep.subr.mxu0 %v3490
      %3716 = vmatpush1.msra.mxu0 %v3489
      %3717 = vmatprep.subr.mxu0 %v3498
      %3718 = vmatpush1.msra.mxu0 %v3497
      %3719 = vmatprep.mubr.f32.mxu0 %v3242
      %3720 = vmatmul.mubr.f32.gmra.mrb[0].mxu0 %v3241
      %v3721 = vpop.f32.mrb[0].mxu0
      %v3722 = vadd.f32 0.0, %v3721
      %v3723 = vpop.f32.mrb[0].mxu0
      %v3724 = vadd.f32 0.0, %v3723
      %3725 = vmatprep.mubr.f32.mxu0 %v3244
      %3726 = vmatmul.mubr.f32.gmra.mrb[0].mxu0 %v3243
      %v3727 = vpop.f32.mrb[0].mxu0
      %v3728 = vadd.f32 0.0, %v3727
      %v3729 = vpop.f32.mrb[0].mxu0
      %v3730 = vadd.f32 0.0, %v3729
      %3731 = vdwg.mxu0
      %3732 = vmatprep.subr.mxu0 %v3252
      %3733 = vmatpush1.msra.mxu0 %v3251
      %3734 = vmatprep.subr.mxu0 %v3260
      %3735 = vmatpush1.msra.mxu0 %v3259
      %3736 = vmatprep.subr.mxu0 %v3268
      %3737 = vmatpush1.msra.mxu0 %v3267
      %3738 = vmatprep.subr.mxu0 %v3276
      %3739 = vmatpush1.msra.mxu0 %v3275
      %3740 = vmatprep.subr.mxu0 %v3284
      %3741 = vmatpush1.msra.mxu0 %v3283
      %3742 = vmatprep.subr.mxu0 %v3292
      %3743 = vmatpush1.msra.mxu0 %v3291
      %3744 = vmatprep.subr.mxu0 %v3300
      %3745 = vmatpush1.msra.mxu0 %v3299
      %3746 = vmatprep.subr.mxu0 %v3308
      %3747 = vmatpush1.msra.mxu0 %v3307
      %3748 = vmatprep.subr.mxu0 %v3316
      %3749 = vmatpush1.msra.mxu0 %v3315
      %3750 = vmatprep.subr.mxu0 %v3324
      %3751 = vmatpush1.msra.mxu0 %v3323
      %3752 = vmatprep.subr.mxu0 %v3332
      %3753 = vmatpush1.msra.mxu0 %v3331
      %3754 = vmatprep.subr.mxu0 %v3340
      %3755 = vmatpush1.msra.mxu0 %v3339
      %3756 = vmatprep.subr.mxu0 %v3348
      %3757 = vmatpush1.msra.mxu0 %v3347
      %3758 = vmatprep.subr.mxu0 %v3356
      %3759 = vmatpush1.msra.mxu0 %v3355
      %3760 = vmatprep.subr.mxu0 %v3364
      %3761 = vmatpush1.msra.mxu0 %v3363
      %3762 = vmatprep.subr.mxu0 %v3372
      %3763 = vmatpush1.msra.mxu0 %v3371
      %3764 = vmatprep.subr.mxu0 %v3380
      %3765 = vmatpush1.msra.mxu0 %v3379
      %3766 = vmatprep.subr.mxu0 %v3388
      %3767 = vmatpush1.msra.mxu0 %v3387
      %3768 = vmatprep.subr.mxu0 %v3396
      %3769 = vmatpush1.msra.mxu0 %v3395
      %3770 = vmatprep.subr.mxu0 %v3404
      %3771 = vmatpush1.msra.mxu0 %v3403
      %3772 = vmatprep.subr.mxu0 %v3412
      %3773 = vmatpush1.msra.mxu0 %v3411
      %3774 = vmatprep.subr.mxu0 %v3420
      %3775 = vmatpush1.msra.mxu0 %v3419
      %3776 = vmatprep.subr.mxu0 %v3428
      %3777 = vmatpush1.msra.mxu0 %v3427
      %3778 = vmatprep.subr.mxu0 %v3436
      %3779 = vmatpush1.msra.mxu0 %v3435
      %3780 = vmatprep.subr.mxu0 %v3444
      %3781 = vmatpush1.msra.mxu0 %v3443
      %3782 = vmatprep.subr.mxu0 %v3452
      %3783 = vmatpush1.msra.mxu0 %v3451
      %3784 = vmatprep.subr.mxu0 %v3460
      %3785 = vmatpush1.msra.mxu0 %v3459
      %3786 = vmatprep.subr.mxu0 %v3468
      %3787 = vmatpush1.msra.mxu0 %v3467
      %3788 = vmatprep.subr.mxu0 %v3476
      %3789 = vmatpush1.msra.mxu0 %v3475
      %3790 = vmatprep.subr.mxu0 %v3484
      %3791 = vmatpush1.msra.mxu0 %v3483
      %3792 = vmatprep.subr.mxu0 %v3492
      %3793 = vmatpush1.msra.mxu0 %v3491
      %3794 = vmatprep.subr.mxu0 %v3500
      %3795 = vmatpush1.msra.mxu0 %v3499
      %3796 = vmatprep.mubr.f32.mxu0 %v3242
      %3797 = vmatmul.mubr.f32.gmra.mrb[0].mxu0 %v3241
      %v3798 = vpop.f32.mrb[0].mxu0
      %v3799 = vadd.f32 0.0, %v3798
      %v3800 = vpop.f32.mrb[0].mxu0
      %v3801 = vadd.f32 0.0, %v3800
      %3802 = vmatprep.mubr.f32.mxu0 %v3244
      %3803 = vmatmul.mubr.f32.gmra.mrb[0].mxu0 %v3243
      %v3804 = vpop.f32.mrb[0].mxu0
      %v3805 = vadd.f32 0.0, %v3804
      %v3806 = vpop.f32.mrb[0].mxu0
      %v3807 = vadd.f32 0.0, %v3806
      %3808 = vdwg.mxu0
      %v3809 = vld [vmem:[%s5] sm:$0xff]
      %v3810 = vld [vmem:[%s5 + $0x8] sm:$0xff]
      %v3811 = vld [vmem:[%s5 + $0x10] sm:$0xff]
      %v3812 = vld [vmem:[%s5 + $0x18] sm:$0xff]
      %v3813 = vld [vmem:[%s5 + $0x20] sm:$0xff]
      %v3814 = vld [vmem:[%s5 + $0x28] sm:$0xff]
      %v3815 = vld [vmem:[%s5 + $0x30] sm:$0xff]
      %v3816 = vld [vmem:[%s5 + $0x38] sm:$0xff]
      %v3817 = vld [vmem:[%s5 + $0x40] sm:$0xff]
      %v3818 = vld [vmem:[%s5 + $0x48] sm:$0xff]
      %v3819 = vld [vmem:[%s5 + $0x50] sm:$0xff]
      %v3820 = vld [vmem:[%s5 + $0x58] sm:$0xff]
      %v3821 = vld [vmem:[%s5 + $0x60] sm:$0xff]
      %v3822 = vld [vmem:[%s5 + $0x68] sm:$0xff]
      %v3823 = vld [vmem:[%s5 + $0x70] sm:$0xff]
      %v3824 = vld [vmem:[%s5 + $0x78] sm:$0xff]
      %v3825 = vld [vmem:[%s6] sm:$0xff]
      %v3826 = vld [vmem:[%s6 + $0x8] sm:$0xff]
      %v3827 = vld [vmem:[%s6 + $0x10] sm:$0xff]
      %v3828 = vld [vmem:[%s6 + $0x18] sm:$0xff]
      %v3829 = vld [vmem:[%s6 + $0x20] sm:$0xff]
      %v3830 = vld [vmem:[%s6 + $0x28] sm:$0xff]
      %v3831 = vld [vmem:[%s6 + $0x30] sm:$0xff]
      %v3832 = vld [vmem:[%s6 + $0x38] sm:$0xff]
      %v3833 = vld [vmem:[%s6 + $0x40] sm:$0xff]
      %v3834 = vld [vmem:[%s6 + $0x48] sm:$0xff]
      %v3835 = vld [vmem:[%s6 + $0x50] sm:$0xff]
      %v3836 = vld [vmem:[%s6 + $0x58] sm:$0xff]
      %v3837 = vld [vmem:[%s6 + $0x60] sm:$0xff]
      %v3838 = vld [vmem:[%s6 + $0x68] sm:$0xff]
      %v3839 = vld [vmem:[%s6 + $0x70] sm:$0xff]
      %v3840 = vld [vmem:[%s6 + $0x78] sm:$0xff]
      %3841 = vst [vmem:[#allocation3 + $0x8] sm:$0xff] %v3568
      %3842 = vst [vmem:[#allocation3 + $0x10] sm:$0xff] %v3570
      %3843 = vst [vmem:[#allocation3 + $0x18] sm:$0xff] %v3645
      %3844 = vst [vmem:[#allocation3 + $0x20] sm:$0xff] %v3647
      %3845 = vst [vmem:[#allocation3 + $0x28] sm:$0xff] %v3722
      %3846 = vst [vmem:[#allocation3 + $0x30] sm:$0xff] %v3724
      %3847 = vst [vmem:[#allocation3 + $0x38] sm:$0xff] %v3799
      %3848 = vst [vmem:[#allocation3 + $0x40] sm:$0xff] %v3801
      %3849 = vst [vmem:[#allocation3 + $0x58] sm:$0xff] %v3574
      %3850 = vst [vmem:[#allocation3 + $0x60] sm:$0xff] %v3576
      %3851 = vst [vmem:[#allocation3 + $0x68] sm:$0xff] %v3651
      %3852 = vst [vmem:[#allocation3 + $0x70] sm:$0xff] %v3653
      %3853 = vst [vmem:[#allocation3 + $0x78] sm:$0xff] %v3728
      %3854 = vst [vmem:[#allocation3 + $0x80] sm:$0xff] %v3730
      %3855 = vst [vmem:[#allocation3 + $0x88] sm:$0xff] %v3805
      %3856 = vst [vmem:[#allocation3 + $0x90] sm:$0xff] %v3807
      %v3857 = vld [vmem:[#allocation3] sm:$0xff]
      %v3858 = vld [vmem:[#allocation3 + $0x8] sm:$0xff]
      %v3859 = vld [vmem:[#allocation3 + $0x10] sm:$0xff]
      %v3860 = vld [vmem:[#allocation3 + $0x18] sm:$0xff]
      %v3861 = vld [vmem:[#allocation3 + $0x20] sm:$0xff]
      %v3862 = vld [vmem:[#allocation3 + $0x28] sm:$0xff]
      %v3863 = vld [vmem:[#allocation3 + $0x30] sm:$0xff]
      %v3864 = vld [vmem:[#allocation3 + $0x38] sm:$0xff]
      %v3865 = vld [vmem:[#allocation3 + $0x40] sm:$0xff]
      %v3866 = vld [vmem:[#allocation3 + $0x50] sm:$0xff]
      %v3867 = vld [vmem:[#allocation3 + $0x58] sm:$0xff]
      %v3868 = vld [vmem:[#allocation3 + $0x60] sm:$0xff]
      %v3869 = vld [vmem:[#allocation3 + $0x68] sm:$0xff]
      %v3870 = vld [vmem:[#allocation3 + $0x70] sm:$0xff]
      %v3871 = vld [vmem:[#allocation3 + $0x78] sm:$0xff]
      %v3872 = vld [vmem:[#allocation3 + $0x80] sm:$0xff]
      %v3873 = vld [vmem:[#allocation3 + $0x88] sm:$0xff]
      %v3874 = vld [vmem:[#allocation3 + $0x90] sm:$0xff]
      %3891 = vrot.lane.b32.xlu0 %v3809, 95
      %v3892 = vpop.permute.xlu0 %3891
      %3893 = vrot.lane.b32.xlu0 %v3810, 95
      %v3894 = vpop.permute.xlu0 %3893
      %3895 = vrot.lane.b32.xlu0 %v3811, 95
      %v3896 = vpop.permute.xlu0 %3895
      %3897 = vrot.lane.b32.xlu0 %v3812, 95
      %v3898 = vpop.permute.xlu0 %3897
      %3899 = vrot.lane.b32.xlu0 %v3813, 95
      %v3900 = vpop.permute.xlu0 %3899
      %3901 = vrot.lane.b32.xlu0 %v3814, 95
      %v3902 = vpop.permute.xlu0 %3901
      %3903 = vrot.lane.b32.xlu0 %v3815, 95
      %v3904 = vpop.permute.xlu0 %3903
      %3905 = vrot.lane.b32.xlu0 %v3816, 95
      %v3906 = vpop.permute.xlu0 %3905
      %3907 = vrot.lane.b32.xlu0 %v3817, 95
      %v3908 = vpop.permute.xlu0 %3907
      %3909 = vrot.lane.b32.xlu0 %v3818, 95
      %v3910 = vpop.permute.xlu0 %3909
      %3911 = vrot.lane.b32.xlu0 %v3819, 95
      %v3912 = vpop.permute.xlu0 %3911
      %3913 = vrot.lane.b32.xlu0 %v3820, 95
      %v3914 = vpop.permute.xlu0 %3913
      %3915 = vrot.lane.b32.xlu0 %v3821, 95
      %v3916 = vpop.permute.xlu0 %3915
      %3917 = vrot.lane.b32.xlu0 %v3822, 95
      %v3918 = vpop.permute.xlu0 %3917
      %3919 = vrot.lane.b32.xlu0 %v3823, 95
      %v3920 = vpop.permute.xlu0 %3919
      %3921 = vrot.lane.b32.xlu0 %v3824, 95
      %v3922 = vpop.permute.xlu0 %3921
      %vm3923 = vcmask 777216
      %v3924 = vsel %vm3923, %v3892, %v3894
      %v3925 = vsel %vm3923, %v3894, %v3896
      %v3926 = vsel %vm3923, %v3896, %v3898
      %v3927 = vsel %vm3923, %v3898, %v3900
      %v3928 = vsel %vm3923, %v3900, %v3902
      %v3929 = vsel %vm3923, %v3902, %v3904
      %v3930 = vsel %vm3923, %v3904, %v3906
      %v3931 = vsel %vm3923, %v3908, %v3910
      %v3932 = vsel %vm3923, %v3910, %v3912
      %v3933 = vsel %vm3923, %v3912, %v3914
      %v3934 = vsel %vm3923, %v3914, %v3916
      %v3935 = vsel %vm3923, %v3916, %v3918
      %v3936 = vsel %vm3923, %v3918, %v3920
      %v3937 = vsel %vm3923, %v3920, %v3922
      %v3956 = vmul.f32 %v3857, %v3892
      %v3957 = vmul.f32 %v3858, %v3924
      %v3958 = vmul.f32 %v3859, %v3925
      %v3959 = vmul.f32 %v3860, %v3926
      %v3960 = vmul.f32 %v3861, %v3927
      %v3961 = vmul.f32 %v3862, %v3928
      %v3962 = vmul.f32 %v3863, %v3929
      %v3963 = vmul.f32 %v3864, %v3930
      %v3964 = vmul.f32 %v3865, %v3906
      %v3965 = vmul.f32 %v3866, %v3908
      %v3966 = vmul.f32 %v3867, %v3931
      %v3967 = vmul.f32 %v3868, %v3932
      %v3968 = vmul.f32 %v3869, %v3933
      %v3969 = vmul.f32 %v3870, %v3934
      %v3970 = vmul.f32 %v3871, %v3935
      %v3971 = vmul.f32 %v3872, %v3936
      %v3972 = vmul.f32 %v3873, %v3937
      %v3973 = vmul.f32 %v3874, %v3922
      %3992 = vrot.lane.b32.xlu0 %v3956, 33
      %v3993 = vpop.permute.xlu0 %3992
      %3994 = vrot.lane.b32.xlu0 %v3957, 33
      %v3995 = vpop.permute.xlu0 %3994
      %3996 = vrot.lane.b32.xlu0 %v3958, 33
      %v3997 = vpop.permute.xlu0 %3996
      %3998 = vrot.lane.b32.xlu0 %v3959, 33
      %v3999 = vpop.permute.xlu0 %3998
      %4000 = vrot.lane.b32.xlu0 %v3960, 33
      %v4001 = vpop.permute.xlu0 %4000
      %4002 = vrot.lane.b32.xlu0 %v3961, 33
      %v4003 = vpop.permute.xlu0 %4002
      %4004 = vrot.lane.b32.xlu0 %v3962, 33
      %v4005 = vpop.permute.xlu0 %4004
      %4006 = vrot.lane.b32.xlu0 %v3963, 33
      %v4007 = vpop.permute.xlu0 %4006
      %4008 = vrot.lane.b32.xlu0 %v3964, 33
      %v4009 = vpop.permute.xlu0 %4008
      %4010 = vrot.lane.b32.xlu0 %v3965, 33
      %v4011 = vpop.permute.xlu0 %4010
      %4012 = vrot.lane.b32.xlu0 %v3966, 33
      %v4013 = vpop.permute.xlu0 %4012
      %4014 = vrot.lane.b32.xlu0 %v3967, 33
      %v4015 = vpop.permute.xlu0 %4014
      %4016 = vrot.lane.b32.xlu0 %v3968, 33
      %v4017 = vpop.permute.xlu0 %4016
      %4018 = vrot.lane.b32.xlu0 %v3969, 33
      %v4019 = vpop.permute.xlu0 %4018
      %4020 = vrot.lane.b32.xlu0 %v3970, 33
      %v4021 = vpop.permute.xlu0 %4020
      %4022 = vrot.lane.b32.xlu0 %v3971, 33
      %v4023 = vpop.permute.xlu0 %4022
      %4024 = vrot.lane.b32.xlu0 %v3972, 33
      %v4025 = vpop.permute.xlu0 %4024
      %4026 = vrot.lane.b32.xlu0 %v3973, 33
      %v4027 = vpop.permute.xlu0 %4026
      %vm4028 = vcmask 269312
      %v4029 = vsel %vm4028, %v3993, %v3995
      %v4030 = vsel %vm4028, %v3995, %v3997
      %v4031 = vsel %vm4028, %v3997, %v3999
      %v4032 = vsel %vm4028, %v3999, %v4001
      %v4033 = vsel %vm4028, %v4001, %v4003
      %v4034 = vsel %vm4028, %v4003, %v4005
      %v4035 = vsel %vm4028, %v4005, %v4007
      %v4036 = vsel %vm4028, %v4007, %v4009
      %v4037 = vsel %vm4028, %v4011, %v4013
      %v4038 = vsel %vm4028, %v4013, %v4015
      %v4039 = vsel %vm4028, %v4015, %v4017
      %v4040 = vsel %vm4028, %v4017, %v4019
      %v4041 = vsel %vm4028, %v4019, %v4021
      %v4042 = vsel %vm4028, %v4021, %v4023
      %v4043 = vsel %vm4028, %v4023, %v4025
      %v4044 = vsel %vm4028, %v4025, %v4027
      %4061 = vst [vmem:[#allocation4] sm:$0xff] %v4029
      %4062 = vst [vmem:[#allocation4 + $0x8] sm:$0xff] %v4030
      %4063 = vst [vmem:[#allocation4 + $0x10] sm:$0xff] %v4031
      %4064 = vst [vmem:[#allocation4 + $0x18] sm:$0xff] %v4032
      %4065 = vst [vmem:[#allocation4 + $0x20] sm:$0xff] %v4033
      %4066 = vst [vmem:[#allocation4 + $0x28] sm:$0xff] %v4034
      %4067 = vst [vmem:[#allocation4 + $0x30] sm:$0xff] %v4035
      %4068 = vst [vmem:[#allocation4 + $0x38] sm:$0xff] %v4036
      %4069 = vst [vmem:[#allocation4 + $0x40] sm:$0xff] %v4037
      %4070 = vst [vmem:[#allocation4 + $0x48] sm:$0xff] %v4038
      %4071 = vst [vmem:[#allocation4 + $0x50] sm:$0xff] %v4039
      %4072 = vst [vmem:[#allocation4 + $0x58] sm:$0xff] %v4040
      %4073 = vst [vmem:[#allocation4 + $0x60] sm:$0xff] %v4041
      %4074 = vst [vmem:[#allocation4 + $0x68] sm:$0xff] %v4042
      %4075 = vst [vmem:[#allocation4 + $0x70] sm:$0xff] %v4043
      %4076 = vst [vmem:[#allocation4 + $0x78] sm:$0xff] %v4044
      %v4077 = vld [vmem:[#allocation3] sm:$0xff]
      %v4078 = vld [vmem:[#allocation3 + $0x8] sm:$0xff]
      %v4079 = vld [vmem:[#allocation3 + $0x10] sm:$0xff]
      %v4080 = vld [vmem:[#allocation3 + $0x18] sm:$0xff]
      %v4081 = vld [vmem:[#allocation3 + $0x20] sm:$0xff]
      %v4082 = vld [vmem:[#allocation3 + $0x28] sm:$0xff]
      %v4083 = vld [vmem:[#allocation3 + $0x30] sm:$0xff]
      %v4084 = vld [vmem:[#allocation3 + $0x38] sm:$0xff]
      %v4085 = vld [vmem:[#allocation3 + $0x40] sm:$0xff]
      %v4086 = vld [vmem:[#allocation3 + $0x50] sm:$0xff]
      %v4087 = vld [vmem:[#allocation3 + $0x58] sm:$0xff]
      %v4088 = vld [vmem:[#allocation3 + $0x60] sm:$0xff]
      %v4089 = vld [vmem:[#allocation3 + $0x68] sm:$0xff]
      %v4090 = vld [vmem:[#allocation3 + $0x70] sm:$0xff]
      %v4091 = vld [vmem:[#allocation3 + $0x78] sm:$0xff]
      %v4092 = vld [vmem:[#allocation3 + $0x80] sm:$0xff]
      %v4093 = vld [vmem:[#allocation3 + $0x88] sm:$0xff]
      %v4094 = vld [vmem:[#allocation3 + $0x90] sm:$0xff]
      %4113 = vrot.lane.b32.xlu0 %v4077, 32
      %v4114 = vpop.permute.xlu0 %4113
      %4115 = vrot.lane.b32.xlu0 %v4078, 32
      %v4116 = vpop.permute.xlu0 %4115
      %4117 = vrot.lane.b32.xlu0 %v4079, 32
      %v4118 = vpop.permute.xlu0 %4117
      %4119 = vrot.lane.b32.xlu0 %v4080, 32
      %v4120 = vpop.permute.xlu0 %4119
      %4121 = vrot.lane.b32.xlu0 %v4081, 32
      %v4122 = vpop.permute.xlu0 %4121
      %4123 = vrot.lane.b32.xlu0 %v4082, 32
      %v4124 = vpop.permute.xlu0 %4123
      %4125 = vrot.lane.b32.xlu0 %v4083, 32
      %v4126 = vpop.permute.xlu0 %4125
      %4127 = vrot.lane.b32.xlu0 %v4084, 32
      %v4128 = vpop.permute.xlu0 %4127
      %4129 = vrot.lane.b32.xlu0 %v4085, 32
      %v4130 = vpop.permute.xlu0 %4129
      %4131 = vrot.lane.b32.xlu0 %v4086, 32
      %v4132 = vpop.permute.xlu0 %4131
      %4133 = vrot.lane.b32.xlu0 %v4087, 32
      %v4134 = vpop.permute.xlu0 %4133
      %4135 = vrot.lane.b32.xlu0 %v4088, 32
      %v4136 = vpop.permute.xlu0 %4135
      %4137 = vrot.lane.b32.xlu0 %v4089, 32
      %v4138 = vpop.permute.xlu0 %4137
      %4139 = vrot.lane.b32.xlu0 %v4090, 32
      %v4140 = vpop.permute.xlu0 %4139
      %4141 = vrot.lane.b32.xlu0 %v4091, 32
      %v4142 = vpop.permute.xlu0 %4141
      %4143 = vrot.lane.b32.xlu0 %v4092, 32
      %v4144 = vpop.permute.xlu0 %4143
      %4145 = vrot.lane.b32.xlu0 %v4093, 32
      %v4146 = vpop.permute.xlu0 %4145
      %4147 = vrot.lane.b32.xlu0 %v4094, 32
      %v4148 = vpop.permute.xlu0 %4147
      %vm4149 = vcmask 261120
      %v4150 = vsel %vm4149, %v4114, %v4116
      %v4151 = vsel %vm4149, %v4116, %v4118
      %v4152 = vsel %vm4149, %v4118, %v4120
      %v4153 = vsel %vm4149, %v4120, %v4122
      %v4154 = vsel %vm4149, %v4122, %v4124
      %v4155 = vsel %vm4149, %v4124, %v4126
      %v4156 = vsel %vm4149, %v4126, %v4128
      %v4157 = vsel %vm4149, %v4128, %v4130
      %v4158 = vsel %vm4149, %v4132, %v4134
      %v4159 = vsel %vm4149, %v4134, %v4136
      %v4160 = vsel %vm4149, %v4136, %v4138
      %v4161 = vsel %vm4149, %v4138, %v4140
      %v4162 = vsel %vm4149, %v4140, %v4142
      %v4163 = vsel %vm4149, %v4142, %v4144
      %v4164 = vsel %vm4149, %v4144, %v4146
      %v4165 = vsel %vm4149, %v4146, %v4148
      %4182 = vst [vmem:[#allocation4 + $0x80] sm:$0xff] %v4150
      %4183 = vst [vmem:[#allocation4 + $0x88] sm:$0xff] %v4151
      %4184 = vst [vmem:[#allocation4 + $0x90] sm:$0xff] %v4152
      %4185 = vst [vmem:[#allocation4 + $0x98] sm:$0xff] %v4153
      %4186 = vst [vmem:[#allocation4 + $0xa0] sm:$0xff] %v4154
      %4187 = vst [vmem:[#allocation4 + $0xa8] sm:$0xff] %v4155
      %4188 = vst [vmem:[#allocation4 + $0xb0] sm:$0xff] %v4156
      %4189 = vst [vmem:[#allocation4 + $0xb8] sm:$0xff] %v4157
      %4190 = vst [vmem:[#allocation4 + $0xc0] sm:$0xff] %v4158
      %4191 = vst [vmem:[#allocation4 + $0xc8] sm:$0xff] %v4159
      %4192 = vst [vmem:[#allocation4 + $0xd0] sm:$0xff] %v4160
      %4193 = vst [vmem:[#allocation4 + $0xd8] sm:$0xff] %v4161
      %4194 = vst [vmem:[#allocation4 + $0xe0] sm:$0xff] %v4162
      %4195 = vst [vmem:[#allocation4 + $0xe8] sm:$0xff] %v4163
      %4196 = vst [vmem:[#allocation4 + $0xf0] sm:$0xff] %v4164
      %4197 = vst [vmem:[#allocation4 + $0xf8] sm:$0xff] %v4165
      %v4198 = vld [vmem:[#allocation3] sm:$0xff]
      %v4199 = vld [vmem:[#allocation3 + $0x8] sm:$0xff]
      %v4200 = vld [vmem:[#allocation3 + $0x10] sm:$0xff]
      %v4201 = vld [vmem:[#allocation3 + $0x18] sm:$0xff]
      %v4202 = vld [vmem:[#allocation3 + $0x20] sm:$0xff]
      %v4203 = vld [vmem:[#allocation3 + $0x28] sm:$0xff]
      %v4204 = vld [vmem:[#allocation3 + $0x30] sm:$0xff]
      %v4205 = vld [vmem:[#allocation3 + $0x38] sm:$0xff]
      %v4206 = vld [vmem:[#allocation3 + $0x40] sm:$0xff]
      %v4207 = vld [vmem:[#allocation3 + $0x50] sm:$0xff]
      %v4208 = vld [vmem:[#allocation3 + $0x58] sm:$0xff]
      %v4209 = vld [vmem:[#allocation3 + $0x60] sm:$0xff]
      %v4210 = vld [vmem:[#allocation3 + $0x68] sm:$0xff]
      %v4211 = vld [vmem:[#allocation3 + $0x70] sm:$0xff]
      %v4212 = vld [vmem:[#allocation3 + $0x78] sm:$0xff]
      %v4213 = vld [vmem:[#allocation3 + $0x80] sm:$0xff]
      %v4214 = vld [vmem:[#allocation3 + $0x88] sm:$0xff]
      %v4215 = vld [vmem:[#allocation3 + $0x90] sm:$0xff]
      %4232 = vrot.lane.b32.xlu0 %v3825, 97
      %v4233 = vpop.permute.xlu0 %4232
      %4234 = vrot.lane.b32.xlu0 %v3826, 97
      %v4235 = vpop.permute.xlu0 %4234
      %4236 = vrot.lane.b32.xlu0 %v3827, 97
      %v4237 = vpop.permute.xlu0 %4236
      %4238 = vrot.lane.b32.xlu0 %v3828, 97
      %v4239 = vpop.permute.xlu0 %4238
      %4240 = vrot.lane.b32.xlu0 %v3829, 97
      %v4241 = vpop.permute.xlu0 %4240
      %4242 = vrot.lane.b32.xlu0 %v3830, 97
      %v4243 = vpop.permute.xlu0 %4242
      %4244 = vrot.lane.b32.xlu0 %v3831, 97
      %v4245 = vpop.permute.xlu0 %4244
      %4246 = vrot.lane.b32.xlu0 %v3832, 97
      %v4247 = vpop.permute.xlu0 %4246
      %4248 = vrot.lane.b32.xlu0 %v3833, 97
      %v4249 = vpop.permute.xlu0 %4248
      %4250 = vrot.lane.b32.xlu0 %v3834, 97
      %v4251 = vpop.permute.xlu0 %4250
      %4252 = vrot.lane.b32.xlu0 %v3835, 97
      %v4253 = vpop.permute.xlu0 %4252
      %4254 = vrot.lane.b32.xlu0 %v3836, 97
      %v4255 = vpop.permute.xlu0 %4254
      %4256 = vrot.lane.b32.xlu0 %v3837, 97
      %v4257 = vpop.permute.xlu0 %4256
      %4258 = vrot.lane.b32.xlu0 %v3838, 97
      %v4259 = vpop.permute.xlu0 %4258
      %4260 = vrot.lane.b32.xlu0 %v3839, 97
      %v4261 = vpop.permute.xlu0 %4260
      %4262 = vrot.lane.b32.xlu0 %v3840, 97
      %v4263 = vpop.permute.xlu0 %4262
      %vm4264 = vcmask 793600
      %v4265 = vsel %vm4264, %v4233, %v4235
      %v4266 = vsel %vm4264, %v4235, %v4237
      %v4267 = vsel %vm4264, %v4237, %v4239
      %v4268 = vsel %vm4264, %v4239, %v4241
      %v4269 = vsel %vm4264, %v4241, %v4243
      %v4270 = vsel %vm4264, %v4243, %v4245
      %v4271 = vsel %vm4264, %v4245, %v4247
      %v4272 = vsel %vm4264, %v4249, %v4251
      %v4273 = vsel %vm4264, %v4251, %v4253
      %v4274 = vsel %vm4264, %v4253, %v4255
      %v4275 = vsel %vm4264, %v4255, %v4257
      %v4276 = vsel %vm4264, %v4257, %v4259
      %v4277 = vsel %vm4264, %v4259, %v4261
      %v4278 = vsel %vm4264, %v4261, %v4263
      %v4297 = vmul.f32 %v4198, %v4233
      %v4298 = vmul.f32 %v4199, %v4265
      %v4299 = vmul.f32 %v4200, %v4266
      %v4300 = vmul.f32 %v4201, %v4267
      %v4301 = vmul.f32 %v4202, %v4268
      %v4302 = vmul.f32 %v4203, %v4269
      %v4303 = vmul.f32 %v4204, %v4270
      %v4304 = vmul.f32 %v4205, %v4271
      %v4305 = vmul.f32 %v4206, %v4247
      %v4306 = vmul.f32 %v4207, %v4249
      %v4307 = vmul.f32 %v4208, %v4272
      %v4308 = vmul.f32 %v4209, %v4273
      %v4309 = vmul.f32 %v4210, %v4274
      %v4310 = vmul.f32 %v4211, %v4275
      %v4311 = vmul.f32 %v4212, %v4276
      %v4312 = vmul.f32 %v4213, %v4277
      %v4313 = vmul.f32 %v4214, %v4278
      %v4314 = vmul.f32 %v4215, %v4263
      %4333 = vrot.lane.b32.xlu0 %v4297, 31
      %v4334 = vpop.permute.xlu0 %4333
      %4335 = vrot.lane.b32.xlu0 %v4298, 31
      %v4336 = vpop.permute.xlu0 %4335
      %4337 = vrot.lane.b32.xlu0 %v4299, 31
      %v4338 = vpop.permute.xlu0 %4337
      %4339 = vrot.lane.b32.xlu0 %v4300, 31
      %v4340 = vpop.permute.xlu0 %4339
      %4341 = vrot.lane.b32.xlu0 %v4301, 31
      %v4342 = vpop.permute.xlu0 %4341
      %4343 = vrot.lane.b32.xlu0 %v4302, 31
      %v4344 = vpop.permute.xlu0 %4343
      %4345 = vrot.lane.b32.xlu0 %v4303, 31
      %v4346 = vpop.permute.xlu0 %4345
      %4347 = vrot.lane.b32.xlu0 %v4304, 31
      %v4348 = vpop.permute.xlu0 %4347
      %4349 = vrot.lane.b32.xlu0 %v4305, 31
      %v4350 = vpop.permute.xlu0 %4349
      %4351 = vrot.lane.b32.xlu0 %v4306, 31
      %v4352 = vpop.permute.xlu0 %4351
      %4353 = vrot.lane.b32.xlu0 %v4307, 31
      %v4354 = vpop.permute.xlu0 %4353
      %4355 = vrot.lane.b32.xlu0 %v4308, 31
      %v4356 = vpop.permute.xlu0 %4355
      %4357 = vrot.lane.b32.xlu0 %v4309, 31
      %v4358 = vpop.permute.xlu0 %4357
      %4359 = vrot.lane.b32.xlu0 %v4310, 31
      %v4360 = vpop.permute.xlu0 %4359
      %4361 = vrot.lane.b32.xlu0 %v4311, 31
      %v4362 = vpop.permute.xlu0 %4361
      %4363 = vrot.lane.b32.xlu0 %v4312, 31
      %v4364 = vpop.permute.xlu0 %4363
      %4365 = vrot.lane.b32.xlu0 %v4313, 31
      %v4366 = vpop.permute.xlu0 %4365
      %4367 = vrot.lane.b32.xlu0 %v4314, 31
      %v4368 = vpop.permute.xlu0 %4367
      %vm4369 = vcmask 252928
      %v4370 = vsel %vm4369, %v4334, %v4336
      %v4371 = vsel %vm4369, %v4336, %v4338
      %v4372 = vsel %vm4369, %v4338, %v4340
      %v4373 = vsel %vm4369, %v4340, %v4342
      %v4374 = vsel %vm4369, %v4342, %v4344
      %v4375 = vsel %vm4369, %v4344, %v4346
      %v4376 = vsel %vm4369, %v4346, %v4348
      %v4377 = vsel %vm4369, %v4348, %v4350
      %v4378 = vsel %vm4369, %v4352, %v4354
      %v4379 = vsel %vm4369, %v4354, %v4356
      %v4380 = vsel %vm4369, %v4356, %v4358
      %v4381 = vsel %vm4369, %v4358, %v4360
      %v4382 = vsel %vm4369, %v4360, %v4362
      %v4383 = vsel %vm4369, %v4362, %v4364
      %v4384 = vsel %vm4369, %v4364, %v4366
      %v4385 = vsel %vm4369, %v4366, %v4368
      %4402 = vst [vmem:[#allocation4 + $0x100] sm:$0xff] %v4370
      %4403 = vst [vmem:[#allocation4 + $0x108] sm:$0xff] %v4371
      %4404 = vst [vmem:[#allocation4 + $0x110] sm:$0xff] %v4372
      %4405 = vst [vmem:[#allocation4 + $0x118] sm:$0xff] %v4373
      %4406 = vst [vmem:[#allocation4 + $0x120] sm:$0xff] %v4374
      %4407 = vst [vmem:[#allocation4 + $0x128] sm:$0xff] %v4375
      %4408 = vst [vmem:[#allocation4 + $0x130] sm:$0xff] %v4376
      %4409 = vst [vmem:[#allocation4 + $0x138] sm:$0xff] %v4377
      %4410 = vst [vmem:[#allocation4 + $0x140] sm:$0xff] %v4378
      %4411 = vst [vmem:[#allocation4 + $0x148] sm:$0xff] %v4379
      %4412 = vst [vmem:[#allocation4 + $0x150] sm:$0xff] %v4380
      %4413 = vst [vmem:[#allocation4 + $0x158] sm:$0xff] %v4381
      %4414 = vst [vmem:[#allocation4 + $0x160] sm:$0xff] %v4382
      %4415 = vst [vmem:[#allocation4 + $0x168] sm:$0xff] %v4383
      %4416 = vst [vmem:[#allocation4 + $0x170] sm:$0xff] %v4384
      %4417 = vst [vmem:[#allocation4 + $0x178] sm:$0xff] %v4385
      %v4418 = vld [vmem:[#allocation3] sm:$0xff]
      %v4419 = vld [vmem:[#allocation3 + $0x8] sm:$0xff]
      %v4420 = vld [vmem:[#allocation3 + $0x10] sm:$0xff]
      %v4421 = vld [vmem:[#allocation3 + $0x18] sm:$0xff]
      %v4422 = vld [vmem:[#allocation3 + $0x20] sm:$0xff]
      %v4423 = vld [vmem:[#allocation3 + $0x28] sm:$0xff]
      %v4424 = vld [vmem:[#allocation3 + $0x30] sm:$0xff]
      %v4425 = vld [vmem:[#allocation3 + $0x38] sm:$0xff]
      %v4426 = vld [vmem:[#allocation3 + $0x40] sm:$0xff]
      %v4427 = vld [vmem:[#allocation3 + $0x50] sm:$0xff]
      %v4428 = vld [vmem:[#allocation3 + $0x58] sm:$0xff]
      %v4429 = vld [vmem:[#allocation3 + $0x60] sm:$0xff]
      %v4430 = vld [vmem:[#allocation3 + $0x68] sm:$0xff]
      %v4431 = vld [vmem:[#allocation3 + $0x70] sm:$0xff]
      %v4432 = vld [vmem:[#allocation3 + $0x78] sm:$0xff]
      %v4433 = vld [vmem:[#allocation3 + $0x80] sm:$0xff]
      %v4434 = vld [vmem:[#allocation3 + $0x88] sm:$0xff]
      %v4435 = vld [vmem:[#allocation3 + $0x90] sm:$0xff]
      %4436 = vrot.lane.b32.xlu0 %v3809, 127
      %v4437 = vpop.permute.xlu0 %4436
      %4438 = vrot.lane.b32.xlu0 %v3810, 127
      %v4439 = vpop.permute.xlu0 %4438
      %4440 = vrot.lane.b32.xlu0 %v3811, 127
      %v4441 = vpop.permute.xlu0 %4440
      %4442 = vrot.lane.b32.xlu0 %v3812, 127
      %v4443 = vpop.permute.xlu0 %4442
      %4444 = vrot.lane.b32.xlu0 %v3813, 127
      %v4445 = vpop.permute.xlu0 %4444
      %4446 = vrot.lane.b32.xlu0 %v3814, 127
      %v4447 = vpop.permute.xlu0 %4446
      %4448 = vrot.lane.b32.xlu0 %v3815, 127
      %v4449 = vpop.permute.xlu0 %4448
      %4450 = vrot.lane.b32.xlu0 %v3816, 127
      %v4451 = vpop.permute.xlu0 %4450
      %4452 = vrot.lane.b32.xlu0 %v3817, 127
      %v4453 = vpop.permute.xlu0 %4452
      %4454 = vrot.lane.b32.xlu0 %v3818, 127
      %v4455 = vpop.permute.xlu0 %4454
      %4456 = vrot.lane.b32.xlu0 %v3819, 127
      %v4457 = vpop.permute.xlu0 %4456
      %4458 = vrot.lane.b32.xlu0 %v3820, 127
      %v4459 = vpop.permute.xlu0 %4458
      %4460 = vrot.lane.b32.xlu0 %v3821, 127
      %v4461 = vpop.permute.xlu0 %4460
      %4462 = vrot.lane.b32.xlu0 %v3822, 127
      %v4463 = vpop.permute.xlu0 %4462
      %4464 = vrot.lane.b32.xlu0 %v3823, 127
      %v4465 = vpop.permute.xlu0 %4464
      %4466 = vrot.lane.b32.xlu0 %v3824, 127
      %v4467 = vpop.permute.xlu0 %4466
      %v4468 = vsel %vm916, %v4437, %v4439
      %v4469 = vsel %vm916, %v4439, %v4441
      %v4470 = vsel %vm916, %v4441, %v4443
      %v4471 = vsel %vm916, %v4443, %v4445
      %v4472 = vsel %vm916, %v4445, %v4447
      %v4473 = vsel %vm916, %v4447, %v4449
      %v4474 = vsel %vm916, %v4449, %v4451
      %v4475 = vsel %vm916, %v4453, %v4455
      %v4476 = vsel %vm916, %v4455, %v4457
      %v4477 = vsel %vm916, %v4457, %v4459
      %v4478 = vsel %vm916, %v4459, %v4461
      %v4479 = vsel %vm916, %v4461, %v4463
      %v4480 = vsel %vm916, %v4463, %v4465
      %v4481 = vsel %vm916, %v4465, %v4467
      %v4500 = vmul.f32 %v4418, %v4437
      %v4501 = vmul.f32 %v4419, %v4468
      %v4502 = vmul.f32 %v4420, %v4469
      %v4503 = vmul.f32 %v4421, %v4470
      %v4504 = vmul.f32 %v4422, %v4471
      %v4505 = vmul.f32 %v4423, %v4472
      %v4506 = vmul.f32 %v4424, %v4473
      %v4507 = vmul.f32 %v4425, %v4474
      %v4508 = vmul.f32 %v4426, %v4451
      %v4509 = vmul.f32 %v4427, %v4453
      %v4510 = vmul.f32 %v4428, %v4475
      %v4511 = vmul.f32 %v4429, %v4476
      %v4512 = vmul.f32 %v4430, %v4477
      %v4513 = vmul.f32 %v4431, %v4478
      %v4514 = vmul.f32 %v4432, %v4479
      %v4515 = vmul.f32 %v4433, %v4480
      %v4516 = vmul.f32 %v4434, %v4481
      %v4517 = vmul.f32 %v4435, %v4467
      %4536 = vrot.lane.b32.xlu0 %v4500, 1
      %v4537 = vpop.permute.xlu0 %4536
      %4538 = vrot.lane.b32.xlu0 %v4501, 1
      %v4539 = vpop.permute.xlu0 %4538
      %4540 = vrot.lane.b32.xlu0 %v4502, 1
      %v4541 = vpop.permute.xlu0 %4540
      %4542 = vrot.lane.b32.xlu0 %v4503, 1
      %v4543 = vpop.permute.xlu0 %4542
      %4544 = vrot.lane.b32.xlu0 %v4504, 1
      %v4545 = vpop.permute.xlu0 %4544
      %4546 = vrot.lane.b32.xlu0 %v4505, 1
      %v4547 = vpop.permute.xlu0 %4546
      %4548 = vrot.lane.b32.xlu0 %v4506, 1
      %v4549 = vpop.permute.xlu0 %4548
      %4550 = vrot.lane.b32.xlu0 %v4507, 1
      %v4551 = vpop.permute.xlu0 %4550
      %4552 = vrot.lane.b32.xlu0 %v4508, 1
      %v4553 = vpop.permute.xlu0 %4552
      %4554 = vrot.lane.b32.xlu0 %v4509, 1
      %v4555 = vpop.permute.xlu0 %4554
      %4556 = vrot.lane.b32.xlu0 %v4510, 1
      %v4557 = vpop.permute.xlu0 %4556
      %4558 = vrot.lane.b32.xlu0 %v4511, 1
      %v4559 = vpop.permute.xlu0 %4558
      %4560 = vrot.lane.b32.xlu0 %v4512, 1
      %v4561 = vpop.permute.xlu0 %4560
      %4562 = vrot.lane.b32.xlu0 %v4513, 1
      %v4563 = vpop.permute.xlu0 %4562
      %4564 = vrot.lane.b32.xlu0 %v4514, 1
      %v4565 = vpop.permute.xlu0 %4564
      %4566 = vrot.lane.b32.xlu0 %v4515, 1
      %v4567 = vpop.permute.xlu0 %4566
      %4568 = vrot.lane.b32.xlu0 %v4516, 1
      %v4569 = vpop.permute.xlu0 %4568
      %4570 = vrot.lane.b32.xlu0 %v4517, 1
      %v4571 = vpop.permute.xlu0 %4570
      %v4572 = vsel %vm949, %v4537, %v4539
      %v4573 = vsel %vm949, %v4539, %v4541
      %v4574 = vsel %vm949, %v4541, %v4543
      %v4575 = vsel %vm949, %v4543, %v4545
      %v4576 = vsel %vm949, %v4545, %v4547
      %v4577 = vsel %vm949, %v4547, %v4549
      %v4578 = vsel %vm949, %v4549, %v4551
      %v4579 = vsel %vm949, %v4551, %v4553
      %v4580 = vsel %vm949, %v4555, %v4557
      %v4581 = vsel %vm949, %v4557, %v4559
      %v4582 = vsel %vm949, %v4559, %v4561
      %v4583 = vsel %vm949, %v4561, %v4563
      %v4584 = vsel %vm949, %v4563, %v4565
      %v4585 = vsel %vm949, %v4565, %v4567
      %v4586 = vsel %vm949, %v4567, %v4569
      %v4587 = vsel %vm949, %v4569, %v4571
      %4604 = vst [vmem:[#allocation4 + $0x180] sm:$0xff] %v4572
      %4605 = vst [vmem:[#allocation4 + $0x188] sm:$0xff] %v4573
      %4606 = vst [vmem:[#allocation4 + $0x190] sm:$0xff] %v4574
      %4607 = vst [vmem:[#allocation4 + $0x198] sm:$0xff] %v4575
      %4608 = vst [vmem:[#allocation4 + $0x1a0] sm:$0xff] %v4576
      %4609 = vst [vmem:[#allocation4 + $0x1a8] sm:$0xff] %v4577
      %4610 = vst [vmem:[#allocation4 + $0x1b0] sm:$0xff] %v4578
      %4611 = vst [vmem:[#allocation4 + $0x1b8] sm:$0xff] %v4579
      %4612 = vst [vmem:[#allocation4 + $0x1c0] sm:$0xff] %v4580
      %4613 = vst [vmem:[#allocation4 + $0x1c8] sm:$0xff] %v4581
      %4614 = vst [vmem:[#allocation4 + $0x1d0] sm:$0xff] %v4582
      %4615 = vst [vmem:[#allocation4 + $0x1d8] sm:$0xff] %v4583
      %4616 = vst [vmem:[#allocation4 + $0x1e0] sm:$0xff] %v4584
      %4617 = vst [vmem:[#allocation4 + $0x1e8] sm:$0xff] %v4585
      %4618 = vst [vmem:[#allocation4 + $0x1f0] sm:$0xff] %v4586
      %4619 = vst [vmem:[#allocation4 + $0x1f8] sm:$0xff] %v4587
      %v4620 = vld [vmem:[#allocation3 + $0x8] sm:$0xff]
      %v4621 = vld [vmem:[#allocation3 + $0x10] sm:$0xff]
      %v4622 = vld [vmem:[#allocation3 + $0x18] sm:$0xff]
      %v4623 = vld [vmem:[#allocation3 + $0x20] sm:$0xff]
      %v4624 = vld [vmem:[#allocation3 + $0x28] sm:$0xff]
      %v4625 = vld [vmem:[#allocation3 + $0x30] sm:$0xff]
      %v4626 = vld [vmem:[#allocation3 + $0x38] sm:$0xff]
      %v4627 = vld [vmem:[#allocation3 + $0x40] sm:$0xff]
      %v4628 = vld [vmem:[#allocation3 + $0x58] sm:$0xff]
      %v4629 = vld [vmem:[#allocation3 + $0x60] sm:$0xff]
      %v4630 = vld [vmem:[#allocation3 + $0x68] sm:$0xff]
      %v4631 = vld [vmem:[#allocation3 + $0x70] sm:$0xff]
      %v4632 = vld [vmem:[#allocation3 + $0x78] sm:$0xff]
      %v4633 = vld [vmem:[#allocation3 + $0x80] sm:$0xff]
      %v4634 = vld [vmem:[#allocation3 + $0x88] sm:$0xff]
      %v4635 = vld [vmem:[#allocation3 + $0x90] sm:$0xff]
      %4636 = vst [vmem:[#allocation4 + $0x200] sm:$0xff] %v4620
      %4637 = vst [vmem:[#allocation4 + $0x208] sm:$0xff] %v4621
      %4638 = vst [vmem:[#allocation4 + $0x210] sm:$0xff] %v4622
      %4639 = vst [vmem:[#allocation4 + $0x218] sm:$0xff] %v4623
      %4640 = vst [vmem:[#allocation4 + $0x220] sm:$0xff] %v4624
      %4641 = vst [vmem:[#allocation4 + $0x228] sm:$0xff] %v4625
      %4642 = vst [vmem:[#allocation4 + $0x230] sm:$0xff] %v4626
      %4643 = vst [vmem:[#allocation4 + $0x238] sm:$0xff] %v4627
      %4644 = vst [vmem:[#allocation4 + $0x240] sm:$0xff] %v4628
      %4645 = vst [vmem:[#allocation4 + $0x248] sm:$0xff] %v4629
      %4646 = vst [vmem:[#allocation4 + $0x250] sm:$0xff] %v4630
      %4647 = vst [vmem:[#allocation4 + $0x258] sm:$0xff] %v4631
      %4648 = vst [vmem:[#allocation4 + $0x260] sm:$0xff] %v4632
      %4649 = vst [vmem:[#allocation4 + $0x268] sm:$0xff] %v4633
      %4650 = vst [vmem:[#allocation4 + $0x270] sm:$0xff] %v4634
      %4651 = vst [vmem:[#allocation4 + $0x278] sm:$0xff] %v4635
      %v4652 = vld [vmem:[#allocation3 + $0x8] sm:$0xff]
      %v4653 = vld [vmem:[#allocation3 + $0x10] sm:$0xff]
      %v4654 = vld [vmem:[#allocation3 + $0x18] sm:$0xff]
      %v4655 = vld [vmem:[#allocation3 + $0x20] sm:$0xff]
      %v4656 = vld [vmem:[#allocation3 + $0x28] sm:$0xff]
      %v4657 = vld [vmem:[#allocation3 + $0x30] sm:$0xff]
      %v4658 = vld [vmem:[#allocation3 + $0x38] sm:$0xff]
      %v4659 = vld [vmem:[#allocation3 + $0x40] sm:$0xff]
      %v4660 = vld [vmem:[#allocation3 + $0x48] sm:$0xff]
      %v4661 = vld [vmem:[#allocation3 + $0x58] sm:$0xff]
      %v4662 = vld [vmem:[#allocation3 + $0x60] sm:$0xff]
      %v4663 = vld [vmem:[#allocation3 + $0x68] sm:$0xff]
      %v4664 = vld [vmem:[#allocation3 + $0x70] sm:$0xff]
      %v4665 = vld [vmem:[#allocation3 + $0x78] sm:$0xff]
      %v4666 = vld [vmem:[#allocation3 + $0x80] sm:$0xff]
      %v4667 = vld [vmem:[#allocation3 + $0x88] sm:$0xff]
      %v4668 = vld [vmem:[#allocation3 + $0x90] sm:$0xff]
      %v4669 = vld [vmem:[#allocation3 + $0x98] sm:$0xff]
      %4670 = vrot.lane.b32.xlu0 %v3825, 1
      %v4671 = vpop.permute.xlu0 %4670
      %4672 = vrot.lane.b32.xlu0 %v3826, 1
      %v4673 = vpop.permute.xlu0 %4672
      %4674 = vrot.lane.b32.xlu0 %v3827, 1
      %v4675 = vpop.permute.xlu0 %4674
      %4676 = vrot.lane.b32.xlu0 %v3828, 1
      %v4677 = vpop.permute.xlu0 %4676
      %4678 = vrot.lane.b32.xlu0 %v3829, 1
      %v4679 = vpop.permute.xlu0 %4678
      %4680 = vrot.lane.b32.xlu0 %v3830, 1
      %v4681 = vpop.permute.xlu0 %4680
      %4682 = vrot.lane.b32.xlu0 %v3831, 1
      %v4683 = vpop.permute.xlu0 %4682
      %4684 = vrot.lane.b32.xlu0 %v3832, 1
      %v4685 = vpop.permute.xlu0 %4684
      %4686 = vrot.lane.b32.xlu0 %v3833, 1
      %v4687 = vpop.permute.xlu0 %4686
      %4688 = vrot.lane.b32.xlu0 %v3834, 1
      %v4689 = vpop.permute.xlu0 %4688
      %4690 = vrot.lane.b32.xlu0 %v3835, 1
      %v4691 = vpop.permute.xlu0 %4690
      %4692 = vrot.lane.b32.xlu0 %v3836, 1
      %v4693 = vpop.permute.xlu0 %4692
      %4694 = vrot.lane.b32.xlu0 %v3837, 1
      %v4695 = vpop.permute.xlu0 %4694
      %4696 = vrot.lane.b32.xlu0 %v3838, 1
      %v4697 = vpop.permute.xlu0 %4696
      %4698 = vrot.lane.b32.xlu0 %v3839, 1
      %v4699 = vpop.permute.xlu0 %4698
      %4700 = vrot.lane.b32.xlu0 %v3840, 1
      %v4701 = vpop.permute.xlu0 %4700
      %v4702 = vsel %vm949, %v4671, %v4673
      %v4703 = vsel %vm949, %v4673, %v4675
      %v4704 = vsel %vm949, %v4675, %v4677
      %v4705 = vsel %vm949, %v4677, %v4679
      %v4706 = vsel %vm949, %v4679, %v4681
      %v4707 = vsel %vm949, %v4681, %v4683
      %v4708 = vsel %vm949, %v4683, %v4685
      %v4709 = vsel %vm949, %v4687, %v4689
      %v4710 = vsel %vm949, %v4689, %v4691
      %v4711 = vsel %vm949, %v4691, %v4693
      %v4712 = vsel %vm949, %v4693, %v4695
      %v4713 = vsel %vm949, %v4695, %v4697
      %v4714 = vsel %vm949, %v4697, %v4699
      %v4715 = vsel %vm949, %v4699, %v4701
      %v4734 = vmul.f32 %v4652, %v4671
      %v4735 = vmul.f32 %v4653, %v4702
      %v4736 = vmul.f32 %v4654, %v4703
      %v4737 = vmul.f32 %v4655, %v4704
      %v4738 = vmul.f32 %v4656, %v4705
      %v4739 = vmul.f32 %v4657, %v4706
      %v4740 = vmul.f32 %v4658, %v4707
      %v4741 = vmul.f32 %v4659, %v4708
      %v4742 = vmul.f32 %v4660, %v4685
      %v4743 = vmul.f32 %v4661, %v4687
      %v4744 = vmul.f32 %v4662, %v4709
      %v4745 = vmul.f32 %v4663, %v4710
      %v4746 = vmul.f32 %v4664, %v4711
      %v4747 = vmul.f32 %v4665, %v4712
      %v4748 = vmul.f32 %v4666, %v4713
      %v4749 = vmul.f32 %v4667, %v4714
      %v4750 = vmul.f32 %v4668, %v4715
      %v4751 = vmul.f32 %v4669, %v4701
      %4770 = vrot.lane.b32.xlu0 %v4734, 127
      %v4771 = vpop.permute.xlu0 %4770
      %4772 = vrot.lane.b32.xlu0 %v4735, 127
      %v4773 = vpop.permute.xlu0 %4772
      %4774 = vrot.lane.b32.xlu0 %v4736, 127
      %v4775 = vpop.permute.xlu0 %4774
      %4776 = vrot.lane.b32.xlu0 %v4737, 127
      %v4777 = vpop.permute.xlu0 %4776
      %4778 = vrot.lane.b32.xlu0 %v4738, 127
      %v4779 = vpop.permute.xlu0 %4778
      %4780 = vrot.lane.b32.xlu0 %v4739, 127
      %v4781 = vpop.permute.xlu0 %4780
      %4782 = vrot.lane.b32.xlu0 %v4740, 127
      %v4783 = vpop.permute.xlu0 %4782
      %4784 = vrot.lane.b32.xlu0 %v4741, 127
      %v4785 = vpop.permute.xlu0 %4784
      %4786 = vrot.lane.b32.xlu0 %v4742, 127
      %v4787 = vpop.permute.xlu0 %4786
      %4788 = vrot.lane.b32.xlu0 %v4743, 127
      %v4789 = vpop.permute.xlu0 %4788
      %4790 = vrot.lane.b32.xlu0 %v4744, 127
      %v4791 = vpop.permute.xlu0 %4790
      %4792 = vrot.lane.b32.xlu0 %v4745, 127
      %v4793 = vpop.permute.xlu0 %4792
      %4794 = vrot.lane.b32.xlu0 %v4746, 127
      %v4795 = vpop.permute.xlu0 %4794
      %4796 = vrot.lane.b32.xlu0 %v4747, 127
      %v4797 = vpop.permute.xlu0 %4796
      %4798 = vrot.lane.b32.xlu0 %v4748, 127
      %v4799 = vpop.permute.xlu0 %4798
      %4800 = vrot.lane.b32.xlu0 %v4749, 127
      %v4801 = vpop.permute.xlu0 %4800
      %4802 = vrot.lane.b32.xlu0 %v4750, 127
      %v4803 = vpop.permute.xlu0 %4802
      %4804 = vrot.lane.b32.xlu0 %v4751, 127
      %v4805 = vpop.permute.xlu0 %4804
      %v4806 = vsel %vm916, %v4771, %v4773
      %v4807 = vsel %vm916, %v4773, %v4775
      %v4808 = vsel %vm916, %v4775, %v4777
      %v4809 = vsel %vm916, %v4777, %v4779
      %v4810 = vsel %vm916, %v4779, %v4781
      %v4811 = vsel %vm916, %v4781, %v4783
      %v4812 = vsel %vm916, %v4783, %v4785
      %v4813 = vsel %vm916, %v4785, %v4787
      %v4814 = vsel %vm916, %v4789, %v4791
      %v4815 = vsel %vm916, %v4791, %v4793
      %v4816 = vsel %vm916, %v4793, %v4795
      %v4817 = vsel %vm916, %v4795, %v4797
      %v4818 = vsel %vm916, %v4797, %v4799
      %v4819 = vsel %vm916, %v4799, %v4801
      %v4820 = vsel %vm916, %v4801, %v4803
      %v4821 = vsel %vm916, %v4803, %v4805
      %4838 = vst [vmem:[#allocation4 + $0x280] sm:$0xff] %v4806
      %4839 = vst [vmem:[#allocation4 + $0x288] sm:$0xff] %v4807
      %4840 = vst [vmem:[#allocation4 + $0x290] sm:$0xff] %v4808
      %4841 = vst [vmem:[#allocation4 + $0x298] sm:$0xff] %v4809
      %4842 = vst [vmem:[#allocation4 + $0x2a0] sm:$0xff] %v4810
      %4843 = vst [vmem:[#allocation4 + $0x2a8] sm:$0xff] %v4811
      %4844 = vst [vmem:[#allocation4 + $0x2b0] sm:$0xff] %v4812
      %4845 = vst [vmem:[#allocation4 + $0x2b8] sm:$0xff] %v4813
      %4846 = vst [vmem:[#allocation4 + $0x2c0] sm:$0xff] %v4814
      %4847 = vst [vmem:[#allocation4 + $0x2c8] sm:$0xff] %v4815
      %4848 = vst [vmem:[#allocation4 + $0x2d0] sm:$0xff] %v4816
      %4849 = vst [vmem:[#allocation4 + $0x2d8] sm:$0xff] %v4817
      %4850 = vst [vmem:[#allocation4 + $0x2e0] sm:$0xff] %v4818
      %4851 = vst [vmem:[#allocation4 + $0x2e8] sm:$0xff] %v4819
      %4852 = vst [vmem:[#allocation4 + $0x2f0] sm:$0xff] %v4820
      %4853 = vst [vmem:[#allocation4 + $0x2f8] sm:$0xff] %v4821
      %v4854 = vld [vmem:[#allocation3 + $0x8] sm:$0xff]
      %v4855 = vld [vmem:[#allocation3 + $0x10] sm:$0xff]
      %v4856 = vld [vmem:[#allocation3 + $0x18] sm:$0xff]
      %v4857 = vld [vmem:[#allocation3 + $0x20] sm:$0xff]
      %v4858 = vld [vmem:[#allocation3 + $0x28] sm:$0xff]
      %v4859 = vld [vmem:[#allocation3 + $0x30] sm:$0xff]
      %v4860 = vld [vmem:[#allocation3 + $0x38] sm:$0xff]
      %v4861 = vld [vmem:[#allocation3 + $0x40] sm:$0xff]
      %v4862 = vld [vmem:[#allocation3 + $0x48] sm:$0xff]
      %v4863 = vld [vmem:[#allocation3 + $0x58] sm:$0xff]
      %v4864 = vld [vmem:[#allocation3 + $0x60] sm:$0xff]
      %v4865 = vld [vmem:[#allocation3 + $0x68] sm:$0xff]
      %v4866 = vld [vmem:[#allocation3 + $0x70] sm:$0xff]
      %v4867 = vld [vmem:[#allocation3 + $0x78] sm:$0xff]
      %v4868 = vld [vmem:[#allocation3 + $0x80] sm:$0xff]
      %v4869 = vld [vmem:[#allocation3 + $0x88] sm:$0xff]
      %v4870 = vld [vmem:[#allocation3 + $0x90] sm:$0xff]
      %v4871 = vld [vmem:[#allocation3 + $0x98] sm:$0xff]
      %4872 = vrot.lane.b32.xlu0 %v3809, 31
      %v4873 = vpop.permute.xlu0 %4872
      %4874 = vrot.lane.b32.xlu0 %v3810, 31
      %v4875 = vpop.permute.xlu0 %4874
      %4876 = vrot.lane.b32.xlu0 %v3811, 31
      %v4877 = vpop.permute.xlu0 %4876
      %4878 = vrot.lane.b32.xlu0 %v3812, 31
      %v4879 = vpop.permute.xlu0 %4878
      %4880 = vrot.lane.b32.xlu0 %v3813, 31
      %v4881 = vpop.permute.xlu0 %4880
      %4882 = vrot.lane.b32.xlu0 %v3814, 31
      %v4883 = vpop.permute.xlu0 %4882
      %4884 = vrot.lane.b32.xlu0 %v3815, 31
      %v4885 = vpop.permute.xlu0 %4884
      %4886 = vrot.lane.b32.xlu0 %v3816, 31
      %v4887 = vpop.permute.xlu0 %4886
      %4888 = vrot.lane.b32.xlu0 %v3817, 31
      %v4889 = vpop.permute.xlu0 %4888
      %4890 = vrot.lane.b32.xlu0 %v3818, 31
      %v4891 = vpop.permute.xlu0 %4890
      %4892 = vrot.lane.b32.xlu0 %v3819, 31
      %v4893 = vpop.permute.xlu0 %4892
      %4894 = vrot.lane.b32.xlu0 %v3820, 31
      %v4895 = vpop.permute.xlu0 %4894
      %4896 = vrot.lane.b32.xlu0 %v3821, 31
      %v4897 = vpop.permute.xlu0 %4896
      %4898 = vrot.lane.b32.xlu0 %v3822, 31
      %v4899 = vpop.permute.xlu0 %4898
      %4900 = vrot.lane.b32.xlu0 %v3823, 31
      %v4901 = vpop.permute.xlu0 %4900
      %4902 = vrot.lane.b32.xlu0 %v3824, 31
      %v4903 = vpop.permute.xlu0 %4902
      %v4904 = vsel %vm4369, %v4873, %v4875
      %v4905 = vsel %vm4369, %v4875, %v4877
      %v4906 = vsel %vm4369, %v4877, %v4879
      %v4907 = vsel %vm4369, %v4879, %v4881
      %v4908 = vsel %vm4369, %v4881, %v4883
      %v4909 = vsel %vm4369, %v4883, %v4885
      %v4910 = vsel %vm4369, %v4885, %v4887
      %v4911 = vsel %vm4369, %v4889, %v4891
      %v4912 = vsel %vm4369, %v4891, %v4893
      %v4913 = vsel %vm4369, %v4893, %v4895
      %v4914 = vsel %vm4369, %v4895, %v4897
      %v4915 = vsel %vm4369, %v4897, %v4899
      %v4916 = vsel %vm4369, %v4899, %v4901
      %v4917 = vsel %vm4369, %v4901, %v4903
      %v4936 = vmul.f32 %v4854, %v4873
      %v4937 = vmul.f32 %v4855, %v4904
      %v4938 = vmul.f32 %v4856, %v4905
      %v4939 = vmul.f32 %v4857, %v4906
      %v4940 = vmul.f32 %v4858, %v4907
      %v4941 = vmul.f32 %v4859, %v4908
      %v4942 = vmul.f32 %v4860, %v4909
      %v4943 = vmul.f32 %v4861, %v4910
      %v4944 = vmul.f32 %v4862, %v4887
      %v4945 = vmul.f32 %v4863, %v4889
      %v4946 = vmul.f32 %v4864, %v4911
      %v4947 = vmul.f32 %v4865, %v4912
      %v4948 = vmul.f32 %v4866, %v4913
      %v4949 = vmul.f32 %v4867, %v4914
      %v4950 = vmul.f32 %v4868, %v4915
      %v4951 = vmul.f32 %v4869, %v4916
      %v4952 = vmul.f32 %v4870, %v4917
      %v4953 = vmul.f32 %v4871, %v4903
      %4972 = vrot.lane.b32.xlu0 %v4936, 97
      %v4973 = vpop.permute.xlu0 %4972
      %4974 = vrot.lane.b32.xlu0 %v4937, 97
      %v4975 = vpop.permute.xlu0 %4974
      %4976 = vrot.lane.b32.xlu0 %v4938, 97
      %v4977 = vpop.permute.xlu0 %4976
      %4978 = vrot.lane.b32.xlu0 %v4939, 97
      %v4979 = vpop.permute.xlu0 %4978
      %4980 = vrot.lane.b32.xlu0 %v4940, 97
      %v4981 = vpop.permute.xlu0 %4980
      %4982 = vrot.lane.b32.xlu0 %v4941, 97
      %v4983 = vpop.permute.xlu0 %4982
      %4984 = vrot.lane.b32.xlu0 %v4942, 97
      %v4985 = vpop.permute.xlu0 %4984
      %4986 = vrot.lane.b32.xlu0 %v4943, 97
      %v4987 = vpop.permute.xlu0 %4986
      %4988 = vrot.lane.b32.xlu0 %v4944, 97
      %v4989 = vpop.permute.xlu0 %4988
      %4990 = vrot.lane.b32.xlu0 %v4945, 97
      %v4991 = vpop.permute.xlu0 %4990
      %4992 = vrot.lane.b32.xlu0 %v4946, 97
      %v4993 = vpop.permute.xlu0 %4992
      %4994 = vrot.lane.b32.xlu0 %v4947, 97
      %v4995 = vpop.permute.xlu0 %4994
      %4996 = vrot.lane.b32.xlu0 %v4948, 97
      %v4997 = vpop.permute.xlu0 %4996
      %4998 = vrot.lane.b32.xlu0 %v4949, 97
      %v4999 = vpop.permute.xlu0 %4998
      %5000 = vrot.lane.b32.xlu0 %v4950, 97
      %v5001 = vpop.permute.xlu0 %5000
      %5002 = vrot.lane.b32.xlu0 %v4951, 97
      %v5003 = vpop.permute.xlu0 %5002
      %5004 = vrot.lane.b32.xlu0 %v4952, 97
      %v5005 = vpop.permute.xlu0 %5004
      %5006 = vrot.lane.b32.xlu0 %v4953, 97
      %v5007 = vpop.permute.xlu0 %5006
      %v5008 = vsel %vm4264, %v4973, %v4975
      %v5009 = vsel %vm4264, %v4975, %v4977
      %v5010 = vsel %vm4264, %v4977, %v4979
      %v5011 = vsel %vm4264, %v4979, %v4981
      %v5012 = vsel %vm4264, %v4981, %v4983
      %v5013 = vsel %vm4264, %v4983, %v4985
      %v5014 = vsel %vm4264, %v4985, %v4987
      %v5015 = vsel %vm4264, %v4987, %v4989
      %v5016 = vsel %vm4264, %v4991, %v4993
      %v5017 = vsel %vm4264, %v4993, %v4995
      %v5018 = vsel %vm4264, %v4995, %v4997
      %v5019 = vsel %vm4264, %v4997, %v4999
      %v5020 = vsel %vm4264, %v4999, %v5001
      %v5021 = vsel %vm4264, %v5001, %v5003
      %v5022 = vsel %vm4264, %v5003, %v5005
      %v5023 = vsel %vm4264, %v5005, %v5007
      %5040 = vst [vmem:[#allocation4 + $0x300] sm:$0xff] %v5008
      %5041 = vst [vmem:[#allocation4 + $0x308] sm:$0xff] %v5009
      %5042 = vst [vmem:[#allocation4 + $0x310] sm:$0xff] %v5010
      %5043 = vst [vmem:[#allocation4 + $0x318] sm:$0xff] %v5011
      %5044 = vst [vmem:[#allocation4 + $0x320] sm:$0xff] %v5012
      %5045 = vst [vmem:[#allocation4 + $0x328] sm:$0xff] %v5013
      %5046 = vst [vmem:[#allocation4 + $0x330] sm:$0xff] %v5014
      %5047 = vst [vmem:[#allocation4 + $0x338] sm:$0xff] %v5015
      %5048 = vst [vmem:[#allocation4 + $0x340] sm:$0xff] %v5016
      %5049 = vst [vmem:[#allocation4 + $0x348] sm:$0xff] %v5017
      %5050 = vst [vmem:[#allocation4 + $0x350] sm:$0xff] %v5018
      %5051 = vst [vmem:[#allocation4 + $0x358] sm:$0xff] %v5019
      %5052 = vst [vmem:[#allocation4 + $0x360] sm:$0xff] %v5020
      %5053 = vst [vmem:[#allocation4 + $0x368] sm:$0xff] %v5021
      %5054 = vst [vmem:[#allocation4 + $0x370] sm:$0xff] %v5022
      %5055 = vst [vmem:[#allocation4 + $0x378] sm:$0xff] %v5023
      %v5056 = vld [vmem:[#allocation3 + $0x8] sm:$0xff]
      %v5057 = vld [vmem:[#allocation3 + $0x10] sm:$0xff]
      %v5058 = vld [vmem:[#allocation3 + $0x18] sm:$0xff]
      %v5059 = vld [vmem:[#allocation3 + $0x20] sm:$0xff]
      %v5060 = vld [vmem:[#allocation3 + $0x28] sm:$0xff]
      %v5061 = vld [vmem:[#allocation3 + $0x30] sm:$0xff]
      %v5062 = vld [vmem:[#allocation3 + $0x38] sm:$0xff]
      %v5063 = vld [vmem:[#allocation3 + $0x40] sm:$0xff]
      %v5064 = vld [vmem:[#allocation3 + $0x48] sm:$0xff]
      %v5065 = vld [vmem:[#allocation3 + $0x58] sm:$0xff]
      %v5066 = vld [vmem:[#allocation3 + $0x60] sm:$0xff]
      %v5067 = vld [vmem:[#allocation3 + $0x68] sm:$0xff]
      %v5068 = vld [vmem:[#allocation3 + $0x70] sm:$0xff]
      %v5069 = vld [vmem:[#allocation3 + $0x78] sm:$0xff]
      %v5070 = vld [vmem:[#allocation3 + $0x80] sm:$0xff]
      %v5071 = vld [vmem:[#allocation3 + $0x88] sm:$0xff]
      %v5072 = vld [vmem:[#allocation3 + $0x90] sm:$0xff]
      %v5073 = vld [vmem:[#allocation3 + $0x98] sm:$0xff]
      %5092 = vrot.lane.b32.xlu0 %v5056, 96
      %v5093 = vpop.permute.xlu0 %5092
      %5094 = vrot.lane.b32.xlu0 %v5057, 96
      %v5095 = vpop.permute.xlu0 %5094
      %5096 = vrot.lane.b32.xlu0 %v5058, 96
      %v5097 = vpop.permute.xlu0 %5096
      %5098 = vrot.lane.b32.xlu0 %v5059, 96
      %v5099 = vpop.permute.xlu0 %5098
      %5100 = vrot.lane.b32.xlu0 %v5060, 96
      %v5101 = vpop.permute.xlu0 %5100
      %5102 = vrot.lane.b32.xlu0 %v5061, 96
      %v5103 = vpop.permute.xlu0 %5102
      %5104 = vrot.lane.b32.xlu0 %v5062, 96
      %v5105 = vpop.permute.xlu0 %5104
      %5106 = vrot.lane.b32.xlu0 %v5063, 96
      %v5107 = vpop.permute.xlu0 %5106
      %5108 = vrot.lane.b32.xlu0 %v5064, 96
      %v5109 = vpop.permute.xlu0 %5108
      %5110 = vrot.lane.b32.xlu0 %v5065, 96
      %v5111 = vpop.permute.xlu0 %5110
      %5112 = vrot.lane.b32.xlu0 %v5066, 96
      %v5113 = vpop.permute.xlu0 %5112
      %5114 = vrot.lane.b32.xlu0 %v5067, 96
      %v5115 = vpop.permute.xlu0 %5114
      %5116 = vrot.lane.b32.xlu0 %v5068, 96
      %v5117 = vpop.permute.xlu0 %5116
      %5118 = vrot.lane.b32.xlu0 %v5069, 96
      %v5119 = vpop.permute.xlu0 %5118
      %5120 = vrot.lane.b32.xlu0 %v5070, 96
      %v5121 = vpop.permute.xlu0 %5120
      %5122 = vrot.lane.b32.xlu0 %v5071, 96
      %v5123 = vpop.permute.xlu0 %5122
      %5124 = vrot.lane.b32.xlu0 %v5072, 96
      %v5125 = vpop.permute.xlu0 %5124
      %5126 = vrot.lane.b32.xlu0 %v5073, 96
      %v5127 = vpop.permute.xlu0 %5126
      %vm5128 = vcmask 785408
      %v5129 = vsel %vm5128, %v5093, %v5095
      %v5130 = vsel %vm5128, %v5095, %v5097
      %v5131 = vsel %vm5128, %v5097, %v5099
      %v5132 = vsel %vm5128, %v5099, %v5101
      %v5133 = vsel %vm5128, %v5101, %v5103
      %v5134 = vsel %vm5128, %v5103, %v5105
      %v5135 = vsel %vm5128, %v5105, %v5107
      %v5136 = vsel %vm5128, %v5107, %v5109
      %v5137 = vsel %vm5128, %v5111, %v5113
      %v5138 = vsel %vm5128, %v5113, %v5115
      %v5139 = vsel %vm5128, %v5115, %v5117
      %v5140 = vsel %vm5128, %v5117, %v5119
      %v5141 = vsel %vm5128, %v5119, %v5121
      %v5142 = vsel %vm5128, %v5121, %v5123
      %v5143 = vsel %vm5128, %v5123, %v5125
      %v5144 = vsel %vm5128, %v5125, %v5127
      %5161 = vst [vmem:[#allocation4 + $0x380] sm:$0xff] %v5129
      %5162 = vst [vmem:[#allocation4 + $0x388] sm:$0xff] %v5130
      %5163 = vst [vmem:[#allocation4 + $0x390] sm:$0xff] %v5131
      %5164 = vst [vmem:[#allocation4 + $0x398] sm:$0xff] %v5132
      %5165 = vst [vmem:[#allocation4 + $0x3a0] sm:$0xff] %v5133
      %5166 = vst [vmem:[#allocation4 + $0x3a8] sm:$0xff] %v5134
      %5167 = vst [vmem:[#allocation4 + $0x3b0] sm:$0xff] %v5135
      %5168 = vst [vmem:[#allocation4 + $0x3b8] sm:$0xff] %v5136
      %5169 = vst [vmem:[#allocation4 + $0x3c0] sm:$0xff] %v5137
      %5170 = vst [vmem:[#allocation4 + $0x3c8] sm:$0xff] %v5138
      %5171 = vst [vmem:[#allocation4 + $0x3d0] sm:$0xff] %v5139
      %5172 = vst [vmem:[#allocation4 + $0x3d8] sm:$0xff] %v5140
      %5173 = vst [vmem:[#allocation4 + $0x3e0] sm:$0xff] %v5141
      %5174 = vst [vmem:[#allocation4 + $0x3e8] sm:$0xff] %v5142
      %5175 = vst [vmem:[#allocation4 + $0x3f0] sm:$0xff] %v5143
      %5176 = vst [vmem:[#allocation4 + $0x3f8] sm:$0xff] %v5144
      %v5177 = vld [vmem:[#allocation3 + $0x8] sm:$0xff]
      %v5178 = vld [vmem:[#allocation3 + $0x10] sm:$0xff]
      %v5179 = vld [vmem:[#allocation3 + $0x18] sm:$0xff]
      %v5180 = vld [vmem:[#allocation3 + $0x20] sm:$0xff]
      %v5181 = vld [vmem:[#allocation3 + $0x28] sm:$0xff]
      %v5182 = vld [vmem:[#allocation3 + $0x30] sm:$0xff]
      %v5183 = vld [vmem:[#allocation3 + $0x38] sm:$0xff]
      %v5184 = vld [vmem:[#allocation3 + $0x40] sm:$0xff]
      %v5185 = vld [vmem:[#allocation3 + $0x48] sm:$0xff]
      %v5186 = vld [vmem:[#allocation3 + $0x58] sm:$0xff]
      %v5187 = vld [vmem:[#allocation3 + $0x60] sm:$0xff]
      %v5188 = vld [vmem:[#allocation3 + $0x68] sm:$0xff]
      %v5189 = vld [vmem:[#allocation3 + $0x70] sm:$0xff]
      %v5190 = vld [vmem:[#allocation3 + $0x78] sm:$0xff]
      %v5191 = vld [vmem:[#allocation3 + $0x80] sm:$0xff]
      %v5192 = vld [vmem:[#allocation3 + $0x88] sm:$0xff]
      %v5193 = vld [vmem:[#allocation3 + $0x90] sm:$0xff]
      %v5194 = vld [vmem:[#allocation3 + $0x98] sm:$0xff]
      %5195 = vrot.lane.b32.xlu0 %v3825, 33
      %v5196 = vpop.permute.xlu0 %5195
      %5197 = vrot.lane.b32.xlu0 %v3826, 33
      %v5198 = vpop.permute.xlu0 %5197
      %5199 = vrot.lane.b32.xlu0 %v3827, 33
      %v5200 = vpop.permute.xlu0 %5199
      %5201 = vrot.lane.b32.xlu0 %v3828, 33
      %v5202 = vpop.permute.xlu0 %5201
      %5203 = vrot.lane.b32.xlu0 %v3829, 33
      %v5204 = vpop.permute.xlu0 %5203
      %5205 = vrot.lane.b32.xlu0 %v3830, 33
      %v5206 = vpop.permute.xlu0 %5205
      %5207 = vrot.lane.b32.xlu0 %v3831, 33
      %v5208 = vpop.permute.xlu0 %5207
      %5209 = vrot.lane.b32.xlu0 %v3832, 33
      %v5210 = vpop.permute.xlu0 %5209
      %5211 = vrot.lane.b32.xlu0 %v3833, 33
      %v5212 = vpop.permute.xlu0 %5211
      %5213 = vrot.lane.b32.xlu0 %v3834, 33
      %v5214 = vpop.permute.xlu0 %5213
      %5215 = vrot.lane.b32.xlu0 %v3835, 33
      %v5216 = vpop.permute.xlu0 %5215
      %5217 = vrot.lane.b32.xlu0 %v3836, 33
      %v5218 = vpop.permute.xlu0 %5217
      %5219 = vrot.lane.b32.xlu0 %v3837, 33
      %v5220 = vpop.permute.xlu0 %5219
      %5221 = vrot.lane.b32.xlu0 %v3838, 33
      %v5222 = vpop.permute.xlu0 %5221
      %5223 = vrot.lane.b32.xlu0 %v3839, 33
      %v5224 = vpop.permute.xlu0 %5223
      %5225 = vrot.lane.b32.xlu0 %v3840, 33
      %v5226 = vpop.permute.xlu0 %5225
      %v5227 = vsel %vm4028, %v5196, %v5198
      %v5228 = vsel %vm4028, %v5198, %v5200
      %v5229 = vsel %vm4028, %v5200, %v5202
      %v5230 = vsel %vm4028, %v5202, %v5204
      %v5231 = vsel %vm4028, %v5204, %v5206
      %v5232 = vsel %vm4028, %v5206, %v5208
      %v5233 = vsel %vm4028, %v5208, %v5210
      %v5234 = vsel %vm4028, %v5212, %v5214
      %v5235 = vsel %vm4028, %v5214, %v5216
      %v5236 = vsel %vm4028, %v5216, %v5218
      %v5237 = vsel %vm4028, %v5218, %v5220
      %v5238 = vsel %vm4028, %v5220, %v5222
      %v5239 = vsel %vm4028, %v5222, %v5224
      %v5240 = vsel %vm4028, %v5224, %v5226
      %v5259 = vmul.f32 %v5177, %v5196
      %v5260 = vmul.f32 %v5178, %v5227
      %v5261 = vmul.f32 %v5179, %v5228
      %v5262 = vmul.f32 %v5180, %v5229
      %v5263 = vmul.f32 %v5181, %v5230
      %v5264 = vmul.f32 %v5182, %v5231
      %v5265 = vmul.f32 %v5183, %v5232
      %v5266 = vmul.f32 %v5184, %v5233
      %v5267 = vmul.f32 %v5185, %v5210
      %v5268 = vmul.f32 %v5186, %v5212
      %v5269 = vmul.f32 %v5187, %v5234
      %v5270 = vmul.f32 %v5188, %v5235
      %v5271 = vmul.f32 %v5189, %v5236
      %v5272 = vmul.f32 %v5190, %v5237
      %v5273 = vmul.f32 %v5191, %v5238
      %v5274 = vmul.f32 %v5192, %v5239
      %v5275 = vmul.f32 %v5193, %v5240
      %v5276 = vmul.f32 %v5194, %v5226
      %5295 = vrot.lane.b32.xlu0 %v5259, 95
      %v5296 = vpop.permute.xlu0 %5295
      %5297 = vrot.lane.b32.xlu0 %v5260, 95
      %v5298 = vpop.permute.xlu0 %5297
      %5299 = vrot.lane.b32.xlu0 %v5261, 95
      %v5300 = vpop.permute.xlu0 %5299
      %5301 = vrot.lane.b32.xlu0 %v5262, 95
      %v5302 = vpop.permute.xlu0 %5301
      %5303 = vrot.lane.b32.xlu0 %v5263, 95
      %v5304 = vpop.permute.xlu0 %5303
      %5305 = vrot.lane.b32.xlu0 %v5264, 95
      %v5306 = vpop.permute.xlu0 %5305
      %5307 = vrot.lane.b32.xlu0 %v5265, 95
      %v5308 = vpop.permute.xlu0 %5307
      %5309 = vrot.lane.b32.xlu0 %v5266, 95
      %v5310 = vpop.permute.xlu0 %5309
      %5311 = vrot.lane.b32.xlu0 %v5267, 95
      %v5312 = vpop.permute.xlu0 %5311
      %5313 = vrot.lane.b32.xlu0 %v5268, 95
      %v5314 = vpop.permute.xlu0 %5313
      %5315 = vrot.lane.b32.xlu0 %v5269, 95
      %v5316 = vpop.permute.xlu0 %5315
      %5317 = vrot.lane.b32.xlu0 %v5270, 95
      %v5318 = vpop.permute.xlu0 %5317
      %5319 = vrot.lane.b32.xlu0 %v5271, 95
      %v5320 = vpop.permute.xlu0 %5319
      %5321 = vrot.lane.b32.xlu0 %v5272, 95
      %v5322 = vpop.permute.xlu0 %5321
      %5323 = vrot.lane.b32.xlu0 %v5273, 95
      %v5324 = vpop.permute.xlu0 %5323
      %5325 = vrot.lane.b32.xlu0 %v5274, 95
      %v5326 = vpop.permute.xlu0 %5325
      %5327 = vrot.lane.b32.xlu0 %v5275, 95
      %v5328 = vpop.permute.xlu0 %5327
      %5329 = vrot.lane.b32.xlu0 %v5276, 95
      %v5330 = vpop.permute.xlu0 %5329
      %v5331 = vsel %vm3923, %v5296, %v5298
      %v5332 = vsel %vm3923, %v5298, %v5300
      %v5333 = vsel %vm3923, %v5300, %v5302
      %v5334 = vsel %vm3923, %v5302, %v5304
      %v5335 = vsel %vm3923, %v5304, %v5306
      %v5336 = vsel %vm3923, %v5306, %v5308
      %v5337 = vsel %vm3923, %v5308, %v5310
      %v5338 = vsel %vm3923, %v5310, %v5312
      %v5339 = vsel %vm3923, %v5314, %v5316
      %v5340 = vsel %vm3923, %v5316, %v5318
      %v5341 = vsel %vm3923, %v5318, %v5320
      %v5342 = vsel %vm3923, %v5320, %v5322
      %v5343 = vsel %vm3923, %v5322, %v5324
      %v5344 = vsel %vm3923, %v5324, %v5326
      %v5345 = vsel %vm3923, %v5326, %v5328
      %v5346 = vsel %vm3923, %v5328, %v5330
      %5363 = vst [vmem:[#allocation4 + $0x400] sm:$0xff] %v5331
      %5364 = vst [vmem:[#allocation4 + $0x408] sm:$0xff] %v5332
      %5365 = vst [vmem:[#allocation4 + $0x410] sm:$0xff] %v5333
      %5366 = vst [vmem:[#allocation4 + $0x418] sm:$0xff] %v5334
      %5367 = vst [vmem:[#allocation4 + $0x420] sm:$0xff] %v5335
      %5368 = vst [vmem:[#allocation4 + $0x428] sm:$0xff] %v5336
      %5369 = vst [vmem:[#allocation4 + $0x430] sm:$0xff] %v5337
      %5370 = vst [vmem:[#allocation4 + $0x438] sm:$0xff] %v5338
      %5371 = vst [vmem:[#allocation4 + $0x440] sm:$0xff] %v5339
      %5372 = vst [vmem:[#allocation4 + $0x448] sm:$0xff] %v5340
      %5373 = vst [vmem:[#allocation4 + $0x450] sm:$0xff] %v5341
      %5374 = vst [vmem:[#allocation4 + $0x458] sm:$0xff] %v5342
      %5375 = vst [vmem:[#allocation4 + $0x460] sm:$0xff] %v5343
      %5376 = vst [vmem:[#allocation4 + $0x468] sm:$0xff] %v5344
      %5377 = vst [vmem:[#allocation4 + $0x470] sm:$0xff] %v5345
      %5378 = vst [vmem:[#allocation4 + $0x478] sm:$0xff] %v5346
      %v5379 = vld [vmem:[%s17] sm:$0xff]
      %v5380 = vld [vmem:[%s17 + $0x8] sm:$0xff]
      %v5381 = vld [vmem:[%s17 + $0x10] sm:$0xff]
      %v5382 = vld [vmem:[%s17 + $0x18] sm:$0xff]
      %v5383 = vld [vmem:[#allocation4] sm:$0xff]
      %v5384 = vld [vmem:[#allocation4 + $0x8] sm:$0xff]
      %v5385 = vld [vmem:[#allocation4 + $0x10] sm:$0xff]
      %v5386 = vld [vmem:[#allocation4 + $0x18] sm:$0xff]
      %v5387 = vld [vmem:[#allocation4 + $0x20] sm:$0xff]
      %v5388 = vld [vmem:[#allocation4 + $0x28] sm:$0xff]
      %v5389 = vld [vmem:[#allocation4 + $0x30] sm:$0xff]
      %v5390 = vld [vmem:[#allocation4 + $0x38] sm:$0xff]
      %v5391 = vld [vmem:[#allocation4 + $0x40] sm:$0xff]
      %v5392 = vld [vmem:[#allocation4 + $0x48] sm:$0xff]
      %v5393 = vld [vmem:[#allocation4 + $0x50] sm:$0xff]
      %v5394 = vld [vmem:[#allocation4 + $0x58] sm:$0xff]
      %v5395 = vld [vmem:[#allocation4 + $0x60] sm:$0xff]
      %v5396 = vld [vmem:[#allocation4 + $0x68] sm:$0xff]
      %v5397 = vld [vmem:[#allocation4 + $0x70] sm:$0xff]
      %v5398 = vld [vmem:[#allocation4 + $0x78] sm:$0xff]
      %v5399 = vld [vmem:[#allocation4 + $0x80] sm:$0xff]
      %v5400 = vld [vmem:[#allocation4 + $0x88] sm:$0xff]
      %v5401 = vld [vmem:[#allocation4 + $0x90] sm:$0xff]
      %v5402 = vld [vmem:[#allocation4 + $0x98] sm:$0xff]
      %v5403 = vld [vmem:[#allocation4 + $0xa0] sm:$0xff]
      %v5404 = vld [vmem:[#allocation4 + $0xa8] sm:$0xff]
      %v5405 = vld [vmem:[#allocation4 + $0xb0] sm:$0xff]
      %v5406 = vld [vmem:[#allocation4 + $0xb8] sm:$0xff]
      %v5407 = vld [vmem:[#allocation4 + $0xc0] sm:$0xff]
      %v5408 = vld [vmem:[#allocation4 + $0xc8] sm:$0xff]
      %v5409 = vld [vmem:[#allocation4 + $0xd0] sm:$0xff]
      %v5410 = vld [vmem:[#allocation4 + $0xd8] sm:$0xff]
      %v5411 = vld [vmem:[#allocation4 + $0xe0] sm:$0xff]
      %v5412 = vld [vmem:[#allocation4 + $0xe8] sm:$0xff]
      %v5413 = vld [vmem:[#allocation4 + $0xf0] sm:$0xff]
      %v5414 = vld [vmem:[#allocation4 + $0xf8] sm:$0xff]
      %v5415 = vld [vmem:[#allocation4 + $0x100] sm:$0xff]
      %v5416 = vld [vmem:[#allocation4 + $0x108] sm:$0xff]
      %v5417 = vld [vmem:[#allocation4 + $0x110] sm:$0xff]
      %v5418 = vld [vmem:[#allocation4 + $0x118] sm:$0xff]
      %v5419 = vld [vmem:[#allocation4 + $0x120] sm:$0xff]
      %v5420 = vld [vmem:[#allocation4 + $0x128] sm:$0xff]
      %v5421 = vld [vmem:[#allocation4 + $0x130] sm:$0xff]
      %v5422 = vld [vmem:[#allocation4 + $0x138] sm:$0xff]
      %v5423 = vld [vmem:[#allocation4 + $0x140] sm:$0xff]
      %v5424 = vld [vmem:[#allocation4 + $0x148] sm:$0xff]
      %v5425 = vld [vmem:[#allocation4 + $0x150] sm:$0xff]
      %v5426 = vld [vmem:[#allocation4 + $0x158] sm:$0xff]
      %v5427 = vld [vmem:[#allocation4 + $0x160] sm:$0xff]
      %v5428 = vld [vmem:[#allocation4 + $0x168] sm:$0xff]
      %v5429 = vld [vmem:[#allocation4 + $0x170] sm:$0xff]
      %v5430 = vld [vmem:[#allocation4 + $0x178] sm:$0xff]
      %v5431 = vld [vmem:[#allocation4 + $0x180] sm:$0xff]
      %v5432 = vld [vmem:[#allocation4 + $0x188] sm:$0xff]
      %v5433 = vld [vmem:[#allocation4 + $0x190] sm:$0xff]
      %v5434 = vld [vmem:[#allocation4 + $0x198] sm:$0xff]
      %v5435 = vld [vmem:[#allocation4 + $0x1a0] sm:$0xff]
      %v5436 = vld [vmem:[#allocation4 + $0x1a8] sm:$0xff]
      %v5437 = vld [vmem:[#allocation4 + $0x1b0] sm:$0xff]
      %v5438 = vld [vmem:[#allocation4 + $0x1b8] sm:$0xff]
      %v5439 = vld [vmem:[#allocation4 + $0x1c0] sm:$0xff]
      %v5440 = vld [vmem:[#allocation4 + $0x1c8] sm:$0xff]
      %v5441 = vld [vmem:[#allocation4 + $0x1d0] sm:$0xff]
      %v5442 = vld [vmem:[#allocation4 + $0x1d8] sm:$0xff]
      %v5443 = vld [vmem:[#allocation4 + $0x1e0] sm:$0xff]
      %v5444 = vld [vmem:[#allocation4 + $0x1e8] sm:$0xff]
      %v5445 = vld [vmem:[#allocation4 + $0x1f0] sm:$0xff]
      %v5446 = vld [vmem:[#allocation4 + $0x1f8] sm:$0xff]
      %v5447 = vld [vmem:[#allocation4 + $0x200] sm:$0xff]
      %v5448 = vld [vmem:[#allocation4 + $0x208] sm:$0xff]
      %v5449 = vld [vmem:[#allocation4 + $0x210] sm:$0xff]
      %v5450 = vld [vmem:[#allocation4 + $0x218] sm:$0xff]
      %v5451 = vld [vmem:[#allocation4 + $0x220] sm:$0xff]
      %v5452 = vld [vmem:[#allocation4 + $0x228] sm:$0xff]
      %v5453 = vld [vmem:[#allocation4 + $0x230] sm:$0xff]
      %v5454 = vld [vmem:[#allocation4 + $0x238] sm:$0xff]
      %v5455 = vld [vmem:[#allocation4 + $0x240] sm:$0xff]
      %v5456 = vld [vmem:[#allocation4 + $0x248] sm:$0xff]
      %v5457 = vld [vmem:[#allocation4 + $0x250] sm:$0xff]
      %v5458 = vld [vmem:[#allocation4 + $0x258] sm:$0xff]
      %v5459 = vld [vmem:[#allocation4 + $0x260] sm:$0xff]
      %v5460 = vld [vmem:[#allocation4 + $0x268] sm:$0xff]
      %v5461 = vld [vmem:[#allocation4 + $0x270] sm:$0xff]
      %v5462 = vld [vmem:[#allocation4 + $0x278] sm:$0xff]
      %v5463 = vld [vmem:[#allocation4 + $0x280] sm:$0xff]
      %v5464 = vld [vmem:[#allocation4 + $0x288] sm:$0xff]
      %v5465 = vld [vmem:[#allocation4 + $0x290] sm:$0xff]
      %v5466 = vld [vmem:[#allocation4 + $0x298] sm:$0xff]
      %v5467 = vld [vmem:[#allocation4 + $0x2a0] sm:$0xff]
      %v5468 = vld [vmem:[#allocation4 + $0x2a8] sm:$0xff]
      %v5469 = vld [vmem:[#allocation4 + $0x2b0] sm:$0xff]
      %v5470 = vld [vmem:[#allocation4 + $0x2b8] sm:$0xff]
      %v5471 = vld [vmem:[#allocation4 + $0x2c0] sm:$0xff]
      %v5472 = vld [vmem:[#allocation4 + $0x2c8] sm:$0xff]
      %v5473 = vld [vmem:[#allocation4 + $0x2d0] sm:$0xff]
      %v5474 = vld [vmem:[#allocation4 + $0x2d8] sm:$0xff]
      %v5475 = vld [vmem:[#allocation4 + $0x2e0] sm:$0xff]
      %v5476 = vld [vmem:[#allocation4 + $0x2e8] sm:$0xff]
      %v5477 = vld [vmem:[#allocation4 + $0x2f0] sm:$0xff]
      %v5478 = vld [vmem:[#allocation4 + $0x2f8] sm:$0xff]
      %v5479 = vld [vmem:[#allocation4 + $0x300] sm:$0xff]
      %v5480 = vld [vmem:[#allocation4 + $0x308] sm:$0xff]
      %v5481 = vld [vmem:[#allocation4 + $0x310] sm:$0xff]
      %v5482 = vld [vmem:[#allocation4 + $0x318] sm:$0xff]
      %v5483 = vld [vmem:[#allocation4 + $0x320] sm:$0xff]
      %v5484 = vld [vmem:[#allocation4 + $0x328] sm:$0xff]
      %v5485 = vld [vmem:[#allocation4 + $0x330] sm:$0xff]
      %v5486 = vld [vmem:[#allocation4 + $0x338] sm:$0xff]
      %v5487 = vld [vmem:[#allocation4 + $0x340] sm:$0xff]
      %v5488 = vld [vmem:[#allocation4 + $0x348] sm:$0xff]
      %v5489 = vld [vmem:[#allocation4 + $0x350] sm:$0xff]
      %v5490 = vld [vmem:[#allocation4 + $0x358] sm:$0xff]
      %v5491 = vld [vmem:[#allocation4 + $0x360] sm:$0xff]
      %v5492 = vld [vmem:[#allocation4 + $0x368] sm:$0xff]
      %v5493 = vld [vmem:[#allocation4 + $0x370] sm:$0xff]
      %v5494 = vld [vmem:[#allocation4 + $0x378] sm:$0xff]
      %v5495 = vld [vmem:[#allocation4 + $0x380] sm:$0xff]
      %v5496 = vld [vmem:[#allocation4 + $0x388] sm:$0xff]
      %v5497 = vld [vmem:[#allocation4 + $0x390] sm:$0xff]
      %v5498 = vld [vmem:[#allocation4 + $0x398] sm:$0xff]
      %v5499 = vld [vmem:[#allocation4 + $0x3a0] sm:$0xff]
      %v5500 = vld [vmem:[#allocation4 + $0x3a8] sm:$0xff]
      %v5501 = vld [vmem:[#allocation4 + $0x3b0] sm:$0xff]
      %v5502 = vld [vmem:[#allocation4 + $0x3b8] sm:$0xff]
      %v5503 = vld [vmem:[#allocation4 + $0x3c0] sm:$0xff]
      %v5504 = vld [vmem:[#allocation4 + $0x3c8] sm:$0xff]
      %v5505 = vld [vmem:[#allocation4 + $0x3d0] sm:$0xff]
      %v5506 = vld [vmem:[#allocation4 + $0x3d8] sm:$0xff]
      %v5507 = vld [vmem:[#allocation4 + $0x3e0] sm:$0xff]
      %v5508 = vld [vmem:[#allocation4 + $0x3e8] sm:$0xff]
      %v5509 = vld [vmem:[#allocation4 + $0x3f0] sm:$0xff]
      %v5510 = vld [vmem:[#allocation4 + $0x3f8] sm:$0xff]
      %v5511 = vld [vmem:[#allocation4 + $0x400] sm:$0xff]
      %v5512 = vld [vmem:[#allocation4 + $0x408] sm:$0xff]
      %v5513 = vld [vmem:[#allocation4 + $0x410] sm:$0xff]
      %v5514 = vld [vmem:[#allocation4 + $0x418] sm:$0xff]
      %v5515 = vld [vmem:[#allocation4 + $0x420] sm:$0xff]
      %v5516 = vld [vmem:[#allocation4 + $0x428] sm:$0xff]
      %v5517 = vld [vmem:[#allocation4 + $0x430] sm:$0xff]
      %v5518 = vld [vmem:[#allocation4 + $0x438] sm:$0xff]
      %v5519 = vld [vmem:[#allocation4 + $0x440] sm:$0xff]
      %v5520 = vld [vmem:[#allocation4 + $0x448] sm:$0xff]
      %v5521 = vld [vmem:[#allocation4 + $0x450] sm:$0xff]
      %v5522 = vld [vmem:[#allocation4 + $0x458] sm:$0xff]
      %v5523 = vld [vmem:[#allocation4 + $0x460] sm:$0xff]
      %v5524 = vld [vmem:[#allocation4 + $0x468] sm:$0xff]
      %v5525 = vld [vmem:[#allocation4 + $0x470] sm:$0xff]
      %v5526 = vld [vmem:[#allocation4 + $0x478] sm:$0xff]
      %v5527 = vld [vmem:[%s18] sm:$0xff]
      %v5528 = vld [vmem:[%s18 + $0x8] sm:$0xff]
      %5530 = vset.pattern.permute.xlu0 0
      %5531 = vperm.xlu0 %5530, %v5527
      %v5532 = vpop.permute.xlu0 %5531
      %5535 = vset.pattern.permute.xlu0 0
      %5536 = vperm.xlu0 %5535, %v5528
      %v5537 = vpop.permute.xlu0 %5536
      %v5540 = vsel %vm825, %v5380, 0
      %v5543 = vsel %vm825, %v5382, 0
      %5545 = vmatprep.subr.mxu0 %v5384
      %5546 = vmatpush1.msra.mxu0 %v5383
      %5547 = vmatprep.subr.mxu0 %v5392
      %5548 = vmatpush1.msra.mxu0 %v5391
      %5549 = vmatprep.subr.mxu0 %v5400
      %5550 = vmatpush1.msra.mxu0 %v5399
      %5551 = vmatprep.subr.mxu0 %v5408
      %5552 = vmatpush1.msra.mxu0 %v5407
      %5553 = vmatprep.subr.mxu0 %v5416
      %5554 = vmatpush1.msra.mxu0 %v5415
      %5555 = vmatprep.subr.mxu0 %v5424
      %5556 = vmatpush1.msra.mxu0 %v5423
      %5557 = vmatprep.subr.mxu0 %v5432
      %5558 = vmatpush1.msra.mxu0 %v5431
      %5559 = vmatprep.subr.mxu0 %v5440
      %5560 = vmatpush1.msra.mxu0 %v5439
      %5561 = vmatprep.subr.mxu0 %v5448
      %5562 = vmatpush1.msra.mxu0 %v5447
      %5563 = vmatprep.subr.mxu0 %v5456
      %5564 = vmatpush1.msra.mxu0 %v5455
      %5565 = vmatprep.subr.mxu0 %v5464
      %5566 = vmatpush1.msra.mxu0 %v5463
      %5567 = vmatprep.subr.mxu0 %v5472
      %5568 = vmatpush1.msra.mxu0 %v5471
      %5569 = vmatprep.subr.mxu0 %v5480
      %5570 = vmatpush1.msra.mxu0 %v5479
      %5571 = vmatprep.subr.mxu0 %v5488
      %5572 = vmatpush1.msra.mxu0 %v5487
      %5573 = vmatprep.subr.mxu0 %v5496
      %5574 = vmatpush1.msra.mxu0 %v5495
      %5575 = vmatprep.subr.mxu0 %v5504
      %5576 = vmatpush1.msra.mxu0 %v5503
      %5577 = vmatprep.subr.mxu0 %v5512
      %5578 = vmatpush1.msra.mxu0 %v5511
      %5579 = vmatprep.subr.mxu0 %v5520
      %5580 = vmatpush1.msra.mxu0 %v5519
      %5581 = vmatprep.subr.mxu0 0.0
      %5582 = vmatpush1.msra.mxu0 0.0
      %5583 = vmatprep.subr.mxu0 0.0
      %5584 = vmatpush1.msra.mxu0 0.0
      %5585 = vmatprep.subr.mxu0 0.0
      %5586 = vmatpush1.msra.mxu0 0.0
      %5587 = vmatprep.subr.mxu0 0.0
      %5588 = vmatpush1.msra.mxu0 0.0
      %5589 = vmatprep.subr.mxu0 0.0
      %5590 = vmatpush1.msra.mxu0 0.0
      %5591 = vmatprep.subr.mxu0 0.0
      %5592 = vmatpush1.msra.mxu0 0.0
      %5593 = vmatprep.subr.mxu0 0.0
      %5594 = vmatpush1.msra.mxu0 0.0
      %5595 = vmatprep.subr.mxu0 0.0
      %5596 = vmatpush1.msra.mxu0 0.0
      %5597 = vmatprep.subr.mxu0 0.0
      %5598 = vmatpush1.msra.mxu0 0.0
      %5599 = vmatprep.subr.mxu0 0.0
      %5600 = vmatpush1.msra.mxu0 0.0
      %5601 = vmatprep.subr.mxu0 0.0
      %5602 = vmatpush1.msra.mxu0 0.0
      %5603 = vmatprep.subr.mxu0 0.0
      %5604 = vmatpush1.msra.mxu0 0.0
      %5605 = vmatprep.subr.mxu0 0.0
      %5606 = vmatpush1.msra.mxu0 0.0
      %5607 = vmatprep.subr.mxu0 0.0
      %5608 = vmatpush1.msra.mxu0 0.0
      %5609 = vmatprep.mubr.f32.mxu0 %v5540
      %5610 = vmatmul.mubr.f32.gmra.mrb[0].mxu0 %v5379
      %v5611 = vpop.f32.mrb[0].mxu0
      %v5612 = vadd.f32 %v5532, %v5611
      %v5613 = vpop.f32.mrb[0].mxu0
      %v5614 = vadd.f32 %v5532, %v5613
      %5615 = vmatprep.mubr.f32.mxu0 %v5543
      %5616 = vmatmul.mubr.f32.gmra.mrb[0].mxu0 %v5381
      %v5617 = vpop.f32.mrb[0].mxu0
      %v5618 = vadd.f32 %v5537, %v5617
      %v5619 = vpop.f32.mrb[0].mxu0
      %v5620 = vadd.f32 %v5537, %v5619
      %5621 = vdwg.mxu0
      %5622 = vmatprep.subr.mxu0 %v5386
      %5623 = vmatpush1.msra.mxu0 %v5385
      %5624 = vmatprep.subr.mxu0 %v5394
      %5625 = vmatpush1.msra.mxu0 %v5393
      %5626 = vmatprep.subr.mxu0 %v5402
      %5627 = vmatpush1.msra.mxu0 %v5401
      %5628 = vmatprep.subr.mxu0 %v5410
      %5629 = vmatpush1.msra.mxu0 %v5409
      %5630 = vmatprep.subr.mxu0 %v5418
      %5631 = vmatpush1.msra.mxu0 %v5417
      %5632 = vmatprep.subr.mxu0 %v5426
      %5633 = vmatpush1.msra.mxu0 %v5425
      %5634 = vmatprep.subr.mxu0 %v5434
      %5635 = vmatpush1.msra.mxu0 %v5433
      %5636 = vmatprep.subr.mxu0 %v5442
      %5637 = vmatpush1.msra.mxu0 %v5441
      %5638 = vmatprep.subr.mxu0 %v5450
      %5639 = vmatpush1.msra.mxu0 %v5449
      %5640 = vmatprep.subr.mxu0 %v5458
      %5641 = vmatpush1.msra.mxu0 %v5457
      %5642 = vmatprep.subr.mxu0 %v5466
      %5643 = vmatpush1.msra.mxu0 %v5465
      %5644 = vmatprep.subr.mxu0 %v5474
      %5645 = vmatpush1.msra.mxu0 %v5473
      %5646 = vmatprep.subr.mxu0 %v5482
      %5647 = vmatpush1.msra.mxu0 %v5481
      %5648 = vmatprep.subr.mxu0 %v5490
      %5649 = vmatpush1.msra.mxu0 %v5489
      %5650 = vmatprep.subr.mxu0 %v5498
      %5651 = vmatpush1.msra.mxu0 %v5497
      %5652 = vmatprep.subr.mxu0 %v5506
      %5653 = vmatpush1.msra.mxu0 %v5505
      %5654 = vmatprep.subr.mxu0 %v5514
      %5655 = vmatpush1.msra.mxu0 %v5513
      %5656 = vmatprep.subr.mxu0 %v5522
      %5657 = vmatpush1.msra.mxu0 %v5521
      %5658 = vmatprep.subr.mxu0 0.0
      %5659 = vmatpush1.msra.mxu0 0.0
      %5660 = vmatprep.subr.mxu0 0.0
      %5661 = vmatpush1.msra.mxu0 0.0
      %5662 = vmatprep.subr.mxu0 0.0
      %5663 = vmatpush1.msra.mxu0 0.0
      %5664 = vmatprep.subr.mxu0 0.0
      %5665 = vmatpush1.msra.mxu0 0.0
      %5666 = vmatprep.subr.mxu0 0.0
      %5667 = vmatpush1.msra.mxu0 0.0
      %5668 = vmatprep.subr.mxu0 0.0
      %5669 = vmatpush1.msra.mxu0 0.0
      %5670 = vmatprep.subr.mxu0 0.0
      %5671 = vmatpush1.msra.mxu0 0.0
      %5672 = vmatprep.subr.mxu0 0.0
      %5673 = vmatpush1.msra.mxu0 0.0
      %5674 = vmatprep.subr.mxu0 0.0
      %5675 = vmatpush1.msra.mxu0 0.0
      %5676 = vmatprep.subr.mxu0 0.0
      %5677 = vmatpush1.msra.mxu0 0.0
      %5678 = vmatprep.subr.mxu0 0.0
      %5679 = vmatpush1.msra.mxu0 0.0
      %5680 = vmatprep.subr.mxu0 0.0
      %5681 = vmatpush1.msra.mxu0 0.0
      %5682 = vmatprep.subr.mxu0 0.0
      %5683 = vmatpush1.msra.mxu0 0.0
      %5684 = vmatprep.subr.mxu0 0.0
      %5685 = vmatpush1.msra.mxu0 0.0
      %5686 = vmatprep.mubr.f32.mxu0 %v5540
      %5687 = vmatmul.mubr.f32.gmra.mrb[0].mxu0 %v5379
      %v5688 = vpop.f32.mrb[0].mxu0
      %v5689 = vadd.f32 %v5532, %v5688
      %v5690 = vpop.f32.mrb[0].mxu0
      %v5691 = vadd.f32 %v5532, %v5690
      %5692 = vmatprep.mubr.f32.mxu0 %v5543
      %5693 = vmatmul.mubr.f32.gmra.mrb[0].mxu0 %v5381
      %v5694 = vpop.f32.mrb[0].mxu0
      %v5695 = vadd.f32 %v5537, %v5694
      %v5696 = vpop.f32.mrb[0].mxu0
      %v5697 = vadd.f32 %v5537, %v5696
      %5698 = vdwg.mxu0
      %5699 = vmatprep.subr.mxu0 %v5388
      %5700 = vmatpush1.msra.mxu0 %v5387
      %5701 = vmatprep.subr.mxu0 %v5396
      %5702 = vmatpush1.msra.mxu0 %v5395
      %5703 = vmatprep.subr.mxu0 %v5404
      %5704 = vmatpush1.msra.mxu0 %v5403
      %5705 = vmatprep.subr.mxu0 %v5412
      %5706 = vmatpush1.msra.mxu0 %v5411
      %5707 = vmatprep.subr.mxu0 %v5420
      %5708 = vmatpush1.msra.mxu0 %v5419
      %5709 = vmatprep.subr.mxu0 %v5428
      %5710 = vmatpush1.msra.mxu0 %v5427
      %5711 = vmatprep.subr.mxu0 %v5436
      %5712 = vmatpush1.msra.mxu0 %v5435
      %5713 = vmatprep.subr.mxu0 %v5444
      %5714 = vmatpush1.msra.mxu0 %v5443
      %5715 = vmatprep.subr.mxu0 %v5452
      %5716 = vmatpush1.msra.mxu0 %v5451
      %5717 = vmatprep.subr.mxu0 %v5460
      %5718 = vmatpush1.msra.mxu0 %v5459
      %5719 = vmatprep.subr.mxu0 %v5468
      %5720 = vmatpush1.msra.mxu0 %v5467
      %5721 = vmatprep.subr.mxu0 %v5476
      %5722 = vmatpush1.msra.mxu0 %v5475
      %5723 = vmatprep.subr.mxu0 %v5484
      %5724 = vmatpush1.msra.mxu0 %v5483
      %5725 = vmatprep.subr.mxu0 %v5492
      %5726 = vmatpush1.msra.mxu0 %v5491
      %5727 = vmatprep.subr.mxu0 %v5500
      %5728 = vmatpush1.msra.mxu0 %v5499
      %5729 = vmatprep.subr.mxu0 %v5508
      %5730 = vmatpush1.msra.mxu0 %v5507
      %5731 = vmatprep.subr.mxu0 %v5516
      %5732 = vmatpush1.msra.mxu0 %v5515
      %5733 = vmatprep.subr.mxu0 %v5524
      %5734 = vmatpush1.msra.mxu0 %v5523
      %5735 = vmatprep.subr.mxu0 0.0
      %5736 = vmatpush1.msra.mxu0 0.0
      %5737 = vmatprep.subr.mxu0 0.0
      %5738 = vmatpush1.msra.mxu0 0.0
      %5739 = vmatprep.subr.mxu0 0.0
      %5740 = vmatpush1.msra.mxu0 0.0
      %5741 = vmatprep.subr.mxu0 0.0
      %5742 = vmatpush1.msra.mxu0 0.0
      %5743 = vmatprep.subr.mxu0 0.0
      %5744 = vmatpush1.msra.mxu0 0.0
      %5745 = vmatprep.subr.mxu0 0.0
      %5746 = vmatpush1.msra.mxu0 0.0
      %5747 = vmatprep.subr.mxu0 0.0
      %5748 = vmatpush1.msra.mxu0 0.0
      %5749 = vmatprep.subr.mxu0 0.0
      %5750 = vmatpush1.msra.mxu0 0.0
      %5751 = vmatprep.subr.mxu0 0.0
      %5752 = vmatpush1.msra.mxu0 0.0
      %5753 = vmatprep.subr.mxu0 0.0
      %5754 = vmatpush1.msra.mxu0 0.0
      %5755 = vmatprep.subr.mxu0 0.0
      %5756 = vmatpush1.msra.mxu0 0.0
      %5757 = vmatprep.subr.mxu0 0.0
      %5758 = vmatpush1.msra.mxu0 0.0
      %5759 = vmatprep.subr.mxu0 0.0
      %5760 = vmatpush1.msra.mxu0 0.0
      %5761 = vmatprep.subr.mxu0 0.0
      %5762 = vmatpush1.msra.mxu0 0.0
      %5763 = vmatprep.mubr.f32.mxu0 %v5540
      %5764 = vmatmul.mubr.f32.gmra.mrb[0].mxu0 %v5379
      %v5765 = vpop.f32.mrb[0].mxu0
      %v5766 = vadd.f32 %v5532, %v5765
      %v5767 = vpop.f32.mrb[0].mxu0
      %v5768 = vadd.f32 %v5532, %v5767
      %5769 = vmatprep.mubr.f32.mxu0 %v5543
      %5770 = vmatmul.mubr.f32.gmra.mrb[0].mxu0 %v5381
      %v5771 = vpop.f32.mrb[0].mxu0
      %v5772 = vadd.f32 %v5537, %v5771
      %v5773 = vpop.f32.mrb[0].mxu0
      %v5774 = vadd.f32 %v5537, %v5773
      %5775 = vdwg.mxu0
      %5776 = vmatprep.subr.mxu0 %v5390
      %5777 = vmatpush1.msra.mxu0 %v5389
      %5778 = vmatprep.subr.mxu0 %v5398
      %5779 = vmatpush1.msra.mxu0 %v5397
      %5780 = vmatprep.subr.mxu0 %v5406
      %5781 = vmatpush1.msra.mxu0 %v5405
      %5782 = vmatprep.subr.mxu0 %v5414
      %5783 = vmatpush1.msra.mxu0 %v5413
      %5784 = vmatprep.subr.mxu0 %v5422
      %5785 = vmatpush1.msra.mxu0 %v5421
      %5786 = vmatprep.subr.mxu0 %v5430
      %5787 = vmatpush1.msra.mxu0 %v5429
      %5788 = vmatprep.subr.mxu0 %v5438
      %5789 = vmatpush1.msra.mxu0 %v5437
      %5790 = vmatprep.subr.mxu0 %v5446
      %5791 = vmatpush1.msra.mxu0 %v5445
      %5792 = vmatprep.subr.mxu0 %v5454
      %5793 = vmatpush1.msra.mxu0 %v5453
      %5794 = vmatprep.subr.mxu0 %v5462
      %5795 = vmatpush1.msra.mxu0 %v5461
      %5796 = vmatprep.subr.mxu0 %v5470
      %5797 = vmatpush1.msra.mxu0 %v5469
      %5798 = vmatprep.subr.mxu0 %v5478
      %5799 = vmatpush1.msra.mxu0 %v5477
      %5800 = vmatprep.subr.mxu0 %v5486
      %5801 = vmatpush1.msra.mxu0 %v5485
      %5802 = vmatprep.subr.mxu0 %v5494
      %5803 = vmatpush1.msra.mxu0 %v5493
      %5804 = vmatprep.subr.mxu0 %v5502
      %5805 = vmatpush1.msra.mxu0 %v5501
      %5806 = vmatprep.subr.mxu0 %v5510
      %5807 = vmatpush1.msra.mxu0 %v5509
      %5808 = vmatprep.subr.mxu0 %v5518
      %5809 = vmatpush1.msra.mxu0 %v5517
      %5810 = vmatprep.subr.mxu0 %v5526
      %5811 = vmatpush1.msra.mxu0 %v5525
      %5812 = vmatprep.subr.mxu0 0.0
      %5813 = vmatpush1.msra.mxu0 0.0
      %5814 = vmatprep.subr.mxu0 0.0
      %5815 = vmatpush1.msra.mxu0 0.0
      %5816 = vmatprep.subr.mxu0 0.0
      %5817 = vmatpush1.msra.mxu0 0.0
      %5818 = vmatprep.subr.mxu0 0.0
      %5819 = vmatpush1.msra.mxu0 0.0
      %5820 = vmatprep.subr.mxu0 0.0
      %5821 = vmatpush1.msra.mxu0 0.0
      %5822 = vmatprep.subr.mxu0 0.0
      %5823 = vmatpush1.msra.mxu0 0.0
      %5824 = vmatprep.subr.mxu0 0.0
      %5825 = vmatpush1.msra.mxu0 0.0
      %5826 = vmatprep.subr.mxu0 0.0
      %5827 = vmatpush1.msra.mxu0 0.0
      %5828 = vmatprep.subr.mxu0 0.0
      %5829 = vmatpush1.msra.mxu0 0.0
      %5830 = vmatprep.subr.mxu0 0.0
      %5831 = vmatpush1.msra.mxu0 0.0
      %5832 = vmatprep.subr.mxu0 0.0
      %5833 = vmatpush1.msra.mxu0 0.0
      %5834 = vmatprep.subr.mxu0 0.0
      %5835 = vmatpush1.msra.mxu0 0.0
      %5836 = vmatprep.subr.mxu0 0.0
      %5837 = vmatpush1.msra.mxu0 0.0
      %5838 = vmatprep.subr.mxu0 0.0
      %5839 = vmatpush1.msra.mxu0 0.0
      %5840 = vmatprep.mubr.f32.mxu0 %v5540
      %5841 = vmatmul.mubr.f32.gmra.mrb[0].mxu0 %v5379
      %v5842 = vpop.f32.mrb[0].mxu0
      %v5843 = vadd.f32 %v5532, %v5842
      %v5844 = vpop.f32.mrb[0].mxu0
      %v5845 = vadd.f32 %v5532, %v5844
      %5846 = vmatprep.mubr.f32.mxu0 %v5543
      %5847 = vmatmul.mubr.f32.gmra.mrb[0].mxu0 %v5381
      %v5848 = vpop.f32.mrb[0].mxu0
      %v5849 = vadd.f32 %v5537, %v5848
      %v5850 = vpop.f32.mrb[0].mxu0
      %v5851 = vadd.f32 %v5537, %v5850
      %5852 = vdwg.mxu0
      %v5853 = vadd.f32 %v5612, %v5614
      %v5854 = vadd.f32 %v5853, %v5689
      %v5855 = vadd.f32 %v5854, %v5691
      %v5856 = vadd.f32 %v5855, %v5766
      %v5857 = vadd.f32 %v5856, %v5768
      %v5858 = vadd.f32 %v5857, %v5843
      %v5859 = vadd.f32 %v5858, %v5845
      %5860 = vadd.xlane.f32.xlu0 %v5859
      %v5861 = vpop.xlane.xlu0 %5860
      %v5862 = vadd.f32 %v5618, %v5620
      %v5863 = vadd.f32 %v5862, %v5695
      %v5864 = vadd.f32 %v5863, %v5697
      %v5865 = vadd.f32 %v5864, %v5772
      %v5866 = vadd.f32 %v5865, %v5774
      %v5867 = vadd.f32 %v5866, %v5849
      %v5868 = vadd.f32 %v5867, %v5851
      %5869 = vadd.xlane.f32.xlu0 %v5868
      %v5870 = vpop.xlane.xlu0 %5869
      %v5871 = vmul.f32 %v5612, %v5612
      %v5872 = vmul.f32 %v5614, %v5614
      %v5873 = vmul.f32 %v5689, %v5689
      %v5874 = vmul.f32 %v5691, %v5691
      %v5875 = vmul.f32 %v5766, %v5766
      %v5876 = vmul.f32 %v5768, %v5768
      %v5877 = vmul.f32 %v5843, %v5843
      %v5878 = vmul.f32 %v5845, %v5845
      %v5879 = vmul.f32 %v5618, %v5618
      %v5880 = vmul.f32 %v5620, %v5620
      %v5881 = vmul.f32 %v5695, %v5695
      %v5882 = vmul.f32 %v5697, %v5697
      %v5883 = vmul.f32 %v5772, %v5772
      %v5884 = vmul.f32 %v5774, %v5774
      %v5885 = vmul.f32 %v5849, %v5849
      %v5886 = vmul.f32 %v5851, %v5851
      %v5887 = vadd.f32 %v5871, %v5872
      %v5888 = vadd.f32 %v5887, %v5873
      %v5889 = vadd.f32 %v5888, %v5874
      %v5890 = vadd.f32 %v5889, %v5875
      %v5891 = vadd.f32 %v5890, %v5876
      %v5892 = vadd.f32 %v5891, %v5877
      %v5893 = vadd.f32 %v5892, %v5878
      %5894 = vadd.xlane.f32.xlu0 %v5893
      %v5895 = vpop.xlane.xlu0 %5894
      %v5896 = vadd.f32 %v5879, %v5880
      %v5897 = vadd.f32 %v5896, %v5881
      %v5898 = vadd.f32 %v5897, %v5882
      %v5899 = vadd.f32 %v5898, %v5883
      %v5900 = vadd.f32 %v5899, %v5884
      %v5901 = vadd.f32 %v5900, %v5885
      %v5902 = vadd.f32 %v5901, %v5886
      %5903 = vadd.xlane.f32.xlu0 %v5902
      %v5904 = vpop.xlane.xlu0 %5903
      %5905 = vmatprep.subr.mxu0 0.0
      %5906 = vmatpush1.msra.mxu0 %v5861
      %5907 = vmatprep.subr.mxu0 0.0
      %5908 = vmatpush1.msra.mxu0 %v5870
      %5909 = vmatprep.subr.mxu0 0.0
      %5910 = vmatpush1.msra.mxu0 0.0
      %5911 = vmatprep.subr.mxu0 0.0
      %5912 = vmatpush1.msra.mxu0 0.0
      %5913 = vmatprep.subr.mxu0 0.0
      %5914 = vmatpush1.msra.mxu0 0.0
      %5915 = vmatprep.subr.mxu0 0.0
      %5916 = vmatpush1.msra.mxu0 0.0
      %5917 = vmatprep.subr.mxu0 0.0
      %5918 = vmatpush1.msra.mxu0 0.0
      %5919 = vmatprep.subr.mxu0 0.0
      %5920 = vmatpush1.msra.mxu0 0.0
      %5921 = vmatprep.subr.mxu0 0.0
      %5922 = vmatpush1.msra.mxu0 0.0
      %5923 = vmatprep.subr.mxu0 0.0
      %5924 = vmatpush1.msra.mxu0 0.0
      %5925 = vmatprep.subr.mxu0 0.0
      %5926 = vmatpush1.msra.mxu0 0.0
      %5927 = vmatprep.subr.mxu0 0.0
      %5928 = vmatpush1.msra.mxu0 0.0
      %5929 = vmatprep.subr.mxu0 0.0
      %5930 = vmatpush1.msra.mxu0 0.0
      %5931 = vmatprep.subr.mxu0 0.0
      %5932 = vmatpush1.msra.mxu0 0.0
      %5933 = vmatprep.subr.mxu0 0.0
      %5934 = vmatpush1.msra.mxu0 0.0
      %5935 = vmatprep.subr.mxu0 0.0
      %5936 = vmatpush1.msra.mxu0 0.0
      %5937 = vmatprep.subr.mxu0 0.0
      %5938 = vmatpush1.msra.mxu0 0.0
      %5939 = vmatprep.subr.mxu0 0.0
      %5940 = vmatpush1.msra.mxu0 0.0
      %5941 = vmatprep.subr.mxu0 0.0
      %5942 = vmatpush1.msra.mxu0 0.0
      %5943 = vmatprep.subr.mxu0 0.0
      %5944 = vmatpush1.msra.mxu0 0.0
      %5945 = vmatprep.subr.mxu0 0.0
      %5946 = vmatpush1.msra.mxu0 0.0
      %5947 = vmatprep.subr.mxu0 0.0
      %5948 = vmatpush1.msra.mxu0 0.0
      %5949 = vmatprep.subr.mxu0 0.0
      %5950 = vmatpush1.msra.mxu0 0.0
      %5951 = vmatprep.subr.mxu0 0.0
      %5952 = vmatpush1.msra.mxu0 0.0
      %5953 = vmatprep.subr.mxu0 0.0
      %5954 = vmatpush1.msra.mxu0 0.0
      %5955 = vmatprep.subr.mxu0 0.0
      %5956 = vmatpush1.msra.mxu0 0.0
      %5957 = vmatprep.subr.mxu0 0.0
      %5958 = vmatpush1.msra.mxu0 0.0
      %5959 = vmatprep.subr.mxu0 0.0
      %5960 = vmatpush1.msra.mxu0 0.0
      %5961 = vmatprep.subr.mxu0 0.0
      %5962 = vmatpush1.msra.mxu0 0.0
      %5963 = vmatprep.subr.mxu0 0.0
      %5964 = vmatpush1.msra.mxu0 0.0
      %5965 = vmatprep.subr.mxu0 0.0
      %5966 = vmatpush1.msra.mxu0 0.0
      %5967 = vmatprep.subr.mxu0 0.0
      %5968 = vmatpush1.msra.mxu0 0.0
      %5969 = vmatprep.mubr.f32.mxu0 0.0
      %5970 = vmatmul.mubr.f32.gmra.mrb[0].mxu0 %v1434
      %v5971 = vpop.f32.mrb[0].mxu0
      %v5972 = vadd.f32 0.0, %v5971
      %v5973 = vpop.f32.mrb[0].mxu0
      %5974 = vmatprep.mubr.f32.mxu0 0.0
      %5975 = vmatmul.mubr.f32.gmra.mrb[0].mxu0 %v1437
      %v5976 = vpop.f32.mrb[0].mxu0
      %v5977 = vadd.f32 0.0, %v5976
      %v5978 = vpop.f32.mrb[0].mxu0
      %5979 = vdwg.mxu0
      %v5980 = vmul.f32 %v5972, 0.00048828125
      %v5981 = vmul.f32 %v5977, 0.00048828125
      %5982 = vmatprep.subr.mxu0 0.0
      %5983 = vmatpush1.msra.mxu0 %v5895
      %5984 = vmatprep.subr.mxu0 0.0
      %5985 = vmatpush1.msra.mxu0 %v5904
      %5986 = vmatprep.subr.mxu0 0.0
      %5987 = vmatpush1.msra.mxu0 0.0
      %5988 = vmatprep.subr.mxu0 0.0
      %5989 = vmatpush1.msra.mxu0 0.0
      %5990 = vmatprep.subr.mxu0 0.0
      %5991 = vmatpush1.msra.mxu0 0.0
      %5992 = vmatprep.subr.mxu0 0.0
      %5993 = vmatpush1.msra.mxu0 0.0
      %5994 = vmatprep.subr.mxu0 0.0
      %5995 = vmatpush1.msra.mxu0 0.0
      %5996 = vmatprep.subr.mxu0 0.0
      %5997 = vmatpush1.msra.mxu0 0.0
      %5998 = vmatprep.subr.mxu0 0.0
      %5999 = vmatpush1.msra.mxu0 0.0
      %6000 = vmatprep.subr.mxu0 0.0
      %6001 = vmatpush1.msra.mxu0 0.0
      %6002 = vmatprep.subr.mxu0 0.0
      %6003 = vmatpush1.msra.mxu0 0.0
      %6004 = vmatprep.subr.mxu0 0.0
      %6005 = vmatpush1.msra.mxu0 0.0
      %6006 = vmatprep.subr.mxu0 0.0
      %6007 = vmatpush1.msra.mxu0 0.0
      %6008 = vmatprep.subr.mxu0 0.0
      %6009 = vmatpush1.msra.mxu0 0.0
      %6010 = vmatprep.subr.mxu0 0.0
      %6011 = vmatpush1.msra.mxu0 0.0
      %6012 = vmatprep.subr.mxu0 0.0
      %6013 = vmatpush1.msra.mxu0 0.0
      %6014 = vmatprep.subr.mxu0 0.0
      %6015 = vmatpush1.msra.mxu0 0.0
      %6016 = vmatprep.subr.mxu0 0.0
      %6017 = vmatpush1.msra.mxu0 0.0
      %6018 = vmatprep.subr.mxu0 0.0
      %6019 = vmatpush1.msra.mxu0 0.0
      %6020 = vmatprep.subr.mxu0 0.0
      %6021 = vmatpush1.msra.mxu0 0.0
      %6022 = vmatprep.subr.mxu0 0.0
      %6023 = vmatpush1.msra.mxu0 0.0
      %6024 = vmatprep.subr.mxu0 0.0
      %6025 = vmatpush1.msra.mxu0 0.0
      %6026 = vmatprep.subr.mxu0 0.0
      %6027 = vmatpush1.msra.mxu0 0.0
      %6028 = vmatprep.subr.mxu0 0.0
      %6029 = vmatpush1.msra.mxu0 0.0
      %6030 = vmatprep.subr.mxu0 0.0
      %6031 = vmatpush1.msra.mxu0 0.0
      %6032 = vmatprep.subr.mxu0 0.0
      %6033 = vmatpush1.msra.mxu0 0.0
      %6034 = vmatprep.subr.mxu0 0.0
      %6035 = vmatpush1.msra.mxu0 0.0
      %6036 = vmatprep.subr.mxu0 0.0
      %6037 = vmatpush1.msra.mxu0 0.0
      %6038 = vmatprep.subr.mxu0 0.0
      %6039 = vmatpush1.msra.mxu0 0.0
      %6040 = vmatprep.subr.mxu0 0.0
      %6041 = vmatpush1.msra.mxu0 0.0
      %6042 = vmatprep.subr.mxu0 0.0
      %6043 = vmatpush1.msra.mxu0 0.0
      %6044 = vmatprep.subr.mxu0 0.0
      %6045 = vmatpush1.msra.mxu0 0.0
      %6046 = vmatprep.mubr.f32.mxu0 0.0
      %6047 = vmatmul.mubr.f32.gmra.mrb[0].mxu0 %v1434
      %v6048 = vpop.f32.mrb[0].mxu0
      %v6049 = vadd.f32 0.0, %v6048
      %v6050 = vpop.f32.mrb[0].mxu0
      %6051 = vmatprep.mubr.f32.mxu0 0.0
      %6052 = vmatmul.mubr.f32.gmra.mrb[0].mxu0 %v1437
      %v6053 = vpop.f32.mrb[0].mxu0
      %v6054 = vadd.f32 0.0, %v6053
      %v6055 = vpop.f32.mrb[0].mxu0
      %6056 = vdwg.mxu0
      %v6057 = vmul.f32 %v6049, 0.00048828125
      %v6058 = vmul.f32 %v6054, 0.00048828125
      %v6059 = vmul.f32 %v5980, %v5980
      %v6060 = vmul.f32 %v5981, %v5981
      %v6061 = vsub.f32 %v6057, %v6059
      %v6062 = vsub.f32 %v6058, %v6060
      %v6063 = vadd.f32 %v6061, 1e-05
      %v6064 = vadd.f32 %v6062, 1e-05
      %v6065 = vrsqrt.pop %v6063
      %v6066 = vrsqrt.pop %v6064
      %v6067 = vmul.f32 %v6065, %v3025
      %v6068 = vmul.f32 %v6066, %v3026
      %v6069 = vmul.f32 %v5980, %v6067
      %v6070 = vmul.f32 %v5981, %v6068
      %v6071 = vsub.f32 %v3027, %v6069
      %v6072 = vsub.f32 %v3028, %v6070
      %6074 = vset.pattern.permute.xlu0 0
      %6075 = vperm.xlu0 %6074, %v6067
      %v6076 = vpop.permute.xlu0 %6075
      %6079 = vset.pattern.permute.xlu0 0
      %6080 = vperm.xlu0 %6079, %v6068
      %v6081 = vpop.permute.xlu0 %6080
      %v6083 = vmul.f32 %v5612, %v6076
      %v6084 = vmul.f32 %v5614, %v6076
      %v6085 = vmul.f32 %v5689, %v6076
      %v6086 = vmul.f32 %v5691, %v6076
      %v6087 = vmul.f32 %v5766, %v6076
      %v6088 = vmul.f32 %v5768, %v6076
      %v6089 = vmul.f32 %v5843, %v6076
      %v6090 = vmul.f32 %v5845, %v6076
      %v6091 = vmul.f32 %v5618, %v6081
      %v6092 = vmul.f32 %v5620, %v6081
      %v6093 = vmul.f32 %v5695, %v6081
      %v6094 = vmul.f32 %v5697, %v6081
      %v6095 = vmul.f32 %v5772, %v6081
      %v6096 = vmul.f32 %v5774, %v6081
      %v6097 = vmul.f32 %v5849, %v6081
      %v6098 = vmul.f32 %v5851, %v6081
      %6100 = vset.pattern.permute.xlu0 0
      %6101 = vperm.xlu0 %6100, %v6071
      %v6102 = vpop.permute.xlu0 %6101
      %6105 = vset.pattern.permute.xlu0 0
      %6106 = vperm.xlu0 %6105, %v6072
      %v6107 = vpop.permute.xlu0 %6106
      %v6109 = vadd.f32 %v6083, %v6102
      %v6110 = vadd.f32 %v6084, %v6102
      %v6111 = vadd.f32 %v6085, %v6102
      %v6112 = vadd.f32 %v6086, %v6102
      %v6113 = vadd.f32 %v6087, %v6102
      %v6114 = vadd.f32 %v6088, %v6102
      %v6115 = vadd.f32 %v6089, %v6102
      %v6116 = vadd.f32 %v6090, %v6102
      %v6117 = vadd.f32 %v6091, %v6107
      %v6118 = vadd.f32 %v6092, %v6107
      %v6119 = vadd.f32 %v6093, %v6107
      %v6120 = vadd.f32 %v6094, %v6107
      %v6121 = vadd.f32 %v6095, %v6107
      %v6122 = vadd.f32 %v6096, %v6107
      %v6123 = vadd.f32 %v6097, %v6107
      %v6124 = vadd.f32 %v6098, %v6107
      %v6125 = vmax.f32 %v6109, 0.0
      %v6126 = vmax.f32 %v6110, 0.0
      %v6127 = vmax.f32 %v6111, 0.0
      %v6128 = vmax.f32 %v6112, 0.0
      %v6129 = vmax.f32 %v6113, 0.0
      %v6130 = vmax.f32 %v6114, 0.0
      %v6131 = vmax.f32 %v6115, 0.0
      %v6132 = vmax.f32 %v6116, 0.0
      %v6133 = vmax.f32 %v6117, 0.0
      %v6134 = vmax.f32 %v6118, 0.0
      %v6135 = vmax.f32 %v6119, 0.0
      %v6136 = vmax.f32 %v6120, 0.0
      %v6137 = vmax.f32 %v6121, 0.0
      %v6138 = vmax.f32 %v6122, 0.0
      %v6139 = vmax.f32 %v6123, 0.0
      %v6140 = vmax.f32 %v6124, 0.0
      %v6141 = vld [vmem:[%s5] sm:$0xff]
      %v6142 = vld [vmem:[%s5 + $0x8] sm:$0xff]
      %v6143 = vld [vmem:[%s5 + $0x10] sm:$0xff]
      %v6144 = vld [vmem:[%s5 + $0x18] sm:$0xff]
      %v6145 = vld [vmem:[%s5 + $0x20] sm:$0xff]
      %v6146 = vld [vmem:[%s5 + $0x28] sm:$0xff]
      %v6147 = vld [vmem:[%s5 + $0x30] sm:$0xff]
      %v6148 = vld [vmem:[%s5 + $0x38] sm:$0xff]
      %v6149 = vld [vmem:[%s5 + $0x40] sm:$0xff]
      %v6150 = vld [vmem:[%s5 + $0x48] sm:$0xff]
      %v6151 = vld [vmem:[%s5 + $0x50] sm:$0xff]
      %v6152 = vld [vmem:[%s5 + $0x58] sm:$0xff]
      %v6153 = vld [vmem:[%s5 + $0x60] sm:$0xff]
      %v6154 = vld [vmem:[%s5 + $0x68] sm:$0xff]
      %v6155 = vld [vmem:[%s5 + $0x70] sm:$0xff]
      %v6156 = vld [vmem:[%s5 + $0x78] sm:$0xff]
      %v6157 = vld [vmem:[%s6] sm:$0xff]
      %v6158 = vld [vmem:[%s6 + $0x8] sm:$0xff]
      %v6159 = vld [vmem:[%s6 + $0x10] sm:$0xff]
      %v6160 = vld [vmem:[%s6 + $0x18] sm:$0xff]
      %v6161 = vld [vmem:[%s6 + $0x20] sm:$0xff]
      %v6162 = vld [vmem:[%s6 + $0x28] sm:$0xff]
      %v6163 = vld [vmem:[%s6 + $0x30] sm:$0xff]
      %v6164 = vld [vmem:[%s6 + $0x38] sm:$0xff]
      %v6165 = vld [vmem:[%s6 + $0x40] sm:$0xff]
      %v6166 = vld [vmem:[%s6 + $0x48] sm:$0xff]
      %v6167 = vld [vmem:[%s6 + $0x50] sm:$0xff]
      %v6168 = vld [vmem:[%s6 + $0x58] sm:$0xff]
      %v6169 = vld [vmem:[%s6 + $0x60] sm:$0xff]
      %v6170 = vld [vmem:[%s6 + $0x68] sm:$0xff]
      %v6171 = vld [vmem:[%s6 + $0x70] sm:$0xff]
      %v6172 = vld [vmem:[%s6 + $0x78] sm:$0xff]
      %6173 = vst [vmem:[#allocation3 + $0x8] sm:$0xff] %v6125
      %6174 = vst [vmem:[#allocation3 + $0x10] sm:$0xff] %v6126
      %6175 = vst [vmem:[#allocation3 + $0x18] sm:$0xff] %v6127
      %6176 = vst [vmem:[#allocation3 + $0x20] sm:$0xff] %v6128
      %6177 = vst [vmem:[#allocation3 + $0x28] sm:$0xff] %v6129
      %6178 = vst [vmem:[#allocation3 + $0x30] sm:$0xff] %v6130
      %6179 = vst [vmem:[#allocation3 + $0x38] sm:$0xff] %v6131
      %6180 = vst [vmem:[#allocation3 + $0x40] sm:$0xff] %v6132
      %6181 = vst [vmem:[#allocation3 + $0x58] sm:$0xff] %v6133
      %6182 = vst [vmem:[#allocation3 + $0x60] sm:$0xff] %v6134
      %6183 = vst [vmem:[#allocation3 + $0x68] sm:$0xff] %v6135
      %6184 = vst [vmem:[#allocation3 + $0x70] sm:$0xff] %v6136
      %6185 = vst [vmem:[#allocation3 + $0x78] sm:$0xff] %v6137
      %6186 = vst [vmem:[#allocation3 + $0x80] sm:$0xff] %v6138
      %6187 = vst [vmem:[#allocation3 + $0x88] sm:$0xff] %v6139
      %6188 = vst [vmem:[#allocation3 + $0x90] sm:$0xff] %v6140
      %v6189 = vld [vmem:[#allocation3] sm:$0xff]
      %v6190 = vld [vmem:[#allocation3 + $0x8] sm:$0xff]
      %v6191 = vld [vmem:[#allocation3 + $0x10] sm:$0xff]
      %v6192 = vld [vmem:[#allocation3 + $0x18] sm:$0xff]
      %v6193 = vld [vmem:[#allocation3 + $0x20] sm:$0xff]
      %v6194 = vld [vmem:[#allocation3 + $0x28] sm:$0xff]
      %v6195 = vld [vmem:[#allocation3 + $0x30] sm:$0xff]
      %v6196 = vld [vmem:[#allocation3 + $0x38] sm:$0xff]
      %v6197 = vld [vmem:[#allocation3 + $0x40] sm:$0xff]
      %v6198 = vld [vmem:[#allocation3 + $0x50] sm:$0xff]
      %v6199 = vld [vmem:[#allocation3 + $0x58] sm:$0xff]
      %v6200 = vld [vmem:[#allocation3 + $0x60] sm:$0xff]
      %v6201 = vld [vmem:[#allocation3 + $0x68] sm:$0xff]
      %v6202 = vld [vmem:[#allocation3 + $0x70] sm:$0xff]
      %v6203 = vld [vmem:[#allocation3 + $0x78] sm:$0xff]
      %v6204 = vld [vmem:[#allocation3 + $0x80] sm:$0xff]
      %v6205 = vld [vmem:[#allocation3 + $0x88] sm:$0xff]
      %v6206 = vld [vmem:[#allocation3 + $0x90] sm:$0xff]
      %6223 = vrot.lane.b32.xlu0 %v6141, 95
      %v6224 = vpop.permute.xlu0 %6223
      %6225 = vrot.lane.b32.xlu0 %v6142, 95
      %v6226 = vpop.permute.xlu0 %6225
      %6227 = vrot.lane.b32.xlu0 %v6143, 95
      %v6228 = vpop.permute.xlu0 %6227
      %6229 = vrot.lane.b32.xlu0 %v6144, 95
      %v6230 = vpop.permute.xlu0 %6229
      %6231 = vrot.lane.b32.xlu0 %v6145, 95
      %v6232 = vpop.permute.xlu0 %6231
      %6233 = vrot.lane.b32.xlu0 %v6146, 95
      %v6234 = vpop.permute.xlu0 %6233
      %6235 = vrot.lane.b32.xlu0 %v6147, 95
      %v6236 = vpop.permute.xlu0 %6235
      %6237 = vrot.lane.b32.xlu0 %v6148, 95
      %v6238 = vpop.permute.xlu0 %6237
      %6239 = vrot.lane.b32.xlu0 %v6149, 95
      %v6240 = vpop.permute.xlu0 %6239
      %6241 = vrot.lane.b32.xlu0 %v6150, 95
      %v6242 = vpop.permute.xlu0 %6241
      %6243 = vrot.lane.b32.xlu0 %v6151, 95
      %v6244 = vpop.permute.xlu0 %6243
      %6245 = vrot.lane.b32.xlu0 %v6152, 95
      %v6246 = vpop.permute.xlu0 %6245
      %6247 = vrot.lane.b32.xlu0 %v6153, 95
      %v6248 = vpop.permute.xlu0 %6247
      %6249 = vrot.lane.b32.xlu0 %v6154, 95
      %v6250 = vpop.permute.xlu0 %6249
      %6251 = vrot.lane.b32.xlu0 %v6155, 95
      %v6252 = vpop.permute.xlu0 %6251
      %6253 = vrot.lane.b32.xlu0 %v6156, 95
      %v6254 = vpop.permute.xlu0 %6253
      %v6255 = vsel %vm3923, %v6224, %v6226
      %v6256 = vsel %vm3923, %v6226, %v6228
      %v6257 = vsel %vm3923, %v6228, %v6230
      %v6258 = vsel %vm3923, %v6230, %v6232
      %v6259 = vsel %vm3923, %v6232, %v6234
      %v6260 = vsel %vm3923, %v6234, %v6236
      %v6261 = vsel %vm3923, %v6236, %v6238
      %v6262 = vsel %vm3923, %v6240, %v6242
      %v6263 = vsel %vm3923, %v6242, %v6244
      %v6264 = vsel %vm3923, %v6244, %v6246
      %v6265 = vsel %vm3923, %v6246, %v6248
      %v6266 = vsel %vm3923, %v6248, %v6250
      %v6267 = vsel %vm3923, %v6250, %v6252
      %v6268 = vsel %vm3923, %v6252, %v6254
      %v6287 = vmul.f32 %v6189, %v6224
      %v6288 = vmul.f32 %v6190, %v6255
      %v6289 = vmul.f32 %v6191, %v6256
      %v6290 = vmul.f32 %v6192, %v6257
      %v6291 = vmul.f32 %v6193, %v6258
      %v6292 = vmul.f32 %v6194, %v6259
      %v6293 = vmul.f32 %v6195, %v6260
      %v6294 = vmul.f32 %v6196, %v6261
      %v6295 = vmul.f32 %v6197, %v6238
      %v6296 = vmul.f32 %v6198, %v6240
      %v6297 = vmul.f32 %v6199, %v6262
      %v6298 = vmul.f32 %v6200, %v6263
      %v6299 = vmul.f32 %v6201, %v6264
      %v6300 = vmul.f32 %v6202, %v6265
      %v6301 = vmul.f32 %v6203, %v6266
      %v6302 = vmul.f32 %v6204, %v6267
      %v6303 = vmul.f32 %v6205, %v6268
      %v6304 = vmul.f32 %v6206, %v6254
      %6323 = vrot.lane.b32.xlu0 %v6287, 33
      %v6324 = vpop.permute.xlu0 %6323
      %6325 = vrot.lane.b32.xlu0 %v6288, 33
      %v6326 = vpop.permute.xlu0 %6325
      %6327 = vrot.lane.b32.xlu0 %v6289, 33
      %v6328 = vpop.permute.xlu0 %6327
      %6329 = vrot.lane.b32.xlu0 %v6290, 33
      %v6330 = vpop.permute.xlu0 %6329
      %6331 = vrot.lane.b32.xlu0 %v6291, 33
      %v6332 = vpop.permute.xlu0 %6331
      %6333 = vrot.lane.b32.xlu0 %v6292, 33
      %v6334 = vpop.permute.xlu0 %6333
      %6335 = vrot.lane.b32.xlu0 %v6293, 33
      %v6336 = vpop.permute.xlu0 %6335
      %6337 = vrot.lane.b32.xlu0 %v6294, 33
      %v6338 = vpop.permute.xlu0 %6337
      %6339 = vrot.lane.b32.xlu0 %v6295, 33
      %v6340 = vpop.permute.xlu0 %6339
      %6341 = vrot.lane.b32.xlu0 %v6296, 33
      %v6342 = vpop.permute.xlu0 %6341
      %6343 = vrot.lane.b32.xlu0 %v6297, 33
      %v6344 = vpop.permute.xlu0 %6343
      %6345 = vrot.lane.b32.xlu0 %v6298, 33
      %v6346 = vpop.permute.xlu0 %6345
      %6347 = vrot.lane.b32.xlu0 %v6299, 33
      %v6348 = vpop.permute.xlu0 %6347
      %6349 = vrot.lane.b32.xlu0 %v6300, 33
      %v6350 = vpop.permute.xlu0 %6349
      %6351 = vrot.lane.b32.xlu0 %v6301, 33
      %v6352 = vpop.permute.xlu0 %6351
      %6353 = vrot.lane.b32.xlu0 %v6302, 33
      %v6354 = vpop.permute.xlu0 %6353
      %6355 = vrot.lane.b32.xlu0 %v6303, 33
      %v6356 = vpop.permute.xlu0 %6355
      %6357 = vrot.lane.b32.xlu0 %v6304, 33
      %v6358 = vpop.permute.xlu0 %6357
      %v6359 = vsel %vm4028, %v6324, %v6326
      %v6360 = vsel %vm4028, %v6326, %v6328
      %v6361 = vsel %vm4028, %v6328, %v6330
      %v6362 = vsel %vm4028, %v6330, %v6332
      %v6363 = vsel %vm4028, %v6332, %v6334
      %v6364 = vsel %vm4028, %v6334, %v6336
      %v6365 = vsel %vm4028, %v6336, %v6338
      %v6366 = vsel %vm4028, %v6338, %v6340
      %v6367 = vsel %vm4028, %v6342, %v6344
      %v6368 = vsel %vm4028, %v6344, %v6346
      %v6369 = vsel %vm4028, %v6346, %v6348
      %v6370 = vsel %vm4028, %v6348, %v6350
      %v6371 = vsel %vm4028, %v6350, %v6352
      %v6372 = vsel %vm4028, %v6352, %v6354
      %v6373 = vsel %vm4028, %v6354, %v6356
      %v6374 = vsel %vm4028, %v6356, %v6358
      %6391 = vst [vmem:[#allocation4] sm:$0xff] %v6359
      %6392 = vst [vmem:[#allocation4 + $0x8] sm:$0xff] %v6360
      %6393 = vst [vmem:[#allocation4 + $0x10] sm:$0xff] %v6361
      %6394 = vst [vmem:[#allocation4 + $0x18] sm:$0xff] %v6362
      %6395 = vst [vmem:[#allocation4 + $0x20] sm:$0xff] %v6363
      %6396 = vst [vmem:[#allocation4 + $0x28] sm:$0xff] %v6364
      %6397 = vst [vmem:[#allocation4 + $0x30] sm:$0xff] %v6365
      %6398 = vst [vmem:[#allocation4 + $0x38] sm:$0xff] %v6366
      %6399 = vst [vmem:[#allocation4 + $0x40] sm:$0xff] %v6367
      %6400 = vst [vmem:[#allocation4 + $0x48] sm:$0xff] %v6368
      %6401 = vst [vmem:[#allocation4 + $0x50] sm:$0xff] %v6369
      %6402 = vst [vmem:[#allocation4 + $0x58] sm:$0xff] %v6370
      %6403 = vst [vmem:[#allocation4 + $0x60] sm:$0xff] %v6371
      %6404 = vst [vmem:[#allocation4 + $0x68] sm:$0xff] %v6372
      %6405 = vst [vmem:[#allocation4 + $0x70] sm:$0xff] %v6373
      %6406 = vst [vmem:[#allocation4 + $0x78] sm:$0xff] %v6374
      %v6407 = vld [vmem:[#allocation3] sm:$0xff]
      %v6408 = vld [vmem:[#allocation3 + $0x8] sm:$0xff]
      %v6409 = vld [vmem:[#allocation3 + $0x10] sm:$0xff]
      %v6410 = vld [vmem:[#allocation3 + $0x18] sm:$0xff]
      %v6411 = vld [vmem:[#allocation3 + $0x20] sm:$0xff]
      %v6412 = vld [vmem:[#allocation3 + $0x28] sm:$0xff]
      %v6413 = vld [vmem:[#allocation3 + $0x30] sm:$0xff]
      %v6414 = vld [vmem:[#allocation3 + $0x38] sm:$0xff]
      %v6415 = vld [vmem:[#allocation3 + $0x40] sm:$0xff]
      %v6416 = vld [vmem:[#allocation3 + $0x50] sm:$0xff]
      %v6417 = vld [vmem:[#allocation3 + $0x58] sm:$0xff]
      %v6418 = vld [vmem:[#allocation3 + $0x60] sm:$0xff]
      %v6419 = vld [vmem:[#allocation3 + $0x68] sm:$0xff]
      %v6420 = vld [vmem:[#allocation3 + $0x70] sm:$0xff]
      %v6421 = vld [vmem:[#allocation3 + $0x78] sm:$0xff]
      %v6422 = vld [vmem:[#allocation3 + $0x80] sm:$0xff]
      %v6423 = vld [vmem:[#allocation3 + $0x88] sm:$0xff]
      %v6424 = vld [vmem:[#allocation3 + $0x90] sm:$0xff]
      %6443 = vrot.lane.b32.xlu0 %v6407, 32
      %v6444 = vpop.permute.xlu0 %6443
      %6445 = vrot.lane.b32.xlu0 %v6408, 32
      %v6446 = vpop.permute.xlu0 %6445
      %6447 = vrot.lane.b32.xlu0 %v6409, 32
      %v6448 = vpop.permute.xlu0 %6447
      %6449 = vrot.lane.b32.xlu0 %v6410, 32
      %v6450 = vpop.permute.xlu0 %6449
      %6451 = vrot.lane.b32.xlu0 %v6411, 32
      %v6452 = vpop.permute.xlu0 %6451
      %6453 = vrot.lane.b32.xlu0 %v6412, 32
      %v6454 = vpop.permute.xlu0 %6453
      %6455 = vrot.lane.b32.xlu0 %v6413, 32
      %v6456 = vpop.permute.xlu0 %6455
      %6457 = vrot.lane.b32.xlu0 %v6414, 32
      %v6458 = vpop.permute.xlu0 %6457
      %6459 = vrot.lane.b32.xlu0 %v6415, 32
      %v6460 = vpop.permute.xlu0 %6459
      %6461 = vrot.lane.b32.xlu0 %v6416, 32
      %v6462 = vpop.permute.xlu0 %6461
      %6463 = vrot.lane.b32.xlu0 %v6417, 32
      %v6464 = vpop.permute.xlu0 %6463
      %6465 = vrot.lane.b32.xlu0 %v6418, 32
      %v6466 = vpop.permute.xlu0 %6465
      %6467 = vrot.lane.b32.xlu0 %v6419, 32
      %v6468 = vpop.permute.xlu0 %6467
      %6469 = vrot.lane.b32.xlu0 %v6420, 32
      %v6470 = vpop.permute.xlu0 %6469
      %6471 = vrot.lane.b32.xlu0 %v6421, 32
      %v6472 = vpop.permute.xlu0 %6471
      %6473 = vrot.lane.b32.xlu0 %v6422, 32
      %v6474 = vpop.permute.xlu0 %6473
      %6475 = vrot.lane.b32.xlu0 %v6423, 32
      %v6476 = vpop.permute.xlu0 %6475
      %6477 = vrot.lane.b32.xlu0 %v6424, 32
      %v6478 = vpop.permute.xlu0 %6477
      %v6479 = vsel %vm4149, %v6444, %v6446
      %v6480 = vsel %vm4149, %v6446, %v6448
      %v6481 = vsel %vm4149, %v6448, %v6450
      %v6482 = vsel %vm4149, %v6450, %v6452
      %v6483 = vsel %vm4149, %v6452, %v6454
      %v6484 = vsel %vm4149, %v6454, %v6456
      %v6485 = vsel %vm4149, %v6456, %v6458
      %v6486 = vsel %vm4149, %v6458, %v6460
      %v6487 = vsel %vm4149, %v6462, %v6464
      %v6488 = vsel %vm4149, %v6464, %v6466
      %v6489 = vsel %vm4149, %v6466, %v6468
      %v6490 = vsel %vm4149, %v6468, %v6470
      %v6491 = vsel %vm4149, %v6470, %v6472
      %v6492 = vsel %vm4149, %v6472, %v6474
      %v6493 = vsel %vm4149, %v6474, %v6476
      %v6494 = vsel %vm4149, %v6476, %v6478
      %6511 = vst [vmem:[#allocation4 + $0x80] sm:$0xff] %v6479
      %6512 = vst [vmem:[#allocation4 + $0x88] sm:$0xff] %v6480
      %6513 = vst [vmem:[#allocation4 + $0x90] sm:$0xff] %v6481
      %6514 = vst [vmem:[#allocation4 + $0x98] sm:$0xff] %v6482
      %6515 = vst [vmem:[#allocation4 + $0xa0] sm:$0xff] %v6483
      %6516 = vst [vmem:[#allocation4 + $0xa8] sm:$0xff] %v6484
      %6517 = vst [vmem:[#allocation4 + $0xb0] sm:$0xff] %v6485
      %6518 = vst [vmem:[#allocation4 + $0xb8] sm:$0xff] %v6486
      %6519 = vst [vmem:[#allocation4 + $0xc0] sm:$0xff] %v6487
      %6520 = vst [vmem:[#allocation4 + $0xc8] sm:$0xff] %v6488
      %6521 = vst [vmem:[#allocation4 + $0xd0] sm:$0xff] %v6489
      %6522 = vst [vmem:[#allocation4 + $0xd8] sm:$0xff] %v6490
      %6523 = vst [vmem:[#allocation4 + $0xe0] sm:$0xff] %v6491
      %6524 = vst [vmem:[#allocation4 + $0xe8] sm:$0xff] %v6492
      %6525 = vst [vmem:[#allocation4 + $0xf0] sm:$0xff] %v6493
      %6526 = vst [vmem:[#allocation4 + $0xf8] sm:$0xff] %v6494
      %v6527 = vld [vmem:[#allocation3] sm:$0xff]
      %v6528 = vld [vmem:[#allocation3 + $0x8] sm:$0xff]
      %v6529 = vld [vmem:[#allocation3 + $0x10] sm:$0xff]
      %v6530 = vld [vmem:[#allocation3 + $0x18] sm:$0xff]
      %v6531 = vld [vmem:[#allocation3 + $0x20] sm:$0xff]
      %v6532 = vld [vmem:[#allocation3 + $0x28] sm:$0xff]
      %v6533 = vld [vmem:[#allocation3 + $0x30] sm:$0xff]
      %v6534 = vld [vmem:[#allocation3 + $0x38] sm:$0xff]
      %v6535 = vld [vmem:[#allocation3 + $0x40] sm:$0xff]
      %v6536 = vld [vmem:[#allocation3 + $0x50] sm:$0xff]
      %v6537 = vld [vmem:[#allocation3 + $0x58] sm:$0xff]
      %v6538 = vld [vmem:[#allocation3 + $0x60] sm:$0xff]
      %v6539 = vld [vmem:[#allocation3 + $0x68] sm:$0xff]
      %v6540 = vld [vmem:[#allocation3 + $0x70] sm:$0xff]
      %v6541 = vld [vmem:[#allocation3 + $0x78] sm:$0xff]
      %v6542 = vld [vmem:[#allocation3 + $0x80] sm:$0xff]
      %v6543 = vld [vmem:[#allocation3 + $0x88] sm:$0xff]
      %v6544 = vld [vmem:[#allocation3 + $0x90] sm:$0xff]
      %6561 = vrot.lane.b32.xlu0 %v6157, 97
      %v6562 = vpop.permute.xlu0 %6561
      %6563 = vrot.lane.b32.xlu0 %v6158, 97
      %v6564 = vpop.permute.xlu0 %6563
      %6565 = vrot.lane.b32.xlu0 %v6159, 97
      %v6566 = vpop.permute.xlu0 %6565
      %6567 = vrot.lane.b32.xlu0 %v6160, 97
      %v6568 = vpop.permute.xlu0 %6567
      %6569 = vrot.lane.b32.xlu0 %v6161, 97
      %v6570 = vpop.permute.xlu0 %6569
      %6571 = vrot.lane.b32.xlu0 %v6162, 97
      %v6572 = vpop.permute.xlu0 %6571
      %6573 = vrot.lane.b32.xlu0 %v6163, 97
      %v6574 = vpop.permute.xlu0 %6573
      %6575 = vrot.lane.b32.xlu0 %v6164, 97
      %v6576 = vpop.permute.xlu0 %6575
      %6577 = vrot.lane.b32.xlu0 %v6165, 97
      %v6578 = vpop.permute.xlu0 %6577
      %6579 = vrot.lane.b32.xlu0 %v6166, 97
      %v6580 = vpop.permute.xlu0 %6579
      %6581 = vrot.lane.b32.xlu0 %v6167, 97
      %v6582 = vpop.permute.xlu0 %6581
      %6583 = vrot.lane.b32.xlu0 %v6168, 97
      %v6584 = vpop.permute.xlu0 %6583
      %6585 = vrot.lane.b32.xlu0 %v6169, 97
      %v6586 = vpop.permute.xlu0 %6585
      %6587 = vrot.lane.b32.xlu0 %v6170, 97
      %v6588 = vpop.permute.xlu0 %6587
      %6589 = vrot.lane.b32.xlu0 %v6171, 97
      %v6590 = vpop.permute.xlu0 %6589
      %6591 = vrot.lane.b32.xlu0 %v6172, 97
      %v6592 = vpop.permute.xlu0 %6591
      %v6593 = vsel %vm4264, %v6562, %v6564
      %v6594 = vsel %vm4264, %v6564, %v6566
      %v6595 = vsel %vm4264, %v6566, %v6568
      %v6596 = vsel %vm4264, %v6568, %v6570
      %v6597 = vsel %vm4264, %v6570, %v6572
      %v6598 = vsel %vm4264, %v6572, %v6574
      %v6599 = vsel %vm4264, %v6574, %v6576
      %v6600 = vsel %vm4264, %v6578, %v6580
      %v6601 = vsel %vm4264, %v6580, %v6582
      %v6602 = vsel %vm4264, %v6582, %v6584
      %v6603 = vsel %vm4264, %v6584, %v6586
      %v6604 = vsel %vm4264, %v6586, %v6588
      %v6605 = vsel %vm4264, %v6588, %v6590
      %v6606 = vsel %vm4264, %v6590, %v6592
      %v6625 = vmul.f32 %v6527, %v6562
      %v6626 = vmul.f32 %v6528, %v6593
      %v6627 = vmul.f32 %v6529, %v6594
      %v6628 = vmul.f32 %v6530, %v6595
      %v6629 = vmul.f32 %v6531, %v6596
      %v6630 = vmul.f32 %v6532, %v6597
      %v6631 = vmul.f32 %v6533, %v6598
      %v6632 = vmul.f32 %v6534, %v6599
      %v6633 = vmul.f32 %v6535, %v6576
      %v6634 = vmul.f32 %v6536, %v6578
      %v6635 = vmul.f32 %v6537, %v6600
      %v6636 = vmul.f32 %v6538, %v6601
      %v6637 = vmul.f32 %v6539, %v6602
      %v6638 = vmul.f32 %v6540, %v6603
      %v6639 = vmul.f32 %v6541, %v6604
      %v6640 = vmul.f32 %v6542, %v6605
      %v6641 = vmul.f32 %v6543, %v6606
      %v6642 = vmul.f32 %v6544, %v6592
      %6661 = vrot.lane.b32.xlu0 %v6625, 31
      %v6662 = vpop.permute.xlu0 %6661
      %6663 = vrot.lane.b32.xlu0 %v6626, 31
      %v6664 = vpop.permute.xlu0 %6663
      %6665 = vrot.lane.b32.xlu0 %v6627, 31
      %v6666 = vpop.permute.xlu0 %6665
      %6667 = vrot.lane.b32.xlu0 %v6628, 31
      %v6668 = vpop.permute.xlu0 %6667
      %6669 = vrot.lane.b32.xlu0 %v6629, 31
      %v6670 = vpop.permute.xlu0 %6669
      %6671 = vrot.lane.b32.xlu0 %v6630, 31
      %v6672 = vpop.permute.xlu0 %6671
      %6673 = vrot.lane.b32.xlu0 %v6631, 31
      %v6674 = vpop.permute.xlu0 %6673
      %6675 = vrot.lane.b32.xlu0 %v6632, 31
      %v6676 = vpop.permute.xlu0 %6675
      %6677 = vrot.lane.b32.xlu0 %v6633, 31
      %v6678 = vpop.permute.xlu0 %6677
      %6679 = vrot.lane.b32.xlu0 %v6634, 31
      %v6680 = vpop.permute.xlu0 %6679
      %6681 = vrot.lane.b32.xlu0 %v6635, 31
      %v6682 = vpop.permute.xlu0 %6681
      %6683 = vrot.lane.b32.xlu0 %v6636, 31
      %v6684 = vpop.permute.xlu0 %6683
      %6685 = vrot.lane.b32.xlu0 %v6637, 31
      %v6686 = vpop.permute.xlu0 %6685
      %6687 = vrot.lane.b32.xlu0 %v6638, 31
      %v6688 = vpop.permute.xlu0 %6687
      %6689 = vrot.lane.b32.xlu0 %v6639, 31
      %v6690 = vpop.permute.xlu0 %6689
      %6691 = vrot.lane.b32.xlu0 %v6640, 31
      %v6692 = vpop.permute.xlu0 %6691
      %6693 = vrot.lane.b32.xlu0 %v6641, 31
      %v6694 = vpop.permute.xlu0 %6693
      %6695 = vrot.lane.b32.xlu0 %v6642, 31
      %v6696 = vpop.permute.xlu0 %6695
      %v6697 = vsel %vm4369, %v6662, %v6664
      %v6698 = vsel %vm4369, %v6664, %v6666
      %v6699 = vsel %vm4369, %v6666, %v6668
      %v6700 = vsel %vm4369, %v6668, %v6670
      %v6701 = vsel %vm4369, %v6670, %v6672
      %v6702 = vsel %vm4369, %v6672, %v6674
      %v6703 = vsel %vm4369, %v6674, %v6676
      %v6704 = vsel %vm4369, %v6676, %v6678
      %v6705 = vsel %vm4369, %v6680, %v6682
      %v6706 = vsel %vm4369, %v6682, %v6684
      %v6707 = vsel %vm4369, %v6684, %v6686
      %v6708 = vsel %vm4369, %v6686, %v6688
      %v6709 = vsel %vm4369, %v6688, %v6690
      %v6710 = vsel %vm4369, %v6690, %v6692
      %v6711 = vsel %vm4369, %v6692, %v6694
      %v6712 = vsel %vm4369, %v6694, %v6696
      %6729 = vst [vmem:[#allocation4 + $0x100] sm:$0xff] %v6697
      %6730 = vst [vmem:[#allocation4 + $0x108] sm:$0xff] %v6698
      %6731 = vst [vmem:[#allocation4 + $0x110] sm:$0xff] %v6699
      %6732 = vst [vmem:[#allocation4 + $0x118] sm:$0xff] %v6700
      %6733 = vst [vmem:[#allocation4 + $0x120] sm:$0xff] %v6701
      %6734 = vst [vmem:[#allocation4 + $0x128] sm:$0xff] %v6702
      %6735 = vst [vmem:[#allocation4 + $0x130] sm:$0xff] %v6703
      %6736 = vst [vmem:[#allocation4 + $0x138] sm:$0xff] %v6704
      %6737 = vst [vmem:[#allocation4 + $0x140] sm:$0xff] %v6705
      %6738 = vst [vmem:[#allocation4 + $0x148] sm:$0xff] %v6706
      %6739 = vst [vmem:[#allocation4 + $0x150] sm:$0xff] %v6707
      %6740 = vst [vmem:[#allocation4 + $0x158] sm:$0xff] %v6708
      %6741 = vst [vmem:[#allocation4 + $0x160] sm:$0xff] %v6709
      %6742 = vst [vmem:[#allocation4 + $0x168] sm:$0xff] %v6710
      %6743 = vst [vmem:[#allocation4 + $0x170] sm:$0xff] %v6711
      %6744 = vst [vmem:[#allocation4 + $0x178] sm:$0xff] %v6712
      %v6745 = vld [vmem:[#allocation3] sm:$0xff]
      %v6746 = vld [vmem:[#allocation3 + $0x8] sm:$0xff]
      %v6747 = vld [vmem:[#allocation3 + $0x10] sm:$0xff]
      %v6748 = vld [vmem:[#allocation3 + $0x18] sm:$0xff]
      %v6749 = vld [vmem:[#allocation3 + $0x20] sm:$0xff]
      %v6750 = vld [vmem:[#allocation3 + $0x28] sm:$0xff]
      %v6751 = vld [vmem:[#allocation3 + $0x30] sm:$0xff]
      %v6752 = vld [vmem:[#allocation3 + $0x38] sm:$0xff]
      %v6753 = vld [vmem:[#allocation3 + $0x40] sm:$0xff]
      %v6754 = vld [vmem:[#allocation3 + $0x50] sm:$0xff]
      %v6755 = vld [vmem:[#allocation3 + $0x58] sm:$0xff]
      %v6756 = vld [vmem:[#allocation3 + $0x60] sm:$0xff]
      %v6757 = vld [vmem:[#allocation3 + $0x68] sm:$0xff]
      %v6758 = vld [vmem:[#allocation3 + $0x70] sm:$0xff]
      %v6759 = vld [vmem:[#allocation3 + $0x78] sm:$0xff]
      %v6760 = vld [vmem:[#allocation3 + $0x80] sm:$0xff]
      %v6761 = vld [vmem:[#allocation3 + $0x88] sm:$0xff]
      %v6762 = vld [vmem:[#allocation3 + $0x90] sm:$0xff]
      %6763 = vrot.lane.b32.xlu0 %v6141, 127
      %v6764 = vpop.permute.xlu0 %6763
      %6765 = vrot.lane.b32.xlu0 %v6142, 127
      %v6766 = vpop.permute.xlu0 %6765
      %6767 = vrot.lane.b32.xlu0 %v6143, 127
      %v6768 = vpop.permute.xlu0 %6767
      %6769 = vrot.lane.b32.xlu0 %v6144, 127
      %v6770 = vpop.permute.xlu0 %6769
      %6771 = vrot.lane.b32.xlu0 %v6145, 127
      %v6772 = vpop.permute.xlu0 %6771
      %6773 = vrot.lane.b32.xlu0 %v6146, 127
      %v6774 = vpop.permute.xlu0 %6773
      %6775 = vrot.lane.b32.xlu0 %v6147, 127
      %v6776 = vpop.permute.xlu0 %6775
      %6777 = vrot.lane.b32.xlu0 %v6148, 127
      %v6778 = vpop.permute.xlu0 %6777
      %6779 = vrot.lane.b32.xlu0 %v6149, 127
      %v6780 = vpop.permute.xlu0 %6779
      %6781 = vrot.lane.b32.xlu0 %v6150, 127
      %v6782 = vpop.permute.xlu0 %6781
      %6783 = vrot.lane.b32.xlu0 %v6151, 127
      %v6784 = vpop.permute.xlu0 %6783
      %6785 = vrot.lane.b32.xlu0 %v6152, 127
      %v6786 = vpop.permute.xlu0 %6785
      %6787 = vrot.lane.b32.xlu0 %v6153, 127
      %v6788 = vpop.permute.xlu0 %6787
      %6789 = vrot.lane.b32.xlu0 %v6154, 127
      %v6790 = vpop.permute.xlu0 %6789
      %6791 = vrot.lane.b32.xlu0 %v6155, 127
      %v6792 = vpop.permute.xlu0 %6791
      %6793 = vrot.lane.b32.xlu0 %v6156, 127
      %v6794 = vpop.permute.xlu0 %6793
      %v6795 = vsel %vm916, %v6764, %v6766
      %v6796 = vsel %vm916, %v6766, %v6768
      %v6797 = vsel %vm916, %v6768, %v6770
      %v6798 = vsel %vm916, %v6770, %v6772
      %v6799 = vsel %vm916, %v6772, %v6774
      %v6800 = vsel %vm916, %v6774, %v6776
      %v6801 = vsel %vm916, %v6776, %v6778
      %v6802 = vsel %vm916, %v6780, %v6782
      %v6803 = vsel %vm916, %v6782, %v6784
      %v6804 = vsel %vm916, %v6784, %v6786
      %v6805 = vsel %vm916, %v6786, %v6788
      %v6806 = vsel %vm916, %v6788, %v6790
      %v6807 = vsel %vm916, %v6790, %v6792
      %v6808 = vsel %vm916, %v6792, %v6794
      %v6827 = vmul.f32 %v6745, %v6764
      %v6828 = vmul.f32 %v6746, %v6795
      %v6829 = vmul.f32 %v6747, %v6796
      %v6830 = vmul.f32 %v6748, %v6797
      %v6831 = vmul.f32 %v6749, %v6798
      %v6832 = vmul.f32 %v6750, %v6799
      %v6833 = vmul.f32 %v6751, %v6800
      %v6834 = vmul.f32 %v6752, %v6801
      %v6835 = vmul.f32 %v6753, %v6778
      %v6836 = vmul.f32 %v6754, %v6780
      %v6837 = vmul.f32 %v6755, %v6802
      %v6838 = vmul.f32 %v6756, %v6803
      %v6839 = vmul.f32 %v6757, %v6804
      %v6840 = vmul.f32 %v6758, %v6805
      %v6841 = vmul.f32 %v6759, %v6806
      %v6842 = vmul.f32 %v6760, %v6807
      %v6843 = vmul.f32 %v6761, %v6808
      %v6844 = vmul.f32 %v6762, %v6794
      %6863 = vrot.lane.b32.xlu0 %v6827, 1
      %v6864 = vpop.permute.xlu0 %6863
      %6865 = vrot.lane.b32.xlu0 %v6828, 1
      %v6866 = vpop.permute.xlu0 %6865
      %6867 = vrot.lane.b32.xlu0 %v6829, 1
      %v6868 = vpop.permute.xlu0 %6867
      %6869 = vrot.lane.b32.xlu0 %v6830, 1
      %v6870 = vpop.permute.xlu0 %6869
      %6871 = vrot.lane.b32.xlu0 %v6831, 1
      %v6872 = vpop.permute.xlu0 %6871
      %6873 = vrot.lane.b32.xlu0 %v6832, 1
      %v6874 = vpop.permute.xlu0 %6873
      %6875 = vrot.lane.b32.xlu0 %v6833, 1
      %v6876 = vpop.permute.xlu0 %6875
      %6877 = vrot.lane.b32.xlu0 %v6834, 1
      %v6878 = vpop.permute.xlu0 %6877
      %6879 = vrot.lane.b32.xlu0 %v6835, 1
      %v6880 = vpop.permute.xlu0 %6879
      %6881 = vrot.lane.b32.xlu0 %v6836, 1
      %v6882 = vpop.permute.xlu0 %6881
      %6883 = vrot.lane.b32.xlu0 %v6837, 1
      %v6884 = vpop.permute.xlu0 %6883
      %6885 = vrot.lane.b32.xlu0 %v6838, 1
      %v6886 = vpop.permute.xlu0 %6885
      %6887 = vrot.lane.b32.xlu0 %v6839, 1
      %v6888 = vpop.permute.xlu0 %6887
      %6889 = vrot.lane.b32.xlu0 %v6840, 1
      %v6890 = vpop.permute.xlu0 %6889
      %6891 = vrot.lane.b32.xlu0 %v6841, 1
      %v6892 = vpop.permute.xlu0 %6891
      %6893 = vrot.lane.b32.xlu0 %v6842, 1
      %v6894 = vpop.permute.xlu0 %6893
      %6895 = vrot.lane.b32.xlu0 %v6843, 1
      %v6896 = vpop.permute.xlu0 %6895
      %6897 = vrot.lane.b32.xlu0 %v6844, 1
      %v6898 = vpop.permute.xlu0 %6897
      %v6899 = vsel %vm949, %v6864, %v6866
      %v6900 = vsel %vm949, %v6866, %v6868
      %v6901 = vsel %vm949, %v6868, %v6870
      %v6902 = vsel %vm949, %v6870, %v6872
      %v6903 = vsel %vm949, %v6872, %v6874
      %v6904 = vsel %vm949, %v6874, %v6876
      %v6905 = vsel %vm949, %v6876, %v6878
      %v6906 = vsel %vm949, %v6878, %v6880
      %v6907 = vsel %vm949, %v6882, %v6884
      %v6908 = vsel %vm949, %v6884, %v6886
      %v6909 = vsel %vm949, %v6886, %v6888
      %v6910 = vsel %vm949, %v6888, %v6890
      %v6911 = vsel %vm949, %v6890, %v6892
      %v6912 = vsel %vm949, %v6892, %v6894
      %v6913 = vsel %vm949, %v6894, %v6896
      %v6914 = vsel %vm949, %v6896, %v6898
      %6931 = vst [vmem:[#allocation4 + $0x180] sm:$0xff] %v6899
      %6932 = vst [vmem:[#allocation4 + $0x188] sm:$0xff] %v6900
      %6933 = vst [vmem:[#allocation4 + $0x190] sm:$0xff] %v6901
      %6934 = vst [vmem:[#allocation4 + $0x198] sm:$0xff] %v6902
      %6935 = vst [vmem:[#allocation4 + $0x1a0] sm:$0xff] %v6903
      %6936 = vst [vmem:[#allocation4 + $0x1a8] sm:$0xff] %v6904
      %6937 = vst [vmem:[#allocation4 + $0x1b0] sm:$0xff] %v6905
      %6938 = vst [vmem:[#allocation4 + $0x1b8] sm:$0xff] %v6906
      %6939 = vst [vmem:[#allocation4 + $0x1c0] sm:$0xff] %v6907
      %6940 = vst [vmem:[#allocation4 + $0x1c8] sm:$0xff] %v6908
      %6941 = vst [vmem:[#allocation4 + $0x1d0] sm:$0xff] %v6909
      %6942 = vst [vmem:[#allocation4 + $0x1d8] sm:$0xff] %v6910
      %6943 = vst [vmem:[#allocation4 + $0x1e0] sm:$0xff] %v6911
      %6944 = vst [vmem:[#allocation4 + $0x1e8] sm:$0xff] %v6912
      %6945 = vst [vmem:[#allocation4 + $0x1f0] sm:$0xff] %v6913
      %6946 = vst [vmem:[#allocation4 + $0x1f8] sm:$0xff] %v6914
      %v6947 = vld [vmem:[#allocation3 + $0x8] sm:$0xff]
      %v6948 = vld [vmem:[#allocation3 + $0x10] sm:$0xff]
      %v6949 = vld [vmem:[#allocation3 + $0x18] sm:$0xff]
      %v6950 = vld [vmem:[#allocation3 + $0x20] sm:$0xff]
      %v6951 = vld [vmem:[#allocation3 + $0x28] sm:$0xff]
      %v6952 = vld [vmem:[#allocation3 + $0x30] sm:$0xff]
      %v6953 = vld [vmem:[#allocation3 + $0x38] sm:$0xff]
      %v6954 = vld [vmem:[#allocation3 + $0x40] sm:$0xff]
      %v6955 = vld [vmem:[#allocation3 + $0x58] sm:$0xff]
      %v6956 = vld [vmem:[#allocation3 + $0x60] sm:$0xff]
      %v6957 = vld [vmem:[#allocation3 + $0x68] sm:$0xff]
      %v6958 = vld [vmem:[#allocation3 + $0x70] sm:$0xff]
      %v6959 = vld [vmem:[#allocation3 + $0x78] sm:$0xff]
      %v6960 = vld [vmem:[#allocation3 + $0x80] sm:$0xff]
      %v6961 = vld [vmem:[#allocation3 + $0x88] sm:$0xff]
      %v6962 = vld [vmem:[#allocation3 + $0x90] sm:$0xff]
      %6963 = vst [vmem:[#allocation4 + $0x200] sm:$0xff] %v6947
      %6964 = vst [vmem:[#allocation4 + $0x208] sm:$0xff] %v6948
      %6965 = vst [vmem:[#allocation4 + $0x210] sm:$0xff] %v6949
      %6966 = vst [vmem:[#allocation4 + $0x218] sm:$0xff] %v6950
      %6967 = vst [vmem:[#allocation4 + $0x220] sm:$0xff] %v6951
      %6968 = vst [vmem:[#allocation4 + $0x228] sm:$0xff] %v6952
      %6969 = vst [vmem:[#allocation4 + $0x230] sm:$0xff] %v6953
      %6970 = vst [vmem:[#allocation4 + $0x238] sm:$0xff] %v6954
      %6971 = vst [vmem:[#allocation4 + $0x240] sm:$0xff] %v6955
      %6972 = vst [vmem:[#allocation4 + $0x248] sm:$0xff] %v6956
      %6973 = vst [vmem:[#allocation4 + $0x250] sm:$0xff] %v6957
      %6974 = vst [vmem:[#allocation4 + $0x258] sm:$0xff] %v6958
      %6975 = vst [vmem:[#allocation4 + $0x260] sm:$0xff] %v6959
      %6976 = vst [vmem:[#allocation4 + $0x268] sm:$0xff] %v6960
      %6977 = vst [vmem:[#allocation4 + $0x270] sm:$0xff] %v6961
      %6978 = vst [vmem:[#allocation4 + $0x278] sm:$0xff] %v6962
      %v6979 = vld [vmem:[#allocation3 + $0x8] sm:$0xff]
      %v6980 = vld [vmem:[#allocation3 + $0x10] sm:$0xff]
      %v6981 = vld [vmem:[#allocation3 + $0x18] sm:$0xff]
      %v6982 = vld [vmem:[#allocation3 + $0x20] sm:$0xff]
      %v6983 = vld [vmem:[#allocation3 + $0x28] sm:$0xff]
      %v6984 = vld [vmem:[#allocation3 + $0x30] sm:$0xff]
      %v6985 = vld [vmem:[#allocation3 + $0x38] sm:$0xff]
      %v6986 = vld [vmem:[#allocation3 + $0x40] sm:$0xff]
      %v6987 = vld [vmem:[#allocation3 + $0x48] sm:$0xff]
      %v6988 = vld [vmem:[#allocation3 + $0x58] sm:$0xff]
      %v6989 = vld [vmem:[#allocation3 + $0x60] sm:$0xff]
      %v6990 = vld [vmem:[#allocation3 + $0x68] sm:$0xff]
      %v6991 = vld [vmem:[#allocation3 + $0x70] sm:$0xff]
      %v6992 = vld [vmem:[#allocation3 + $0x78] sm:$0xff]
      %v6993 = vld [vmem:[#allocation3 + $0x80] sm:$0xff]
      %v6994 = vld [vmem:[#allocation3 + $0x88] sm:$0xff]
      %v6995 = vld [vmem:[#allocation3 + $0x90] sm:$0xff]
      %v6996 = vld [vmem:[#allocation3 + $0x98] sm:$0xff]
      %6997 = vrot.lane.b32.xlu0 %v6157, 1
      %v6998 = vpop.permute.xlu0 %6997
      %6999 = vrot.lane.b32.xlu0 %v6158, 1
      %v7000 = vpop.permute.xlu0 %6999
      %7001 = vrot.lane.b32.xlu0 %v6159, 1
      %v7002 = vpop.permute.xlu0 %7001
      %7003 = vrot.lane.b32.xlu0 %v6160, 1
      %v7004 = vpop.permute.xlu0 %7003
      %7005 = vrot.lane.b32.xlu0 %v6161, 1
      %v7006 = vpop.permute.xlu0 %7005
      %7007 = vrot.lane.b32.xlu0 %v6162, 1
      %v7008 = vpop.permute.xlu0 %7007
      %7009 = vrot.lane.b32.xlu0 %v6163, 1
      %v7010 = vpop.permute.xlu0 %7009
      %7011 = vrot.lane.b32.xlu0 %v6164, 1
      %v7012 = vpop.permute.xlu0 %7011
      %7013 = vrot.lane.b32.xlu0 %v6165, 1
      %v7014 = vpop.permute.xlu0 %7013
      %7015 = vrot.lane.b32.xlu0 %v6166, 1
      %v7016 = vpop.permute.xlu0 %7015
      %7017 = vrot.lane.b32.xlu0 %v6167, 1
      %v7018 = vpop.permute.xlu0 %7017
      %7019 = vrot.lane.b32.xlu0 %v6168, 1
      %v7020 = vpop.permute.xlu0 %7019
      %7021 = vrot.lane.b32.xlu0 %v6169, 1
      %v7022 = vpop.permute.xlu0 %7021
      %7023 = vrot.lane.b32.xlu0 %v6170, 1
      %v7024 = vpop.permute.xlu0 %7023
      %7025 = vrot.lane.b32.xlu0 %v6171, 1
      %v7026 = vpop.permute.xlu0 %7025
      %7027 = vrot.lane.b32.xlu0 %v6172, 1
      %v7028 = vpop.permute.xlu0 %7027
      %v7029 = vsel %vm949, %v6998, %v7000
      %v7030 = vsel %vm949, %v7000, %v7002
      %v7031 = vsel %vm949, %v7002, %v7004
      %v7032 = vsel %vm949, %v7004, %v7006
      %v7033 = vsel %vm949, %v7006, %v7008
      %v7034 = vsel %vm949, %v7008, %v7010
      %v7035 = vsel %vm949, %v7010, %v7012
      %v7036 = vsel %vm949, %v7014, %v7016
      %v7037 = vsel %vm949, %v7016, %v7018
      %v7038 = vsel %vm949, %v7018, %v7020
      %v7039 = vsel %vm949, %v7020, %v7022
      %v7040 = vsel %vm949, %v7022, %v7024
      %v7041 = vsel %vm949, %v7024, %v7026
      %v7042 = vsel %vm949, %v7026, %v7028
      %v7061 = vmul.f32 %v6979, %v6998
      %v7062 = vmul.f32 %v6980, %v7029
      %v7063 = vmul.f32 %v6981, %v7030
      %v7064 = vmul.f32 %v6982, %v7031
      %v7065 = vmul.f32 %v6983, %v7032
      %v7066 = vmul.f32 %v6984, %v7033
      %v7067 = vmul.f32 %v6985, %v7034
      %v7068 = vmul.f32 %v6986, %v7035
      %v7069 = vmul.f32 %v6987, %v7012
      %v7070 = vmul.f32 %v6988, %v7014
      %v7071 = vmul.f32 %v6989, %v7036
      %v7072 = vmul.f32 %v6990, %v7037
      %v7073 = vmul.f32 %v6991, %v7038
      %v7074 = vmul.f32 %v6992, %v7039
      %v7075 = vmul.f32 %v6993, %v7040
      %v7076 = vmul.f32 %v6994, %v7041
      %v7077 = vmul.f32 %v6995, %v7042
      %v7078 = vmul.f32 %v6996, %v7028
      %7097 = vrot.lane.b32.xlu0 %v7061, 127
      %v7098 = vpop.permute.xlu0 %7097
      %7099 = vrot.lane.b32.xlu0 %v7062, 127
      %v7100 = vpop.permute.xlu0 %7099
      %7101 = vrot.lane.b32.xlu0 %v7063, 127
      %v7102 = vpop.permute.xlu0 %7101
      %7103 = vrot.lane.b32.xlu0 %v7064, 127
      %v7104 = vpop.permute.xlu0 %7103
      %7105 = vrot.lane.b32.xlu0 %v7065, 127
      %v7106 = vpop.permute.xlu0 %7105
      %7107 = vrot.lane.b32.xlu0 %v7066, 127
      %v7108 = vpop.permute.xlu0 %7107
      %7109 = vrot.lane.b32.xlu0 %v7067, 127
      %v7110 = vpop.permute.xlu0 %7109
      %7111 = vrot.lane.b32.xlu0 %v7068, 127
      %v7112 = vpop.permute.xlu0 %7111
      %7113 = vrot.lane.b32.xlu0 %v7069, 127
      %v7114 = vpop.permute.xlu0 %7113
      %7115 = vrot.lane.b32.xlu0 %v7070, 127
      %v7116 = vpop.permute.xlu0 %7115
      %7117 = vrot.lane.b32.xlu0 %v7071, 127
      %v7118 = vpop.permute.xlu0 %7117
      %7119 = vrot.lane.b32.xlu0 %v7072, 127
      %v7120 = vpop.permute.xlu0 %7119
      %7121 = vrot.lane.b32.xlu0 %v7073, 127
      %v7122 = vpop.permute.xlu0 %7121
      %7123 = vrot.lane.b32.xlu0 %v7074, 127
      %v7124 = vpop.permute.xlu0 %7123
      %7125 = vrot.lane.b32.xlu0 %v7075, 127
      %v7126 = vpop.permute.xlu0 %7125
      %7127 = vrot.lane.b32.xlu0 %v7076, 127
      %v7128 = vpop.permute.xlu0 %7127
      %7129 = vrot.lane.b32.xlu0 %v7077, 127
      %v7130 = vpop.permute.xlu0 %7129
      %7131 = vrot.lane.b32.xlu0 %v7078, 127
      %v7132 = vpop.permute.xlu0 %7131
      %v7133 = vsel %vm916, %v7098, %v7100
      %v7134 = vsel %vm916, %v7100, %v7102
      %v7135 = vsel %vm916, %v7102, %v7104
      %v7136 = vsel %vm916, %v7104, %v7106
      %v7137 = vsel %vm916, %v7106, %v7108
      %v7138 = vsel %vm916, %v7108, %v7110
      %v7139 = vsel %vm916, %v7110, %v7112
      %v7140 = vsel %vm916, %v7112, %v7114
      %v7141 = vsel %vm916, %v7116, %v7118
      %v7142 = vsel %vm916, %v7118, %v7120
      %v7143 = vsel %vm916, %v7120, %v7122
      %v7144 = vsel %vm916, %v7122, %v7124
      %v7145 = vsel %vm916, %v7124, %v7126
      %v7146 = vsel %vm916, %v7126, %v7128
      %v7147 = vsel %vm916, %v7128, %v7130
      %v7148 = vsel %vm916, %v7130, %v7132
      %7165 = vst [vmem:[#allocation4 + $0x280] sm:$0xff] %v7133
      %7166 = vst [vmem:[#allocation4 + $0x288] sm:$0xff] %v7134
      %7167 = vst [vmem:[#allocation4 + $0x290] sm:$0xff] %v7135
      %7168 = vst [vmem:[#allocation4 + $0x298] sm:$0xff] %v7136
      %7169 = vst [vmem:[#allocation4 + $0x2a0] sm:$0xff] %v7137
      %7170 = vst [vmem:[#allocation4 + $0x2a8] sm:$0xff] %v7138
      %7171 = vst [vmem:[#allocation4 + $0x2b0] sm:$0xff] %v7139
      %7172 = vst [vmem:[#allocation4 + $0x2b8] sm:$0xff] %v7140
      %7173 = vst [vmem:[#allocation4 + $0x2c0] sm:$0xff] %v7141
      %7174 = vst [vmem:[#allocation4 + $0x2c8] sm:$0xff] %v7142
      %7175 = vst [vmem:[#allocation4 + $0x2d0] sm:$0xff] %v7143
      %7176 = vst [vmem:[#allocation4 + $0x2d8] sm:$0xff] %v7144
      %7177 = vst [vmem:[#allocation4 + $0x2e0] sm:$0xff] %v7145
      %7178 = vst [vmem:[#allocation4 + $0x2e8] sm:$0xff] %v7146
      %7179 = vst [vmem:[#allocation4 + $0x2f0] sm:$0xff] %v7147
      %7180 = vst [vmem:[#allocation4 + $0x2f8] sm:$0xff] %v7148
      %v7181 = vld [vmem:[#allocation3 + $0x8] sm:$0xff]
      %v7182 = vld [vmem:[#allocation3 + $0x10] sm:$0xff]
      %v7183 = vld [vmem:[#allocation3 + $0x18] sm:$0xff]
      %v7184 = vld [vmem:[#allocation3 + $0x20] sm:$0xff]
      %v7185 = vld [vmem:[#allocation3 + $0x28] sm:$0xff]
      %v7186 = vld [vmem:[#allocation3 + $0x30] sm:$0xff]
      %v7187 = vld [vmem:[#allocation3 + $0x38] sm:$0xff]
      %v7188 = vld [vmem:[#allocation3 + $0x40] sm:$0xff]
      %v7189 = vld [vmem:[#allocation3 + $0x48] sm:$0xff]
      %v7190 = vld [vmem:[#allocation3 + $0x58] sm:$0xff]
      %v7191 = vld [vmem:[#allocation3 + $0x60] sm:$0xff]
      %v7192 = vld [vmem:[#allocation3 + $0x68] sm:$0xff]
      %v7193 = vld [vmem:[#allocation3 + $0x70] sm:$0xff]
      %v7194 = vld [vmem:[#allocation3 + $0x78] sm:$0xff]
      %v7195 = vld [vmem:[#allocation3 + $0x80] sm:$0xff]
      %v7196 = vld [vmem:[#allocation3 + $0x88] sm:$0xff]
      %v7197 = vld [vmem:[#allocation3 + $0x90] sm:$0xff]
      %v7198 = vld [vmem:[#allocation3 + $0x98] sm:$0xff]
      %7199 = vrot.lane.b32.xlu0 %v6141, 31
      %v7200 = vpop.permute.xlu0 %7199
      %7201 = vrot.lane.b32.xlu0 %v6142, 31
      %v7202 = vpop.permute.xlu0 %7201
      %7203 = vrot.lane.b32.xlu0 %v6143, 31
      %v7204 = vpop.permute.xlu0 %7203
      %7205 = vrot.lane.b32.xlu0 %v6144, 31
      %v7206 = vpop.permute.xlu0 %7205
      %7207 = vrot.lane.b32.xlu0 %v6145, 31
      %v7208 = vpop.permute.xlu0 %7207
      %7209 = vrot.lane.b32.xlu0 %v6146, 31
      %v7210 = vpop.permute.xlu0 %7209
      %7211 = vrot.lane.b32.xlu0 %v6147, 31
      %v7212 = vpop.permute.xlu0 %7211
      %7213 = vrot.lane.b32.xlu0 %v6148, 31
      %v7214 = vpop.permute.xlu0 %7213
      %7215 = vrot.lane.b32.xlu0 %v6149, 31
      %v7216 = vpop.permute.xlu0 %7215
      %7217 = vrot.lane.b32.xlu0 %v6150, 31
      %v7218 = vpop.permute.xlu0 %7217
      %7219 = vrot.lane.b32.xlu0 %v6151, 31
      %v7220 = vpop.permute.xlu0 %7219
      %7221 = vrot.lane.b32.xlu0 %v6152, 31
      %v7222 = vpop.permute.xlu0 %7221
      %7223 = vrot.lane.b32.xlu0 %v6153, 31
      %v7224 = vpop.permute.xlu0 %7223
      %7225 = vrot.lane.b32.xlu0 %v6154, 31
      %v7226 = vpop.permute.xlu0 %7225
      %7227 = vrot.lane.b32.xlu0 %v6155, 31
      %v7228 = vpop.permute.xlu0 %7227
      %7229 = vrot.lane.b32.xlu0 %v6156, 31
      %v7230 = vpop.permute.xlu0 %7229
      %v7231 = vsel %vm4369, %v7200, %v7202
      %v7232 = vsel %vm4369, %v7202, %v7204
      %v7233 = vsel %vm4369, %v7204, %v7206
      %v7234 = vsel %vm4369, %v7206, %v7208
      %v7235 = vsel %vm4369, %v7208, %v7210
      %v7236 = vsel %vm4369, %v7210, %v7212
      %v7237 = vsel %vm4369, %v7212, %v7214
      %v7238 = vsel %vm4369, %v7216, %v7218
      %v7239 = vsel %vm4369, %v7218, %v7220
      %v7240 = vsel %vm4369, %v7220, %v7222
      %v7241 = vsel %vm4369, %v7222, %v7224
      %v7242 = vsel %vm4369, %v7224, %v7226
      %v7243 = vsel %vm4369, %v7226, %v7228
      %v7244 = vsel %vm4369, %v7228, %v7230
      %v7263 = vmul.f32 %v7181, %v7200
      %v7264 = vmul.f32 %v7182, %v7231
      %v7265 = vmul.f32 %v7183, %v7232
      %v7266 = vmul.f32 %v7184, %v7233
      %v7267 = vmul.f32 %v7185, %v7234
      %v7268 = vmul.f32 %v7186, %v7235
      %v7269 = vmul.f32 %v7187, %v7236
      %v7270 = vmul.f32 %v7188, %v7237
      %v7271 = vmul.f32 %v7189, %v7214
      %v7272 = vmul.f32 %v7190, %v7216
      %v7273 = vmul.f32 %v7191, %v7238
      %v7274 = vmul.f32 %v7192, %v7239
      %v7275 = vmul.f32 %v7193, %v7240
      %v7276 = vmul.f32 %v7194, %v7241
      %v7277 = vmul.f32 %v7195, %v7242
      %v7278 = vmul.f32 %v7196, %v7243
      %v7279 = vmul.f32 %v7197, %v7244
      %v7280 = vmul.f32 %v7198, %v7230
      %7299 = vrot.lane.b32.xlu0 %v7263, 97
      %v7300 = vpop.permute.xlu0 %7299
      %7301 = vrot.lane.b32.xlu0 %v7264, 97
      %v7302 = vpop.permute.xlu0 %7301
      %7303 = vrot.lane.b32.xlu0 %v7265, 97
      %v7304 = vpop.permute.xlu0 %7303
      %7305 = vrot.lane.b32.xlu0 %v7266, 97
      %v7306 = vpop.permute.xlu0 %7305
      %7307 = vrot.lane.b32.xlu0 %v7267, 97
      %v7308 = vpop.permute.xlu0 %7307
      %7309 = vrot.lane.b32.xlu0 %v7268, 97
      %v7310 = vpop.permute.xlu0 %7309
      %7311 = vrot.lane.b32.xlu0 %v7269, 97
      %v7312 = vpop.permute.xlu0 %7311
      %7313 = vrot.lane.b32.xlu0 %v7270, 97
      %v7314 = vpop.permute.xlu0 %7313
      %7315 = vrot.lane.b32.xlu0 %v7271, 97
      %v7316 = vpop.permute.xlu0 %7315
      %7317 = vrot.lane.b32.xlu0 %v7272, 97
      %v7318 = vpop.permute.xlu0 %7317
      %7319 = vrot.lane.b32.xlu0 %v7273, 97
      %v7320 = vpop.permute.xlu0 %7319
      %7321 = vrot.lane.b32.xlu0 %v7274, 97
      %v7322 = vpop.permute.xlu0 %7321
      %7323 = vrot.lane.b32.xlu0 %v7275, 97
      %v7324 = vpop.permute.xlu0 %7323
      %7325 = vrot.lane.b32.xlu0 %v7276, 97
      %v7326 = vpop.permute.xlu0 %7325
      %7327 = vrot.lane.b32.xlu0 %v7277, 97
      %v7328 = vpop.permute.xlu0 %7327
      %7329 = vrot.lane.b32.xlu0 %v7278, 97
      %v7330 = vpop.permute.xlu0 %7329
      %7331 = vrot.lane.b32.xlu0 %v7279, 97
      %v7332 = vpop.permute.xlu0 %7331
      %7333 = vrot.lane.b32.xlu0 %v7280, 97
      %v7334 = vpop.permute.xlu0 %7333
      %v7335 = vsel %vm4264, %v7300, %v7302
      %v7336 = vsel %vm4264, %v7302, %v7304
      %v7337 = vsel %vm4264, %v7304, %v7306
      %v7338 = vsel %vm4264, %v7306, %v7308
      %v7339 = vsel %vm4264, %v7308, %v7310
      %v7340 = vsel %vm4264, %v7310, %v7312
      %v7341 = vsel %vm4264, %v7312, %v7314
      %v7342 = vsel %vm4264, %v7314, %v7316
      %v7343 = vsel %vm4264, %v7318, %v7320
      %v7344 = vsel %vm4264, %v7320, %v7322
      %v7345 = vsel %vm4264, %v7322, %v7324
      %v7346 = vsel %vm4264, %v7324, %v7326
      %v7347 = vsel %vm4264, %v7326, %v7328
      %v7348 = vsel %vm4264, %v7328, %v7330
      %v7349 = vsel %vm4264, %v7330, %v7332
      %v7350 = vsel %vm4264, %v7332, %v7334
      %7367 = vst [vmem:[#allocation4 + $0x300] sm:$0xff] %v7335
      %7368 = vst [vmem:[#allocation4 + $0x308] sm:$0xff] %v7336
      %7369 = vst [vmem:[#allocation4 + $0x310] sm:$0xff] %v7337
      %7370 = vst [vmem:[#allocation4 + $0x318] sm:$0xff] %v7338
      %7371 = vst [vmem:[#allocation4 + $0x320] sm:$0xff] %v7339
      %7372 = vst [vmem:[#allocation4 + $0x328] sm:$0xff] %v7340
      %7373 = vst [vmem:[#allocation4 + $0x330] sm:$0xff] %v7341
      %7374 = vst [vmem:[#allocation4 + $0x338] sm:$0xff] %v7342
      %7375 = vst [vmem:[#allocation4 + $0x340] sm:$0xff] %v7343
      %7376 = vst [vmem:[#allocation4 + $0x348] sm:$0xff] %v7344
      %7377 = vst [vmem:[#allocation4 + $0x350] sm:$0xff] %v7345
      %7378 = vst [vmem:[#allocation4 + $0x358] sm:$0xff] %v7346
      %7379 = vst [vmem:[#allocation4 + $0x360] sm:$0xff] %v7347
      %7380 = vst [vmem:[#allocation4 + $0x368] sm:$0xff] %v7348
      %7381 = vst [vmem:[#allocation4 + $0x370] sm:$0xff] %v7349
      %7382 = vst [vmem:[#allocation4 + $0x378] sm:$0xff] %v7350
      %v7383 = vld [vmem:[#allocation3 + $0x8] sm:$0xff]
      %v7384 = vld [vmem:[#allocation3 + $0x10] sm:$0xff]
      %v7385 = vld [vmem:[#allocation3 + $0x18] sm:$0xff]
      %v7386 = vld [vmem:[#allocation3 + $0x20] sm:$0xff]
      %v7387 = vld [vmem:[#allocation3 + $0x28] sm:$0xff]
      %v7388 = vld [vmem:[#allocation3 + $0x30] sm:$0xff]
      %v7389 = vld [vmem:[#allocation3 + $0x38] sm:$0xff]
      %v7390 = vld [vmem:[#allocation3 + $0x40] sm:$0xff]
      %v7391 = vld [vmem:[#allocation3 + $0x48] sm:$0xff]
      %v7392 = vld [vmem:[#allocation3 + $0x58] sm:$0xff]
      %v7393 = vld [vmem:[#allocation3 + $0x60] sm:$0xff]
      %v7394 = vld [vmem:[#allocation3 + $0x68] sm:$0xff]
      %v7395 = vld [vmem:[#allocation3 + $0x70] sm:$0xff]
      %v7396 = vld [vmem:[#allocation3 + $0x78] sm:$0xff]
      %v7397 = vld [vmem:[#allocation3 + $0x80] sm:$0xff]
      %v7398 = vld [vmem:[#allocation3 + $0x88] sm:$0xff]
      %v7399 = vld [vmem:[#allocation3 + $0x90] sm:$0xff]
      %v7400 = vld [vmem:[#allocation3 + $0x98] sm:$0xff]
      %7419 = vrot.lane.b32.xlu0 %v7383, 96
      %v7420 = vpop.permute.xlu0 %7419
      %7421 = vrot.lane.b32.xlu0 %v7384, 96
      %v7422 = vpop.permute.xlu0 %7421
      %7423 = vrot.lane.b32.xlu0 %v7385, 96
      %v7424 = vpop.permute.xlu0 %7423
      %7425 = vrot.lane.b32.xlu0 %v7386, 96
      %v7426 = vpop.permute.xlu0 %7425
      %7427 = vrot.lane.b32.xlu0 %v7387, 96
      %v7428 = vpop.permute.xlu0 %7427
      %7429 = vrot.lane.b32.xlu0 %v7388, 96
      %v7430 = vpop.permute.xlu0 %7429
      %7431 = vrot.lane.b32.xlu0 %v7389, 96
      %v7432 = vpop.permute.xlu0 %7431
      %7433 = vrot.lane.b32.xlu0 %v7390, 96
      %v7434 = vpop.permute.xlu0 %7433
      %7435 = vrot.lane.b32.xlu0 %v7391, 96
      %v7436 = vpop.permute.xlu0 %7435
      %7437 = vrot.lane.b32.xlu0 %v7392, 96
      %v7438 = vpop.permute.xlu0 %7437
      %7439 = vrot.lane.b32.xlu0 %v7393, 96
      %v7440 = vpop.permute.xlu0 %7439
      %7441 = vrot.lane.b32.xlu0 %v7394, 96
      %v7442 = vpop.permute.xlu0 %7441
      %7443 = vrot.lane.b32.xlu0 %v7395, 96
      %v7444 = vpop.permute.xlu0 %7443
      %7445 = vrot.lane.b32.xlu0 %v7396, 96
      %v7446 = vpop.permute.xlu0 %7445
      %7447 = vrot.lane.b32.xlu0 %v7397, 96
      %v7448 = vpop.permute.xlu0 %7447
      %7449 = vrot.lane.b32.xlu0 %v7398, 96
      %v7450 = vpop.permute.xlu0 %7449
      %7451 = vrot.lane.b32.xlu0 %v7399, 96
      %v7452 = vpop.permute.xlu0 %7451
      %7453 = vrot.lane.b32.xlu0 %v7400, 96
      %v7454 = vpop.permute.xlu0 %7453
      %v7455 = vsel %vm5128, %v7420, %v7422
      %v7456 = vsel %vm5128, %v7422, %v7424
      %v7457 = vsel %vm5128, %v7424, %v7426
      %v7458 = vsel %vm5128, %v7426, %v7428
      %v7459 = vsel %vm5128, %v7428, %v7430
      %v7460 = vsel %vm5128, %v7430, %v7432
      %v7461 = vsel %vm5128, %v7432, %v7434
      %v7462 = vsel %vm5128, %v7434, %v7436
      %v7463 = vsel %vm5128, %v7438, %v7440
      %v7464 = vsel %vm5128, %v7440, %v7442
      %v7465 = vsel %vm5128, %v7442, %v7444
      %v7466 = vsel %vm5128, %v7444, %v7446
      %v7467 = vsel %vm5128, %v7446, %v7448
      %v7468 = vsel %vm5128, %v7448, %v7450
      %v7469 = vsel %vm5128, %v7450, %v7452
      %v7470 = vsel %vm5128, %v7452, %v7454
      %7487 = vst [vmem:[#allocation4 + $0x380] sm:$0xff] %v7455
      %7488 = vst [vmem:[#allocation4 + $0x388] sm:$0xff] %v7456
      %7489 = vst [vmem:[#allocation4 + $0x390] sm:$0xff] %v7457
      %7490 = vst [vmem:[#allocation4 + $0x398] sm:$0xff] %v7458
      %7491 = vst [vmem:[#allocation4 + $0x3a0] sm:$0xff] %v7459
      %7492 = vst [vmem:[#allocation4 + $0x3a8] sm:$0xff] %v7460
      %7493 = vst [vmem:[#allocation4 + $0x3b0] sm:$0xff] %v7461
      %7494 = vst [vmem:[#allocation4 + $0x3b8] sm:$0xff] %v7462
      %7495 = vst [vmem:[#allocation4 + $0x3c0] sm:$0xff] %v7463
      %7496 = vst [vmem:[#allocation4 + $0x3c8] sm:$0xff] %v7464
      %7497 = vst [vmem:[#allocation4 + $0x3d0] sm:$0xff] %v7465
      %7498 = vst [vmem:[#allocation4 + $0x3d8] sm:$0xff] %v7466
      %7499 = vst [vmem:[#allocation4 + $0x3e0] sm:$0xff] %v7467
      %7500 = vst [vmem:[#allocation4 + $0x3e8] sm:$0xff] %v7468
      %7501 = vst [vmem:[#allocation4 + $0x3f0] sm:$0xff] %v7469
      %7502 = vst [vmem:[#allocation4 + $0x3f8] sm:$0xff] %v7470
      %v7503 = vld [vmem:[#allocation3 + $0x8] sm:$0xff]
      %v7504 = vld [vmem:[#allocation3 + $0x10] sm:$0xff]
      %v7505 = vld [vmem:[#allocation3 + $0x18] sm:$0xff]
      %v7506 = vld [vmem:[#allocation3 + $0x20] sm:$0xff]
      %v7507 = vld [vmem:[#allocation3 + $0x28] sm:$0xff]
      %v7508 = vld [vmem:[#allocation3 + $0x30] sm:$0xff]
      %v7509 = vld [vmem:[#allocation3 + $0x38] sm:$0xff]
      %v7510 = vld [vmem:[#allocation3 + $0x40] sm:$0xff]
      %v7511 = vld [vmem:[#allocation3 + $0x48] sm:$0xff]
      %v7512 = vld [vmem:[#allocation3 + $0x58] sm:$0xff]
      %v7513 = vld [vmem:[#allocation3 + $0x60] sm:$0xff]
      %v7514 = vld [vmem:[#allocation3 + $0x68] sm:$0xff]
      %v7515 = vld [vmem:[#allocation3 + $0x70] sm:$0xff]
      %v7516 = vld [vmem:[#allocation3 + $0x78] sm:$0xff]
      %v7517 = vld [vmem:[#allocation3 + $0x80] sm:$0xff]
      %v7518 = vld [vmem:[#allocation3 + $0x88] sm:$0xff]
      %v7519 = vld [vmem:[#allocation3 + $0x90] sm:$0xff]
      %v7520 = vld [vmem:[#allocation3 + $0x98] sm:$0xff]
      %7521 = vrot.lane.b32.xlu0 %v6157, 33
      %v7522 = vpop.permute.xlu0 %7521
      %7523 = vrot.lane.b32.xlu0 %v6158, 33
      %v7524 = vpop.permute.xlu0 %7523
      %7525 = vrot.lane.b32.xlu0 %v6159, 33
      %v7526 = vpop.permute.xlu0 %7525
      %7527 = vrot.lane.b32.xlu0 %v6160, 33
      %v7528 = vpop.permute.xlu0 %7527
      %7529 = vrot.lane.b32.xlu0 %v6161, 33
      %v7530 = vpop.permute.xlu0 %7529
      %7531 = vrot.lane.b32.xlu0 %v6162, 33
      %v7532 = vpop.permute.xlu0 %7531
      %7533 = vrot.lane.b32.xlu0 %v6163, 33
      %v7534 = vpop.permute.xlu0 %7533
      %7535 = vrot.lane.b32.xlu0 %v6164, 33
      %v7536 = vpop.permute.xlu0 %7535
      %7537 = vrot.lane.b32.xlu0 %v6165, 33
      %v7538 = vpop.permute.xlu0 %7537
      %7539 = vrot.lane.b32.xlu0 %v6166, 33
      %v7540 = vpop.permute.xlu0 %7539
      %7541 = vrot.lane.b32.xlu0 %v6167, 33
      %v7542 = vpop.permute.xlu0 %7541
      %7543 = vrot.lane.b32.xlu0 %v6168, 33
      %v7544 = vpop.permute.xlu0 %7543
      %7545 = vrot.lane.b32.xlu0 %v6169, 33
      %v7546 = vpop.permute.xlu0 %7545
      %7547 = vrot.lane.b32.xlu0 %v6170, 33
      %v7548 = vpop.permute.xlu0 %7547
      %7549 = vrot.lane.b32.xlu0 %v6171, 33
      %v7550 = vpop.permute.xlu0 %7549
      %7551 = vrot.lane.b32.xlu0 %v6172, 33
      %v7552 = vpop.permute.xlu0 %7551
      %v7553 = vsel %vm4028, %v7522, %v7524
      %v7554 = vsel %vm4028, %v7524, %v7526
      %v7555 = vsel %vm4028, %v7526, %v7528
      %v7556 = vsel %vm4028, %v7528, %v7530
      %v7557 = vsel %vm4028, %v7530, %v7532
      %v7558 = vsel %vm4028, %v7532, %v7534
      %v7559 = vsel %vm4028, %v7534, %v7536
      %v7560 = vsel %vm4028, %v7538, %v7540
      %v7561 = vsel %vm4028, %v7540, %v7542
      %v7562 = vsel %vm4028, %v7542, %v7544
      %v7563 = vsel %vm4028, %v7544, %v7546
      %v7564 = vsel %vm4028, %v7546, %v7548
      %v7565 = vsel %vm4028, %v7548, %v7550
      %v7566 = vsel %vm4028, %v7550, %v7552
      %v7585 = vmul.f32 %v7503, %v7522
      %v7586 = vmul.f32 %v7504, %v7553
      %v7587 = vmul.f32 %v7505, %v7554
      %v7588 = vmul.f32 %v7506, %v7555
      %v7589 = vmul.f32 %v7507, %v7556
      %v7590 = vmul.f32 %v7508, %v7557
      %v7591 = vmul.f32 %v7509, %v7558
      %v7592 = vmul.f32 %v7510, %v7559
      %v7593 = vmul.f32 %v7511, %v7536
      %v7594 = vmul.f32 %v7512, %v7538
      %v7595 = vmul.f32 %v7513, %v7560
      %v7596 = vmul.f32 %v7514, %v7561
      %v7597 = vmul.f32 %v7515, %v7562
      %v7598 = vmul.f32 %v7516, %v7563
      %v7599 = vmul.f32 %v7517, %v7564
      %v7600 = vmul.f32 %v7518, %v7565
      %v7601 = vmul.f32 %v7519, %v7566
      %v7602 = vmul.f32 %v7520, %v7552
      %7621 = vrot.lane.b32.xlu0 %v7585, 95
      %v7622 = vpop.permute.xlu0 %7621
      %7623 = vrot.lane.b32.xlu0 %v7586, 95
      %v7624 = vpop.permute.xlu0 %7623
      %7625 = vrot.lane.b32.xlu0 %v7587, 95
      %v7626 = vpop.permute.xlu0 %7625
      %7627 = vrot.lane.b32.xlu0 %v7588, 95
      %v7628 = vpop.permute.xlu0 %7627
      %7629 = vrot.lane.b32.xlu0 %v7589, 95
      %v7630 = vpop.permute.xlu0 %7629
      %7631 = vrot.lane.b32.xlu0 %v7590, 95
      %v7632 = vpop.permute.xlu0 %7631
      %7633 = vrot.lane.b32.xlu0 %v7591, 95
      %v7634 = vpop.permute.xlu0 %7633
      %7635 = vrot.lane.b32.xlu0 %v7592, 95
      %v7636 = vpop.permute.xlu0 %7635
      %7637 = vrot.lane.b32.xlu0 %v7593, 95
      %v7638 = vpop.permute.xlu0 %7637
      %7639 = vrot.lane.b32.xlu0 %v7594, 95
      %v7640 = vpop.permute.xlu0 %7639
      %7641 = vrot.lane.b32.xlu0 %v7595, 95
      %v7642 = vpop.permute.xlu0 %7641
      %7643 = vrot.lane.b32.xlu0 %v7596, 95
      %v7644 = vpop.permute.xlu0 %7643
      %7645 = vrot.lane.b32.xlu0 %v7597, 95
      %v7646 = vpop.permute.xlu0 %7645
      %7647 = vrot.lane.b32.xlu0 %v7598, 95
      %v7648 = vpop.permute.xlu0 %7647
      %7649 = vrot.lane.b32.xlu0 %v7599, 95
      %v7650 = vpop.permute.xlu0 %7649
      %7651 = vrot.lane.b32.xlu0 %v7600, 95
      %v7652 = vpop.permute.xlu0 %7651
      %7653 = vrot.lane.b32.xlu0 %v7601, 95
      %v7654 = vpop.permute.xlu0 %7653
      %7655 = vrot.lane.b32.xlu0 %v7602, 95
      %v7656 = vpop.permute.xlu0 %7655
      %v7657 = vsel %vm3923, %v7622, %v7624
      %v7658 = vsel %vm3923, %v7624, %v7626
      %v7659 = vsel %vm3923, %v7626, %v7628
      %v7660 = vsel %vm3923, %v7628, %v7630
      %v7661 = vsel %vm3923, %v7630, %v7632
      %v7662 = vsel %vm3923, %v7632, %v7634
      %v7663 = vsel %vm3923, %v7634, %v7636
      %v7664 = vsel %vm3923, %v7636, %v7638
      %v7665 = vsel %vm3923, %v7640, %v7642
      %v7666 = vsel %vm3923, %v7642, %v7644
      %v7667 = vsel %vm3923, %v7644, %v7646
      %v7668 = vsel %vm3923, %v7646, %v7648
      %v7669 = vsel %vm3923, %v7648, %v7650
      %v7670 = vsel %vm3923, %v7650, %v7652
      %v7671 = vsel %vm3923, %v7652, %v7654
      %v7672 = vsel %vm3923, %v7654, %v7656
      %7689 = vst [vmem:[#allocation4 + $0x400] sm:$0xff] %v7657
      %7690 = vst [vmem:[#allocation4 + $0x408] sm:$0xff] %v7658
      %7691 = vst [vmem:[#allocation4 + $0x410] sm:$0xff] %v7659
      %7692 = vst [vmem:[#allocation4 + $0x418] sm:$0xff] %v7660
      %7693 = vst [vmem:[#allocation4 + $0x420] sm:$0xff] %v7661
      %7694 = vst [vmem:[#allocation4 + $0x428] sm:$0xff] %v7662
      %7695 = vst [vmem:[#allocation4 + $0x430] sm:$0xff] %v7663
      %7696 = vst [vmem:[#allocation4 + $0x438] sm:$0xff] %v7664
      %7697 = vst [vmem:[#allocation4 + $0x440] sm:$0xff] %v7665
      %7698 = vst [vmem:[#allocation4 + $0x448] sm:$0xff] %v7666
      %7699 = vst [vmem:[#allocation4 + $0x450] sm:$0xff] %v7667
      %7700 = vst [vmem:[#allocation4 + $0x458] sm:$0xff] %v7668
      %7701 = vst [vmem:[#allocation4 + $0x460] sm:$0xff] %v7669
      %7702 = vst [vmem:[#allocation4 + $0x468] sm:$0xff] %v7670
      %7703 = vst [vmem:[#allocation4 + $0x470] sm:$0xff] %v7671
      %7704 = vst [vmem:[#allocation4 + $0x478] sm:$0xff] %v7672
      %v7705 = vld [vmem:[%s19] sm:$0xff]
      %v7706 = vld [vmem:[%s19 + $0x8] sm:$0xff]
      %v7707 = vld [vmem:[%s19 + $0x10] sm:$0xff]
      %v7708 = vld [vmem:[%s19 + $0x18] sm:$0xff]
      %v7709 = vld [vmem:[#allocation4] sm:$0xff]
      %v7710 = vld [vmem:[#allocation4 + $0x8] sm:$0xff]
      %v7711 = vld [vmem:[#allocation4 + $0x10] sm:$0xff]
      %v7712 = vld [vmem:[#allocation4 + $0x18] sm:$0xff]
      %v7713 = vld [vmem:[#allocation4 + $0x20] sm:$0xff]
      %v7714 = vld [vmem:[#allocation4 + $0x28] sm:$0xff]
      %v7715 = vld [vmem:[#allocation4 + $0x30] sm:$0xff]
      %v7716 = vld [vmem:[#allocation4 + $0x38] sm:$0xff]
      %v7717 = vld [vmem:[#allocation4 + $0x40] sm:$0xff]
      %v7718 = vld [vmem:[#allocation4 + $0x48] sm:$0xff]
      %v7719 = vld [vmem:[#allocation4 + $0x50] sm:$0xff]
      %v7720 = vld [vmem:[#allocation4 + $0x58] sm:$0xff]
      %v7721 = vld [vmem:[#allocation4 + $0x60] sm:$0xff]
      %v7722 = vld [vmem:[#allocation4 + $0x68] sm:$0xff]
      %v7723 = vld [vmem:[#allocation4 + $0x70] sm:$0xff]
      %v7724 = vld [vmem:[#allocation4 + $0x78] sm:$0xff]
      %v7725 = vld [vmem:[#allocation4 + $0x80] sm:$0xff]
      %v7726 = vld [vmem:[#allocation4 + $0x88] sm:$0xff]
      %v7727 = vld [vmem:[#allocation4 + $0x90] sm:$0xff]
      %v7728 = vld [vmem:[#allocation4 + $0x98] sm:$0xff]
      %v7729 = vld [vmem:[#allocation4 + $0xa0] sm:$0xff]
      %v7730 = vld [vmem:[#allocation4 + $0xa8] sm:$0xff]
      %v7731 = vld [vmem:[#allocation4 + $0xb0] sm:$0xff]
      %v7732 = vld [vmem:[#allocation4 + $0xb8] sm:$0xff]
      %v7733 = vld [vmem:[#allocation4 + $0xc0] sm:$0xff]
      %v7734 = vld [vmem:[#allocation4 + $0xc8] sm:$0xff]
      %v7735 = vld [vmem:[#allocation4 + $0xd0] sm:$0xff]
      %v7736 = vld [vmem:[#allocation4 + $0xd8] sm:$0xff]
      %v7737 = vld [vmem:[#allocation4 + $0xe0] sm:$0xff]
      %v7738 = vld [vmem:[#allocation4 + $0xe8] sm:$0xff]
      %v7739 = vld [vmem:[#allocation4 + $0xf0] sm:$0xff]
      %v7740 = vld [vmem:[#allocation4 + $0xf8] sm:$0xff]
      %v7741 = vld [vmem:[#allocation4 + $0x100] sm:$0xff]
      %v7742 = vld [vmem:[#allocation4 + $0x108] sm:$0xff]
      %v7743 = vld [vmem:[#allocation4 + $0x110] sm:$0xff]
      %v7744 = vld [vmem:[#allocation4 + $0x118] sm:$0xff]
      %v7745 = vld [vmem:[#allocation4 + $0x120] sm:$0xff]
      %v7746 = vld [vmem:[#allocation4 + $0x128] sm:$0xff]
      %v7747 = vld [vmem:[#allocation4 + $0x130] sm:$0xff]
      %v7748 = vld [vmem:[#allocation4 + $0x138] sm:$0xff]
      %v7749 = vld [vmem:[#allocation4 + $0x140] sm:$0xff]
      %v7750 = vld [vmem:[#allocation4 + $0x148] sm:$0xff]
      %v7751 = vld [vmem:[#allocation4 + $0x150] sm:$0xff]
      %v7752 = vld [vmem:[#allocation4 + $0x158] sm:$0xff]
      %v7753 = vld [vmem:[#allocation4 + $0x160] sm:$0xff]
      %v7754 = vld [vmem:[#allocation4 + $0x168] sm:$0xff]
      %v7755 = vld [vmem:[#allocation4 + $0x170] sm:$0xff]
      %v7756 = vld [vmem:[#allocation4 + $0x178] sm:$0xff]
      %v7757 = vld [vmem:[#allocation4 + $0x180] sm:$0xff]
      %v7758 = vld [vmem:[#allocation4 + $0x188] sm:$0xff]
      %v7759 = vld [vmem:[#allocation4 + $0x190] sm:$0xff]
      %v7760 = vld [vmem:[#allocation4 + $0x198] sm:$0xff]
      %v7761 = vld [vmem:[#allocation4 + $0x1a0] sm:$0xff]
      %v7762 = vld [vmem:[#allocation4 + $0x1a8] sm:$0xff]
      %v7763 = vld [vmem:[#allocation4 + $0x1b0] sm:$0xff]
      %v7764 = vld [vmem:[#allocation4 + $0x1b8] sm:$0xff]
      %v7765 = vld [vmem:[#allocation4 + $0x1c0] sm:$0xff]
      %v7766 = vld [vmem:[#allocation4 + $0x1c8] sm:$0xff]
      %v7767 = vld [vmem:[#allocation4 + $0x1d0] sm:$0xff]
      %v7768 = vld [vmem:[#allocation4 + $0x1d8] sm:$0xff]
      %v7769 = vld [vmem:[#allocation4 + $0x1e0] sm:$0xff]
      %v7770 = vld [vmem:[#allocation4 + $0x1e8] sm:$0xff]
      %v7771 = vld [vmem:[#allocation4 + $0x1f0] sm:$0xff]
      %v7772 = vld [vmem:[#allocation4 + $0x1f8] sm:$0xff]
      %v7773 = vld [vmem:[#allocation4 + $0x200] sm:$0xff]
      %v7774 = vld [vmem:[#allocation4 + $0x208] sm:$0xff]
      %v7775 = vld [vmem:[#allocation4 + $0x210] sm:$0xff]
      %v7776 = vld [vmem:[#allocation4 + $0x218] sm:$0xff]
      %v7777 = vld [vmem:[#allocation4 + $0x220] sm:$0xff]
      %v7778 = vld [vmem:[#allocation4 + $0x228] sm:$0xff]
      %v7779 = vld [vmem:[#allocation4 + $0x230] sm:$0xff]
      %v7780 = vld [vmem:[#allocation4 + $0x238] sm:$0xff]
      %v7781 = vld [vmem:[#allocation4 + $0x240] sm:$0xff]
      %v7782 = vld [vmem:[#allocation4 + $0x248] sm:$0xff]
      %v7783 = vld [vmem:[#allocation4 + $0x250] sm:$0xff]
      %v7784 = vld [vmem:[#allocation4 + $0x258] sm:$0xff]
      %v7785 = vld [vmem:[#allocation4 + $0x260] sm:$0xff]
      %v7786 = vld [vmem:[#allocation4 + $0x268] sm:$0xff]
      %v7787 = vld [vmem:[#allocation4 + $0x270] sm:$0xff]
      %v7788 = vld [vmem:[#allocation4 + $0x278] sm:$0xff]
      %v7789 = vld [vmem:[#allocation4 + $0x280] sm:$0xff]
      %v7790 = vld [vmem:[#allocation4 + $0x288] sm:$0xff]
      %v7791 = vld [vmem:[#allocation4 + $0x290] sm:$0xff]
      %v7792 = vld [vmem:[#allocation4 + $0x298] sm:$0xff]
      %v7793 = vld [vmem:[#allocation4 + $0x2a0] sm:$0xff]
      %v7794 = vld [vmem:[#allocation4 + $0x2a8] sm:$0xff]
      %v7795 = vld [vmem:[#allocation4 + $0x2b0] sm:$0xff]
      %v7796 = vld [vmem:[#allocation4 + $0x2b8] sm:$0xff]
      %v7797 = vld [vmem:[#allocation4 + $0x2c0] sm:$0xff]
      %v7798 = vld [vmem:[#allocation4 + $0x2c8] sm:$0xff]
      %v7799 = vld [vmem:[#allocation4 + $0x2d0] sm:$0xff]
      %v7800 = vld [vmem:[#allocation4 + $0x2d8] sm:$0xff]
      %v7801 = vld [vmem:[#allocation4 + $0x2e0] sm:$0xff]
      %v7802 = vld [vmem:[#allocation4 + $0x2e8] sm:$0xff]
      %v7803 = vld [vmem:[#allocation4 + $0x2f0] sm:$0xff]
      %v7804 = vld [vmem:[#allocation4 + $0x2f8] sm:$0xff]
      %v7805 = vld [vmem:[#allocation4 + $0x300] sm:$0xff]
      %v7806 = vld [vmem:[#allocation4 + $0x308] sm:$0xff]
      %v7807 = vld [vmem:[#allocation4 + $0x310] sm:$0xff]
      %v7808 = vld [vmem:[#allocation4 + $0x318] sm:$0xff]
      %v7809 = vld [vmem:[#allocation4 + $0x320] sm:$0xff]
      %v7810 = vld [vmem:[#allocation4 + $0x328] sm:$0xff]
      %v7811 = vld [vmem:[#allocation4 + $0x330] sm:$0xff]
      %v7812 = vld [vmem:[#allocation4 + $0x338] sm:$0xff]
      %v7813 = vld [vmem:[#allocation4 + $0x340] sm:$0xff]
      %v7814 = vld [vmem:[#allocation4 + $0x348] sm:$0xff]
      %v7815 = vld [vmem:[#allocation4 + $0x350] sm:$0xff]
      %v7816 = vld [vmem:[#allocation4 + $0x358] sm:$0xff]
      %v7817 = vld [vmem:[#allocation4 + $0x360] sm:$0xff]
      %v7818 = vld [vmem:[#allocation4 + $0x368] sm:$0xff]
      %v7819 = vld [vmem:[#allocation4 + $0x370] sm:$0xff]
      %v7820 = vld [vmem:[#allocation4 + $0x378] sm:$0xff]
      %v7821 = vld [vmem:[#allocation4 + $0x380] sm:$0xff]
      %v7822 = vld [vmem:[#allocation4 + $0x388] sm:$0xff]
      %v7823 = vld [vmem:[#allocation4 + $0x390] sm:$0xff]
      %v7824 = vld [vmem:[#allocation4 + $0x398] sm:$0xff]
      %v7825 = vld [vmem:[#allocation4 + $0x3a0] sm:$0xff]
      %v7826 = vld [vmem:[#allocation4 + $0x3a8] sm:$0xff]
      %v7827 = vld [vmem:[#allocation4 + $0x3b0] sm:$0xff]
      %v7828 = vld [vmem:[#allocation4 + $0x3b8] sm:$0xff]
      %v7829 = vld [vmem:[#allocation4 + $0x3c0] sm:$0xff]
      %v7830 = vld [vmem:[#allocation4 + $0x3c8] sm:$0xff]
      %v7831 = vld [vmem:[#allocation4 + $0x3d0] sm:$0xff]
      %v7832 = vld [vmem:[#allocation4 + $0x3d8] sm:$0xff]
      %v7833 = vld [vmem:[#allocation4 + $0x3e0] sm:$0xff]
      %v7834 = vld [vmem:[#allocation4 + $0x3e8] sm:$0xff]
      %v7835 = vld [vmem:[#allocation4 + $0x3f0] sm:$0xff]
      %v7836 = vld [vmem:[#allocation4 + $0x3f8] sm:$0xff]
      %v7837 = vld [vmem:[#allocation4 + $0x400] sm:$0xff]
      %v7838 = vld [vmem:[#allocation4 + $0x408] sm:$0xff]
      %v7839 = vld [vmem:[#allocation4 + $0x410] sm:$0xff]
      %v7840 = vld [vmem:[#allocation4 + $0x418] sm:$0xff]
      %v7841 = vld [vmem:[#allocation4 + $0x420] sm:$0xff]
      %v7842 = vld [vmem:[#allocation4 + $0x428] sm:$0xff]
      %v7843 = vld [vmem:[#allocation4 + $0x430] sm:$0xff]
      %v7844 = vld [vmem:[#allocation4 + $0x438] sm:$0xff]
      %v7845 = vld [vmem:[#allocation4 + $0x440] sm:$0xff]
      %v7846 = vld [vmem:[#allocation4 + $0x448] sm:$0xff]
      %v7847 = vld [vmem:[#allocation4 + $0x450] sm:$0xff]
      %v7848 = vld [vmem:[#allocation4 + $0x458] sm:$0xff]
      %v7849 = vld [vmem:[#allocation4 + $0x460] sm:$0xff]
      %v7850 = vld [vmem:[#allocation4 + $0x468] sm:$0xff]
      %v7851 = vld [vmem:[#allocation4 + $0x470] sm:$0xff]
      %v7852 = vld [vmem:[#allocation4 + $0x478] sm:$0xff]
      %v7853 = vld [vmem:[%s20] sm:$0xff]
      %v7854 = vld [vmem:[%s20 + $0x8] sm:$0xff]
      %7856 = vset.pattern.permute.xlu0 0
      %7857 = vperm.xlu0 %7856, %v7853
      %v7858 = vpop.permute.xlu0 %7857
      %7861 = vset.pattern.permute.xlu0 0
      %7862 = vperm.xlu0 %7861, %v7854
      %v7863 = vpop.permute.xlu0 %7862
      %v7866 = vsel %vm825, %v7706, 0
      %v7869 = vsel %vm825, %v7708, 0
      %7871 = vmatprep.subr.mxu0 %v7710
      %7872 = vmatpush1.msra.mxu0 %v7709
      %7873 = vmatprep.subr.mxu0 %v7718
      %7874 = vmatpush1.msra.mxu0 %v7717
      %7875 = vmatprep.subr.mxu0 %v7726
      %7876 = vmatpush1.msra.mxu0 %v7725
      %7877 = vmatprep.subr.mxu0 %v7734
      %7878 = vmatpush1.msra.mxu0 %v7733
      %7879 = vmatprep.subr.mxu0 %v7742
      %7880 = vmatpush1.msra.mxu0 %v7741
      %7881 = vmatprep.subr.mxu0 %v7750
      %7882 = vmatpush1.msra.mxu0 %v7749
      %7883 = vmatprep.subr.mxu0 %v7758
      %7884 = vmatpush1.msra.mxu0 %v7757
      %7885 = vmatprep.subr.mxu0 %v7766
      %7886 = vmatpush1.msra.mxu0 %v7765
      %7887 = vmatprep.subr.mxu0 %v7774
      %7888 = vmatpush1.msra.mxu0 %v7773
      %7889 = vmatprep.subr.mxu0 %v7782
      %7890 = vmatpush1.msra.mxu0 %v7781
      %7891 = vmatprep.subr.mxu0 %v7790
      %7892 = vmatpush1.msra.mxu0 %v7789
      %7893 = vmatprep.subr.mxu0 %v7798
      %7894 = vmatpush1.msra.mxu0 %v7797
      %7895 = vmatprep.subr.mxu0 %v7806
      %7896 = vmatpush1.msra.mxu0 %v7805
      %7897 = vmatprep.subr.mxu0 %v7814
      %7898 = vmatpush1.msra.mxu0 %v7813
      %7899 = vmatprep.subr.mxu0 %v7822
      %7900 = vmatpush1.msra.mxu0 %v7821
      %7901 = vmatprep.subr.mxu0 %v7830
      %7902 = vmatpush1.msra.mxu0 %v7829
      %7903 = vmatprep.subr.mxu0 %v7838
      %7904 = vmatpush1.msra.mxu0 %v7837
      %7905 = vmatprep.subr.mxu0 %v7846
      %7906 = vmatpush1.msra.mxu0 %v7845
      %7907 = vmatprep.subr.mxu0 0.0
      %7908 = vmatpush1.msra.mxu0 0.0
      %7909 = vmatprep.subr.mxu0 0.0
      %7910 = vmatpush1.msra.mxu0 0.0
      %7911 = vmatprep.subr.mxu0 0.0
      %7912 = vmatpush1.msra.mxu0 0.0
      %7913 = vmatprep.subr.mxu0 0.0
      %7914 = vmatpush1.msra.mxu0 0.0
      %7915 = vmatprep.subr.mxu0 0.0
      %7916 = vmatpush1.msra.mxu0 0.0
      %7917 = vmatprep.subr.mxu0 0.0
      %7918 = vmatpush1.msra.mxu0 0.0
      %7919 = vmatprep.subr.mxu0 0.0
      %7920 = vmatpush1.msra.mxu0 0.0
      %7921 = vmatprep.subr.mxu0 0.0
      %7922 = vmatpush1.msra.mxu0 0.0
      %7923 = vmatprep.subr.mxu0 0.0
      %7924 = vmatpush1.msra.mxu0 0.0
      %7925 = vmatprep.subr.mxu0 0.0
      %7926 = vmatpush1.msra.mxu0 0.0
      %7927 = vmatprep.subr.mxu0 0.0
      %7928 = vmatpush1.msra.mxu0 0.0
      %7929 = vmatprep.subr.mxu0 0.0
      %7930 = vmatpush1.msra.mxu0 0.0
      %7931 = vmatprep.subr.mxu0 0.0
      %7932 = vmatpush1.msra.mxu0 0.0
      %7933 = vmatprep.subr.mxu0 0.0
      %7934 = vmatpush1.msra.mxu0 0.0
      %7935 = vmatprep.mubr.f32.mxu0 %v7866
      %7936 = vmatmul.mubr.f32.gmra.mrb[0].mxu0 %v7705
      %v7937 = vpop.f32.mrb[0].mxu0
      %v7938 = vadd.f32 %v7858, %v7937
      %v7939 = vpop.f32.mrb[0].mxu0
      %v7940 = vadd.f32 %v7858, %v7939
      %7941 = vmatprep.mubr.f32.mxu0 %v7869
      %7942 = vmatmul.mubr.f32.gmra.mrb[0].mxu0 %v7707
      %v7943 = vpop.f32.mrb[0].mxu0
      %v7944 = vadd.f32 %v7863, %v7943
      %v7945 = vpop.f32.mrb[0].mxu0
      %v7946 = vadd.f32 %v7863, %v7945
      %7947 = vdwg.mxu0
      %7948 = vmatprep.subr.mxu0 %v7712
      %7949 = vmatpush1.msra.mxu0 %v7711
      %7950 = vmatprep.subr.mxu0 %v7720
      %7951 = vmatpush1.msra.mxu0 %v7719
      %7952 = vmatprep.subr.mxu0 %v7728
      %7953 = vmatpush1.msra.mxu0 %v7727
      %7954 = vmatprep.subr.mxu0 %v7736
      %7955 = vmatpush1.msra.mxu0 %v7735
      %7956 = vmatprep.subr.mxu0 %v7744
      %7957 = vmatpush1.msra.mxu0 %v7743
      %7958 = vmatprep.subr.mxu0 %v7752
      %7959 = vmatpush1.msra.mxu0 %v7751
      %7960 = vmatprep.subr.mxu0 %v7760
      %7961 = vmatpush1.msra.mxu0 %v7759
      %7962 = vmatprep.subr.mxu0 %v7768
      %7963 = vmatpush1.msra.mxu0 %v7767
      %7964 = vmatprep.subr.mxu0 %v7776
      %7965 = vmatpush1.msra.mxu0 %v7775
      %7966 = vmatprep.subr.mxu0 %v7784
      %7967 = vmatpush1.msra.mxu0 %v7783
      %7968 = vmatprep.subr.mxu0 %v7792
      %7969 = vmatpush1.msra.mxu0 %v7791
      %7970 = vmatprep.subr.mxu0 %v7800
      %7971 = vmatpush1.msra.mxu0 %v7799
      %7972 = vmatprep.subr.mxu0 %v7808
      %7973 = vmatpush1.msra.mxu0 %v7807
      %7974 = vmatprep.subr.mxu0 %v7816
      %7975 = vmatpush1.msra.mxu0 %v7815
      %7976 = vmatprep.subr.mxu0 %v7824
      %7977 = vmatpush1.msra.mxu0 %v7823
      %7978 = vmatprep.subr.mxu0 %v7832
      %7979 = vmatpush1.msra.mxu0 %v7831
      %7980 = vmatprep.subr.mxu0 %v7840
      %7981 = vmatpush1.msra.mxu0 %v7839
      %7982 = vmatprep.subr.mxu0 %v7848
      %7983 = vmatpush1.msra.mxu0 %v7847
      %7984 = vmatprep.subr.mxu0 0.0
      %7985 = vmatpush1.msra.mxu0 0.0
      %7986 = vmatprep.subr.mxu0 0.0
      %7987 = vmatpush1.msra.mxu0 0.0
      %7988 = vmatprep.subr.mxu0 0.0
      %7989 = vmatpush1.msra.mxu0 0.0
      %7990 = vmatprep.subr.mxu0 0.0
      %7991 = vmatpush1.msra.mxu0 0.0
      %7992 = vmatprep.subr.mxu0 0.0
      %7993 = vmatpush1.msra.mxu0 0.0
      %7994 = vmatprep.subr.mxu0 0.0
      %7995 = vmatpush1.msra.mxu0 0.0
      %7996 = vmatprep.subr.mxu0 0.0
      %7997 = vmatpush1.msra.mxu0 0.0
      %7998 = vmatprep.subr.mxu0 0.0
      %7999 = vmatpush1.msra.mxu0 0.0
      %8000 = vmatprep.subr.mxu0 0.0
      %8001 = vmatpush1.msra.mxu0 0.0
      %8002 = vmatprep.subr.mxu0 0.0
      %8003 = vmatpush1.msra.mxu0 0.0
      %8004 = vmatprep.subr.mxu0 0.0
      %8005 = vmatpush1.msra.mxu0 0.0
      %8006 = vmatprep.subr.mxu0 0.0
      %8007 = vmatpush1.msra.mxu0 0.0
      %8008 = vmatprep.subr.mxu0 0.0
      %8009 = vmatpush1.msra.mxu0 0.0
      %8010 = vmatprep.subr.mxu0 0.0
      %8011 = vmatpush1.msra.mxu0 0.0
      %8012 = vmatprep.mubr.f32.mxu0 %v7866
      %8013 = vmatmul.mubr.f32.gmra.mrb[0].mxu0 %v7705
      %v8014 = vpop.f32.mrb[0].mxu0
      %v8015 = vadd.f32 %v7858, %v8014
      %v8016 = vpop.f32.mrb[0].mxu0
      %v8017 = vadd.f32 %v7858, %v8016
      %8018 = vmatprep.mubr.f32.mxu0 %v7869
      %8019 = vmatmul.mubr.f32.gmra.mrb[0].mxu0 %v7707
      %v8020 = vpop.f32.mrb[0].mxu0
      %v8021 = vadd.f32 %v7863, %v8020
      %v8022 = vpop.f32.mrb[0].mxu0
      %v8023 = vadd.f32 %v7863, %v8022
      %8024 = vdwg.mxu0
      %8025 = vmatprep.subr.mxu0 %v7714
      %8026 = vmatpush1.msra.mxu0 %v7713
      %8027 = vmatprep.subr.mxu0 %v7722
      %8028 = vmatpush1.msra.mxu0 %v7721
      %8029 = vmatprep.subr.mxu0 %v7730
      %8030 = vmatpush1.msra.mxu0 %v7729
      %8031 = vmatprep.subr.mxu0 %v7738
      %8032 = vmatpush1.msra.mxu0 %v7737
      %8033 = vmatprep.subr.mxu0 %v7746
      %8034 = vmatpush1.msra.mxu0 %v7745
      %8035 = vmatprep.subr.mxu0 %v7754
      %8036 = vmatpush1.msra.mxu0 %v7753
      %8037 = vmatprep.subr.mxu0 %v7762
      %8038 = vmatpush1.msra.mxu0 %v7761
      %8039 = vmatprep.subr.mxu0 %v7770
      %8040 = vmatpush1.msra.mxu0 %v7769
      %8041 = vmatprep.subr.mxu0 %v7778
      %8042 = vmatpush1.msra.mxu0 %v7777
      %8043 = vmatprep.subr.mxu0 %v7786
      %8044 = vmatpush1.msra.mxu0 %v7785
      %8045 = vmatprep.subr.mxu0 %v7794
      %8046 = vmatpush1.msra.mxu0 %v7793
      %8047 = vmatprep.subr.mxu0 %v7802
      %8048 = vmatpush1.msra.mxu0 %v7801
      %8049 = vmatprep.subr.mxu0 %v7810
      %8050 = vmatpush1.msra.mxu0 %v7809
      %8051 = vmatprep.subr.mxu0 %v7818
      %8052 = vmatpush1.msra.mxu0 %v7817
      %8053 = vmatprep.subr.mxu0 %v7826
      %8054 = vmatpush1.msra.mxu0 %v7825
      %8055 = vmatprep.subr.mxu0 %v7834
      %8056 = vmatpush1.msra.mxu0 %v7833
      %8057 = vmatprep.subr.mxu0 %v7842
      %8058 = vmatpush1.msra.mxu0 %v7841
      %8059 = vmatprep.subr.mxu0 %v7850
      %8060 = vmatpush1.msra.mxu0 %v7849
      %8061 = vmatprep.subr.mxu0 0.0
      %8062 = vmatpush1.msra.mxu0 0.0
      %8063 = vmatprep.subr.mxu0 0.0
      %8064 = vmatpush1.msra.mxu0 0.0
      %8065 = vmatprep.subr.mxu0 0.0
      %8066 = vmatpush1.msra.mxu0 0.0
      %8067 = vmatprep.subr.mxu0 0.0
      %8068 = vmatpush1.msra.mxu0 0.0
      %8069 = vmatprep.subr.mxu0 0.0
      %8070 = vmatpush1.msra.mxu0 0.0
      %8071 = vmatprep.subr.mxu0 0.0
      %8072 = vmatpush1.msra.mxu0 0.0
      %8073 = vmatprep.subr.mxu0 0.0
      %8074 = vmatpush1.msra.mxu0 0.0
      %8075 = vmatprep.subr.mxu0 0.0
      %8076 = vmatpush1.msra.mxu0 0.0
      %8077 = vmatprep.subr.mxu0 0.0
      %8078 = vmatpush1.msra.mxu0 0.0
      %8079 = vmatprep.subr.mxu0 0.0
      %8080 = vmatpush1.msra.mxu0 0.0
      %8081 = vmatprep.subr.mxu0 0.0
      %8082 = vmatpush1.msra.mxu0 0.0
      %8083 = vmatprep.subr.mxu0 0.0
      %8084 = vmatpush1.msra.mxu0 0.0
      %8085 = vmatprep.subr.mxu0 0.0
      %8086 = vmatpush1.msra.mxu0 0.0
      %8087 = vmatprep.subr.mxu0 0.0
      %8088 = vmatpush1.msra.mxu0 0.0
      %8089 = vmatprep.mubr.f32.mxu0 %v7866
      %8090 = vmatmul.mubr.f32.gmra.mrb[0].mxu0 %v7705
      %v8091 = vpop.f32.mrb[0].mxu0
      %v8092 = vadd.f32 %v7858, %v8091
      %v8093 = vpop.f32.mrb[0].mxu0
      %v8094 = vadd.f32 %v7858, %v8093
      %8095 = vmatprep.mubr.f32.mxu0 %v7869
      %8096 = vmatmul.mubr.f32.gmra.mrb[0].mxu0 %v7707
      %v8097 = vpop.f32.mrb[0].mxu0
      %v8098 = vadd.f32 %v7863, %v8097
      %v8099 = vpop.f32.mrb[0].mxu0
      %v8100 = vadd.f32 %v7863, %v8099
      %8101 = vdwg.mxu0
      %8102 = vmatprep.subr.mxu0 %v7716
      %8103 = vmatpush1.msra.mxu0 %v7715
      %8104 = vmatprep.subr.mxu0 %v7724
      %8105 = vmatpush1.msra.mxu0 %v7723
      %8106 = vmatprep.subr.mxu0 %v7732
      %8107 = vmatpush1.msra.mxu0 %v7731
      %8108 = vmatprep.subr.mxu0 %v7740
      %8109 = vmatpush1.msra.mxu0 %v7739
      %8110 = vmatprep.subr.mxu0 %v7748
      %8111 = vmatpush1.msra.mxu0 %v7747
      %8112 = vmatprep.subr.mxu0 %v7756
      %8113 = vmatpush1.msra.mxu0 %v7755
      %8114 = vmatprep.subr.mxu0 %v7764
      %8115 = vmatpush1.msra.mxu0 %v7763
      %8116 = vmatprep.subr.mxu0 %v7772
      %8117 = vmatpush1.msra.mxu0 %v7771
      %8118 = vmatprep.subr.mxu0 %v7780
      %8119 = vmatpush1.msra.mxu0 %v7779
      %8120 = vmatprep.subr.mxu0 %v7788
      %8121 = vmatpush1.msra.mxu0 %v7787
      %8122 = vmatprep.subr.mxu0 %v7796
      %8123 = vmatpush1.msra.mxu0 %v7795
      %8124 = vmatprep.subr.mxu0 %v7804
      %8125 = vmatpush1.msra.mxu0 %v7803
      %8126 = vmatprep.subr.mxu0 %v7812
      %8127 = vmatpush1.msra.mxu0 %v7811
      %8128 = vmatprep.subr.mxu0 %v7820
      %8129 = vmatpush1.msra.mxu0 %v7819
      %8130 = vmatprep.subr.mxu0 %v7828
      %8131 = vmatpush1.msra.mxu0 %v7827
      %8132 = vmatprep.subr.mxu0 %v7836
      %8133 = vmatpush1.msra.mxu0 %v7835
      %8134 = vmatprep.subr.mxu0 %v7844
      %8135 = vmatpush1.msra.mxu0 %v7843
      %8136 = vmatprep.subr.mxu0 %v7852
      %8137 = vmatpush1.msra.mxu0 %v7851
      %8138 = vmatprep.subr.mxu0 0.0
      %8139 = vmatpush1.msra.mxu0 0.0
      %8140 = vmatprep.subr.mxu0 0.0
      %8141 = vmatpush1.msra.mxu0 0.0
      %8142 = vmatprep.subr.mxu0 0.0
      %8143 = vmatpush1.msra.mxu0 0.0
      %8144 = vmatprep.subr.mxu0 0.0
      %8145 = vmatpush1.msra.mxu0 0.0
      %8146 = vmatprep.subr.mxu0 0.0
      %8147 = vmatpush1.msra.mxu0 0.0
      %8148 = vmatprep.subr.mxu0 0.0
      %8149 = vmatpush1.msra.mxu0 0.0
      %8150 = vmatprep.subr.mxu0 0.0
      %8151 = vmatpush1.msra.mxu0 0.0
      %8152 = vmatprep.subr.mxu0 0.0
      %8153 = vmatpush1.msra.mxu0 0.0
      %8154 = vmatprep.subr.mxu0 0.0
      %8155 = vmatpush1.msra.mxu0 0.0
      %8156 = vmatprep.subr.mxu0 0.0
      %8157 = vmatpush1.msra.mxu0 0.0
      %8158 = vmatprep.subr.mxu0 0.0
      %8159 = vmatpush1.msra.mxu0 0.0
      %8160 = vmatprep.subr.mxu0 0.0
      %8161 = vmatpush1.msra.mxu0 0.0
      %8162 = vmatprep.subr.mxu0 0.0
      %8163 = vmatpush1.msra.mxu0 0.0
      %8164 = vmatprep.subr.mxu0 0.0
      %8165 = vmatpush1.msra.mxu0 0.0
      %8166 = vmatprep.mubr.f32.mxu0 %v7866
      %8167 = vmatmul.mubr.f32.gmra.mrb[0].mxu0 %v7705
      %v8168 = vpop.f32.mrb[0].mxu0
      %v8169 = vadd.f32 %v7858, %v8168
      %v8170 = vpop.f32.mrb[0].mxu0
      %v8171 = vadd.f32 %v7858, %v8170
      %8172 = vmatprep.mubr.f32.mxu0 %v7869
      %8173 = vmatmul.mubr.f32.gmra.mrb[0].mxu0 %v7707
      %v8174 = vpop.f32.mrb[0].mxu0
      %v8175 = vadd.f32 %v7863, %v8174
      %v8176 = vpop.f32.mrb[0].mxu0
      %v8177 = vadd.f32 %v7863, %v8176
      %8178 = vdwg.mxu0
      %v8179 = vld [vmem:[%s2] sm:$0xff]
      %v8180 = vld [vmem:[%s2 + $0x8] sm:$0xff]
      %v8181 = vld [vmem:[%s2 + $0x10] sm:$0xff]
      %v8182 = vld [vmem:[%s2 + $0x18] sm:$0xff]
      %v8183 = vld [vmem:[%s2 + $0x20] sm:$0xff]
      %v8184 = vld [vmem:[%s2 + $0x28] sm:$0xff]
      %v8185 = vld [vmem:[%s2 + $0x30] sm:$0xff]
      %v8186 = vld [vmem:[%s2 + $0x38] sm:$0xff]
      %v8187 = vld [vmem:[%s2 + $0x40] sm:$0xff]
      %v8188 = vld [vmem:[%s2 + $0x48] sm:$0xff]
      %v8189 = vld [vmem:[%s2 + $0x50] sm:$0xff]
      %v8190 = vld [vmem:[%s2 + $0x58] sm:$0xff]
      %v8191 = vld [vmem:[%s2 + $0x60] sm:$0xff]
      %v8192 = vld [vmem:[%s2 + $0x68] sm:$0xff]
      %v8193 = vld [vmem:[%s2 + $0x70] sm:$0xff]
      %v8194 = vld [vmem:[%s2 + $0x78] sm:$0xff]
      %v8195 = vld [vmem:[%s2 + $0x80] sm:$0xff]
      %v8196 = vld [vmem:[%s2 + $0x88] sm:$0xff]
      %v8197 = vld [vmem:[%s2 + $0x90] sm:$0xff]
      %v8198 = vld [vmem:[%s2 + $0x98] sm:$0xff]
      %v8199 = vld [vmem:[%s2 + $0xa0] sm:$0xff]
      %v8200 = vld [vmem:[%s2 + $0xa8] sm:$0xff]
      %v8201 = vld [vmem:[%s2 + $0xb0] sm:$0xff]
      %v8202 = vld [vmem:[%s2 + $0xb8] sm:$0xff]
      %v8203 = vld [vmem:[%s2 + $0xc0] sm:$0xff]
      %v8204 = vld [vmem:[%s2 + $0xc8] sm:$0xff]
      %v8205 = vld [vmem:[%s2 + $0xd0] sm:$0xff]
      %v8206 = vld [vmem:[%s2 + $0xd8] sm:$0xff]
      %v8207 = vld [vmem:[%s2 + $0xe0] sm:$0xff]
      %v8208 = vld [vmem:[%s2 + $0xe8] sm:$0xff]
      %v8209 = vld [vmem:[%s2 + $0xf0] sm:$0xff]
      %v8210 = vld [vmem:[%s2 + $0xf8] sm:$0xff]
      %v8211 = vld [vmem:[%s2 + $0x100] sm:$0xff]
      %v8212 = vld [vmem:[%s2 + $0x108] sm:$0xff]
      %v8213 = vld [vmem:[%s2 + $0x110] sm:$0xff]
      %v8214 = vld [vmem:[%s2 + $0x118] sm:$0xff]
      %v8215 = vld [vmem:[%s2 + $0x120] sm:$0xff]
      %v8216 = vld [vmem:[%s2 + $0x128] sm:$0xff]
      %v8217 = vld [vmem:[%s2 + $0x130] sm:$0xff]
      %v8218 = vld [vmem:[%s2 + $0x138] sm:$0xff]
      %v8219 = vld [vmem:[%s2 + $0x140] sm:$0xff]
      %v8220 = vld [vmem:[%s2 + $0x148] sm:$0xff]
      %v8221 = vld [vmem:[%s2 + $0x150] sm:$0xff]
      %v8222 = vld [vmem:[%s2 + $0x158] sm:$0xff]
      %v8223 = vld [vmem:[%s2 + $0x160] sm:$0xff]
      %v8224 = vld [vmem:[%s2 + $0x168] sm:$0xff]
      %v8225 = vld [vmem:[%s2 + $0x170] sm:$0xff]
      %v8226 = vld [vmem:[%s2 + $0x178] sm:$0xff]
      %v8227 = vld [vmem:[%s2 + $0x180] sm:$0xff]
      %v8228 = vld [vmem:[%s2 + $0x188] sm:$0xff]
      %v8229 = vld [vmem:[%s2 + $0x190] sm:$0xff]
      %v8230 = vld [vmem:[%s2 + $0x198] sm:$0xff]
      %v8231 = vld [vmem:[%s2 + $0x1a0] sm:$0xff]
      %v8232 = vld [vmem:[%s2 + $0x1a8] sm:$0xff]
      %v8233 = vld [vmem:[%s2 + $0x1b0] sm:$0xff]
      %v8234 = vld [vmem:[%s2 + $0x1b8] sm:$0xff]
      %v8235 = vld [vmem:[%s2 + $0x1c0] sm:$0xff]
      %v8236 = vld [vmem:[%s2 + $0x1c8] sm:$0xff]
      %v8237 = vld [vmem:[%s2 + $0x1d0] sm:$0xff]
      %v8238 = vld [vmem:[%s2 + $0x1d8] sm:$0xff]
      %v8239 = vld [vmem:[%s2 + $0x1e0] sm:$0xff]
      %v8240 = vld [vmem:[%s2 + $0x1e8] sm:$0xff]
      %v8241 = vld [vmem:[%s2 + $0x1f0] sm:$0xff]
      %v8242 = vld [vmem:[%s2 + $0x1f8] sm:$0xff]
      %v8243 = vld [vmem:[%s2 + $0x200] sm:$0xff]
      %v8244 = vld [vmem:[%s2 + $0x208] sm:$0xff]
      %v8245 = vld [vmem:[%s2 + $0x210] sm:$0xff]
      %v8246 = vld [vmem:[%s2 + $0x218] sm:$0xff]
      %v8247 = vld [vmem:[%s2 + $0x220] sm:$0xff]
      %v8248 = vld [vmem:[%s2 + $0x228] sm:$0xff]
      %v8249 = vld [vmem:[%s2 + $0x230] sm:$0xff]
      %v8250 = vld [vmem:[%s2 + $0x238] sm:$0xff]
      %v8251 = vld [vmem:[%s2 + $0x240] sm:$0xff]
      %v8252 = vld [vmem:[%s2 + $0x248] sm:$0xff]
      %v8253 = vld [vmem:[%s2 + $0x250] sm:$0xff]
      %v8254 = vld [vmem:[%s2 + $0x258] sm:$0xff]
      %v8255 = vld [vmem:[%s2 + $0x260] sm:$0xff]
      %v8256 = vld [vmem:[%s2 + $0x268] sm:$0xff]
      %v8257 = vld [vmem:[%s2 + $0x270] sm:$0xff]
      %v8258 = vld [vmem:[%s2 + $0x278] sm:$0xff]
      %v8259 = vld [vmem:[%s2 + $0x280] sm:$0xff]
      %v8260 = vld [vmem:[%s2 + $0x288] sm:$0xff]
      %v8261 = vld [vmem:[%s2 + $0x290] sm:$0xff]
      %v8262 = vld [vmem:[%s2 + $0x298] sm:$0xff]
      %v8263 = vld [vmem:[%s2 + $0x2a0] sm:$0xff]
      %v8264 = vld [vmem:[%s2 + $0x2a8] sm:$0xff]
      %v8265 = vld [vmem:[%s2 + $0x2b0] sm:$0xff]
      %v8266 = vld [vmem:[%s2 + $0x2b8] sm:$0xff]
      %v8267 = vld [vmem:[%s2 + $0x2c0] sm:$0xff]
      %v8268 = vld [vmem:[%s2 + $0x2c8] sm:$0xff]
      %v8269 = vld [vmem:[%s2 + $0x2d0] sm:$0xff]
      %v8270 = vld [vmem:[%s2 + $0x2d8] sm:$0xff]
      %v8271 = vld [vmem:[%s2 + $0x2e0] sm:$0xff]
      %v8272 = vld [vmem:[%s2 + $0x2e8] sm:$0xff]
      %v8273 = vld [vmem:[%s2 + $0x2f0] sm:$0xff]
      %v8274 = vld [vmem:[%s2 + $0x2f8] sm:$0xff]
      %v8275 = vld [vmem:[%s2 + $0x300] sm:$0xff]
      %v8276 = vld [vmem:[%s2 + $0x308] sm:$0xff]
      %v8277 = vld [vmem:[%s2 + $0x310] sm:$0xff]
      %v8278 = vld [vmem:[%s2 + $0x318] sm:$0xff]
      %v8279 = vld [vmem:[%s2 + $0x320] sm:$0xff]
      %v8280 = vld [vmem:[%s2 + $0x328] sm:$0xff]
      %v8281 = vld [vmem:[%s2 + $0x330] sm:$0xff]
      %v8282 = vld [vmem:[%s2 + $0x338] sm:$0xff]
      %v8283 = vld [vmem:[%s2 + $0x340] sm:$0xff]
      %v8284 = vld [vmem:[%s2 + $0x348] sm:$0xff]
      %v8285 = vld [vmem:[%s2 + $0x350] sm:$0xff]
      %v8286 = vld [vmem:[%s2 + $0x358] sm:$0xff]
      %v8287 = vld [vmem:[%s2 + $0x360] sm:$0xff]
      %v8288 = vld [vmem:[%s2 + $0x368] sm:$0xff]
      %v8289 = vld [vmem:[%s2 + $0x370] sm:$0xff]
      %v8290 = vld [vmem:[%s2 + $0x378] sm:$0xff]
      %v8291 = vld [vmem:[%s2 + $0x380] sm:$0xff]
      %v8292 = vld [vmem:[%s2 + $0x388] sm:$0xff]
      %v8293 = vld [vmem:[%s2 + $0x390] sm:$0xff]
      %v8294 = vld [vmem:[%s2 + $0x398] sm:$0xff]
      %v8295 = vld [vmem:[%s2 + $0x3a0] sm:$0xff]
      %v8296 = vld [vmem:[%s2 + $0x3a8] sm:$0xff]
      %v8297 = vld [vmem:[%s2 + $0x3b0] sm:$0xff]
      %v8298 = vld [vmem:[%s2 + $0x3b8] sm:$0xff]
      %v8299 = vld [vmem:[%s2 + $0x3c0] sm:$0xff]
      %v8300 = vld [vmem:[%s2 + $0x3c8] sm:$0xff]
      %v8301 = vld [vmem:[%s2 + $0x3d0] sm:$0xff]
      %v8302 = vld [vmem:[%s2 + $0x3d8] sm:$0xff]
      %v8303 = vld [vmem:[%s2 + $0x3e0] sm:$0xff]
      %v8304 = vld [vmem:[%s2 + $0x3e8] sm:$0xff]
      %v8305 = vld [vmem:[%s2 + $0x3f0] sm:$0xff]
      %v8306 = vld [vmem:[%s2 + $0x3f8] sm:$0xff]
      %v8307 = vld [vmem:[%s2 + $0x400] sm:$0xff]
      %v8308 = vld [vmem:[%s2 + $0x408] sm:$0xff]
      %v8309 = vld [vmem:[%s2 + $0x410] sm:$0xff]
      %v8310 = vld [vmem:[%s2 + $0x418] sm:$0xff]
      %v8311 = vld [vmem:[%s2 + $0x420] sm:$0xff]
      %v8312 = vld [vmem:[%s2 + $0x428] sm:$0xff]
      %v8313 = vld [vmem:[%s2 + $0x430] sm:$0xff]
      %v8314 = vld [vmem:[%s2 + $0x438] sm:$0xff]
      %v8315 = vld [vmem:[%s2 + $0x440] sm:$0xff]
      %v8316 = vld [vmem:[%s2 + $0x448] sm:$0xff]
      %v8317 = vld [vmem:[%s2 + $0x450] sm:$0xff]
      %v8318 = vld [vmem:[%s2 + $0x458] sm:$0xff]
      %v8319 = vld [vmem:[%s2 + $0x460] sm:$0xff]
      %v8320 = vld [vmem:[%s2 + $0x468] sm:$0xff]
      %v8321 = vld [vmem:[%s2 + $0x470] sm:$0xff]
      %v8322 = vld [vmem:[%s2 + $0x478] sm:$0xff]
      %v8323 = vld [vmem:[%s2 + $0x480] sm:$0xff]
      %v8324 = vld [vmem:[%s2 + $0x488] sm:$0xff]
      %v8325 = vld [vmem:[%s2 + $0x490] sm:$0xff]
      %v8326 = vld [vmem:[%s2 + $0x498] sm:$0xff]
      %v8327 = vld [vmem:[%s2 + $0x4a0] sm:$0xff]
      %v8328 = vld [vmem:[%s2 + $0x4a8] sm:$0xff]
      %v8329 = vld [vmem:[%s2 + $0x4b0] sm:$0xff]
      %v8330 = vld [vmem:[%s2 + $0x4b8] sm:$0xff]
      %v8331 = vld [vmem:[%s2 + $0x4c0] sm:$0xff]
      %v8332 = vld [vmem:[%s2 + $0x4c8] sm:$0xff]
      %v8333 = vld [vmem:[%s2 + $0x4d0] sm:$0xff]
      %v8334 = vld [vmem:[%s2 + $0x4d8] sm:$0xff]
      %v8335 = vld [vmem:[%s2 + $0x4e0] sm:$0xff]
      %v8336 = vld [vmem:[%s2 + $0x4e8] sm:$0xff]
      %v8337 = vld [vmem:[%s2 + $0x4f0] sm:$0xff]
      %v8338 = vld [vmem:[%s2 + $0x4f8] sm:$0xff]
      %v8339 = vld [vmem:[%s2 + $0x500] sm:$0xff]
      %v8340 = vld [vmem:[%s2 + $0x508] sm:$0xff]
      %v8341 = vld [vmem:[%s2 + $0x510] sm:$0xff]
      %v8342 = vld [vmem:[%s2 + $0x518] sm:$0xff]
      %v8343 = vld [vmem:[%s2 + $0x520] sm:$0xff]
      %v8344 = vld [vmem:[%s2 + $0x528] sm:$0xff]
      %v8345 = vld [vmem:[%s2 + $0x530] sm:$0xff]
      %v8346 = vld [vmem:[%s2 + $0x538] sm:$0xff]
      %v8347 = vld [vmem:[%s2 + $0x540] sm:$0xff]
      %v8348 = vld [vmem:[%s2 + $0x548] sm:$0xff]
      %v8349 = vld [vmem:[%s2 + $0x550] sm:$0xff]
      %v8350 = vld [vmem:[%s2 + $0x558] sm:$0xff]
      %v8351 = vld [vmem:[%s2 + $0x560] sm:$0xff]
      %v8352 = vld [vmem:[%s2 + $0x568] sm:$0xff]
      %v8353 = vld [vmem:[%s2 + $0x570] sm:$0xff]
      %v8354 = vld [vmem:[%s2 + $0x578] sm:$0xff]
      %v8355 = vld [vmem:[%s2 + $0x580] sm:$0xff]
      %v8356 = vld [vmem:[%s2 + $0x588] sm:$0xff]
      %v8357 = vld [vmem:[%s2 + $0x590] sm:$0xff]
      %v8358 = vld [vmem:[%s2 + $0x598] sm:$0xff]
      %v8359 = vld [vmem:[%s2 + $0x5a0] sm:$0xff]
      %v8360 = vld [vmem:[%s2 + $0x5a8] sm:$0xff]
      %v8361 = vld [vmem:[%s2 + $0x5b0] sm:$0xff]
      %v8362 = vld [vmem:[%s2 + $0x5b8] sm:$0xff]
      %v8363 = vld [vmem:[%s2 + $0x5c0] sm:$0xff]
      %v8364 = vld [vmem:[%s2 + $0x5c8] sm:$0xff]
      %v8365 = vld [vmem:[%s2 + $0x5d0] sm:$0xff]
      %v8366 = vld [vmem:[%s2 + $0x5d8] sm:$0xff]
      %v8367 = vld [vmem:[%s2 + $0x5e0] sm:$0xff]
      %v8368 = vld [vmem:[%s2 + $0x5e8] sm:$0xff]
      %v8369 = vld [vmem:[%s2 + $0x5f0] sm:$0xff]
      %v8370 = vld [vmem:[%s2 + $0x5f8] sm:$0xff]
      %v8371 = vld [vmem:[%s2 + $0x600] sm:$0xff]
      %v8372 = vld [vmem:[%s2 + $0x608] sm:$0xff]
      %v8373 = vld [vmem:[%s2 + $0x610] sm:$0xff]
      %v8374 = vld [vmem:[%s2 + $0x618] sm:$0xff]
      %v8375 = vld [vmem:[%s2 + $0x620] sm:$0xff]
      %v8376 = vld [vmem:[%s2 + $0x628] sm:$0xff]
      %v8377 = vld [vmem:[%s2 + $0x630] sm:$0xff]
      %v8378 = vld [vmem:[%s2 + $0x638] sm:$0xff]
      %v8379 = vld [vmem:[%s2 + $0x640] sm:$0xff]
      %v8380 = vld [vmem:[%s2 + $0x648] sm:$0xff]
      %v8381 = vld [vmem:[%s2 + $0x650] sm:$0xff]
      %v8382 = vld [vmem:[%s2 + $0x658] sm:$0xff]
      %v8383 = vld [vmem:[%s2 + $0x660] sm:$0xff]
      %v8384 = vld [vmem:[%s2 + $0x668] sm:$0xff]
      %v8385 = vld [vmem:[%s2 + $0x670] sm:$0xff]
      %v8386 = vld [vmem:[%s2 + $0x678] sm:$0xff]
      %v8387 = vld [vmem:[%s2 + $0x680] sm:$0xff]
      %v8388 = vld [vmem:[%s2 + $0x688] sm:$0xff]
      %v8389 = vld [vmem:[%s2 + $0x690] sm:$0xff]
      %v8390 = vld [vmem:[%s2 + $0x698] sm:$0xff]
      %v8391 = vld [vmem:[%s2 + $0x6a0] sm:$0xff]
      %v8392 = vld [vmem:[%s2 + $0x6a8] sm:$0xff]
      %v8393 = vld [vmem:[%s2 + $0x6b0] sm:$0xff]
      %v8394 = vld [vmem:[%s2 + $0x6b8] sm:$0xff]
      %v8395 = vld [vmem:[%s2 + $0x6c0] sm:$0xff]
      %v8396 = vld [vmem:[%s2 + $0x6c8] sm:$0xff]
      %v8397 = vld [vmem:[%s2 + $0x6d0] sm:$0xff]
      %v8398 = vld [vmem:[%s2 + $0x6d8] sm:$0xff]
      %v8399 = vld [vmem:[%s2 + $0x6e0] sm:$0xff]
      %v8400 = vld [vmem:[%s2 + $0x6e8] sm:$0xff]
      %v8401 = vld [vmem:[%s2 + $0x6f0] sm:$0xff]
      %v8402 = vld [vmem:[%s2 + $0x6f8] sm:$0xff]
      %v8403 = vld [vmem:[%s2 + $0x700] sm:$0xff]
      %v8404 = vld [vmem:[%s2 + $0x708] sm:$0xff]
      %v8405 = vld [vmem:[%s2 + $0x710] sm:$0xff]
      %v8406 = vld [vmem:[%s2 + $0x718] sm:$0xff]
      %v8407 = vld [vmem:[%s2 + $0x720] sm:$0xff]
      %v8408 = vld [vmem:[%s2 + $0x728] sm:$0xff]
      %v8409 = vld [vmem:[%s2 + $0x730] sm:$0xff]
      %v8410 = vld [vmem:[%s2 + $0x738] sm:$0xff]
      %v8411 = vld [vmem:[%s2 + $0x740] sm:$0xff]
      %v8412 = vld [vmem:[%s2 + $0x748] sm:$0xff]
      %v8413 = vld [vmem:[%s2 + $0x750] sm:$0xff]
      %v8414 = vld [vmem:[%s2 + $0x758] sm:$0xff]
      %v8415 = vld [vmem:[%s2 + $0x760] sm:$0xff]
      %v8416 = vld [vmem:[%s2 + $0x768] sm:$0xff]
      %v8417 = vld [vmem:[%s2 + $0x770] sm:$0xff]
      %v8418 = vld [vmem:[%s2 + $0x778] sm:$0xff]
      %v8419 = vld [vmem:[%s2 + $0x780] sm:$0xff]
      %v8420 = vld [vmem:[%s2 + $0x788] sm:$0xff]
      %v8421 = vld [vmem:[%s2 + $0x790] sm:$0xff]
      %v8422 = vld [vmem:[%s2 + $0x798] sm:$0xff]
      %v8423 = vld [vmem:[%s2 + $0x7a0] sm:$0xff]
      %v8424 = vld [vmem:[%s2 + $0x7a8] sm:$0xff]
      %v8425 = vld [vmem:[%s2 + $0x7b0] sm:$0xff]
      %v8426 = vld [vmem:[%s2 + $0x7b8] sm:$0xff]
      %v8427 = vld [vmem:[%s2 + $0x7c0] sm:$0xff]
      %v8428 = vld [vmem:[%s2 + $0x7c8] sm:$0xff]
      %v8429 = vld [vmem:[%s2 + $0x7d0] sm:$0xff]
      %v8430 = vld [vmem:[%s2 + $0x7d8] sm:$0xff]
      %v8431 = vld [vmem:[%s2 + $0x7e0] sm:$0xff]
      %v8432 = vld [vmem:[%s2 + $0x7e8] sm:$0xff]
      %v8433 = vld [vmem:[%s2 + $0x7f0] sm:$0xff]
      %v8434 = vld [vmem:[%s2 + $0x7f8] sm:$0xff]
      %8435 = vmatprep.subr.mxu0 %v8180
      %8436 = vmatpush1.msra.mxu0 %v8179
      %8437 = vmatprep.subr.mxu0 %v8188
      %8438 = vmatpush1.msra.mxu0 %v8187
      %8439 = vmatprep.subr.mxu0 %v8196
      %8440 = vmatpush1.msra.mxu0 %v8195
      %8441 = vmatprep.subr.mxu0 %v8204
      %8442 = vmatpush1.msra.mxu0 %v8203
      %8443 = vmatprep.subr.mxu0 %v8212
      %8444 = vmatpush1.msra.mxu0 %v8211
      %8445 = vmatprep.subr.mxu0 %v8220
      %8446 = vmatpush1.msra.mxu0 %v8219
      %8447 = vmatprep.subr.mxu0 %v8228
      %8448 = vmatpush1.msra.mxu0 %v8227
      %8449 = vmatprep.subr.mxu0 %v8236
      %8450 = vmatpush1.msra.mxu0 %v8235
      %8451 = vmatprep.subr.mxu0 %v8244
      %8452 = vmatpush1.msra.mxu0 %v8243
      %8453 = vmatprep.subr.mxu0 %v8252
      %8454 = vmatpush1.msra.mxu0 %v8251
      %8455 = vmatprep.subr.mxu0 %v8260
      %8456 = vmatpush1.msra.mxu0 %v8259
      %8457 = vmatprep.subr.mxu0 %v8268
      %8458 = vmatpush1.msra.mxu0 %v8267
      %8459 = vmatprep.subr.mxu0 %v8276
      %8460 = vmatpush1.msra.mxu0 %v8275
      %8461 = vmatprep.subr.mxu0 %v8284
      %8462 = vmatpush1.msra.mxu0 %v8283
      %8463 = vmatprep.subr.mxu0 %v8292
      %8464 = vmatpush1.msra.mxu0 %v8291
      %8465 = vmatprep.subr.mxu0 %v8300
      %8466 = vmatpush1.msra.mxu0 %v8299
      %8467 = vmatprep.subr.mxu0 %v8308
      %8468 = vmatpush1.msra.mxu0 %v8307
      %8469 = vmatprep.subr.mxu0 %v8316
      %8470 = vmatpush1.msra.mxu0 %v8315
      %8471 = vmatprep.subr.mxu0 %v8324
      %8472 = vmatpush1.msra.mxu0 %v8323
      %8473 = vmatprep.subr.mxu0 %v8332
      %8474 = vmatpush1.msra.mxu0 %v8331
      %8475 = vmatprep.subr.mxu0 %v8340
      %8476 = vmatpush1.msra.mxu0 %v8339
      %8477 = vmatprep.subr.mxu0 %v8348
      %8478 = vmatpush1.msra.mxu0 %v8347
      %8479 = vmatprep.subr.mxu0 %v8356
      %8480 = vmatpush1.msra.mxu0 %v8355
      %8481 = vmatprep.subr.mxu0 %v8364
      %8482 = vmatpush1.msra.mxu0 %v8363
      %8483 = vmatprep.subr.mxu0 %v8372
      %8484 = vmatpush1.msra.mxu0 %v8371
      %8485 = vmatprep.subr.mxu0 %v8380
      %8486 = vmatpush1.msra.mxu0 %v8379
      %8487 = vmatprep.subr.mxu0 %v8388
      %8488 = vmatpush1.msra.mxu0 %v8387
      %8489 = vmatprep.subr.mxu0 %v8396
      %8490 = vmatpush1.msra.mxu0 %v8395
      %8491 = vmatprep.subr.mxu0 %v8404
      %8492 = vmatpush1.msra.mxu0 %v8403
      %8493 = vmatprep.subr.mxu0 %v8412
      %8494 = vmatpush1.msra.mxu0 %v8411
      %8495 = vmatprep.subr.mxu0 %v8420
      %8496 = vmatpush1.msra.mxu0 %v8419
      %8497 = vmatprep.subr.mxu0 %v8428
      %8498 = vmatpush1.msra.mxu0 %v8427
      %8499 = vmatprep.mubr.f32.mxu0 %v3022
      %8500 = vmatmul.mubr.f32.gmra.mrb[0].mxu0 %v3021
      %v8501 = vpop.f32.mrb[0].mxu0
      %v8502 = vadd.f32 0.0, %v8501
      %v8503 = vpop.f32.mrb[0].mxu0
      %v8504 = vadd.f32 0.0, %v8503
      %8505 = vmatprep.mubr.f32.mxu0 %v3024
      %8506 = vmatmul.mubr.f32.gmra.mrb[0].mxu0 %v3023
      %v8507 = vpop.f32.mrb[0].mxu0
      %v8508 = vadd.f32 0.0, %v8507
      %v8509 = vpop.f32.mrb[0].mxu0
      %v8510 = vadd.f32 0.0, %v8509
      %8511 = vdwg.mxu0
      %8512 = vmatprep.subr.mxu0 %v8182
      %8513 = vmatpush1.msra.mxu0 %v8181
      %8514 = vmatprep.subr.mxu0 %v8190
      %8515 = vmatpush1.msra.mxu0 %v8189
      %8516 = vmatprep.subr.mxu0 %v8198
      %8517 = vmatpush1.msra.mxu0 %v8197
      %8518 = vmatprep.subr.mxu0 %v8206
      %8519 = vmatpush1.msra.mxu0 %v8205
      %8520 = vmatprep.subr.mxu0 %v8214
      %8521 = vmatpush1.msra.mxu0 %v8213
      %8522 = vmatprep.subr.mxu0 %v8222
      %8523 = vmatpush1.msra.mxu0 %v8221
      %8524 = vmatprep.subr.mxu0 %v8230
      %8525 = vmatpush1.msra.mxu0 %v8229
      %8526 = vmatprep.subr.mxu0 %v8238
      %8527 = vmatpush1.msra.mxu0 %v8237
      %8528 = vmatprep.subr.mxu0 %v8246
      %8529 = vmatpush1.msra.mxu0 %v8245
      %8530 = vmatprep.subr.mxu0 %v8254
      %8531 = vmatpush1.msra.mxu0 %v8253
      %8532 = vmatprep.subr.mxu0 %v8262
      %8533 = vmatpush1.msra.mxu0 %v8261
      %8534 = vmatprep.subr.mxu0 %v8270
      %8535 = vmatpush1.msra.mxu0 %v8269
      %8536 = vmatprep.subr.mxu0 %v8278
      %8537 = vmatpush1.msra.mxu0 %v8277
      %8538 = vmatprep.subr.mxu0 %v8286
      %8539 = vmatpush1.msra.mxu0 %v8285
      %8540 = vmatprep.subr.mxu0 %v8294
      %8541 = vmatpush1.msra.mxu0 %v8293
      %8542 = vmatprep.subr.mxu0 %v8302
      %8543 = vmatpush1.msra.mxu0 %v8301
      %8544 = vmatprep.subr.mxu0 %v8310
      %8545 = vmatpush1.msra.mxu0 %v8309
      %8546 = vmatprep.subr.mxu0 %v8318
      %8547 = vmatpush1.msra.mxu0 %v8317
      %8548 = vmatprep.subr.mxu0 %v8326
      %8549 = vmatpush1.msra.mxu0 %v8325
      %8550 = vmatprep.subr.mxu0 %v8334
      %8551 = vmatpush1.msra.mxu0 %v8333
      %8552 = vmatprep.subr.mxu0 %v8342
      %8553 = vmatpush1.msra.mxu0 %v8341
      %8554 = vmatprep.subr.mxu0 %v8350
      %8555 = vmatpush1.msra.mxu0 %v8349
      %8556 = vmatprep.subr.mxu0 %v8358
      %8557 = vmatpush1.msra.mxu0 %v8357
      %8558 = vmatprep.subr.mxu0 %v8366
      %8559 = vmatpush1.msra.mxu0 %v8365
      %8560 = vmatprep.subr.mxu0 %v8374
      %8561 = vmatpush1.msra.mxu0 %v8373
      %8562 = vmatprep.subr.mxu0 %v8382
      %8563 = vmatpush1.msra.mxu0 %v8381
      %8564 = vmatprep.subr.mxu0 %v8390
      %8565 = vmatpush1.msra.mxu0 %v8389
      %8566 = vmatprep.subr.mxu0 %v8398
      %8567 = vmatpush1.msra.mxu0 %v8397
      %8568 = vmatprep.subr.mxu0 %v8406
      %8569 = vmatpush1.msra.mxu0 %v8405
      %8570 = vmatprep.subr.mxu0 %v8414
      %8571 = vmatpush1.msra.mxu0 %v8413
      %8572 = vmatprep.subr.mxu0 %v8422
      %8573 = vmatpush1.msra.mxu0 %v8421
      %8574 = vmatprep.subr.mxu0 %v8430
      %8575 = vmatpush1.msra.mxu0 %v8429
      %8576 = vmatprep.mubr.f32.mxu0 %v3022
      %8577 = vmatmul.mubr.f32.gmra.mrb[0].mxu0 %v3021
      %v8578 = vpop.f32.mrb[0].mxu0
      %v8579 = vadd.f32 0.0, %v8578
      %v8580 = vpop.f32.mrb[0].mxu0
      %v8581 = vadd.f32 0.0, %v8580
      %8582 = vmatprep.mubr.f32.mxu0 %v3024
      %8583 = vmatmul.mubr.f32.gmra.mrb[0].mxu0 %v3023
      %v8584 = vpop.f32.mrb[0].mxu0
      %v8585 = vadd.f32 0.0, %v8584
      %v8586 = vpop.f32.mrb[0].mxu0
      %v8587 = vadd.f32 0.0, %v8586
      %8588 = vdwg.mxu0
      %8589 = vmatprep.subr.mxu0 %v8184
      %8590 = vmatpush1.msra.mxu0 %v8183
      %8591 = vmatprep.subr.mxu0 %v8192
      %8592 = vmatpush1.msra.mxu0 %v8191
      %8593 = vmatprep.subr.mxu0 %v8200
      %8594 = vmatpush1.msra.mxu0 %v8199
      %8595 = vmatprep.subr.mxu0 %v8208
      %8596 = vmatpush1.msra.mxu0 %v8207
      %8597 = vmatprep.subr.mxu0 %v8216
      %8598 = vmatpush1.msra.mxu0 %v8215
      %8599 = vmatprep.subr.mxu0 %v8224
      %8600 = vmatpush1.msra.mxu0 %v8223
      %8601 = vmatprep.subr.mxu0 %v8232
      %8602 = vmatpush1.msra.mxu0 %v8231
      %8603 = vmatprep.subr.mxu0 %v8240
      %8604 = vmatpush1.msra.mxu0 %v8239
      %8605 = vmatprep.subr.mxu0 %v8248
      %8606 = vmatpush1.msra.mxu0 %v8247
      %8607 = vmatprep.subr.mxu0 %v8256
      %8608 = vmatpush1.msra.mxu0 %v8255
      %8609 = vmatprep.subr.mxu0 %v8264
      %8610 = vmatpush1.msra.mxu0 %v8263
      %8611 = vmatprep.subr.mxu0 %v8272
      %8612 = vmatpush1.msra.mxu0 %v8271
      %8613 = vmatprep.subr.mxu0 %v8280
      %8614 = vmatpush1.msra.mxu0 %v8279
      %8615 = vmatprep.subr.mxu0 %v8288
      %8616 = vmatpush1.msra.mxu0 %v8287
      %8617 = vmatprep.subr.mxu0 %v8296
      %8618 = vmatpush1.msra.mxu0 %v8295
      %8619 = vmatprep.subr.mxu0 %v8304
      %8620 = vmatpush1.msra.mxu0 %v8303
      %8621 = vmatprep.subr.mxu0 %v8312
      %8622 = vmatpush1.msra.mxu0 %v8311
      %8623 = vmatprep.subr.mxu0 %v8320
      %8624 = vmatpush1.msra.mxu0 %v8319
      %8625 = vmatprep.subr.mxu0 %v8328
      %8626 = vmatpush1.msra.mxu0 %v8327
      %8627 = vmatprep.subr.mxu0 %v8336
      %8628 = vmatpush1.msra.mxu0 %v8335
      %8629 = vmatprep.subr.mxu0 %v8344
      %8630 = vmatpush1.msra.mxu0 %v8343
      %8631 = vmatprep.subr.mxu0 %v8352
      %8632 = vmatpush1.msra.mxu0 %v8351
      %8633 = vmatprep.subr.mxu0 %v8360
      %8634 = vmatpush1.msra.mxu0 %v8359
      %8635 = vmatprep.subr.mxu0 %v8368
      %8636 = vmatpush1.msra.mxu0 %v8367
      %8637 = vmatprep.subr.mxu0 %v8376
      %8638 = vmatpush1.msra.mxu0 %v8375
      %8639 = vmatprep.subr.mxu0 %v8384
      %8640 = vmatpush1.msra.mxu0 %v8383
      %8641 = vmatprep.subr.mxu0 %v8392
      %8642 = vmatpush1.msra.mxu0 %v8391
      %8643 = vmatprep.subr.mxu0 %v8400
      %8644 = vmatpush1.msra.mxu0 %v8399
      %8645 = vmatprep.subr.mxu0 %v8408
      %8646 = vmatpush1.msra.mxu0 %v8407
      %8647 = vmatprep.subr.mxu0 %v8416
      %8648 = vmatpush1.msra.mxu0 %v8415
      %8649 = vmatprep.subr.mxu0 %v8424
      %8650 = vmatpush1.msra.mxu0 %v8423
      %8651 = vmatprep.subr.mxu0 %v8432
      %8652 = vmatpush1.msra.mxu0 %v8431
      %8653 = vmatprep.mubr.f32.mxu0 %v3022
      %8654 = vmatmul.mubr.f32.gmra.mrb[0].mxu0 %v3021
      %v8655 = vpop.f32.mrb[0].mxu0
      %v8656 = vadd.f32 0.0, %v8655
      %v8657 = vpop.f32.mrb[0].mxu0
      %v8658 = vadd.f32 0.0, %v8657
      %8659 = vmatprep.mubr.f32.mxu0 %v3024
      %8660 = vmatmul.mubr.f32.gmra.mrb[0].mxu0 %v3023
      %v8661 = vpop.f32.mrb[0].mxu0
      %v8662 = vadd.f32 0.0, %v8661
      %v8663 = vpop.f32.mrb[0].mxu0
      %v8664 = vadd.f32 0.0, %v8663
      %8665 = vdwg.mxu0
      %8666 = vmatprep.subr.mxu0 %v8186
      %8667 = vmatpush1.msra.mxu0 %v8185
      %8668 = vmatprep.subr.mxu0 %v8194
      %8669 = vmatpush1.msra.mxu0 %v8193
      %8670 = vmatprep.subr.mxu0 %v8202
      %8671 = vmatpush1.msra.mxu0 %v8201
      %8672 = vmatprep.subr.mxu0 %v8210
      %8673 = vmatpush1.msra.mxu0 %v8209
      %8674 = vmatprep.subr.mxu0 %v8218
      %8675 = vmatpush1.msra.mxu0 %v8217
      %8676 = vmatprep.subr.mxu0 %v8226
      %8677 = vmatpush1.msra.mxu0 %v8225
      %8678 = vmatprep.subr.mxu0 %v8234
      %8679 = vmatpush1.msra.mxu0 %v8233
      %8680 = vmatprep.subr.mxu0 %v8242
      %8681 = vmatpush1.msra.mxu0 %v8241
      %8682 = vmatprep.subr.mxu0 %v8250
      %8683 = vmatpush1.msra.mxu0 %v8249
      %8684 = vmatprep.subr.mxu0 %v8258
      %8685 = vmatpush1.msra.mxu0 %v8257
      %8686 = vmatprep.subr.mxu0 %v8266
      %8687 = vmatpush1.msra.mxu0 %v8265
      %8688 = vmatprep.subr.mxu0 %v8274
      %8689 = vmatpush1.msra.mxu0 %v8273
      %8690 = vmatprep.subr.mxu0 %v8282
      %8691 = vmatpush1.msra.mxu0 %v8281
      %8692 = vmatprep.subr.mxu0 %v8290
      %8693 = vmatpush1.msra.mxu0 %v8289
      %8694 = vmatprep.subr.mxu0 %v8298
      %8695 = vmatpush1.msra.mxu0 %v8297
      %8696 = vmatprep.subr.mxu0 %v8306
      %8697 = vmatpush1.msra.mxu0 %v8305
      %8698 = vmatprep.subr.mxu0 %v8314
      %8699 = vmatpush1.msra.mxu0 %v8313
      %8700 = vmatprep.subr.mxu0 %v8322
      %8701 = vmatpush1.msra.mxu0 %v8321
      %8702 = vmatprep.subr.mxu0 %v8330
      %8703 = vmatpush1.msra.mxu0 %v8329
      %8704 = vmatprep.subr.mxu0 %v8338
      %8705 = vmatpush1.msra.mxu0 %v8337
      %8706 = vmatprep.subr.mxu0 %v8346
      %8707 = vmatpush1.msra.mxu0 %v8345
      %8708 = vmatprep.subr.mxu0 %v8354
      %8709 = vmatpush1.msra.mxu0 %v8353
      %8710 = vmatprep.subr.mxu0 %v8362
      %8711 = vmatpush1.msra.mxu0 %v8361
      %8712 = vmatprep.subr.mxu0 %v8370
      %8713 = vmatpush1.msra.mxu0 %v8369
      %8714 = vmatprep.subr.mxu0 %v8378
      %8715 = vmatpush1.msra.mxu0 %v8377
      %8716 = vmatprep.subr.mxu0 %v8386
      %8717 = vmatpush1.msra.mxu0 %v8385
      %8718 = vmatprep.subr.mxu0 %v8394
      %8719 = vmatpush1.msra.mxu0 %v8393
      %8720 = vmatprep.subr.mxu0 %v8402
      %8721 = vmatpush1.msra.mxu0 %v8401
      %8722 = vmatprep.subr.mxu0 %v8410
      %8723 = vmatpush1.msra.mxu0 %v8409
      %8724 = vmatprep.subr.mxu0 %v8418
      %8725 = vmatpush1.msra.mxu0 %v8417
      %8726 = vmatprep.subr.mxu0 %v8426
      %8727 = vmatpush1.msra.mxu0 %v8425
      %8728 = vmatprep.subr.mxu0 %v8434
      %8729 = vmatpush1.msra.mxu0 %v8433
      %8730 = vmatprep.mubr.f32.mxu0 %v3022
      %8731 = vmatmul.mubr.f32.gmra.mrb[0].mxu0 %v3021
      %v8732 = vpop.f32.mrb[0].mxu0
      %v8733 = vadd.f32 0.0, %v8732
      %v8734 = vpop.f32.mrb[0].mxu0
      %v8735 = vadd.f32 0.0, %v8734
      %8736 = vmatprep.mubr.f32.mxu0 %v3024
      %8737 = vmatmul.mubr.f32.gmra.mrb[0].mxu0 %v3023
      %v8738 = vpop.f32.mrb[0].mxu0
      %v8739 = vadd.f32 0.0, %v8738
      %v8740 = vpop.f32.mrb[0].mxu0
      %v8741 = vadd.f32 0.0, %v8740
      %8742 = vdwg.mxu0
      %v8743 = vld [vmem:[%s15] sm:$0xff]
      %v8744 = vld [vmem:[%s15 + $0x8] sm:$0xff]
      %v8745 = vld [vmem:[%s16] sm:$0xff]
      %v8746 = vld [vmem:[%s16 + $0x8] sm:$0xff]
      %8748 = vset.pattern.permute.xlu0 0
      %8749 = vperm.xlu0 %8748, %v8745
      %v8750 = vpop.permute.xlu0 %8749
      %8753 = vset.pattern.permute.xlu0 0
      %8754 = vperm.xlu0 %8753, %v8746
      %v8755 = vpop.permute.xlu0 %8754
      %v8758 = vsel %vm825, %v8743, 0
      %v8761 = vsel %vm825, %v8744, 0
      %8763 = vmatprep.subr.mxu0 %v8504
      %8764 = vmatpush1.msra.mxu0 %v8502
      %8765 = vmatprep.subr.mxu0 %v8510
      %8766 = vmatpush1.msra.mxu0 %v8508
      %8767 = vmatprep.subr.mxu0 0.0
      %8768 = vmatpush1.msra.mxu0 0.0
      %8769 = vmatprep.subr.mxu0 0.0
      %8770 = vmatpush1.msra.mxu0 0.0
      %8771 = vmatprep.subr.mxu0 0.0
      %8772 = vmatpush1.msra.mxu0 0.0
      %8773 = vmatprep.subr.mxu0 0.0
      %8774 = vmatpush1.msra.mxu0 0.0
      %8775 = vmatprep.subr.mxu0 0.0
      %8776 = vmatpush1.msra.mxu0 0.0
      %8777 = vmatprep.subr.mxu0 0.0
      %8778 = vmatpush1.msra.mxu0 0.0
      %8779 = vmatprep.subr.mxu0 0.0
      %8780 = vmatpush1.msra.mxu0 0.0
      %8781 = vmatprep.subr.mxu0 0.0
      %8782 = vmatpush1.msra.mxu0 0.0
      %8783 = vmatprep.subr.mxu0 0.0
      %8784 = vmatpush1.msra.mxu0 0.0
      %8785 = vmatprep.subr.mxu0 0.0
      %8786 = vmatpush1.msra.mxu0 0.0
      %8787 = vmatprep.subr.mxu0 0.0
      %8788 = vmatpush1.msra.mxu0 0.0
      %8789 = vmatprep.subr.mxu0 0.0
      %8790 = vmatpush1.msra.mxu0 0.0
      %8791 = vmatprep.subr.mxu0 0.0
      %8792 = vmatpush1.msra.mxu0 0.0
      %8793 = vmatprep.subr.mxu0 0.0
      %8794 = vmatpush1.msra.mxu0 0.0
      %8795 = vmatprep.subr.mxu0 0.0
      %8796 = vmatpush1.msra.mxu0 0.0
      %8797 = vmatprep.subr.mxu0 0.0
      %8798 = vmatpush1.msra.mxu0 0.0
      %8799 = vmatprep.subr.mxu0 0.0
      %8800 = vmatpush1.msra.mxu0 0.0
      %8801 = vmatprep.subr.mxu0 0.0
      %8802 = vmatpush1.msra.mxu0 0.0
      %8803 = vmatprep.subr.mxu0 0.0
      %8804 = vmatpush1.msra.mxu0 0.0
      %8805 = vmatprep.subr.mxu0 0.0
      %8806 = vmatpush1.msra.mxu0 0.0
      %8807 = vmatprep.subr.mxu0 0.0
      %8808 = vmatpush1.msra.mxu0 0.0
      %8809 = vmatprep.subr.mxu0 0.0
      %8810 = vmatpush1.msra.mxu0 0.0
      %8811 = vmatprep.subr.mxu0 0.0
      %8812 = vmatpush1.msra.mxu0 0.0
      %8813 = vmatprep.subr.mxu0 0.0
      %8814 = vmatpush1.msra.mxu0 0.0
      %8815 = vmatprep.subr.mxu0 0.0
      %8816 = vmatpush1.msra.mxu0 0.0
      %8817 = vmatprep.subr.mxu0 0.0
      %8818 = vmatpush1.msra.mxu0 0.0
      %8819 = vmatprep.subr.mxu0 0.0
      %8820 = vmatpush1.msra.mxu0 0.0
      %8821 = vmatprep.subr.mxu0 0.0
      %8822 = vmatpush1.msra.mxu0 0.0
      %8823 = vmatprep.subr.mxu0 0.0
      %8824 = vmatpush1.msra.mxu0 0.0
      %8825 = vmatprep.subr.mxu0 0.0
      %8826 = vmatpush1.msra.mxu0 0.0
      %8827 = vmatprep.mubr.f32.mxu0 0.0
      %8828 = vmatmul.mubr.f32.gmra.mrb[0].mxu0 %v8758
      %v8829 = vpop.f32.mrb[0].mxu0
      %v8830 = vadd.f32 %v8750, %v8829
      %v8831 = vpop.f32.mrb[0].mxu0
      %v8832 = vadd.f32 %v8750, %v8831
      %8833 = vmatprep.mubr.f32.mxu0 0.0
      %8834 = vmatmul.mubr.f32.gmra.mrb[0].mxu0 %v8761
      %v8835 = vpop.f32.mrb[0].mxu0
      %v8836 = vadd.f32 %v8755, %v8835
      %v8837 = vpop.f32.mrb[0].mxu0
      %v8838 = vadd.f32 %v8755, %v8837
      %8839 = vdwg.mxu0
      %8840 = vmatprep.subr.mxu0 %v8581
      %8841 = vmatpush1.msra.mxu0 %v8579
      %8842 = vmatprep.subr.mxu0 %v8587
      %8843 = vmatpush1.msra.mxu0 %v8585
      %8844 = vmatprep.subr.mxu0 0.0
      %8845 = vmatpush1.msra.mxu0 0.0
      %8846 = vmatprep.subr.mxu0 0.0
      %8847 = vmatpush1.msra.mxu0 0.0
      %8848 = vmatprep.subr.mxu0 0.0
      %8849 = vmatpush1.msra.mxu0 0.0
      %8850 = vmatprep.subr.mxu0 0.0
      %8851 = vmatpush1.msra.mxu0 0.0
      %8852 = vmatprep.subr.mxu0 0.0
      %8853 = vmatpush1.msra.mxu0 0.0
      %8854 = vmatprep.subr.mxu0 0.0
      %8855 = vmatpush1.msra.mxu0 0.0
      %8856 = vmatprep.subr.mxu0 0.0
      %8857 = vmatpush1.msra.mxu0 0.0
      %8858 = vmatprep.subr.mxu0 0.0
      %8859 = vmatpush1.msra.mxu0 0.0
      %8860 = vmatprep.subr.mxu0 0.0
      %8861 = vmatpush1.msra.mxu0 0.0
      %8862 = vmatprep.subr.mxu0 0.0
      %8863 = vmatpush1.msra.mxu0 0.0
      %8864 = vmatprep.subr.mxu0 0.0
      %8865 = vmatpush1.msra.mxu0 0.0
      %8866 = vmatprep.subr.mxu0 0.0
      %8867 = vmatpush1.msra.mxu0 0.0
      %8868 = vmatprep.subr.mxu0 0.0
      %8869 = vmatpush1.msra.mxu0 0.0
      %8870 = vmatprep.subr.mxu0 0.0
      %8871 = vmatpush1.msra.mxu0 0.0
      %8872 = vmatprep.subr.mxu0 0.0
      %8873 = vmatpush1.msra.mxu0 0.0
      %8874 = vmatprep.subr.mxu0 0.0
      %8875 = vmatpush1.msra.mxu0 0.0
      %8876 = vmatprep.subr.mxu0 0.0
      %8877 = vmatpush1.msra.mxu0 0.0
      %8878 = vmatprep.subr.mxu0 0.0
      %8879 = vmatpush1.msra.mxu0 0.0
      %8880 = vmatprep.subr.mxu0 0.0
      %8881 = vmatpush1.msra.mxu0 0.0
      %8882 = vmatprep.subr.mxu0 0.0
      %8883 = vmatpush1.msra.mxu0 0.0
      %8884 = vmatprep.subr.mxu0 0.0
      %8885 = vmatpush1.msra.mxu0 0.0
      %8886 = vmatprep.subr.mxu0 0.0
      %8887 = vmatpush1.msra.mxu0 0.0
      %8888 = vmatprep.subr.mxu0 0.0
      %8889 = vmatpush1.msra.mxu0 0.0
      %8890 = vmatprep.subr.mxu0 0.0
      %8891 = vmatpush1.msra.mxu0 0.0
      %8892 = vmatprep.subr.mxu0 0.0
      %8893 = vmatpush1.msra.mxu0 0.0
      %8894 = vmatprep.subr.mxu0 0.0
      %8895 = vmatpush1.msra.mxu0 0.0
      %8896 = vmatprep.subr.mxu0 0.0
      %8897 = vmatpush1.msra.mxu0 0.0
      %8898 = vmatprep.subr.mxu0 0.0
      %8899 = vmatpush1.msra.mxu0 0.0
      %8900 = vmatprep.subr.mxu0 0.0
      %8901 = vmatpush1.msra.mxu0 0.0
      %8902 = vmatprep.subr.mxu0 0.0
      %8903 = vmatpush1.msra.mxu0 0.0
      %8904 = vmatprep.mubr.f32.mxu0 0.0
      %8905 = vmatmul.mubr.f32.gmra.mrb[0].mxu0 %v8758
      %v8906 = vpop.f32.mrb[0].mxu0
      %v8907 = vadd.f32 %v8750, %v8906
      %v8908 = vpop.f32.mrb[0].mxu0
      %v8909 = vadd.f32 %v8750, %v8908
      %8910 = vmatprep.mubr.f32.mxu0 0.0
      %8911 = vmatmul.mubr.f32.gmra.mrb[0].mxu0 %v8761
      %v8912 = vpop.f32.mrb[0].mxu0
      %v8913 = vadd.f32 %v8755, %v8912
      %v8914 = vpop.f32.mrb[0].mxu0
      %v8915 = vadd.f32 %v8755, %v8914
      %8916 = vdwg.mxu0
      %8917 = vmatprep.subr.mxu0 %v8658
      %8918 = vmatpush1.msra.mxu0 %v8656
      %8919 = vmatprep.subr.mxu0 %v8664
      %8920 = vmatpush1.msra.mxu0 %v8662
      %8921 = vmatprep.subr.mxu0 0.0
      %8922 = vmatpush1.msra.mxu0 0.0
      %8923 = vmatprep.subr.mxu0 0.0
      %8924 = vmatpush1.msra.mxu0 0.0
      %8925 = vmatprep.subr.mxu0 0.0
      %8926 = vmatpush1.msra.mxu0 0.0
      %8927 = vmatprep.subr.mxu0 0.0
      %8928 = vmatpush1.msra.mxu0 0.0
      %8929 = vmatprep.subr.mxu0 0.0
      %8930 = vmatpush1.msra.mxu0 0.0
      %8931 = vmatprep.subr.mxu0 0.0
      %8932 = vmatpush1.msra.mxu0 0.0
      %8933 = vmatprep.subr.mxu0 0.0
      %8934 = vmatpush1.msra.mxu0 0.0
      %8935 = vmatprep.subr.mxu0 0.0
      %8936 = vmatpush1.msra.mxu0 0.0
      %8937 = vmatprep.subr.mxu0 0.0
      %8938 = vmatpush1.msra.mxu0 0.0
      %8939 = vmatprep.subr.mxu0 0.0
      %8940 = vmatpush1.msra.mxu0 0.0
      %8941 = vmatprep.subr.mxu0 0.0
      %8942 = vmatpush1.msra.mxu0 0.0
      %8943 = vmatprep.subr.mxu0 0.0
      %8944 = vmatpush1.msra.mxu0 0.0
      %8945 = vmatprep.subr.mxu0 0.0
      %8946 = vmatpush1.msra.mxu0 0.0
      %8947 = vmatprep.subr.mxu0 0.0
      %8948 = vmatpush1.msra.mxu0 0.0
      %8949 = vmatprep.subr.mxu0 0.0
      %8950 = vmatpush1.msra.mxu0 0.0
      %8951 = vmatprep.subr.mxu0 0.0
      %8952 = vmatpush1.msra.mxu0 0.0
      %8953 = vmatprep.subr.mxu0 0.0
      %8954 = vmatpush1.msra.mxu0 0.0
      %8955 = vmatprep.subr.mxu0 0.0
      %8956 = vmatpush1.msra.mxu0 0.0
      %8957 = vmatprep.subr.mxu0 0.0
      %8958 = vmatpush1.msra.mxu0 0.0
      %8959 = vmatprep.subr.mxu0 0.0
      %8960 = vmatpush1.msra.mxu0 0.0
      %8961 = vmatprep.subr.mxu0 0.0
      %8962 = vmatpush1.msra.mxu0 0.0
      %8963 = vmatprep.subr.mxu0 0.0
      %8964 = vmatpush1.msra.mxu0 0.0
      %8965 = vmatprep.subr.mxu0 0.0
      %8966 = vmatpush1.msra.mxu0 0.0
      %8967 = vmatprep.subr.mxu0 0.0
      %8968 = vmatpush1.msra.mxu0 0.0
      %8969 = vmatprep.subr.mxu0 0.0
      %8970 = vmatpush1.msra.mxu0 0.0
      %8971 = vmatprep.subr.mxu0 0.0
      %8972 = vmatpush1.msra.mxu0 0.0
      %8973 = vmatprep.subr.mxu0 0.0
      %8974 = vmatpush1.msra.mxu0 0.0
      %8975 = vmatprep.subr.mxu0 0.0
      %8976 = vmatpush1.msra.mxu0 0.0
      %8977 = vmatprep.subr.mxu0 0.0
      %8978 = vmatpush1.msra.mxu0 0.0
      %8979 = vmatprep.subr.mxu0 0.0
      %8980 = vmatpush1.msra.mxu0 0.0
      %8981 = vmatprep.mubr.f32.mxu0 0.0
      %8982 = vmatmul.mubr.f32.gmra.mrb[0].mxu0 %v8758
      %v8983 = vpop.f32.mrb[0].mxu0
      %v8984 = vadd.f32 %v8750, %v8983
      %v8985 = vpop.f32.mrb[0].mxu0
      %v8986 = vadd.f32 %v8750, %v8985
      %8987 = vmatprep.mubr.f32.mxu0 0.0
      %8988 = vmatmul.mubr.f32.gmra.mrb[0].mxu0 %v8761
      %v8989 = vpop.f32.mrb[0].mxu0
      %v8990 = vadd.f32 %v8755, %v8989
      %v8991 = vpop.f32.mrb[0].mxu0
      %v8992 = vadd.f32 %v8755, %v8991
      %8993 = vdwg.mxu0
      %8994 = vmatprep.subr.mxu0 %v8735
      %8995 = vmatpush1.msra.mxu0 %v8733
      %8996 = vmatprep.subr.mxu0 %v8741
      %8997 = vmatpush1.msra.mxu0 %v8739
      %8998 = vmatprep.subr.mxu0 0.0
      %8999 = vmatpush1.msra.mxu0 0.0
      %9000 = vmatprep.subr.mxu0 0.0
      %9001 = vmatpush1.msra.mxu0 0.0
      %9002 = vmatprep.subr.mxu0 0.0
      %9003 = vmatpush1.msra.mxu0 0.0
      %9004 = vmatprep.subr.mxu0 0.0
      %9005 = vmatpush1.msra.mxu0 0.0
      %9006 = vmatprep.subr.mxu0 0.0
      %9007 = vmatpush1.msra.mxu0 0.0
      %9008 = vmatprep.subr.mxu0 0.0
      %9009 = vmatpush1.msra.mxu0 0.0
      %9010 = vmatprep.subr.mxu0 0.0
      %9011 = vmatpush1.msra.mxu0 0.0
      %9012 = vmatprep.subr.mxu0 0.0
      %9013 = vmatpush1.msra.mxu0 0.0
      %9014 = vmatprep.subr.mxu0 0.0
      %9015 = vmatpush1.msra.mxu0 0.0
      %9016 = vmatprep.subr.mxu0 0.0
      %9017 = vmatpush1.msra.mxu0 0.0
      %9018 = vmatprep.subr.mxu0 0.0
      %9019 = vmatpush1.msra.mxu0 0.0
      %9020 = vmatprep.subr.mxu0 0.0
      %9021 = vmatpush1.msra.mxu0 0.0
      %9022 = vmatprep.subr.mxu0 0.0
      %9023 = vmatpush1.msra.mxu0 0.0
      %9024 = vmatprep.subr.mxu0 0.0
      %9025 = vmatpush1.msra.mxu0 0.0
      %9026 = vmatprep.subr.mxu0 0.0
      %9027 = vmatpush1.msra.mxu0 0.0
      %9028 = vmatprep.subr.mxu0 0.0
      %9029 = vmatpush1.msra.mxu0 0.0
      %9030 = vmatprep.subr.mxu0 0.0
      %9031 = vmatpush1.msra.mxu0 0.0
      %9032 = vmatprep.subr.mxu0 0.0
      %9033 = vmatpush1.msra.mxu0 0.0
      %9034 = vmatprep.subr.mxu0 0.0
      %9035 = vmatpush1.msra.mxu0 0.0
      %9036 = vmatprep.subr.mxu0 0.0
      %9037 = vmatpush1.msra.mxu0 0.0
      %9038 = vmatprep.subr.mxu0 0.0
      %9039 = vmatpush1.msra.mxu0 0.0
      %9040 = vmatprep.subr.mxu0 0.0
      %9041 = vmatpush1.msra.mxu0 0.0
      %9042 = vmatprep.subr.mxu0 0.0
      %9043 = vmatpush1.msra.mxu0 0.0
      %9044 = vmatprep.subr.mxu0 0.0
      %9045 = vmatpush1.msra.mxu0 0.0
      %9046 = vmatprep.subr.mxu0 0.0
      %9047 = vmatpush1.msra.mxu0 0.0
      %9048 = vmatprep.subr.mxu0 0.0
      %9049 = vmatpush1.msra.mxu0 0.0
      %9050 = vmatprep.subr.mxu0 0.0
      %9051 = vmatpush1.msra.mxu0 0.0
      %9052 = vmatprep.subr.mxu0 0.0
      %9053 = vmatpush1.msra.mxu0 0.0
      %9054 = vmatprep.subr.mxu0 0.0
      %9055 = vmatpush1.msra.mxu0 0.0
      %9056 = vmatprep.subr.mxu0 0.0
      %9057 = vmatpush1.msra.mxu0 0.0
      %9058 = vmatprep.mubr.f32.mxu0 0.0
      %9059 = vmatmul.mubr.f32.gmra.mrb[0].mxu0 %v8758
      %v9060 = vpop.f32.mrb[0].mxu0
      %v9061 = vadd.f32 %v8750, %v9060
      %v9062 = vpop.f32.mrb[0].mxu0
      %v9063 = vadd.f32 %v8750, %v9062
      %9064 = vmatprep.mubr.f32.mxu0 0.0
      %9065 = vmatmul.mubr.f32.gmra.mrb[0].mxu0 %v8761
      %v9066 = vpop.f32.mrb[0].mxu0
      %v9067 = vadd.f32 %v8755, %v9066
      %v9068 = vpop.f32.mrb[0].mxu0
      %v9069 = vadd.f32 %v8755, %v9068
      %9070 = vdwg.mxu0
      %v9071 = vadd.f32 %v8830, %v7938
      %v9072 = vadd.f32 %v8832, %v7940
      %v9073 = vadd.f32 %v8907, %v8015
      %v9074 = vadd.f32 %v8909, %v8017
      %v9075 = vadd.f32 %v8984, %v8092
      %v9076 = vadd.f32 %v8986, %v8094
      %v9077 = vadd.f32 %v9061, %v8169
      %v9078 = vadd.f32 %v9063, %v8171
      %v9079 = vadd.f32 %v8836, %v7944
      %v9080 = vadd.f32 %v8838, %v7946
      %v9081 = vadd.f32 %v8913, %v8021
      %v9082 = vadd.f32 %v8915, %v8023
      %v9083 = vadd.f32 %v8990, %v8098
      %v9084 = vadd.f32 %v8992, %v8100
      %v9085 = vadd.f32 %v9067, %v8175
      %v9086 = vadd.f32 %v9069, %v8177
      %9087 = vst [vmem:[%s710] sm:$0xff] %v9071
      %9088 = vst [vmem:[%s710 + $0x8] sm:$0xff] %v9072
      %9089 = vst [vmem:[%s710 + $0x10] sm:$0xff] %v9073
      %9090 = vst [vmem:[%s710 + $0x18] sm:$0xff] %v9074
      %9091 = vst [vmem:[%s710 + $0x20] sm:$0xff] %v9075
      %9092 = vst [vmem:[%s710 + $0x28] sm:$0xff] %v9076
      %9093 = vst [vmem:[%s710 + $0x30] sm:$0xff] %v9077
      %9094 = vst [vmem:[%s710 + $0x38] sm:$0xff] %v9078
      %9095 = vst [vmem:[%s710 + $0x40] sm:$0xff] %v9079
      %9096 = vst [vmem:[%s710 + $0x48] sm:$0xff] %v9080
      %9097 = vst [vmem:[%s710 + $0x50] sm:$0xff] %v9081
      %9098 = vst [vmem:[%s710 + $0x58] sm:$0xff] %v9082
      %9099 = vst [vmem:[%s710 + $0x60] sm:$0xff] %v9083
      %9100 = vst [vmem:[%s710 + $0x68] sm:$0xff] %v9084
      %9101 = vst [vmem:[%s710 + $0x70] sm:$0xff] %v9085
      %9102 = vst [vmem:[%s710 + $0x78] sm:$0xff] %v9086
      %p9103 = scmp.lt.s32.totalorder %s34, 3
      %s9104 = scalar_select %p9103, %s34, 3
      %s9105 = smul.addr %s9104, 16
      %s9106 = smul.addr %s9105, 8
      %s9107 = scalar_lea.vmem %s23, %s9106
      // Predicated region
      $region113: #{sequence_gru_forward.1} parent=111 // pred_check
        %p9108 = pneg %p540
      $region114: #{sequence_gru_forward.1} parent=111 // pred_check_branch
        %9110 = sbr.rel (%p9108) target = $region116
      $region115: #{sequence_gru_forward.1} parent=111 // pred_region
        _
      $region116: #{sequence_gru_forward.1} parent=111 // pred_fallthru
        _
    $region112: #{sequence_gru_forward.1} parent=5 // pred_fallthru
      _
    %p9111 = scmp.le.s32.totalorder 2, %s29
    // Predicated region
    $region117: #{sequence_gru_forward.1} parent=5 // pred_check
      %p9112 = pneg %p9111
    $region118: #{sequence_gru_forward.1} parent=5 // pred_check_branch
      %9114 = sbr.rel (%p9112) target = $region120
    $region119: #{sequence_gru_forward.1} parent=5 // pred_region
      %s9115 = ssub.s32 %s29, 2
      // Predicated region
      $region121: #{sequence_gru_forward.1} parent=119 // pred_check
        %p9116 = pneg %p546
      $region122: #{sequence_gru_forward.1} parent=119 // pred_check_branch
        %9118 = sbr.rel (%p9116) target = $region124
      $region123: #{sequence_gru_forward.1} parent=119 // pred_region
        %p9119 = scmp.lt.s32.totalorder %s35, 3
        %s9120 = scalar_select %p9119, %s35, 3
        %s9121 = smul.addr %s9120, 16
        %s9122 = smul.addr %s9121, 8
        %s9123 = scalar_lea.vmem %s23, %s9122
      $region124: #{sequence_gru_forward.1} parent=119 // pred_fallthru
        _
    $region120: #{sequence_gru_forward.1} parent=5 // pred_fallthru
      _
  $region6: #{sequence_gru_forward.1} parent=0 // loop_footer
    %s33 = sadd.s32 1, %s29
  $region7: #{sequence_gru_forward.1} parent=0 // loop_footer_branch
    %28 = sbr.rel target = $region3
  $region8: #{sequence_gru_forward.1} parent=0 // loop_exit
    _

</llo_original>
